<compile_context>
chip_gen: v7x
topology: tpu7x:2x2x1
jax: 0.10.0
libtpu: 0.0.40
codegen_flags: <defaults>
</compile_context>

<pallas_src>
import jax
import jax.numpy as jnp
from jax.experimental import pallas as pl
from jax.experimental.pallas import tpu as pltpu

_MIB = 1024 * 1024


def _round_up(x, m):
    return ((x + m - 1) // m) * m


def _tpu_params():
    """Generation-specific knobs: (max_thw_f32, vmem_limit_bytes, num_tensorcores).

    Conservative v7x-safe defaults (64 MiB physical VMEM, 2 TCs); upgraded to
    bigger tiles only if we positively detect a large-VMEM part (v5e / v6e).
    """
    max_thw, vmem_limit, n_tc = 2048, 48 * _MIB, 2
    vmem_cap = None
    try:
        vmem_cap = int(pltpu.get_tpu_info().vmem_capacity_bytes)
    except Exception:
        vmem_cap = None
    kind = ""
    try:
        kind = jax.devices()[0].device_kind.lower()
    except Exception:
        kind = ""
    big_vmem = (vmem_cap is not None and vmem_cap >= 100 * _MIB) or any(
        tag in kind for tag in ("v5", "v6"))
    if big_vmem:
        max_thw, vmem_limit, n_tc = 4096, 64 * _MIB, 1
    return max_thw, vmem_limit, n_tc


def conv1x1_kernel(w_ref, b_ref, x_ref, o_ref):
    # w_ref: (Cout, Cin), b_ref: (Cout, 1) f32, x_ref: (Cin, THW), o_ref: (Cout, THW)
    acc = jnp.dot(w_ref[...], x_ref[...], preferred_element_type=jnp.float32)
    o_ref[...] = (acc + b_ref[...]).astype(o_ref.dtype)


def conv2d_1x1(x_nchw, weight, bias, *, max_thw=None):
    """1x1 stride-1 conv, NCHW in/out: out[n,o,h,w] = sum_c w[o,c] * x[n,c,h,w] + b[o].

    x_nchw: (N, Cin, H, W); weight: (Cout, Cin, 1, 1) PyTorch layout; bias: (Cout,).
    """
    N, Cin, H, W = x_nchw.shape
    Cout = weight.shape[0]
    HW = H * W

    w2d = weight.reshape(Cout, Cin).astype(x_nchw.dtype)  # bf16 pass-through supported
    b2d = bias.reshape(Cout, 1).astype(jnp.float32)       # bias add stays f32

    # ---- Small-problem fallback (covers the module's literal (1,1536,1,1)). ----
    if HW < 128:
        x3d = x_nchw.reshape(N, Cin, HW)
        out = jnp.einsum("oc,ncs->nos", w2d, x3d,
                         preferred_element_type=jnp.float32)
        out = out + b2d[None, :, :]
        return out.astype(x_nchw.dtype).reshape(N, Cout, H, W)

    gen_max_thw, vmem_limit, n_tc = _tpu_params()
    if max_thw is None:
        max_thw = gen_max_thw
    # Keep the (8,128) rule honest for the tiled path.
    max_thw = max(128, (max_thw // 128) * 128)

    # ---- Spatial-tile choice: prefer full-HW tiles; split for v7x's 2 TCs. ----
    if HW <= max_thw:
        thw = HW
        if n_tc >= 2 and N == 1 and HW >= 256:
            thw = _round_up(-(-HW // 2), 128)  # two half-HW tiles -> both cores busy
    else:
        thw = max_thw  # multiple of 128 by construction

    x3d = x_nchw.reshape(N, Cin, HW)  # NCHW -> (N, Cin, HW): no wrapper transpose
    grid = (N, pl.cdiv(HW, thw))

    itemsize = jnp.dtype(x3d.dtype).itemsize
    cost = pl.CostEstimate(
        flops=2 * N * Cout * Cin * HW,
        transcendentals=0,
        bytes_accessed=(N * Cin * HW * itemsize + N * Cout * HW * itemsize
                        + Cout * Cin * jnp.dtype(w2d.dtype).itemsize + Cout * 4),
    )
    compiler_params = pltpu.CompilerParams(
        dimension_semantics=("parallel", "parallel"),
        vmem_limit_bytes=vmem_limit,
    )
    out_shape = jax.ShapeDtypeStruct((N, Cout, HW), x_nchw.dtype)

    def build_specs(single_buffer_resident):
        # Weight & bias use the same block every grid step -> VMEM-resident;
        # single-buffer them to reclaim the wasted second buffer.
        wb = dict(pipeline_mode=pl.Buffered(1)) if single_buffer_resident else {}
        in_specs = [
            pl.BlockSpec((Cout, Cin), lambda n, t: (0, 0), **wb),
            pl.BlockSpec((Cout, 1), lambda n, t: (0, 0), **wb),
            # Input: one (Cin, THW) slab per (batch, spatial-tile); double-buffered.
            pl.BlockSpec((None, Cin, thw), lambda n, t: (n, 0, t)),
        ]
        out_specs = pl.BlockSpec((None, Cout, thw), lambda n, t: (n, 0, t))
        return in_specs, out_specs

    out3d = None
    last_err = None
    for single_buf in (True, False):
        try:
            in_specs, out_specs = build_specs(single_buf)
            out3d = pl.pallas_call(
                conv1x1_kernel,
                out_shape=out_shape,
                grid_spec=pltpu.PrefetchScalarGridSpec(
                    num_scalar_prefetch=0,
                    grid=grid,
                    in_specs=in_specs,
                    out_specs=out_specs,
                ),
                compiler_params=compiler_params,
                cost_estimate=cost,
            )(w2d, b2d, x3d)
            break
        except Exception as e:  # e.g. pipeline_mode unsupported on this JAX build
            last_err = e
            out3d = None
    if out3d is None:
        raise last_err
    return out3d.reshape(N, Cout, H, W)


if __name__ == "__main__":
    key = jax.random.PRNGKey(0)
    kx1, kx2, kx3, kw, kb = jax.random.split(key, 5)

    Cin, Cout = 1536, 64  # Conv2d(1536, 64, kernel_size=1, stride=1)

    bound = 1.0 / (Cin ** 0.5)
    weight = jax.random.uniform(kw, (Cout, Cin, 1, 1), minval=-bound,
                                maxval=bound, dtype=jnp.float32)
    bias = jax.random.uniform(kb, (Cout,), minval=-bound, maxval=bound,
                              dtype=jnp.float32)

    def ref_conv(x):
        # General NCHW 1x1-conv reference (valid for any H, W), computed in f32.
        return (jnp.einsum("nchw,oc->nohw", x.astype(jnp.float32),
                           weight.reshape(Cout, Cin))
                + bias.reshape(1, Cout, 1, 1))

    # 1) Literal module shape (1, 1536, 1, 1): small-problem fallback path.
    x1 = jax.random.normal(kx1, (1, Cin, 1, 1), dtype=jnp.float32)
    out1 = conv2d_1x1(x1, weight, bias)
    jax.block_until_ready(out1)
    assert out1.shape == (1, Cout, 1, 1), out1.shape
    assert jnp.allclose(out1, ref_conv(x1), atol=1e-4, rtol=1e-4)

    # 2) Realistic feature map: full-HW tile, lane-dense stores, grid=(2, 1).
    x2 = jax.random.normal(kx2, (2, Cin, 32, 32), dtype=jnp.float32)
    out2 = conv2d_1x1(x2, weight, bias)
    jax.block_until_ready(out2)
    assert out2.shape == (2, Cout, 32, 32), out2.shape
    assert jnp.allclose(out2, ref_conv(x2), atol=1e-4, rtol=1e-4)

    # 3) Multi-tile + partial-last-tile path (HW=320, thw=256 -> tiles 256 + 64).
    x3 = jax.random.normal(kx3, (1, Cin, 16, 20), dtype=jnp.float32)
    out3 = conv2d_1x1(x3, weight, bias, max_thw=256)
    jax.block_until_ready(out3)
    assert out3.shape == (1, Cout, 16, 20), out3.shape
    assert jnp.allclose(out3, ref_conv(x3), atol=1e-4, rtol=1e-4)

    # 4) bf16 activation pass-through (f32 accumulation), loose tolerance.
    out4 = conv2d_1x1(x2.astype(jnp.bfloat16), weight, bias)
    jax.block_until_ready(out4)
    assert out4.dtype == jnp.bfloat16
    assert jnp.allclose(out4.astype(jnp.float32), ref_conv(x2), atol=1e-1, rtol=1e-1)

    print("KERNEL_OK")
</pallas_src>

<mosaic_0001>
module attributes {stable_mosaic.version = 11 : i64} {
  func.func @conv1x1_kernel(%arg0: i32, %arg1: i32, %arg2: memref<64x1536xf32, #tpu.memory_space<vmem>>, %arg3: memref<64x1xf32, #tpu.memory_space<vmem>>, %arg4: memref<1x1536x1024xf32, #tpu.memory_space<vmem>>, %arg5: memref<1x64x1024xf32, #tpu.memory_space<vmem>>) attributes {dimension_semantics = [#tpu.dimension_semantics<parallel>, #tpu.dimension_semantics<parallel>], iteration_bounds = array<i64: 2, 1>, scalar_prefetch = 0 : i64, scratch_operands = 0 : i64, tpu.core_type = #tpu.core_type<tc>, window_params = [{pipeline_mode = #tpu.pipeline_mode<synchronous>, transform_indices = @transform_0, window_bounds = array<i64: 64, 1536>}, {pipeline_mode = #tpu.pipeline_mode<synchronous>, transform_indices = @transform_1, window_bounds = array<i64: 64, 1>}, {transform_indices = @transform_2, window_bounds = array<i64: 1, 1536, 1024>}, {transform_indices = @transform_3, window_bounds = array<i64: 1, 64, 1024>}]} {
    %c0 = arith.constant 0 : index
    %c0_0 = arith.constant 0 : index
    %0 = vector.load %arg2[%c0, %c0_0] : memref<64x1536xf32, #tpu.memory_space<vmem>>, vector<64x1536xf32>
    %c0_1 = arith.constant 0 : index
    %c0_2 = arith.constant 0 : index
    %c0_3 = arith.constant 0 : index
    %1 = vector.load %arg4[%c0_1, %c0_2, %c0_3] : memref<1x1536x1024xf32, #tpu.memory_space<vmem>>, vector<1x1536x1024xf32>
    %2 = vector.shape_cast %1 : vector<1x1536x1024xf32> to vector<1536x1024xf32>
    %cst = arith.constant dense<0.000000e+00> : vector<64x1024xf32>
    %3 = tpu.matmul %0, %2, %cst {dimension_numbers = #tpu.dot_dimension_numbers<[1], [0], [0], [1], [0, 0, 1, 1], [], []>} : vector<64x1536xf32>, vector<1536x1024xf32>, vector<64x1024xf32> -> vector<64x1024xf32>
    %c0_4 = arith.constant 0 : index
    %c0_5 = arith.constant 0 : index
    %4 = vector.load %arg3[%c0_4, %c0_5] : memref<64x1xf32, #tpu.memory_space<vmem>>, vector<64x1xf32>
    %5 = vector.broadcast %4 : vector<64x1xf32> to vector<64x1024xf32>
    %6 = arith.addf %3, %5 : vector<64x1024xf32>
    %c0_6 = arith.constant 0 : index
    %c0_7 = arith.constant 0 : index
    %c0_8 = arith.constant 0 : index
    %7 = vector.load %arg5[%c0_6, %c0_7, %c0_8] : memref<1x64x1024xf32, #tpu.memory_space<vmem>>, vector<1x64x1024xf32>
    %8 = vector.shape_cast %7 : vector<1x64x1024xf32> to vector<64x1024xf32>
    %9 = vector.shape_cast %6 : vector<64x1024xf32> to vector<1x64x1024xf32>
    tpu.vector_store %arg5[%c0_6, %c0_7, %c0_8], %9 {strides = array<i32>} : memref<1x64x1024xf32, #tpu.memory_space<vmem>>, vector<1x64x1024xf32>,
    return
  }
  func.func @transform_0(%arg0: i32, %arg1: i32) -> (i32, i32) {
    %c0_i32 = arith.constant 0 : i32
    %c0_i32_0 = arith.constant 0 : i32
    %c0_i32_1 = arith.constant 0 : i32
    return %c0_i32, %c0_i32_0 : i32, i32
  }
  func.func @transform_1(%arg0: i32, %arg1: i32) -> (i32, i32) {
    %c0_i32 = arith.constant 0 : i32
    %c0_i32_0 = arith.constant 0 : i32
    %c0_i32_1 = arith.constant 0 : i32
    return %c0_i32, %c0_i32_0 : i32, i32
  }
  func.func @transform_2(%arg0: i32, %arg1: i32) -> (i32, i32, i32) {
    %c0_i32 = arith.constant 0 : i32
    %c0_i32_0 = arith.constant 0 : i32
    return %arg0, %c0_i32, %arg1 : i32, i32, i32
  }
  func.func @transform_3(%arg0: i32, %arg1: i32) -> (i32, i32, i32) {
    %c0_i32 = arith.constant 0 : i32
    %c0_i32_0 = arith.constant 0 : i32
    return %arg0, %c0_i32, %arg1 : i32, i32, i32
  }
}

module attributes {stable_mosaic.version = 11 : i64} {
  func.func @conv1x1_kernel(%arg0: i32, %arg1: i32, %arg2: memref<64x1536xf32, #tpu.memory_space<vmem>>, %arg3: memref<64x1xf32, #tpu.memory_space<vmem>>, %arg4: memref<1x1536x1024xf32, #tpu.memory_space<vmem>>, %arg5: memref<1x64x1024xf32, #tpu.memory_space<vmem>>) attributes {dimension_semantics = [#tpu.dimension_semantics<parallel>, #tpu.dimension_semantics<parallel>], iteration_bounds = array<i64: 2, 1>, scalar_prefetch = 0 : i64, scratch_operands = 0 : i64, tpu.core_type = #tpu.core_type<tc>, window_params = [{pipeline_mode = #tpu.pipeline_mode<synchronous>, transform_indices = @transform_0, window_bounds = array<i64: 64, 1536>}, {pipeline_mode = #tpu.pipeline_mode<synchronous>, transform_indices = @transform_1, window_bounds = array<i64: 64, 1>}, {transform_indices = @transform_2, window_bounds = array<i64: 1, 1536, 1024>}, {transform_indices = @transform_3, window_bounds = array<i64: 1, 64, 1024>}]} {
    %c0 = arith.constant 0 : index
    %c0_0 = arith.constant 0 : index
    %0 = vector.load %arg2[%c0, %c0_0] : memref<64x1536xf32, #tpu.memory_space<vmem>>, vector<64x1536xf32>
    %c0_1 = arith.constant 0 : index
    %c0_2 = arith.constant 0 : index
    %c0_3 = arith.constant 0 : index
    %1 = vector.load %arg4[%c0_1, %c0_2, %c0_3] : memref<1x1536x1024xf32, #tpu.memory_space<vmem>>, vector<1x1536x1024xf32>
    %2 = vector.shape_cast %1 : vector<1x1536x1024xf32> to vector<1536x1024xf32>
    %cst = arith.constant dense<0.000000e+00> : vector<64x1024xf32>
    %3 = tpu.matmul %0, %2, %cst {dimension_numbers = #tpu.dot_dimension_numbers<[1], [0], [0], [1], [0, 0, 1, 1], [], []>} : vector<64x1536xf32>, vector<1536x1024xf32>, vector<64x1024xf32> -> vector<64x1024xf32>
    %c0_4 = arith.constant 0 : index
    %c0_5 = arith.constant 0 : index
    %4 = vector.load %arg3[%c0_4, %c0_5] : memref<64x1xf32, #tpu.memory_space<vmem>>, vector<64x1xf32>
    %5 = vector.broadcast %4 : vector<64x1xf32> to vector<64x1024xf32>
    %6 = arith.addf %3, %5 : vector<64x1024xf32>
    %c0_6 = arith.constant 0 : index
    %c0_7 = arith.constant 0 : index
    %c0_8 = arith.constant 0 : index
    %7 = vector.load %arg5[%c0_6, %c0_7, %c0_8] : memref<1x64x1024xf32, #tpu.memory_space<vmem>>, vector<1x64x1024xf32>
    %8 = vector.shape_cast %7 : vector<1x64x1024xf32> to vector<64x1024xf32>
    %9 = vector.shape_cast %6 : vector<64x1024xf32> to vector<1x64x1024xf32>
    tpu.vector_store %arg5[%c0_6, %c0_7, %c0_8], %9 {strides = array<i32>} : memref<1x64x1024xf32, #tpu.memory_space<vmem>>, vector<1x64x1024xf32>,
    return
  }
  func.func @transform_0(%arg0: i32, %arg1: i32) -> (i32, i32) {
    %c0_i32 = arith.constant 0 : i32
    %c0_i32_0 = arith.constant 0 : i32
    %c0_i32_1 = arith.constant 0 : i32
    return %c0_i32, %c0_i32_0 : i32, i32
  }
  func.func @transform_1(%arg0: i32, %arg1: i32) -> (i32, i32) {
    %c0_i32 = arith.constant 0 : i32
    %c0_i32_0 = arith.constant 0 : i32
    %c0_i32_1 = arith.constant 0 : i32
    return %c0_i32, %c0_i32_0 : i32, i32
  }
  func.func @transform_2(%arg0: i32, %arg1: i32) -> (i32, i32, i32) {
    %c0_i32 = arith.constant 0 : i32
    %c0_i32_0 = arith.constant 0 : i32
    return %arg0, %c0_i32, %arg1 : i32, i32, i32
  }
  func.func @transform_3(%arg0: i32, %arg1: i32) -> (i32, i32, i32) {
    %c0_i32 = arith.constant 0 : i32
    %c0_i32_0 = arith.constant 0 : i32
    return %arg0, %c0_i32, %arg1 : i32, i32, i32
  }
}

</mosaic_0001>

<llo_original>
// kernel: tpu_custom_call.1
$region0: #{tpu_custom_call.1}
  #allocation0 [shape = 'u32[]', space=smem, size = 0x4, offset = 0x4, fixed_abs, tag = 'smem constant byte address 0x4 - core index']
  #allocation1 [shape = 'u32[144,128]{1,0:T(1,128)}', space=vmem, size = 0x12000, scoped, tag = 'internal scratch']
  %s0 = inlined_call_operand.hbm [shape: f32[64,1536], index: 0, kind: input, shape index: {}]
  %s1 = inlined_call_operand.vmem [shape: f32[64,1], index: 1, kind: input, shape index: {}]
  %s2 = inlined_call_operand.hbm [shape: f32[2,1536,1024], index: 2, kind: input, shape index: {}]
  %s3 = inlined_call_operand.hbm [shape: f32[2,64,1024], index: 3, kind: output, shape index: {}]
  %s4 = sld [smem:[#allocation0]]
  $region53: #{tpu_custom_call.1} parent=0
    _
  %s6 = ssub.s32 1, %s4
  %s7 = scalar_select 0, %s6, %s4
  $region1: #{tpu_custom_call.1} parent=0
    #allocation2 [shape = 'u8[393216]{0}', space=vmem, size = 0x60000, scoped, tag = 'input window, operand 0, single buffered']
    #allocation3 [shape = 's32[2]{0}', space=sflag, size = 0x8, scoped, tag = 'scoped memory for tpu_custom_call.1']
    #allocation4 [shape = 's32[2]{0}', space=sflag, size = 0x8, scoped, tag = 'scoped memory for tpu_custom_call.1']
    #allocation5 [shape = 'u8[12582912]{0}', space=vmem, size = 0xc00000, scoped, tag = 'input window, operand 2']
    #allocation6 [shape = 's32[2]{0}', space=sflag, size = 0x8, scoped, tag = 'scoped memory for tpu_custom_call.1']
    #allocation7 [shape = 'u8[524288]{0}', space=vmem, size = 0x80000, scoped, tag = 'output window, operand 0']
    %8 = vsyncpa [#allocation3], 0
    %9 = vsyncpa [#allocation6], 0
    %s10 = scalar_lea.sflag [#allocation6], 1
    %11 = vsyncpa %s10, 0
    %12 = vsyncpa [#allocation4], 0
    %s13 = scalar_lea.sflag [#allocation4], 1
    %14 = vsyncpa %s13, 0
    loop: start=0, step=1, limit=4
    $region2: #{tpu_custom_call.1} parent=1 // loop_pre_header
      _
    $region3: #{tpu_custom_call.1} parent=1 // loop_header
      %s16 = sphi 0, %s20
      %p17 = scmp.ge.s32.totalorder %s16, 4
      %s23 = sphi 0, %s35
      %s24 = sphi 0, %s31
      %s25 = sphi 0, %s23
      %s26 = sphi 0, %s24
      %s27 = sphi 0, %s25
      %s28 = sphi 0, %s26
      %s36 = sphi 0, %s36
      %s38 = sphi 0, %s36
      %s39 = sphi 0, %s38
      %s53 = sphi 0, %s39
      %s57 = sphi 0, %s57
      %s59 = sphi 0, %s57
      %s60 = sphi 0, %s59
      %s74 = sphi 0, %s60
      %s82 = sphi 0, %s84
      %s85 = sphi 0, %s82
      %s86 = sphi 0, %s85
      %s102 = sphi 0, %s86
      %s110 = sphi 0, %s112
      %s113 = sphi 0, %s110
      %s114 = sphi 0, %s113
      %s130 = sphi 0, %s114
    $region4: #{tpu_custom_call.1} parent=1 // loop_header_branch
      %19 = sbr.rel (%p17) target = $region8
    $region5: #{tpu_custom_call.1} parent=1 // loop_body
      %s21 = ssub.s32 %s16, 1
      %s22 = ssub.s32 %s16, 2
      %s29 = sadd.s32 1, %s24
      %p30 = scmp.ge.s32.totalorder %s29, 1
      %s31 = scalar_select %p30, 0, %s29
      %s32 = sadd.s32 1, %s23
      %s33 = scalar_select %p30, %s32, %s23
      %p34 = scmp.ge.s32.totalorder %s33, 2
      %s35 = scalar_select %p34, 0, %s33
      %s37 = sadd.s32 %s36, 1
      %p40 = scmp.eq.s32.totalorder %s16, 1
      %p41 = scmp.ne.s32.totalorder %s36, %s38
      %p42 = scmp.eq.s32.totalorder %s16, 0
      %p43 = por %p41, %p42
      %p44 = scmp.ne.s32.totalorder %s36, %s38
      %p45 = scmp.eq.s32.totalorder %s21, 1
      %p46 = por %p44, %p45
      %p47 = scmp.ne.s32.totalorder %s38, %s39
      %p48 = scmp.eq.s32.totalorder %s21, 0
      %p49 = por %p47, %p48
      %p50 = scmp.ne.s32.totalorder %s38, %s39
      %p51 = scmp.eq.s32.totalorder %s22, 1
      %p52 = por %p50, %p51
      %p54 = scmp.ne.s32.totalorder %s39, %s53
      %p55 = scmp.eq.s32.totalorder %s22, 0
      %p56 = por %p54, %p55
      %s58 = sadd.s32 %s57, 1
      %p61 = scmp.eq.s32.totalorder %s16, 1
      %p62 = scmp.ne.s32.totalorder %s57, %s59
      %p63 = scmp.eq.s32.totalorder %s16, 0
      %p64 = por %p62, %p63
      %p65 = scmp.ne.s32.totalorder %s57, %s59
      %p66 = scmp.eq.s32.totalorder %s21, 1
      %p67 = por %p65, %p66
      %p68 = scmp.ne.s32.totalorder %s59, %s60
      %p69 = scmp.eq.s32.totalorder %s21, 0
      %p70 = por %p68, %p69
      %p71 = scmp.ne.s32.totalorder %s59, %s60
      %p72 = scmp.eq.s32.totalorder %s22, 1
      %p73 = por %p71, %p72
      %p75 = scmp.ne.s32.totalorder %s60, %s74
      %p76 = scmp.eq.s32.totalorder %s22, 0
      %p77 = por %p75, %p76
      %s78 = ssub.s32 %s23, %s35
      %s79 = ssub.s32 %s24, %s31
      %s80 = sor.u32 %s78, %s79
      %p81 = scmp.eq.s32.totalorder %s80, 0
      %s83 = sadd.s32 %s82, 1
      %s84 = scalar_select %p81, %s82, %s83
      %p87 = pneg %p81
      %p88 = scmp.eq.s32.totalorder %s16, 1
      %p89 = por %p87, %p88
      %p90 = scmp.ne.s32.totalorder %s82, %s85
      %p91 = scmp.eq.s32.totalorder %s16, 0
      %p92 = por %p90, %p91
      %p93 = scmp.ne.s32.totalorder %s82, %s85
      %p94 = scmp.eq.s32.totalorder %s21, 1
      %p95 = por %p93, %p94
      %p96 = scmp.ne.s32.totalorder %s85, %s86
      %p97 = scmp.eq.s32.totalorder %s21, 0
      %p98 = por %p96, %p97
      %p99 = scmp.ne.s32.totalorder %s85, %s86
      %p100 = scmp.eq.s32.totalorder %s22, 1
      %p101 = por %p99, %p100
      %p103 = scmp.ne.s32.totalorder %s86, %s102
      %p104 = scmp.eq.s32.totalorder %s22, 0
      %p105 = por %p103, %p104
      %s106 = ssub.s32 %s23, %s35
      %s107 = ssub.s32 %s24, %s31
      %s108 = sor.u32 %s106, %s107
      %p109 = scmp.eq.s32.totalorder %s108, 0
      %s111 = sadd.s32 %s110, 1
      %s112 = scalar_select %p109, %s110, %s111
      %p115 = pneg %p109
      %p116 = scmp.eq.s32.totalorder %s16, 1
      %p117 = por %p115, %p116
      %p118 = scmp.ne.s32.totalorder %s110, %s113
      %p119 = scmp.eq.s32.totalorder %s16, 0
      %p120 = por %p118, %p119
      %p121 = scmp.ne.s32.totalorder %s110, %s113
      %p122 = scmp.eq.s32.totalorder %s21, 1
      %p123 = por %p121, %p122
      %p124 = scmp.ne.s32.totalorder %s113, %s114
      %p125 = scmp.eq.s32.totalorder %s21, 0
      %p126 = por %p124, %p125
      %p127 = scmp.ne.s32.totalorder %s113, %s114
      %p128 = scmp.eq.s32.totalorder %s22, 1
      %p129 = por %p127, %p128
      %p131 = scmp.ne.s32.totalorder %s114, %s130
      %p132 = scmp.eq.s32.totalorder %s22, 0
      %p133 = por %p131, %p132
      %p134 = scmp.le.s32.totalorder 1, %s16
      %p135 = scmp.lt.s32.totalorder %s16, 3
      %p136 = pnand %p134, %p135
      %p137 = pneg %p136
      // Predicated region
      $region9: #{tpu_custom_call.1} parent=5 // pred_check
        _
      $region10: #{tpu_custom_call.1} parent=5 // pred_check_branch
        %139 = sbr.rel (%p136) target = $region12
      $region11: #{tpu_custom_call.1} parent=5 // pred_region
        %s140 = ssub.s32 %s16, 1
        // Predicated region
        $region13: #{tpu_custom_call.1} parent=11 // pred_check
          %p141 = pneg %p49
        $region14: #{tpu_custom_call.1} parent=11 // pred_check_branch
          %143 = sbr.rel (%p141) target = $region16
        $region15: #{tpu_custom_call.1} parent=11 // pred_region
          %s145 = ssub.s32 12288, 12288
          %146 = vsyncadd [#allocation3], %s145
          %s147 = sshll.u32 [#allocation2], 4
          %s148 = int_to_ptr.vmem [resolvable:$true] %s147
          %153 = dma.hbm_to_vmem [thread:$0]  %s0, 12288, %s148, [#allocation3], 1536, 1536, 96
        $region16: #{tpu_custom_call.1} parent=11 // pred_fallthru
          _
        // Predicated region
        $region17: #{tpu_custom_call.1} parent=11 // pred_check
          %p154 = pneg %p70
        $region18: #{tpu_custom_call.1} parent=11 // pred_check_branch
          %156 = sbr.rel (%p154) target = $region20
        $region19: #{tpu_custom_call.1} parent=11 // pred_region
          _
        $region20: #{tpu_custom_call.1} parent=11 // pred_fallthru
          _
      $region12: #{tpu_custom_call.1} parent=5 // pred_fallthru
        _
      %p157 = scmp.lt.s32.totalorder %s16, 2
      // Predicated region
      $region21: #{tpu_custom_call.1} parent=5 // pred_check
        %p158 = pneg %p157
      $region22: #{tpu_custom_call.1} parent=5 // pred_check_branch
        %160 = sbr.rel (%p158) target = $region24
      $region23: #{tpu_custom_call.1} parent=5 // pred_region
        // Predicated region
        $region25: #{tpu_custom_call.1} parent=23 // pred_check
          %p161 = pneg %p92
        $region26: #{tpu_custom_call.1} parent=23 // pred_check_branch
          %163 = sbr.rel (%p161) target = $region28
        $region27: #{tpu_custom_call.1} parent=23 // pred_region
          %s164 = sand.u32 %s82, 1
          %s165 = scalar_lea.sflag [#allocation6], %s164
          %s166 = sand.u32 %s82, 1
          %s167 = smul.addr %s166, 12288
          %s168 = scalar_lea.vmem [#allocation5], %s167
          %s169 = smul.u32 8, %s24
          %s171 = ssub.s32 196608, 196608
          %172 = vsyncadd %s165, %s171
          %s173 = smul.addr %s23, 1536
          %s174 = sadd.s32 %s169, %s173
          %s175 = smul.addr %s174, 128
          %s176 = scalar_lea.hbm %s2, %s175
          %s177 = sshll.u32 %s168, 4
          %s178 = int_to_ptr.vmem [resolvable:$true] %s177
          %183 = dma.hbm_to_vmem [thread:$0]  %s176, 196608, %s178, %s165, 1024, 1024, 64
        $region28: #{tpu_custom_call.1} parent=23 // pred_fallthru
          _
      $region24: #{tpu_custom_call.1} parent=5 // pred_fallthru
        _
      %p184 = scmp.le.s32.totalorder 1, %s16
      %p185 = scmp.lt.s32.totalorder %s16, 3
      %p186 = pnand %p184, %p185
      %p187 = pneg %p186
      // Predicated region
      $region29: #{tpu_custom_call.1} parent=5 // pred_check
        _
      $region30: #{tpu_custom_call.1} parent=5 // pred_check_branch
        %189 = sbr.rel (%p186) target = $region32
      $region31: #{tpu_custom_call.1} parent=5 // pred_region
        %s190 = ssub.s32 %s16, 1
        // Predicated region
        $region33: #{tpu_custom_call.1} parent=31 // pred_check
          %p191 = pneg %p49
        $region34: #{tpu_custom_call.1} parent=31 // pred_check_branch
          %193 = sbr.rel (%p191) target = $region36
        $region35: #{tpu_custom_call.1} parent=31 // pred_region
          %194 = dma.done [#allocation3], 12288
        $region36: #{tpu_custom_call.1} parent=31 // pred_fallthru
          _
        %s195 = sand.u32 %s85, 1
        %s196 = scalar_lea.sflag [#allocation6], %s195
        %s197 = sand.u32 %s85, 1
        %s198 = smul.addr %s197, 12288
        %s199 = scalar_lea.vmem [#allocation5], %s198
        // Predicated region
        $region37: #{tpu_custom_call.1} parent=31 // pred_check
          %p200 = pneg %p98
        $region38: #{tpu_custom_call.1} parent=31 // pred_check_branch
          %202 = sbr.rel (%p200) target = $region40
        $region39: #{tpu_custom_call.1} parent=31 // pred_region
          %203 = dma.done %s196, 196608
        $region40: #{tpu_custom_call.1} parent=31 // pred_fallthru
          _
        %p204 = pneg %p49
        %p205 = pneg %p46
        %p206 = pneg %p70
        %p207 = pneg %p67
        %s208 = sand.u32 %s85, 1
        %s209 = scalar_lea.sflag [#allocation6], %s208
        %s210 = sand.u32 %s85, 1
        %s211 = smul.addr %s210, 12288
        %s212 = scalar_lea.vmem [#allocation5], %s211
        %p213 = pneg %p98
        %p214 = pneg %p95
        %p215 = pneg %p126
        %p216 = pneg %p123
        %s217 = sand.u32 %s113, 1
        %s218 = scalar_lea.sflag [#allocation4], %s217
        %s219 = sand.u32 %s113, 1
        %s220 = smul.addr %s219, 512
        %s221 = scalar_lea.vmem [#allocation7], %s220
        %s222 = smul.u32 8, %s26
        %s223 = smul.u32 8, %s26
        %v224 = vld [vmem:[#allocation2] sm:$0xff]
        %v225 = vld [vmem:[#allocation2 + $0x8] sm:$0xff]
        %v226 = vld [vmem:[#allocation2 + $0x10] sm:$0xff]
        %v227 = vld [vmem:[#allocation2 + $0x18] sm:$0xff]
        %v228 = vld [vmem:[#allocation2 + $0x20] sm:$0xff]
        %v229 = vld [vmem:[#allocation2 + $0x28] sm:$0xff]
        %v230 = vld [vmem:[#allocation2 + $0x30] sm:$0xff]
        %v231 = vld [vmem:[#allocation2 + $0x38] sm:$0xff]
        %v232 = vld [vmem:[#allocation2 + $0x40] sm:$0xff]
        %v233 = vld [vmem:[#allocation2 + $0x48] sm:$0xff]
        %v234 = vld [vmem:[#allocation2 + $0x50] sm:$0xff]
        %v235 = vld [vmem:[#allocation2 + $0x58] sm:$0xff]
        %v236 = vld [vmem:[#allocation2 + $0x60] sm:$0xff]
        %v237 = vld [vmem:[#allocation2 + $0x68] sm:$0xff]
        %v238 = vld [vmem:[#allocation2 + $0x70] sm:$0xff]
        %v239 = vld [vmem:[#allocation2 + $0x78] sm:$0xff]
        %v240 = vld [vmem:[#allocation2 + $0x80] sm:$0xff]
        %v241 = vld [vmem:[#allocation2 + $0x88] sm:$0xff]
        %v242 = vld [vmem:[#allocation2 + $0x90] sm:$0xff]
        %v243 = vld [vmem:[#allocation2 + $0x98] sm:$0xff]
        %v244 = vld [vmem:[#allocation2 + $0xa0] sm:$0xff]
        %v245 = vld [vmem:[#allocation2 + $0xa8] sm:$0xff]
        %v246 = vld [vmem:[#allocation2 + $0xb0] sm:$0xff]
        %v247 = vld [vmem:[#allocation2 + $0xb8] sm:$0xff]
        %v248 = vld [vmem:[#allocation2 + $0xc0] sm:$0xff]
        %v249 = vld [vmem:[#allocation2 + $0xc8] sm:$0xff]
        %v250 = vld [vmem:[#allocation2 + $0xd0] sm:$0xff]
        %v251 = vld [vmem:[#allocation2 + $0xd8] sm:$0xff]
        %v252 = vld [vmem:[#allocation2 + $0xe0] sm:$0xff]
        %v253 = vld [vmem:[#allocation2 + $0xe8] sm:$0xff]
        %v254 = vld [vmem:[#allocation2 + $0xf0] sm:$0xff]
        %v255 = vld [vmem:[#allocation2 + $0xf8] sm:$0xff]
        %v256 = vld [vmem:[#allocation2 + $0x100] sm:$0xff]
        %v257 = vld [vmem:[#allocation2 + $0x108] sm:$0xff]
        %v258 = vld [vmem:[#allocation2 + $0x110] sm:$0xff]
        %v259 = vld [vmem:[#allocation2 + $0x118] sm:$0xff]
        %v260 = vld [vmem:[#allocation2 + $0x120] sm:$0xff]
        %v261 = vld [vmem:[#allocation2 + $0x128] sm:$0xff]
        %v262 = vld [vmem:[#allocation2 + $0x130] sm:$0xff]
        %v263 = vld [vmem:[#allocation2 + $0x138] sm:$0xff]
        %v264 = vld [vmem:[#allocation2 + $0x140] sm:$0xff]
        %v265 = vld [vmem:[#allocation2 + $0x148] sm:$0xff]
        %v266 = vld [vmem:[#allocation2 + $0x150] sm:$0xff]
        %v267 = vld [vmem:[#allocation2 + $0x158] sm:$0xff]
        %v268 = vld [vmem:[#allocation2 + $0x160] sm:$0xff]
        %v269 = vld [vmem:[#allocation2 + $0x168] sm:$0xff]
        %v270 = vld [vmem:[#allocation2 + $0x170] sm:$0xff]
        %v271 = vld [vmem:[#allocation2 + $0x178] sm:$0xff]
        %v272 = vld [vmem:[#allocation2 + $0x180] sm:$0xff]
        %v273 = vld [vmem:[#allocation2 + $0x188] sm:$0xff]
        %v274 = vld [vmem:[#allocation2 + $0x190] sm:$0xff]
        %v275 = vld [vmem:[#allocation2 + $0x198] sm:$0xff]
        %v276 = vld [vmem:[#allocation2 + $0x1a0] sm:$0xff]
        %v277 = vld [vmem:[#allocation2 + $0x1a8] sm:$0xff]
        %v278 = vld [vmem:[#allocation2 + $0x1b0] sm:$0xff]
        %v279 = vld [vmem:[#allocation2 + $0x1b8] sm:$0xff]
        %v280 = vld [vmem:[#allocation2 + $0x1c0] sm:$0xff]
        %v281 = vld [vmem:[#allocation2 + $0x1c8] sm:$0xff]
        %v282 = vld [vmem:[#allocation2 + $0x1d0] sm:$0xff]
        %v283 = vld [vmem:[#allocation2 + $0x1d8] sm:$0xff]
        %v284 = vld [vmem:[#allocation2 + $0x1e0] sm:$0xff]
        %v285 = vld [vmem:[#allocation2 + $0x1e8] sm:$0xff]
        %v286 = vld [vmem:[#allocation2 + $0x1f0] sm:$0xff]
        %v287 = vld [vmem:[#allocation2 + $0x1f8] sm:$0xff]
        %v288 = vld [vmem:[#allocation2 + $0x200] sm:$0xff]
        %v289 = vld [vmem:[#allocation2 + $0x208] sm:$0xff]
        %v290 = vld [vmem:[#allocation2 + $0x210] sm:$0xff]
        %v291 = vld [vmem:[#allocation2 + $0x218] sm:$0xff]
        %v292 = vld [vmem:[#allocation2 + $0x220] sm:$0xff]
        %v293 = vld [vmem:[#allocation2 + $0x228] sm:$0xff]
        %v294 = vld [vmem:[#allocation2 + $0x230] sm:$0xff]
        %v295 = vld [vmem:[#allocation2 + $0x238] sm:$0xff]
        %v296 = vld [vmem:[#allocation2 + $0x240] sm:$0xff]
        %v297 = vld [vmem:[#allocation2 + $0x248] sm:$0xff]
        %v298 = vld [vmem:[#allocation2 + $0x250] sm:$0xff]
        %v299 = vld [vmem:[#allocation2 + $0x258] sm:$0xff]
        %v300 = vld [vmem:[#allocation2 + $0x260] sm:$0xff]
        %v301 = vld [vmem:[#allocation2 + $0x268] sm:$0xff]
        %v302 = vld [vmem:[#allocation2 + $0x270] sm:$0xff]
        %v303 = vld [vmem:[#allocation2 + $0x278] sm:$0xff]
        %v304 = vld [vmem:[#allocation2 + $0x280] sm:$0xff]
        %v305 = vld [vmem:[#allocation2 + $0x288] sm:$0xff]
        %v306 = vld [vmem:[#allocation2 + $0x290] sm:$0xff]
        %v307 = vld [vmem:[#allocation2 + $0x298] sm:$0xff]
        %v308 = vld [vmem:[#allocation2 + $0x2a0] sm:$0xff]
        %v309 = vld [vmem:[#allocation2 + $0x2a8] sm:$0xff]
        %v310 = vld [vmem:[#allocation2 + $0x2b0] sm:$0xff]
        %v311 = vld [vmem:[#allocation2 + $0x2b8] sm:$0xff]
        %v312 = vld [vmem:[#allocation2 + $0x2c0] sm:$0xff]
        %v313 = vld [vmem:[#allocation2 + $0x2c8] sm:$0xff]
        %v314 = vld [vmem:[#allocation2 + $0x2d0] sm:$0xff]
        %v315 = vld [vmem:[#allocation2 + $0x2d8] sm:$0xff]
        %v316 = vld [vmem:[#allocation2 + $0x2e0] sm:$0xff]
        %v317 = vld [vmem:[#allocation2 + $0x2e8] sm:$0xff]
        %v318 = vld [vmem:[#allocation2 + $0x2f0] sm:$0xff]
        %v319 = vld [vmem:[#allocation2 + $0x2f8] sm:$0xff]
        %v320 = vld [vmem:[%s199] sm:$0xff]
        %v321 = vld [vmem:[%s199 + $0x8] sm:$0xff]
        %v322 = vld [vmem:[%s199 + $0x10] sm:$0xff]
        %v323 = vld [vmem:[%s199 + $0x18] sm:$0xff]
        %v324 = vld [vmem:[%s199 + $0x20] sm:$0xff]
        %v325 = vld [vmem:[%s199 + $0x28] sm:$0xff]
        %v326 = vld [vmem:[%s199 + $0x30] sm:$0xff]
        %v327 = vld [vmem:[%s199 + $0x38] sm:$0xff]
        %v328 = vld [vmem:[%s199 + $0x40] sm:$0xff]
        %v329 = vld [vmem:[%s199 + $0x48] sm:$0xff]
        %v330 = vld [vmem:[%s199 + $0x50] sm:$0xff]
        %v331 = vld [vmem:[%s199 + $0x58] sm:$0xff]
        %v332 = vld [vmem:[%s199 + $0x60] sm:$0xff]
        %v333 = vld [vmem:[%s199 + $0x68] sm:$0xff]
        %v334 = vld [vmem:[%s199 + $0x70] sm:$0xff]
        %v335 = vld [vmem:[%s199 + $0x78] sm:$0xff]
        %v336 = vld [vmem:[%s199 + $0x80] sm:$0xff]
        %v337 = vld [vmem:[%s199 + $0x88] sm:$0xff]
        %v338 = vld [vmem:[%s199 + $0x90] sm:$0xff]
        %v339 = vld [vmem:[%s199 + $0x98] sm:$0xff]
        %v340 = vld [vmem:[%s199 + $0xa0] sm:$0xff]
        %v341 = vld [vmem:[%s199 + $0xa8] sm:$0xff]
        %v342 = vld [vmem:[%s199 + $0xb0] sm:$0xff]
        %v343 = vld [vmem:[%s199 + $0xb8] sm:$0xff]
        %v344 = vld [vmem:[%s199 + $0xc0] sm:$0xff]
        %v345 = vld [vmem:[%s199 + $0xc8] sm:$0xff]
        %v346 = vld [vmem:[%s199 + $0xd0] sm:$0xff]
        %v347 = vld [vmem:[%s199 + $0xd8] sm:$0xff]
        %v348 = vld [vmem:[%s199 + $0xe0] sm:$0xff]
        %v349 = vld [vmem:[%s199 + $0xe8] sm:$0xff]
        %v350 = vld [vmem:[%s199 + $0xf0] sm:$0xff]
        %v351 = vld [vmem:[%s199 + $0xf8] sm:$0xff]
        %v352 = vld [vmem:[%s199 + $0x100] sm:$0xff]
        %v353 = vld [vmem:[%s199 + $0x108] sm:$0xff]
        %v354 = vld [vmem:[%s199 + $0x110] sm:$0xff]
        %v355 = vld [vmem:[%s199 + $0x118] sm:$0xff]
        %v356 = vld [vmem:[%s199 + $0x120] sm:$0xff]
        %v357 = vld [vmem:[%s199 + $0x128] sm:$0xff]
        %v358 = vld [vmem:[%s199 + $0x130] sm:$0xff]
        %v359 = vld [vmem:[%s199 + $0x138] sm:$0xff]
        %v360 = vld [vmem:[%s199 + $0x140] sm:$0xff]
        %v361 = vld [vmem:[%s199 + $0x148] sm:$0xff]
        %v362 = vld [vmem:[%s199 + $0x150] sm:$0xff]
        %v363 = vld [vmem:[%s199 + $0x158] sm:$0xff]
        %v364 = vld [vmem:[%s199 + $0x160] sm:$0xff]
        %v365 = vld [vmem:[%s199 + $0x168] sm:$0xff]
        %v366 = vld [vmem:[%s199 + $0x170] sm:$0xff]
        %v367 = vld [vmem:[%s199 + $0x178] sm:$0xff]
        %v368 = vld [vmem:[%s199 + $0x180] sm:$0xff]
        %v369 = vld [vmem:[%s199 + $0x188] sm:$0xff]
        %v370 = vld [vmem:[%s199 + $0x190] sm:$0xff]
        %v371 = vld [vmem:[%s199 + $0x198] sm:$0xff]
        %v372 = vld [vmem:[%s199 + $0x1a0] sm:$0xff]
        %v373 = vld [vmem:[%s199 + $0x1a8] sm:$0xff]
        %v374 = vld [vmem:[%s199 + $0x1b0] sm:$0xff]
        %v375 = vld [vmem:[%s199 + $0x1b8] sm:$0xff]
        %v376 = vld [vmem:[%s199 + $0x1c0] sm:$0xff]
        %v377 = vld [vmem:[%s199 + $0x1c8] sm:$0xff]
        %v378 = vld [vmem:[%s199 + $0x1d0] sm:$0xff]
        %v379 = vld [vmem:[%s199 + $0x1d8] sm:$0xff]
        %v380 = vld [vmem:[%s199 + $0x1e0] sm:$0xff]
        %v381 = vld [vmem:[%s199 + $0x1e8] sm:$0xff]
        %v382 = vld [vmem:[%s199 + $0x1f0] sm:$0xff]
        %v383 = vld [vmem:[%s199 + $0x1f8] sm:$0xff]
        %v384 = vld [vmem:[%s199 + $0x200] sm:$0xff]
        %v385 = vld [vmem:[%s199 + $0x208] sm:$0xff]
        %v386 = vld [vmem:[%s199 + $0x210] sm:$0xff]
        %v387 = vld [vmem:[%s199 + $0x218] sm:$0xff]
        %v388 = vld [vmem:[%s199 + $0x220] sm:$0xff]
        %v389 = vld [vmem:[%s199 + $0x228] sm:$0xff]
        %v390 = vld [vmem:[%s199 + $0x230] sm:$0xff]
        %v391 = vld [vmem:[%s199 + $0x238] sm:$0xff]
        %v392 = vld [vmem:[%s199 + $0x240] sm:$0xff]
        %v393 = vld [vmem:[%s199 + $0x248] sm:$0xff]
        %v394 = vld [vmem:[%s199 + $0x250] sm:$0xff]
        %v395 = vld [vmem:[%s199 + $0x258] sm:$0xff]
        %v396 = vld [vmem:[%s199 + $0x260] sm:$0xff]
        %v397 = vld [vmem:[%s199 + $0x268] sm:$0xff]
        %v398 = vld [vmem:[%s199 + $0x270] sm:$0xff]
        %v399 = vld [vmem:[%s199 + $0x278] sm:$0xff]
        %v400 = vld [vmem:[%s199 + $0x280] sm:$0xff]
        %v401 = vld [vmem:[%s199 + $0x288] sm:$0xff]
        %v402 = vld [vmem:[%s199 + $0x290] sm:$0xff]
        %v403 = vld [vmem:[%s199 + $0x298] sm:$0xff]
        %v404 = vld [vmem:[%s199 + $0x2a0] sm:$0xff]
        %v405 = vld [vmem:[%s199 + $0x2a8] sm:$0xff]
        %v406 = vld [vmem:[%s199 + $0x2b0] sm:$0xff]
        %v407 = vld [vmem:[%s199 + $0x2b8] sm:$0xff]
        %v408 = vld [vmem:[%s199 + $0x2c0] sm:$0xff]
        %v409 = vld [vmem:[%s199 + $0x2c8] sm:$0xff]
        %v410 = vld [vmem:[%s199 + $0x2d0] sm:$0xff]
        %v411 = vld [vmem:[%s199 + $0x2d8] sm:$0xff]
        %v412 = vld [vmem:[%s199 + $0x2e0] sm:$0xff]
        %v413 = vld [vmem:[%s199 + $0x2e8] sm:$0xff]
        %v414 = vld [vmem:[%s199 + $0x2f0] sm:$0xff]
        %v415 = vld [vmem:[%s199 + $0x2f8] sm:$0xff]
        %v416 = vld [vmem:[%s199 + $0x300] sm:$0xff]
        %v417 = vld [vmem:[%s199 + $0x308] sm:$0xff]
        %v418 = vld [vmem:[%s199 + $0x310] sm:$0xff]
        %v419 = vld [vmem:[%s199 + $0x318] sm:$0xff]
        %v420 = vld [vmem:[%s199 + $0x320] sm:$0xff]
        %v421 = vld [vmem:[%s199 + $0x328] sm:$0xff]
        %v422 = vld [vmem:[%s199 + $0x330] sm:$0xff]
        %v423 = vld [vmem:[%s199 + $0x338] sm:$0xff]
        %v424 = vld [vmem:[%s199 + $0x340] sm:$0xff]
        %v425 = vld [vmem:[%s199 + $0x348] sm:$0xff]
        %v426 = vld [vmem:[%s199 + $0x350] sm:$0xff]
        %v427 = vld [vmem:[%s199 + $0x358] sm:$0xff]
        %v428 = vld [vmem:[%s199 + $0x360] sm:$0xff]
        %v429 = vld [vmem:[%s199 + $0x368] sm:$0xff]
        %v430 = vld [vmem:[%s199 + $0x370] sm:$0xff]
        %v431 = vld [vmem:[%s199 + $0x378] sm:$0xff]
        %v432 = vld [vmem:[%s199 + $0x380] sm:$0xff]
        %v433 = vld [vmem:[%s199 + $0x388] sm:$0xff]
        %v434 = vld [vmem:[%s199 + $0x390] sm:$0xff]
        %v435 = vld [vmem:[%s199 + $0x398] sm:$0xff]
        %v436 = vld [vmem:[%s199 + $0x3a0] sm:$0xff]
        %v437 = vld [vmem:[%s199 + $0x3a8] sm:$0xff]
        %v438 = vld [vmem:[%s199 + $0x3b0] sm:$0xff]
        %v439 = vld [vmem:[%s199 + $0x3b8] sm:$0xff]
        %v440 = vld [vmem:[%s199 + $0x3c0] sm:$0xff]
        %v441 = vld [vmem:[%s199 + $0x3c8] sm:$0xff]
        %v442 = vld [vmem:[%s199 + $0x3d0] sm:$0xff]
        %v443 = vld [vmem:[%s199 + $0x3d8] sm:$0xff]
        %v444 = vld [vmem:[%s199 + $0x3e0] sm:$0xff]
        %v445 = vld [vmem:[%s199 + $0x3e8] sm:$0xff]
        %v446 = vld [vmem:[%s199 + $0x3f0] sm:$0xff]
        %v447 = vld [vmem:[%s199 + $0x3f8] sm:$0xff]
        %v448 = vld [vmem:[%s199 + $0x400] sm:$0xff]
        %v449 = vld [vmem:[%s199 + $0x408] sm:$0xff]
        %v450 = vld [vmem:[%s199 + $0x410] sm:$0xff]
        %v451 = vld [vmem:[%s199 + $0x418] sm:$0xff]
        %v452 = vld [vmem:[%s199 + $0x420] sm:$0xff]
        %v453 = vld [vmem:[%s199 + $0x428] sm:$0xff]
        %v454 = vld [vmem:[%s199 + $0x430] sm:$0xff]
        %v455 = vld [vmem:[%s199 + $0x438] sm:$0xff]
        %v456 = vld [vmem:[%s199 + $0x440] sm:$0xff]
        %v457 = vld [vmem:[%s199 + $0x448] sm:$0xff]
        %v458 = vld [vmem:[%s199 + $0x450] sm:$0xff]
        %v459 = vld [vmem:[%s199 + $0x458] sm:$0xff]
        %v460 = vld [vmem:[%s199 + $0x460] sm:$0xff]
        %v461 = vld [vmem:[%s199 + $0x468] sm:$0xff]
        %v462 = vld [vmem:[%s199 + $0x470] sm:$0xff]
        %v463 = vld [vmem:[%s199 + $0x478] sm:$0xff]
        %v464 = vld [vmem:[%s199 + $0x480] sm:$0xff]
        %v465 = vld [vmem:[%s199 + $0x488] sm:$0xff]
        %v466 = vld [vmem:[%s199 + $0x490] sm:$0xff]
        %v467 = vld [vmem:[%s199 + $0x498] sm:$0xff]
        %v468 = vld [vmem:[%s199 + $0x4a0] sm:$0xff]
        %v469 = vld [vmem:[%s199 + $0x4a8] sm:$0xff]
        %v470 = vld [vmem:[%s199 + $0x4b0] sm:$0xff]
        %v471 = vld [vmem:[%s199 + $0x4b8] sm:$0xff]
        %v472 = vld [vmem:[%s199 + $0x4c0] sm:$0xff]
        %v473 = vld [vmem:[%s199 + $0x4c8] sm:$0xff]
        %v474 = vld [vmem:[%s199 + $0x4d0] sm:$0xff]
        %v475 = vld [vmem:[%s199 + $0x4d8] sm:$0xff]
        %v476 = vld [vmem:[%s199 + $0x4e0] sm:$0xff]
        %v477 = vld [vmem:[%s199 + $0x4e8] sm:$0xff]
        %v478 = vld [vmem:[%s199 + $0x4f0] sm:$0xff]
        %v479 = vld [vmem:[%s199 + $0x4f8] sm:$0xff]
        %v480 = vld [vmem:[%s199 + $0x500] sm:$0xff]
        %v481 = vld [vmem:[%s199 + $0x508] sm:$0xff]
        %v482 = vld [vmem:[%s199 + $0x510] sm:$0xff]
        %v483 = vld [vmem:[%s199 + $0x518] sm:$0xff]
        %v484 = vld [vmem:[%s199 + $0x520] sm:$0xff]
        %v485 = vld [vmem:[%s199 + $0x528] sm:$0xff]
        %v486 = vld [vmem:[%s199 + $0x530] sm:$0xff]
        %v487 = vld [vmem:[%s199 + $0x538] sm:$0xff]
        %v488 = vld [vmem:[%s199 + $0x540] sm:$0xff]
        %v489 = vld [vmem:[%s199 + $0x548] sm:$0xff]
        %v490 = vld [vmem:[%s199 + $0x550] sm:$0xff]
        %v491 = vld [vmem:[%s199 + $0x558] sm:$0xff]
        %v492 = vld [vmem:[%s199 + $0x560] sm:$0xff]
        %v493 = vld [vmem:[%s199 + $0x568] sm:$0xff]
        %v494 = vld [vmem:[%s199 + $0x570] sm:$0xff]
        %v495 = vld [vmem:[%s199 + $0x578] sm:$0xff]
        %v496 = vld [vmem:[%s199 + $0x580] sm:$0xff]
        %v497 = vld [vmem:[%s199 + $0x588] sm:$0xff]
        %v498 = vld [vmem:[%s199 + $0x590] sm:$0xff]
        %v499 = vld [vmem:[%s199 + $0x598] sm:$0xff]
        %v500 = vld [vmem:[%s199 + $0x5a0] sm:$0xff]
        %v501 = vld [vmem:[%s199 + $0x5a8] sm:$0xff]
        %v502 = vld [vmem:[%s199 + $0x5b0] sm:$0xff]
        %v503 = vld [vmem:[%s199 + $0x5b8] sm:$0xff]
        %v504 = vld [vmem:[%s199 + $0x5c0] sm:$0xff]
        %v505 = vld [vmem:[%s199 + $0x5c8] sm:$0xff]
        %v506 = vld [vmem:[%s199 + $0x5d0] sm:$0xff]
        %v507 = vld [vmem:[%s199 + $0x5d8] sm:$0xff]
        %v508 = vld [vmem:[%s199 + $0x5e0] sm:$0xff]
        %v509 = vld [vmem:[%s199 + $0x5e8] sm:$0xff]
        %v510 = vld [vmem:[%s199 + $0x5f0] sm:$0xff]
        %v511 = vld [vmem:[%s199 + $0x5f8] sm:$0xff]
        %v512 = vld [vmem:[%s199 + $0x600] sm:$0xff]
        %v513 = vld [vmem:[%s199 + $0x608] sm:$0xff]
        %v514 = vld [vmem:[%s199 + $0x610] sm:$0xff]
        %v515 = vld [vmem:[%s199 + $0x618] sm:$0xff]
        %v516 = vld [vmem:[%s199 + $0x620] sm:$0xff]
        %v517 = vld [vmem:[%s199 + $0x628] sm:$0xff]
        %v518 = vld [vmem:[%s199 + $0x630] sm:$0xff]
        %v519 = vld [vmem:[%s199 + $0x638] sm:$0xff]
        %v520 = vld [vmem:[%s199 + $0x640] sm:$0xff]
        %v521 = vld [vmem:[%s199 + $0x648] sm:$0xff]
        %v522 = vld [vmem:[%s199 + $0x650] sm:$0xff]
        %v523 = vld [vmem:[%s199 + $0x658] sm:$0xff]
        %v524 = vld [vmem:[%s199 + $0x660] sm:$0xff]
        %v525 = vld [vmem:[%s199 + $0x668] sm:$0xff]
        %v526 = vld [vmem:[%s199 + $0x670] sm:$0xff]
        %v527 = vld [vmem:[%s199 + $0x678] sm:$0xff]
        %v528 = vld [vmem:[%s199 + $0x680] sm:$0xff]
        %v529 = vld [vmem:[%s199 + $0x688] sm:$0xff]
        %v530 = vld [vmem:[%s199 + $0x690] sm:$0xff]
        %v531 = vld [vmem:[%s199 + $0x698] sm:$0xff]
        %v532 = vld [vmem:[%s199 + $0x6a0] sm:$0xff]
        %v533 = vld [vmem:[%s199 + $0x6a8] sm:$0xff]
        %v534 = vld [vmem:[%s199 + $0x6b0] sm:$0xff]
        %v535 = vld [vmem:[%s199 + $0x6b8] sm:$0xff]
        %v536 = vld [vmem:[%s199 + $0x6c0] sm:$0xff]
        %v537 = vld [vmem:[%s199 + $0x6c8] sm:$0xff]
        %v538 = vld [vmem:[%s199 + $0x6d0] sm:$0xff]
        %v539 = vld [vmem:[%s199 + $0x6d8] sm:$0xff]
        %v540 = vld [vmem:[%s199 + $0x6e0] sm:$0xff]
        %v541 = vld [vmem:[%s199 + $0x6e8] sm:$0xff]
        %v542 = vld [vmem:[%s199 + $0x6f0] sm:$0xff]
        %v543 = vld [vmem:[%s199 + $0x6f8] sm:$0xff]
        %v544 = vld [vmem:[%s199 + $0x700] sm:$0xff]
        %v545 = vld [vmem:[%s199 + $0x708] sm:$0xff]
        %v546 = vld [vmem:[%s199 + $0x710] sm:$0xff]
        %v547 = vld [vmem:[%s199 + $0x718] sm:$0xff]
        %v548 = vld [vmem:[%s199 + $0x720] sm:$0xff]
        %v549 = vld [vmem:[%s199 + $0x728] sm:$0xff]
        %v550 = vld [vmem:[%s199 + $0x730] sm:$0xff]
        %v551 = vld [vmem:[%s199 + $0x738] sm:$0xff]
        %v552 = vld [vmem:[%s199 + $0x740] sm:$0xff]
        %v553 = vld [vmem:[%s199 + $0x748] sm:$0xff]
        %v554 = vld [vmem:[%s199 + $0x750] sm:$0xff]
        %v555 = vld [vmem:[%s199 + $0x758] sm:$0xff]
        %v556 = vld [vmem:[%s199 + $0x760] sm:$0xff]
        %v557 = vld [vmem:[%s199 + $0x768] sm:$0xff]
        %v558 = vld [vmem:[%s199 + $0x770] sm:$0xff]
        %v559 = vld [vmem:[%s199 + $0x778] sm:$0xff]
        %v560 = vld [vmem:[%s199 + $0x780] sm:$0xff]
        %v561 = vld [vmem:[%s199 + $0x788] sm:$0xff]
        %v562 = vld [vmem:[%s199 + $0x790] sm:$0xff]
        %v563 = vld [vmem:[%s199 + $0x798] sm:$0xff]
        %v564 = vld [vmem:[%s199 + $0x7a0] sm:$0xff]
        %v565 = vld [vmem:[%s199 + $0x7a8] sm:$0xff]
        %v566 = vld [vmem:[%s199 + $0x7b0] sm:$0xff]
        %v567 = vld [vmem:[%s199 + $0x7b8] sm:$0xff]
        %v568 = vld [vmem:[%s199 + $0x7c0] sm:$0xff]
        %v569 = vld [vmem:[%s199 + $0x7c8] sm:$0xff]
        %v570 = vld [vmem:[%s199 + $0x7d0] sm:$0xff]
        %v571 = vld [vmem:[%s199 + $0x7d8] sm:$0xff]
        %v572 = vld [vmem:[%s199 + $0x7e0] sm:$0xff]
        %v573 = vld [vmem:[%s199 + $0x7e8] sm:$0xff]
        %v574 = vld [vmem:[%s199 + $0x7f0] sm:$0xff]
        %v575 = vld [vmem:[%s199 + $0x7f8] sm:$0xff]
        %v576 = vld [vmem:[%s199 + $0x800] sm:$0xff]
        %v577 = vld [vmem:[%s199 + $0x808] sm:$0xff]
        %v578 = vld [vmem:[%s199 + $0x810] sm:$0xff]
        %v579 = vld [vmem:[%s199 + $0x818] sm:$0xff]
        %v580 = vld [vmem:[%s199 + $0x820] sm:$0xff]
        %v581 = vld [vmem:[%s199 + $0x828] sm:$0xff]
        %v582 = vld [vmem:[%s199 + $0x830] sm:$0xff]
        %v583 = vld [vmem:[%s199 + $0x838] sm:$0xff]
        %v584 = vld [vmem:[%s199 + $0x840] sm:$0xff]
        %v585 = vld [vmem:[%s199 + $0x848] sm:$0xff]
        %v586 = vld [vmem:[%s199 + $0x850] sm:$0xff]
        %v587 = vld [vmem:[%s199 + $0x858] sm:$0xff]
        %v588 = vld [vmem:[%s199 + $0x860] sm:$0xff]
        %v589 = vld [vmem:[%s199 + $0x868] sm:$0xff]
        %v590 = vld [vmem:[%s199 + $0x870] sm:$0xff]
        %v591 = vld [vmem:[%s199 + $0x878] sm:$0xff]
        %v592 = vld [vmem:[%s199 + $0x880] sm:$0xff]
        %v593 = vld [vmem:[%s199 + $0x888] sm:$0xff]
        %v594 = vld [vmem:[%s199 + $0x890] sm:$0xff]
        %v595 = vld [vmem:[%s199 + $0x898] sm:$0xff]
        %v596 = vld [vmem:[%s199 + $0x8a0] sm:$0xff]
        %v597 = vld [vmem:[%s199 + $0x8a8] sm:$0xff]
        %v598 = vld [vmem:[%s199 + $0x8b0] sm:$0xff]
        %v599 = vld [vmem:[%s199 + $0x8b8] sm:$0xff]
        %v600 = vld [vmem:[%s199 + $0x8c0] sm:$0xff]
        %v601 = vld [vmem:[%s199 + $0x8c8] sm:$0xff]
        %v602 = vld [vmem:[%s199 + $0x8d0] sm:$0xff]
        %v603 = vld [vmem:[%s199 + $0x8d8] sm:$0xff]
        %v604 = vld [vmem:[%s199 + $0x8e0] sm:$0xff]
        %v605 = vld [vmem:[%s199 + $0x8e8] sm:$0xff]
        %v606 = vld [vmem:[%s199 + $0x8f0] sm:$0xff]
        %v607 = vld [vmem:[%s199 + $0x8f8] sm:$0xff]
        %v608 = vld [vmem:[%s199 + $0x900] sm:$0xff]
        %v609 = vld [vmem:[%s199 + $0x908] sm:$0xff]
        %v610 = vld [vmem:[%s199 + $0x910] sm:$0xff]
        %v611 = vld [vmem:[%s199 + $0x918] sm:$0xff]
        %v612 = vld [vmem:[%s199 + $0x920] sm:$0xff]
        %v613 = vld [vmem:[%s199 + $0x928] sm:$0xff]
        %v614 = vld [vmem:[%s199 + $0x930] sm:$0xff]
        %v615 = vld [vmem:[%s199 + $0x938] sm:$0xff]
        %v616 = vld [vmem:[%s199 + $0x940] sm:$0xff]
        %v617 = vld [vmem:[%s199 + $0x948] sm:$0xff]
        %v618 = vld [vmem:[%s199 + $0x950] sm:$0xff]
        %v619 = vld [vmem:[%s199 + $0x958] sm:$0xff]
        %v620 = vld [vmem:[%s199 + $0x960] sm:$0xff]
        %v621 = vld [vmem:[%s199 + $0x968] sm:$0xff]
        %v622 = vld [vmem:[%s199 + $0x970] sm:$0xff]
        %v623 = vld [vmem:[%s199 + $0x978] sm:$0xff]
        %v624 = vld [vmem:[%s199 + $0x980] sm:$0xff]
        %v625 = vld [vmem:[%s199 + $0x988] sm:$0xff]
        %v626 = vld [vmem:[%s199 + $0x990] sm:$0xff]
        %v627 = vld [vmem:[%s199 + $0x998] sm:$0xff]
        %v628 = vld [vmem:[%s199 + $0x9a0] sm:$0xff]
        %v629 = vld [vmem:[%s199 + $0x9a8] sm:$0xff]
        %v630 = vld [vmem:[%s199 + $0x9b0] sm:$0xff]
        %v631 = vld [vmem:[%s199 + $0x9b8] sm:$0xff]
        %v632 = vld [vmem:[%s199 + $0x9c0] sm:$0xff]
        %v633 = vld [vmem:[%s199 + $0x9c8] sm:$0xff]
        %v634 = vld [vmem:[%s199 + $0x9d0] sm:$0xff]
        %v635 = vld [vmem:[%s199 + $0x9d8] sm:$0xff]
        %v636 = vld [vmem:[%s199 + $0x9e0] sm:$0xff]
        %v637 = vld [vmem:[%s199 + $0x9e8] sm:$0xff]
        %v638 = vld [vmem:[%s199 + $0x9f0] sm:$0xff]
        %v639 = vld [vmem:[%s199 + $0x9f8] sm:$0xff]
        %v640 = vld [vmem:[%s199 + $0xa00] sm:$0xff]
        %v641 = vld [vmem:[%s199 + $0xa08] sm:$0xff]
        %v642 = vld [vmem:[%s199 + $0xa10] sm:$0xff]
        %v643 = vld [vmem:[%s199 + $0xa18] sm:$0xff]
        %v644 = vld [vmem:[%s199 + $0xa20] sm:$0xff]
        %v645 = vld [vmem:[%s199 + $0xa28] sm:$0xff]
        %v646 = vld [vmem:[%s199 + $0xa30] sm:$0xff]
        %v647 = vld [vmem:[%s199 + $0xa38] sm:$0xff]
        %v648 = vld [vmem:[%s199 + $0xa40] sm:$0xff]
        %v649 = vld [vmem:[%s199 + $0xa48] sm:$0xff]
        %v650 = vld [vmem:[%s199 + $0xa50] sm:$0xff]
        %v651 = vld [vmem:[%s199 + $0xa58] sm:$0xff]
        %v652 = vld [vmem:[%s199 + $0xa60] sm:$0xff]
        %v653 = vld [vmem:[%s199 + $0xa68] sm:$0xff]
        %v654 = vld [vmem:[%s199 + $0xa70] sm:$0xff]
        %v655 = vld [vmem:[%s199 + $0xa78] sm:$0xff]
        %v656 = vld [vmem:[%s199 + $0xa80] sm:$0xff]
        %v657 = vld [vmem:[%s199 + $0xa88] sm:$0xff]
        %v658 = vld [vmem:[%s199 + $0xa90] sm:$0xff]
        %v659 = vld [vmem:[%s199 + $0xa98] sm:$0xff]
        %v660 = vld [vmem:[%s199 + $0xaa0] sm:$0xff]
        %v661 = vld [vmem:[%s199 + $0xaa8] sm:$0xff]
        %v662 = vld [vmem:[%s199 + $0xab0] sm:$0xff]
        %v663 = vld [vmem:[%s199 + $0xab8] sm:$0xff]
        %v664 = vld [vmem:[%s199 + $0xac0] sm:$0xff]
        %v665 = vld [vmem:[%s199 + $0xac8] sm:$0xff]
        %v666 = vld [vmem:[%s199 + $0xad0] sm:$0xff]
        %v667 = vld [vmem:[%s199 + $0xad8] sm:$0xff]
        %v668 = vld [vmem:[%s199 + $0xae0] sm:$0xff]
        %v669 = vld [vmem:[%s199 + $0xae8] sm:$0xff]
        %v670 = vld [vmem:[%s199 + $0xaf0] sm:$0xff]
        %v671 = vld [vmem:[%s199 + $0xaf8] sm:$0xff]
        %v672 = vld [vmem:[%s199 + $0xb00] sm:$0xff]
        %v673 = vld [vmem:[%s199 + $0xb08] sm:$0xff]
        %v674 = vld [vmem:[%s199 + $0xb10] sm:$0xff]
        %v675 = vld [vmem:[%s199 + $0xb18] sm:$0xff]
        %v676 = vld [vmem:[%s199 + $0xb20] sm:$0xff]
        %v677 = vld [vmem:[%s199 + $0xb28] sm:$0xff]
        %v678 = vld [vmem:[%s199 + $0xb30] sm:$0xff]
        %v679 = vld [vmem:[%s199 + $0xb38] sm:$0xff]
        %v680 = vld [vmem:[%s199 + $0xb40] sm:$0xff]
        %v681 = vld [vmem:[%s199 + $0xb48] sm:$0xff]
        %v682 = vld [vmem:[%s199 + $0xb50] sm:$0xff]
        %v683 = vld [vmem:[%s199 + $0xb58] sm:$0xff]
        %v684 = vld [vmem:[%s199 + $0xb60] sm:$0xff]
        %v685 = vld [vmem:[%s199 + $0xb68] sm:$0xff]
        %v686 = vld [vmem:[%s199 + $0xb70] sm:$0xff]
        %v687 = vld [vmem:[%s199 + $0xb78] sm:$0xff]
        %v688 = vld [vmem:[%s199 + $0xb80] sm:$0xff]
        %v689 = vld [vmem:[%s199 + $0xb88] sm:$0xff]
        %v690 = vld [vmem:[%s199 + $0xb90] sm:$0xff]
        %v691 = vld [vmem:[%s199 + $0xb98] sm:$0xff]
        %v692 = vld [vmem:[%s199 + $0xba0] sm:$0xff]
        %v693 = vld [vmem:[%s199 + $0xba8] sm:$0xff]
        %v694 = vld [vmem:[%s199 + $0xbb0] sm:$0xff]
        %v695 = vld [vmem:[%s199 + $0xbb8] sm:$0xff]
        %v696 = vld [vmem:[%s199 + $0xbc0] sm:$0xff]
        %v697 = vld [vmem:[%s199 + $0xbc8] sm:$0xff]
        %v698 = vld [vmem:[%s199 + $0xbd0] sm:$0xff]
        %v699 = vld [vmem:[%s199 + $0xbd8] sm:$0xff]
        %v700 = vld [vmem:[%s199 + $0xbe0] sm:$0xff]
        %v701 = vld [vmem:[%s199 + $0xbe8] sm:$0xff]
        %v702 = vld [vmem:[%s199 + $0xbf0] sm:$0xff]
        %v703 = vld [vmem:[%s199 + $0xbf8] sm:$0xff]
        %v704 = vld [vmem:[%s199 + $0xc00] sm:$0xff]
        %v705 = vld [vmem:[%s199 + $0xc08] sm:$0xff]
        %v706 = vld [vmem:[%s199 + $0xc10] sm:$0xff]
        %v707 = vld [vmem:[%s199 + $0xc18] sm:$0xff]
        %v708 = vld [vmem:[%s199 + $0xc20] sm:$0xff]
        %v709 = vld [vmem:[%s199 + $0xc28] sm:$0xff]
        %v710 = vld [vmem:[%s199 + $0xc30] sm:$0xff]
        %v711 = vld [vmem:[%s199 + $0xc38] sm:$0xff]
        %v712 = vld [vmem:[%s199 + $0xc40] sm:$0xff]
        %v713 = vld [vmem:[%s199 + $0xc48] sm:$0xff]
        %v714 = vld [vmem:[%s199 + $0xc50] sm:$0xff]
        %v715 = vld [vmem:[%s199 + $0xc58] sm:$0xff]
        %v716 = vld [vmem:[%s199 + $0xc60] sm:$0xff]
        %v717 = vld [vmem:[%s199 + $0xc68] sm:$0xff]
        %v718 = vld [vmem:[%s199 + $0xc70] sm:$0xff]
        %v719 = vld [vmem:[%s199 + $0xc78] sm:$0xff]
        %v720 = vld [vmem:[%s199 + $0xc80] sm:$0xff]
        %v721 = vld [vmem:[%s199 + $0xc88] sm:$0xff]
        %v722 = vld [vmem:[%s199 + $0xc90] sm:$0xff]
        %v723 = vld [vmem:[%s199 + $0xc98] sm:$0xff]
        %v724 = vld [vmem:[%s199 + $0xca0] sm:$0xff]
        %v725 = vld [vmem:[%s199 + $0xca8] sm:$0xff]
        %v726 = vld [vmem:[%s199 + $0xcb0] sm:$0xff]
        %v727 = vld [vmem:[%s199 + $0xcb8] sm:$0xff]
        %v728 = vld [vmem:[%s199 + $0xcc0] sm:$0xff]
        %v729 = vld [vmem:[%s199 + $0xcc8] sm:$0xff]
        %v730 = vld [vmem:[%s199 + $0xcd0] sm:$0xff]
        %v731 = vld [vmem:[%s199 + $0xcd8] sm:$0xff]
        %v732 = vld [vmem:[%s199 + $0xce0] sm:$0xff]
        %v733 = vld [vmem:[%s199 + $0xce8] sm:$0xff]
        %v734 = vld [vmem:[%s199 + $0xcf0] sm:$0xff]
        %v735 = vld [vmem:[%s199 + $0xcf8] sm:$0xff]
        %v736 = vld [vmem:[%s199 + $0xd00] sm:$0xff]
        %v737 = vld [vmem:[%s199 + $0xd08] sm:$0xff]
        %v738 = vld [vmem:[%s199 + $0xd10] sm:$0xff]
        %v739 = vld [vmem:[%s199 + $0xd18] sm:$0xff]
        %v740 = vld [vmem:[%s199 + $0xd20] sm:$0xff]
        %v741 = vld [vmem:[%s199 + $0xd28] sm:$0xff]
        %v742 = vld [vmem:[%s199 + $0xd30] sm:$0xff]
        %v743 = vld [vmem:[%s199 + $0xd38] sm:$0xff]
        %v744 = vld [vmem:[%s199 + $0xd40] sm:$0xff]
        %v745 = vld [vmem:[%s199 + $0xd48] sm:$0xff]
        %v746 = vld [vmem:[%s199 + $0xd50] sm:$0xff]
        %v747 = vld [vmem:[%s199 + $0xd58] sm:$0xff]
        %v748 = vld [vmem:[%s199 + $0xd60] sm:$0xff]
        %v749 = vld [vmem:[%s199 + $0xd68] sm:$0xff]
        %v750 = vld [vmem:[%s199 + $0xd70] sm:$0xff]
        %v751 = vld [vmem:[%s199 + $0xd78] sm:$0xff]
        %v752 = vld [vmem:[%s199 + $0xd80] sm:$0xff]
        %v753 = vld [vmem:[%s199 + $0xd88] sm:$0xff]
        %v754 = vld [vmem:[%s199 + $0xd90] sm:$0xff]
        %v755 = vld [vmem:[%s199 + $0xd98] sm:$0xff]
        %v756 = vld [vmem:[%s199 + $0xda0] sm:$0xff]
        %v757 = vld [vmem:[%s199 + $0xda8] sm:$0xff]
        %v758 = vld [vmem:[%s199 + $0xdb0] sm:$0xff]
        %v759 = vld [vmem:[%s199 + $0xdb8] sm:$0xff]
        %v760 = vld [vmem:[%s199 + $0xdc0] sm:$0xff]
        %v761 = vld [vmem:[%s199 + $0xdc8] sm:$0xff]
        %v762 = vld [vmem:[%s199 + $0xdd0] sm:$0xff]
        %v763 = vld [vmem:[%s199 + $0xdd8] sm:$0xff]
        %v764 = vld [vmem:[%s199 + $0xde0] sm:$0xff]
        %v765 = vld [vmem:[%s199 + $0xde8] sm:$0xff]
        %v766 = vld [vmem:[%s199 + $0xdf0] sm:$0xff]
        %v767 = vld [vmem:[%s199 + $0xdf8] sm:$0xff]
        %v768 = vld [vmem:[%s199 + $0xe00] sm:$0xff]
        %v769 = vld [vmem:[%s199 + $0xe08] sm:$0xff]
        %v770 = vld [vmem:[%s199 + $0xe10] sm:$0xff]
        %v771 = vld [vmem:[%s199 + $0xe18] sm:$0xff]
        %v772 = vld [vmem:[%s199 + $0xe20] sm:$0xff]
        %v773 = vld [vmem:[%s199 + $0xe28] sm:$0xff]
        %v774 = vld [vmem:[%s199 + $0xe30] sm:$0xff]
        %v775 = vld [vmem:[%s199 + $0xe38] sm:$0xff]
        %v776 = vld [vmem:[%s199 + $0xe40] sm:$0xff]
        %v777 = vld [vmem:[%s199 + $0xe48] sm:$0xff]
        %v778 = vld [vmem:[%s199 + $0xe50] sm:$0xff]
        %v779 = vld [vmem:[%s199 + $0xe58] sm:$0xff]
        %v780 = vld [vmem:[%s199 + $0xe60] sm:$0xff]
        %v781 = vld [vmem:[%s199 + $0xe68] sm:$0xff]
        %v782 = vld [vmem:[%s199 + $0xe70] sm:$0xff]
        %v783 = vld [vmem:[%s199 + $0xe78] sm:$0xff]
        %v784 = vld [vmem:[%s199 + $0xe80] sm:$0xff]
        %v785 = vld [vmem:[%s199 + $0xe88] sm:$0xff]
        %v786 = vld [vmem:[%s199 + $0xe90] sm:$0xff]
        %v787 = vld [vmem:[%s199 + $0xe98] sm:$0xff]
        %v788 = vld [vmem:[%s199 + $0xea0] sm:$0xff]
        %v789 = vld [vmem:[%s199 + $0xea8] sm:$0xff]
        %v790 = vld [vmem:[%s199 + $0xeb0] sm:$0xff]
        %v791 = vld [vmem:[%s199 + $0xeb8] sm:$0xff]
        %v792 = vld [vmem:[%s199 + $0xec0] sm:$0xff]
        %v793 = vld [vmem:[%s199 + $0xec8] sm:$0xff]
        %v794 = vld [vmem:[%s199 + $0xed0] sm:$0xff]
        %v795 = vld [vmem:[%s199 + $0xed8] sm:$0xff]
        %v796 = vld [vmem:[%s199 + $0xee0] sm:$0xff]
        %v797 = vld [vmem:[%s199 + $0xee8] sm:$0xff]
        %v798 = vld [vmem:[%s199 + $0xef0] sm:$0xff]
        %v799 = vld [vmem:[%s199 + $0xef8] sm:$0xff]
        %v800 = vld [vmem:[%s199 + $0xf00] sm:$0xff]
        %v801 = vld [vmem:[%s199 + $0xf08] sm:$0xff]
        %v802 = vld [vmem:[%s199 + $0xf10] sm:$0xff]
        %v803 = vld [vmem:[%s199 + $0xf18] sm:$0xff]
        %v804 = vld [vmem:[%s199 + $0xf20] sm:$0xff]
        %v805 = vld [vmem:[%s199 + $0xf28] sm:$0xff]
        %v806 = vld [vmem:[%s199 + $0xf30] sm:$0xff]
        %v807 = vld [vmem:[%s199 + $0xf38] sm:$0xff]
        %v808 = vld [vmem:[%s199 + $0xf40] sm:$0xff]
        %v809 = vld [vmem:[%s199 + $0xf48] sm:$0xff]
        %v810 = vld [vmem:[%s199 + $0xf50] sm:$0xff]
        %v811 = vld [vmem:[%s199 + $0xf58] sm:$0xff]
        %v812 = vld [vmem:[%s199 + $0xf60] sm:$0xff]
        %v813 = vld [vmem:[%s199 + $0xf68] sm:$0xff]
        %v814 = vld [vmem:[%s199 + $0xf70] sm:$0xff]
        %v815 = vld [vmem:[%s199 + $0xf78] sm:$0xff]
        %v816 = vld [vmem:[%s199 + $0xf80] sm:$0xff]
        %v817 = vld [vmem:[%s199 + $0xf88] sm:$0xff]
        %v818 = vld [vmem:[%s199 + $0xf90] sm:$0xff]
        %v819 = vld [vmem:[%s199 + $0xf98] sm:$0xff]
        %v820 = vld [vmem:[%s199 + $0xfa0] sm:$0xff]
        %v821 = vld [vmem:[%s199 + $0xfa8] sm:$0xff]
        %v822 = vld [vmem:[%s199 + $0xfb0] sm:$0xff]
        %v823 = vld [vmem:[%s199 + $0xfb8] sm:$0xff]
        %v824 = vld [vmem:[%s199 + $0xfc0] sm:$0xff]
        %v825 = vld [vmem:[%s199 + $0xfc8] sm:$0xff]
        %v826 = vld [vmem:[%s199 + $0xfd0] sm:$0xff]
        %v827 = vld [vmem:[%s199 + $0xfd8] sm:$0xff]
        %v828 = vld [vmem:[%s199 + $0xfe0] sm:$0xff]
        %v829 = vld [vmem:[%s199 + $0xfe8] sm:$0xff]
        %v830 = vld [vmem:[%s199 + $0xff0] sm:$0xff]
        %v831 = vld [vmem:[%s199 + $0xff8] sm:$0xff]
        %v832 = vld [vmem:[%s199 + $0x1000] sm:$0xff]
        %v833 = vld [vmem:[%s199 + $0x1008] sm:$0xff]
        %v834 = vld [vmem:[%s199 + $0x1010] sm:$0xff]
        %v835 = vld [vmem:[%s199 + $0x1018] sm:$0xff]
        %v836 = vld [vmem:[%s199 + $0x1020] sm:$0xff]
        %v837 = vld [vmem:[%s199 + $0x1028] sm:$0xff]
        %v838 = vld [vmem:[%s199 + $0x1030] sm:$0xff]
        %v839 = vld [vmem:[%s199 + $0x1038] sm:$0xff]
        %v840 = vld [vmem:[%s199 + $0x1040] sm:$0xff]
        %v841 = vld [vmem:[%s199 + $0x1048] sm:$0xff]
        %v842 = vld [vmem:[%s199 + $0x1050] sm:$0xff]
        %v843 = vld [vmem:[%s199 + $0x1058] sm:$0xff]
        %v844 = vld [vmem:[%s199 + $0x1060] sm:$0xff]
        %v845 = vld [vmem:[%s199 + $0x1068] sm:$0xff]
        %v846 = vld [vmem:[%s199 + $0x1070] sm:$0xff]
        %v847 = vld [vmem:[%s199 + $0x1078] sm:$0xff]
        %v848 = vld [vmem:[%s199 + $0x1080] sm:$0xff]
        %v849 = vld [vmem:[%s199 + $0x1088] sm:$0xff]
        %v850 = vld [vmem:[%s199 + $0x1090] sm:$0xff]
        %v851 = vld [vmem:[%s199 + $0x1098] sm:$0xff]
        %v852 = vld [vmem:[%s199 + $0x10a0] sm:$0xff]
        %v853 = vld [vmem:[%s199 + $0x10a8] sm:$0xff]
        %v854 = vld [vmem:[%s199 + $0x10b0] sm:$0xff]
        %v855 = vld [vmem:[%s199 + $0x10b8] sm:$0xff]
        %v856 = vld [vmem:[%s199 + $0x10c0] sm:$0xff]
        %v857 = vld [vmem:[%s199 + $0x10c8] sm:$0xff]
        %v858 = vld [vmem:[%s199 + $0x10d0] sm:$0xff]
        %v859 = vld [vmem:[%s199 + $0x10d8] sm:$0xff]
        %v860 = vld [vmem:[%s199 + $0x10e0] sm:$0xff]
        %v861 = vld [vmem:[%s199 + $0x10e8] sm:$0xff]
        %v862 = vld [vmem:[%s199 + $0x10f0] sm:$0xff]
        %v863 = vld [vmem:[%s199 + $0x10f8] sm:$0xff]
        %v864 = vld [vmem:[%s199 + $0x1100] sm:$0xff]
        %v865 = vld [vmem:[%s199 + $0x1108] sm:$0xff]
        %v866 = vld [vmem:[%s199 + $0x1110] sm:$0xff]
        %v867 = vld [vmem:[%s199 + $0x1118] sm:$0xff]
        %v868 = vld [vmem:[%s199 + $0x1120] sm:$0xff]
        %v869 = vld [vmem:[%s199 + $0x1128] sm:$0xff]
        %v870 = vld [vmem:[%s199 + $0x1130] sm:$0xff]
        %v871 = vld [vmem:[%s199 + $0x1138] sm:$0xff]
        %v872 = vld [vmem:[%s199 + $0x1140] sm:$0xff]
        %v873 = vld [vmem:[%s199 + $0x1148] sm:$0xff]
        %v874 = vld [vmem:[%s199 + $0x1150] sm:$0xff]
        %v875 = vld [vmem:[%s199 + $0x1158] sm:$0xff]
        %v876 = vld [vmem:[%s199 + $0x1160] sm:$0xff]
        %v877 = vld [vmem:[%s199 + $0x1168] sm:$0xff]
        %v878 = vld [vmem:[%s199 + $0x1170] sm:$0xff]
        %v879 = vld [vmem:[%s199 + $0x1178] sm:$0xff]
        %v880 = vld [vmem:[%s199 + $0x1180] sm:$0xff]
        %v881 = vld [vmem:[%s199 + $0x1188] sm:$0xff]
        %v882 = vld [vmem:[%s199 + $0x1190] sm:$0xff]
        %v883 = vld [vmem:[%s199 + $0x1198] sm:$0xff]
        %v884 = vld [vmem:[%s199 + $0x11a0] sm:$0xff]
        %v885 = vld [vmem:[%s199 + $0x11a8] sm:$0xff]
        %v886 = vld [vmem:[%s199 + $0x11b0] sm:$0xff]
        %v887 = vld [vmem:[%s199 + $0x11b8] sm:$0xff]
        %v888 = vld [vmem:[%s199 + $0x11c0] sm:$0xff]
        %v889 = vld [vmem:[%s199 + $0x11c8] sm:$0xff]
        %v890 = vld [vmem:[%s199 + $0x11d0] sm:$0xff]
        %v891 = vld [vmem:[%s199 + $0x11d8] sm:$0xff]
        %v892 = vld [vmem:[%s199 + $0x11e0] sm:$0xff]
        %v893 = vld [vmem:[%s199 + $0x11e8] sm:$0xff]
        %v894 = vld [vmem:[%s199 + $0x11f0] sm:$0xff]
        %v895 = vld [vmem:[%s199 + $0x11f8] sm:$0xff]
        %v896 = vld [vmem:[%s199 + $0x1200] sm:$0xff]
        %v897 = vld [vmem:[%s199 + $0x1208] sm:$0xff]
        %v898 = vld [vmem:[%s199 + $0x1210] sm:$0xff]
        %v899 = vld [vmem:[%s199 + $0x1218] sm:$0xff]
        %v900 = vld [vmem:[%s199 + $0x1220] sm:$0xff]
        %v901 = vld [vmem:[%s199 + $0x1228] sm:$0xff]
        %v902 = vld [vmem:[%s199 + $0x1230] sm:$0xff]
        %v903 = vld [vmem:[%s199 + $0x1238] sm:$0xff]
        %v904 = vld [vmem:[%s199 + $0x1240] sm:$0xff]
        %v905 = vld [vmem:[%s199 + $0x1248] sm:$0xff]
        %v906 = vld [vmem:[%s199 + $0x1250] sm:$0xff]
        %v907 = vld [vmem:[%s199 + $0x1258] sm:$0xff]
        %v908 = vld [vmem:[%s199 + $0x1260] sm:$0xff]
        %v909 = vld [vmem:[%s199 + $0x1268] sm:$0xff]
        %v910 = vld [vmem:[%s199 + $0x1270] sm:$0xff]
        %v911 = vld [vmem:[%s199 + $0x1278] sm:$0xff]
        %v912 = vld [vmem:[%s199 + $0x1280] sm:$0xff]
        %v913 = vld [vmem:[%s199 + $0x1288] sm:$0xff]
        %v914 = vld [vmem:[%s199 + $0x1290] sm:$0xff]
        %v915 = vld [vmem:[%s199 + $0x1298] sm:$0xff]
        %v916 = vld [vmem:[%s199 + $0x12a0] sm:$0xff]
        %v917 = vld [vmem:[%s199 + $0x12a8] sm:$0xff]
        %v918 = vld [vmem:[%s199 + $0x12b0] sm:$0xff]
        %v919 = vld [vmem:[%s199 + $0x12b8] sm:$0xff]
        %v920 = vld [vmem:[%s199 + $0x12c0] sm:$0xff]
        %v921 = vld [vmem:[%s199 + $0x12c8] sm:$0xff]
        %v922 = vld [vmem:[%s199 + $0x12d0] sm:$0xff]
        %v923 = vld [vmem:[%s199 + $0x12d8] sm:$0xff]
        %v924 = vld [vmem:[%s199 + $0x12e0] sm:$0xff]
        %v925 = vld [vmem:[%s199 + $0x12e8] sm:$0xff]
        %v926 = vld [vmem:[%s199 + $0x12f0] sm:$0xff]
        %v927 = vld [vmem:[%s199 + $0x12f8] sm:$0xff]
        %v928 = vld [vmem:[%s199 + $0x1300] sm:$0xff]
        %v929 = vld [vmem:[%s199 + $0x1308] sm:$0xff]
        %v930 = vld [vmem:[%s199 + $0x1310] sm:$0xff]
        %v931 = vld [vmem:[%s199 + $0x1318] sm:$0xff]
        %v932 = vld [vmem:[%s199 + $0x1320] sm:$0xff]
        %v933 = vld [vmem:[%s199 + $0x1328] sm:$0xff]
        %v934 = vld [vmem:[%s199 + $0x1330] sm:$0xff]
        %v935 = vld [vmem:[%s199 + $0x1338] sm:$0xff]
        %v936 = vld [vmem:[%s199 + $0x1340] sm:$0xff]
        %v937 = vld [vmem:[%s199 + $0x1348] sm:$0xff]
        %v938 = vld [vmem:[%s199 + $0x1350] sm:$0xff]
        %v939 = vld [vmem:[%s199 + $0x1358] sm:$0xff]
        %v940 = vld [vmem:[%s199 + $0x1360] sm:$0xff]
        %v941 = vld [vmem:[%s199 + $0x1368] sm:$0xff]
        %v942 = vld [vmem:[%s199 + $0x1370] sm:$0xff]
        %v943 = vld [vmem:[%s199 + $0x1378] sm:$0xff]
        %v944 = vld [vmem:[%s199 + $0x1380] sm:$0xff]
        %v945 = vld [vmem:[%s199 + $0x1388] sm:$0xff]
        %v946 = vld [vmem:[%s199 + $0x1390] sm:$0xff]
        %v947 = vld [vmem:[%s199 + $0x1398] sm:$0xff]
        %v948 = vld [vmem:[%s199 + $0x13a0] sm:$0xff]
        %v949 = vld [vmem:[%s199 + $0x13a8] sm:$0xff]
        %v950 = vld [vmem:[%s199 + $0x13b0] sm:$0xff]
        %v951 = vld [vmem:[%s199 + $0x13b8] sm:$0xff]
        %v952 = vld [vmem:[%s199 + $0x13c0] sm:$0xff]
        %v953 = vld [vmem:[%s199 + $0x13c8] sm:$0xff]
        %v954 = vld [vmem:[%s199 + $0x13d0] sm:$0xff]
        %v955 = vld [vmem:[%s199 + $0x13d8] sm:$0xff]
        %v956 = vld [vmem:[%s199 + $0x13e0] sm:$0xff]
        %v957 = vld [vmem:[%s199 + $0x13e8] sm:$0xff]
        %v958 = vld [vmem:[%s199 + $0x13f0] sm:$0xff]
        %v959 = vld [vmem:[%s199 + $0x13f8] sm:$0xff]
        %v960 = vld [vmem:[%s199 + $0x1400] sm:$0xff]
        %v961 = vld [vmem:[%s199 + $0x1408] sm:$0xff]
        %v962 = vld [vmem:[%s199 + $0x1410] sm:$0xff]
        %v963 = vld [vmem:[%s199 + $0x1418] sm:$0xff]
        %v964 = vld [vmem:[%s199 + $0x1420] sm:$0xff]
        %v965 = vld [vmem:[%s199 + $0x1428] sm:$0xff]
        %v966 = vld [vmem:[%s199 + $0x1430] sm:$0xff]
        %v967 = vld [vmem:[%s199 + $0x1438] sm:$0xff]
        %v968 = vld [vmem:[%s199 + $0x1440] sm:$0xff]
        %v969 = vld [vmem:[%s199 + $0x1448] sm:$0xff]
        %v970 = vld [vmem:[%s199 + $0x1450] sm:$0xff]
        %v971 = vld [vmem:[%s199 + $0x1458] sm:$0xff]
        %v972 = vld [vmem:[%s199 + $0x1460] sm:$0xff]
        %v973 = vld [vmem:[%s199 + $0x1468] sm:$0xff]
        %v974 = vld [vmem:[%s199 + $0x1470] sm:$0xff]
        %v975 = vld [vmem:[%s199 + $0x1478] sm:$0xff]
        %v976 = vld [vmem:[%s199 + $0x1480] sm:$0xff]
        %v977 = vld [vmem:[%s199 + $0x1488] sm:$0xff]
        %v978 = vld [vmem:[%s199 + $0x1490] sm:$0xff]
        %v979 = vld [vmem:[%s199 + $0x1498] sm:$0xff]
        %v980 = vld [vmem:[%s199 + $0x14a0] sm:$0xff]
        %v981 = vld [vmem:[%s199 + $0x14a8] sm:$0xff]
        %v982 = vld [vmem:[%s199 + $0x14b0] sm:$0xff]
        %v983 = vld [vmem:[%s199 + $0x14b8] sm:$0xff]
        %v984 = vld [vmem:[%s199 + $0x14c0] sm:$0xff]
        %v985 = vld [vmem:[%s199 + $0x14c8] sm:$0xff]
        %v986 = vld [vmem:[%s199 + $0x14d0] sm:$0xff]
        %v987 = vld [vmem:[%s199 + $0x14d8] sm:$0xff]
        %v988 = vld [vmem:[%s199 + $0x14e0] sm:$0xff]
        %v989 = vld [vmem:[%s199 + $0x14e8] sm:$0xff]
        %v990 = vld [vmem:[%s199 + $0x14f0] sm:$0xff]
        %v991 = vld [vmem:[%s199 + $0x14f8] sm:$0xff]
        %v992 = vld [vmem:[%s199 + $0x1500] sm:$0xff]
        %v993 = vld [vmem:[%s199 + $0x1508] sm:$0xff]
        %v994 = vld [vmem:[%s199 + $0x1510] sm:$0xff]
        %v995 = vld [vmem:[%s199 + $0x1518] sm:$0xff]
        %v996 = vld [vmem:[%s199 + $0x1520] sm:$0xff]
        %v997 = vld [vmem:[%s199 + $0x1528] sm:$0xff]
        %v998 = vld [vmem:[%s199 + $0x1530] sm:$0xff]
        %v999 = vld [vmem:[%s199 + $0x1538] sm:$0xff]
        %v1000 = vld [vmem:[%s199 + $0x1540] sm:$0xff]
        %v1001 = vld [vmem:[%s199 + $0x1548] sm:$0xff]
        %v1002 = vld [vmem:[%s199 + $0x1550] sm:$0xff]
        %v1003 = vld [vmem:[%s199 + $0x1558] sm:$0xff]
        %v1004 = vld [vmem:[%s199 + $0x1560] sm:$0xff]
        %v1005 = vld [vmem:[%s199 + $0x1568] sm:$0xff]
        %v1006 = vld [vmem:[%s199 + $0x1570] sm:$0xff]
        %v1007 = vld [vmem:[%s199 + $0x1578] sm:$0xff]
        %v1008 = vld [vmem:[%s199 + $0x1580] sm:$0xff]
        %v1009 = vld [vmem:[%s199 + $0x1588] sm:$0xff]
        %v1010 = vld [vmem:[%s199 + $0x1590] sm:$0xff]
        %v1011 = vld [vmem:[%s199 + $0x1598] sm:$0xff]
        %v1012 = vld [vmem:[%s199 + $0x15a0] sm:$0xff]
        %v1013 = vld [vmem:[%s199 + $0x15a8] sm:$0xff]
        %v1014 = vld [vmem:[%s199 + $0x15b0] sm:$0xff]
        %v1015 = vld [vmem:[%s199 + $0x15b8] sm:$0xff]
        %v1016 = vld [vmem:[%s199 + $0x15c0] sm:$0xff]
        %v1017 = vld [vmem:[%s199 + $0x15c8] sm:$0xff]
        %v1018 = vld [vmem:[%s199 + $0x15d0] sm:$0xff]
        %v1019 = vld [vmem:[%s199 + $0x15d8] sm:$0xff]
        %v1020 = vld [vmem:[%s199 + $0x15e0] sm:$0xff]
        %v1021 = vld [vmem:[%s199 + $0x15e8] sm:$0xff]
        %v1022 = vld [vmem:[%s199 + $0x15f0] sm:$0xff]
        %v1023 = vld [vmem:[%s199 + $0x15f8] sm:$0xff]
        %v1024 = vld [vmem:[%s199 + $0x1600] sm:$0xff]
        %v1025 = vld [vmem:[%s199 + $0x1608] sm:$0xff]
        %v1026 = vld [vmem:[%s199 + $0x1610] sm:$0xff]
        %v1027 = vld [vmem:[%s199 + $0x1618] sm:$0xff]
        %v1028 = vld [vmem:[%s199 + $0x1620] sm:$0xff]
        %v1029 = vld [vmem:[%s199 + $0x1628] sm:$0xff]
        %v1030 = vld [vmem:[%s199 + $0x1630] sm:$0xff]
        %v1031 = vld [vmem:[%s199 + $0x1638] sm:$0xff]
        %v1032 = vld [vmem:[%s199 + $0x1640] sm:$0xff]
        %v1033 = vld [vmem:[%s199 + $0x1648] sm:$0xff]
        %v1034 = vld [vmem:[%s199 + $0x1650] sm:$0xff]
        %v1035 = vld [vmem:[%s199 + $0x1658] sm:$0xff]
        %v1036 = vld [vmem:[%s199 + $0x1660] sm:$0xff]
        %v1037 = vld [vmem:[%s199 + $0x1668] sm:$0xff]
        %v1038 = vld [vmem:[%s199 + $0x1670] sm:$0xff]
        %v1039 = vld [vmem:[%s199 + $0x1678] sm:$0xff]
        %v1040 = vld [vmem:[%s199 + $0x1680] sm:$0xff]
        %v1041 = vld [vmem:[%s199 + $0x1688] sm:$0xff]
        %v1042 = vld [vmem:[%s199 + $0x1690] sm:$0xff]
        %v1043 = vld [vmem:[%s199 + $0x1698] sm:$0xff]
        %v1044 = vld [vmem:[%s199 + $0x16a0] sm:$0xff]
        %v1045 = vld [vmem:[%s199 + $0x16a8] sm:$0xff]
        %v1046 = vld [vmem:[%s199 + $0x16b0] sm:$0xff]
        %v1047 = vld [vmem:[%s199 + $0x16b8] sm:$0xff]
        %v1048 = vld [vmem:[%s199 + $0x16c0] sm:$0xff]
        %v1049 = vld [vmem:[%s199 + $0x16c8] sm:$0xff]
        %v1050 = vld [vmem:[%s199 + $0x16d0] sm:$0xff]
        %v1051 = vld [vmem:[%s199 + $0x16d8] sm:$0xff]
        %v1052 = vld [vmem:[%s199 + $0x16e0] sm:$0xff]
        %v1053 = vld [vmem:[%s199 + $0x16e8] sm:$0xff]
        %v1054 = vld [vmem:[%s199 + $0x16f0] sm:$0xff]
        %v1055 = vld [vmem:[%s199 + $0x16f8] sm:$0xff]
        %v1056 = vld [vmem:[%s199 + $0x1700] sm:$0xff]
        %v1057 = vld [vmem:[%s199 + $0x1708] sm:$0xff]
        %v1058 = vld [vmem:[%s199 + $0x1710] sm:$0xff]
        %v1059 = vld [vmem:[%s199 + $0x1718] sm:$0xff]
        %v1060 = vld [vmem:[%s199 + $0x1720] sm:$0xff]
        %v1061 = vld [vmem:[%s199 + $0x1728] sm:$0xff]
        %v1062 = vld [vmem:[%s199 + $0x1730] sm:$0xff]
        %v1063 = vld [vmem:[%s199 + $0x1738] sm:$0xff]
        %v1064 = vld [vmem:[%s199 + $0x1740] sm:$0xff]
        %v1065 = vld [vmem:[%s199 + $0x1748] sm:$0xff]
        %v1066 = vld [vmem:[%s199 + $0x1750] sm:$0xff]
        %v1067 = vld [vmem:[%s199 + $0x1758] sm:$0xff]
        %v1068 = vld [vmem:[%s199 + $0x1760] sm:$0xff]
        %v1069 = vld [vmem:[%s199 + $0x1768] sm:$0xff]
        %v1070 = vld [vmem:[%s199 + $0x1770] sm:$0xff]
        %v1071 = vld [vmem:[%s199 + $0x1778] sm:$0xff]
        %v1072 = vld [vmem:[%s199 + $0x1780] sm:$0xff]
        %v1073 = vld [vmem:[%s199 + $0x1788] sm:$0xff]
        %v1074 = vld [vmem:[%s199 + $0x1790] sm:$0xff]
        %v1075 = vld [vmem:[%s199 + $0x1798] sm:$0xff]
        %v1076 = vld [vmem:[%s199 + $0x17a0] sm:$0xff]
        %v1077 = vld [vmem:[%s199 + $0x17a8] sm:$0xff]
        %v1078 = vld [vmem:[%s199 + $0x17b0] sm:$0xff]
        %v1079 = vld [vmem:[%s199 + $0x17b8] sm:$0xff]
        %v1080 = vld [vmem:[%s199 + $0x17c0] sm:$0xff]
        %v1081 = vld [vmem:[%s199 + $0x17c8] sm:$0xff]
        %v1082 = vld [vmem:[%s199 + $0x17d0] sm:$0xff]
        %v1083 = vld [vmem:[%s199 + $0x17d8] sm:$0xff]
        %v1084 = vld [vmem:[%s199 + $0x17e0] sm:$0xff]
        %v1085 = vld [vmem:[%s199 + $0x17e8] sm:$0xff]
        %v1086 = vld [vmem:[%s199 + $0x17f0] sm:$0xff]
        %v1087 = vld [vmem:[%s199 + $0x17f8] sm:$0xff]
        %v1088 = vld [vmem:[%s199 + $0x1800] sm:$0xff]
        %v1089 = vld [vmem:[%s199 + $0x1808] sm:$0xff]
        %v1090 = vld [vmem:[%s199 + $0x1810] sm:$0xff]
        %v1091 = vld [vmem:[%s199 + $0x1818] sm:$0xff]
        %v1092 = vld [vmem:[%s199 + $0x1820] sm:$0xff]
        %v1093 = vld [vmem:[%s199 + $0x1828] sm:$0xff]
        %v1094 = vld [vmem:[%s199 + $0x1830] sm:$0xff]
        %v1095 = vld [vmem:[%s199 + $0x1838] sm:$0xff]
        %v1096 = vld [vmem:[%s199 + $0x1840] sm:$0xff]
        %v1097 = vld [vmem:[%s199 + $0x1848] sm:$0xff]
        %v1098 = vld [vmem:[%s199 + $0x1850] sm:$0xff]
        %v1099 = vld [vmem:[%s199 + $0x1858] sm:$0xff]
        %v1100 = vld [vmem:[%s199 + $0x1860] sm:$0xff]
        %v1101 = vld [vmem:[%s199 + $0x1868] sm:$0xff]
        %v1102 = vld [vmem:[%s199 + $0x1870] sm:$0xff]
        %v1103 = vld [vmem:[%s199 + $0x1878] sm:$0xff]
        %v1104 = vld [vmem:[%s199 + $0x1880] sm:$0xff]
        %v1105 = vld [vmem:[%s199 + $0x1888] sm:$0xff]
        %v1106 = vld [vmem:[%s199 + $0x1890] sm:$0xff]
        %v1107 = vld [vmem:[%s199 + $0x1898] sm:$0xff]
        %v1108 = vld [vmem:[%s199 + $0x18a0] sm:$0xff]
        %v1109 = vld [vmem:[%s199 + $0x18a8] sm:$0xff]
        %v1110 = vld [vmem:[%s199 + $0x18b0] sm:$0xff]
        %v1111 = vld [vmem:[%s199 + $0x18b8] sm:$0xff]
        %v1112 = vld [vmem:[%s199 + $0x18c0] sm:$0xff]
        %v1113 = vld [vmem:[%s199 + $0x18c8] sm:$0xff]
        %v1114 = vld [vmem:[%s199 + $0x18d0] sm:$0xff]
        %v1115 = vld [vmem:[%s199 + $0x18d8] sm:$0xff]
        %v1116 = vld [vmem:[%s199 + $0x18e0] sm:$0xff]
        %v1117 = vld [vmem:[%s199 + $0x18e8] sm:$0xff]
        %v1118 = vld [vmem:[%s199 + $0x18f0] sm:$0xff]
        %v1119 = vld [vmem:[%s199 + $0x18f8] sm:$0xff]
        %v1120 = vld [vmem:[%s199 + $0x1900] sm:$0xff]
        %v1121 = vld [vmem:[%s199 + $0x1908] sm:$0xff]
        %v1122 = vld [vmem:[%s199 + $0x1910] sm:$0xff]
        %v1123 = vld [vmem:[%s199 + $0x1918] sm:$0xff]
        %v1124 = vld [vmem:[%s199 + $0x1920] sm:$0xff]
        %v1125 = vld [vmem:[%s199 + $0x1928] sm:$0xff]
        %v1126 = vld [vmem:[%s199 + $0x1930] sm:$0xff]
        %v1127 = vld [vmem:[%s199 + $0x1938] sm:$0xff]
        %v1128 = vld [vmem:[%s199 + $0x1940] sm:$0xff]
        %v1129 = vld [vmem:[%s199 + $0x1948] sm:$0xff]
        %v1130 = vld [vmem:[%s199 + $0x1950] sm:$0xff]
        %v1131 = vld [vmem:[%s199 + $0x1958] sm:$0xff]
        %v1132 = vld [vmem:[%s199 + $0x1960] sm:$0xff]
        %v1133 = vld [vmem:[%s199 + $0x1968] sm:$0xff]
        %v1134 = vld [vmem:[%s199 + $0x1970] sm:$0xff]
        %v1135 = vld [vmem:[%s199 + $0x1978] sm:$0xff]
        %v1136 = vld [vmem:[%s199 + $0x1980] sm:$0xff]
        %v1137 = vld [vmem:[%s199 + $0x1988] sm:$0xff]
        %v1138 = vld [vmem:[%s199 + $0x1990] sm:$0xff]
        %v1139 = vld [vmem:[%s199 + $0x1998] sm:$0xff]
        %v1140 = vld [vmem:[%s199 + $0x19a0] sm:$0xff]
        %v1141 = vld [vmem:[%s199 + $0x19a8] sm:$0xff]
        %v1142 = vld [vmem:[%s199 + $0x19b0] sm:$0xff]
        %v1143 = vld [vmem:[%s199 + $0x19b8] sm:$0xff]
        %v1144 = vld [vmem:[%s199 + $0x19c0] sm:$0xff]
        %v1145 = vld [vmem:[%s199 + $0x19c8] sm:$0xff]
        %v1146 = vld [vmem:[%s199 + $0x19d0] sm:$0xff]
        %v1147 = vld [vmem:[%s199 + $0x19d8] sm:$0xff]
        %v1148 = vld [vmem:[%s199 + $0x19e0] sm:$0xff]
        %v1149 = vld [vmem:[%s199 + $0x19e8] sm:$0xff]
        %v1150 = vld [vmem:[%s199 + $0x19f0] sm:$0xff]
        %v1151 = vld [vmem:[%s199 + $0x19f8] sm:$0xff]
        %v1152 = vld [vmem:[%s199 + $0x1a00] sm:$0xff]
        %v1153 = vld [vmem:[%s199 + $0x1a08] sm:$0xff]
        %v1154 = vld [vmem:[%s199 + $0x1a10] sm:$0xff]
        %v1155 = vld [vmem:[%s199 + $0x1a18] sm:$0xff]
        %v1156 = vld [vmem:[%s199 + $0x1a20] sm:$0xff]
        %v1157 = vld [vmem:[%s199 + $0x1a28] sm:$0xff]
        %v1158 = vld [vmem:[%s199 + $0x1a30] sm:$0xff]
        %v1159 = vld [vmem:[%s199 + $0x1a38] sm:$0xff]
        %v1160 = vld [vmem:[%s199 + $0x1a40] sm:$0xff]
        %v1161 = vld [vmem:[%s199 + $0x1a48] sm:$0xff]
        %v1162 = vld [vmem:[%s199 + $0x1a50] sm:$0xff]
        %v1163 = vld [vmem:[%s199 + $0x1a58] sm:$0xff]
        %v1164 = vld [vmem:[%s199 + $0x1a60] sm:$0xff]
        %v1165 = vld [vmem:[%s199 + $0x1a68] sm:$0xff]
        %v1166 = vld [vmem:[%s199 + $0x1a70] sm:$0xff]
        %v1167 = vld [vmem:[%s199 + $0x1a78] sm:$0xff]
        %v1168 = vld [vmem:[%s199 + $0x1a80] sm:$0xff]
        %v1169 = vld [vmem:[%s199 + $0x1a88] sm:$0xff]
        %v1170 = vld [vmem:[%s199 + $0x1a90] sm:$0xff]
        %v1171 = vld [vmem:[%s199 + $0x1a98] sm:$0xff]
        %v1172 = vld [vmem:[%s199 + $0x1aa0] sm:$0xff]
        %v1173 = vld [vmem:[%s199 + $0x1aa8] sm:$0xff]
        %v1174 = vld [vmem:[%s199 + $0x1ab0] sm:$0xff]
        %v1175 = vld [vmem:[%s199 + $0x1ab8] sm:$0xff]
        %v1176 = vld [vmem:[%s199 + $0x1ac0] sm:$0xff]
        %v1177 = vld [vmem:[%s199 + $0x1ac8] sm:$0xff]
        %v1178 = vld [vmem:[%s199 + $0x1ad0] sm:$0xff]
        %v1179 = vld [vmem:[%s199 + $0x1ad8] sm:$0xff]
        %v1180 = vld [vmem:[%s199 + $0x1ae0] sm:$0xff]
        %v1181 = vld [vmem:[%s199 + $0x1ae8] sm:$0xff]
        %v1182 = vld [vmem:[%s199 + $0x1af0] sm:$0xff]
        %v1183 = vld [vmem:[%s199 + $0x1af8] sm:$0xff]
        %v1184 = vld [vmem:[%s199 + $0x1b00] sm:$0xff]
        %v1185 = vld [vmem:[%s199 + $0x1b08] sm:$0xff]
        %v1186 = vld [vmem:[%s199 + $0x1b10] sm:$0xff]
        %v1187 = vld [vmem:[%s199 + $0x1b18] sm:$0xff]
        %v1188 = vld [vmem:[%s199 + $0x1b20] sm:$0xff]
        %v1189 = vld [vmem:[%s199 + $0x1b28] sm:$0xff]
        %v1190 = vld [vmem:[%s199 + $0x1b30] sm:$0xff]
        %v1191 = vld [vmem:[%s199 + $0x1b38] sm:$0xff]
        %v1192 = vld [vmem:[%s199 + $0x1b40] sm:$0xff]
        %v1193 = vld [vmem:[%s199 + $0x1b48] sm:$0xff]
        %v1194 = vld [vmem:[%s199 + $0x1b50] sm:$0xff]
        %v1195 = vld [vmem:[%s199 + $0x1b58] sm:$0xff]
        %v1196 = vld [vmem:[%s199 + $0x1b60] sm:$0xff]
        %v1197 = vld [vmem:[%s199 + $0x1b68] sm:$0xff]
        %v1198 = vld [vmem:[%s199 + $0x1b70] sm:$0xff]
        %v1199 = vld [vmem:[%s199 + $0x1b78] sm:$0xff]
        %v1200 = vld [vmem:[%s199 + $0x1b80] sm:$0xff]
        %v1201 = vld [vmem:[%s199 + $0x1b88] sm:$0xff]
        %v1202 = vld [vmem:[%s199 + $0x1b90] sm:$0xff]
        %v1203 = vld [vmem:[%s199 + $0x1b98] sm:$0xff]
        %v1204 = vld [vmem:[%s199 + $0x1ba0] sm:$0xff]
        %v1205 = vld [vmem:[%s199 + $0x1ba8] sm:$0xff]
        %v1206 = vld [vmem:[%s199 + $0x1bb0] sm:$0xff]
        %v1207 = vld [vmem:[%s199 + $0x1bb8] sm:$0xff]
        %v1208 = vld [vmem:[%s199 + $0x1bc0] sm:$0xff]
        %v1209 = vld [vmem:[%s199 + $0x1bc8] sm:$0xff]
        %v1210 = vld [vmem:[%s199 + $0x1bd0] sm:$0xff]
        %v1211 = vld [vmem:[%s199 + $0x1bd8] sm:$0xff]
        %v1212 = vld [vmem:[%s199 + $0x1be0] sm:$0xff]
        %v1213 = vld [vmem:[%s199 + $0x1be8] sm:$0xff]
        %v1214 = vld [vmem:[%s199 + $0x1bf0] sm:$0xff]
        %v1215 = vld [vmem:[%s199 + $0x1bf8] sm:$0xff]
        %v1216 = vld [vmem:[%s199 + $0x1c00] sm:$0xff]
        %v1217 = vld [vmem:[%s199 + $0x1c08] sm:$0xff]
        %v1218 = vld [vmem:[%s199 + $0x1c10] sm:$0xff]
        %v1219 = vld [vmem:[%s199 + $0x1c18] sm:$0xff]
        %v1220 = vld [vmem:[%s199 + $0x1c20] sm:$0xff]
        %v1221 = vld [vmem:[%s199 + $0x1c28] sm:$0xff]
        %v1222 = vld [vmem:[%s199 + $0x1c30] sm:$0xff]
        %v1223 = vld [vmem:[%s199 + $0x1c38] sm:$0xff]
        %v1224 = vld [vmem:[%s199 + $0x1c40] sm:$0xff]
        %v1225 = vld [vmem:[%s199 + $0x1c48] sm:$0xff]
        %v1226 = vld [vmem:[%s199 + $0x1c50] sm:$0xff]
        %v1227 = vld [vmem:[%s199 + $0x1c58] sm:$0xff]
        %v1228 = vld [vmem:[%s199 + $0x1c60] sm:$0xff]
        %v1229 = vld [vmem:[%s199 + $0x1c68] sm:$0xff]
        %v1230 = vld [vmem:[%s199 + $0x1c70] sm:$0xff]
        %v1231 = vld [vmem:[%s199 + $0x1c78] sm:$0xff]
        %v1232 = vld [vmem:[%s199 + $0x1c80] sm:$0xff]
        %v1233 = vld [vmem:[%s199 + $0x1c88] sm:$0xff]
        %v1234 = vld [vmem:[%s199 + $0x1c90] sm:$0xff]
        %v1235 = vld [vmem:[%s199 + $0x1c98] sm:$0xff]
        %v1236 = vld [vmem:[%s199 + $0x1ca0] sm:$0xff]
        %v1237 = vld [vmem:[%s199 + $0x1ca8] sm:$0xff]
        %v1238 = vld [vmem:[%s199 + $0x1cb0] sm:$0xff]
        %v1239 = vld [vmem:[%s199 + $0x1cb8] sm:$0xff]
        %v1240 = vld [vmem:[%s199 + $0x1cc0] sm:$0xff]
        %v1241 = vld [vmem:[%s199 + $0x1cc8] sm:$0xff]
        %v1242 = vld [vmem:[%s199 + $0x1cd0] sm:$0xff]
        %v1243 = vld [vmem:[%s199 + $0x1cd8] sm:$0xff]
        %v1244 = vld [vmem:[%s199 + $0x1ce0] sm:$0xff]
        %v1245 = vld [vmem:[%s199 + $0x1ce8] sm:$0xff]
        %v1246 = vld [vmem:[%s199 + $0x1cf0] sm:$0xff]
        %v1247 = vld [vmem:[%s199 + $0x1cf8] sm:$0xff]
        %v1248 = vld [vmem:[%s199 + $0x1d00] sm:$0xff]
        %v1249 = vld [vmem:[%s199 + $0x1d08] sm:$0xff]
        %v1250 = vld [vmem:[%s199 + $0x1d10] sm:$0xff]
        %v1251 = vld [vmem:[%s199 + $0x1d18] sm:$0xff]
        %v1252 = vld [vmem:[%s199 + $0x1d20] sm:$0xff]
        %v1253 = vld [vmem:[%s199 + $0x1d28] sm:$0xff]
        %v1254 = vld [vmem:[%s199 + $0x1d30] sm:$0xff]
        %v1255 = vld [vmem:[%s199 + $0x1d38] sm:$0xff]
        %v1256 = vld [vmem:[%s199 + $0x1d40] sm:$0xff]
        %v1257 = vld [vmem:[%s199 + $0x1d48] sm:$0xff]
        %v1258 = vld [vmem:[%s199 + $0x1d50] sm:$0xff]
        %v1259 = vld [vmem:[%s199 + $0x1d58] sm:$0xff]
        %v1260 = vld [vmem:[%s199 + $0x1d60] sm:$0xff]
        %v1261 = vld [vmem:[%s199 + $0x1d68] sm:$0xff]
        %v1262 = vld [vmem:[%s199 + $0x1d70] sm:$0xff]
        %v1263 = vld [vmem:[%s199 + $0x1d78] sm:$0xff]
        %v1264 = vld [vmem:[%s199 + $0x1d80] sm:$0xff]
        %v1265 = vld [vmem:[%s199 + $0x1d88] sm:$0xff]
        %v1266 = vld [vmem:[%s199 + $0x1d90] sm:$0xff]
        %v1267 = vld [vmem:[%s199 + $0x1d98] sm:$0xff]
        %v1268 = vld [vmem:[%s199 + $0x1da0] sm:$0xff]
        %v1269 = vld [vmem:[%s199 + $0x1da8] sm:$0xff]
        %v1270 = vld [vmem:[%s199 + $0x1db0] sm:$0xff]
        %v1271 = vld [vmem:[%s199 + $0x1db8] sm:$0xff]
        %v1272 = vld [vmem:[%s199 + $0x1dc0] sm:$0xff]
        %v1273 = vld [vmem:[%s199 + $0x1dc8] sm:$0xff]
        %v1274 = vld [vmem:[%s199 + $0x1dd0] sm:$0xff]
        %v1275 = vld [vmem:[%s199 + $0x1dd8] sm:$0xff]
        %v1276 = vld [vmem:[%s199 + $0x1de0] sm:$0xff]
        %v1277 = vld [vmem:[%s199 + $0x1de8] sm:$0xff]
        %v1278 = vld [vmem:[%s199 + $0x1df0] sm:$0xff]
        %v1279 = vld [vmem:[%s199 + $0x1df8] sm:$0xff]
        %v1280 = vld [vmem:[%s199 + $0x1e00] sm:$0xff]
        %v1281 = vld [vmem:[%s199 + $0x1e08] sm:$0xff]
        %v1282 = vld [vmem:[%s199 + $0x1e10] sm:$0xff]
        %v1283 = vld [vmem:[%s199 + $0x1e18] sm:$0xff]
        %v1284 = vld [vmem:[%s199 + $0x1e20] sm:$0xff]
        %v1285 = vld [vmem:[%s199 + $0x1e28] sm:$0xff]
        %v1286 = vld [vmem:[%s199 + $0x1e30] sm:$0xff]
        %v1287 = vld [vmem:[%s199 + $0x1e38] sm:$0xff]
        %v1288 = vld [vmem:[%s199 + $0x1e40] sm:$0xff]
        %v1289 = vld [vmem:[%s199 + $0x1e48] sm:$0xff]
        %v1290 = vld [vmem:[%s199 + $0x1e50] sm:$0xff]
        %v1291 = vld [vmem:[%s199 + $0x1e58] sm:$0xff]
        %v1292 = vld [vmem:[%s199 + $0x1e60] sm:$0xff]
        %v1293 = vld [vmem:[%s199 + $0x1e68] sm:$0xff]
        %v1294 = vld [vmem:[%s199 + $0x1e70] sm:$0xff]
        %v1295 = vld [vmem:[%s199 + $0x1e78] sm:$0xff]
        %v1296 = vld [vmem:[%s199 + $0x1e80] sm:$0xff]
        %v1297 = vld [vmem:[%s199 + $0x1e88] sm:$0xff]
        %v1298 = vld [vmem:[%s199 + $0x1e90] sm:$0xff]
        %v1299 = vld [vmem:[%s199 + $0x1e98] sm:$0xff]
        %v1300 = vld [vmem:[%s199 + $0x1ea0] sm:$0xff]
        %v1301 = vld [vmem:[%s199 + $0x1ea8] sm:$0xff]
        %v1302 = vld [vmem:[%s199 + $0x1eb0] sm:$0xff]
        %v1303 = vld [vmem:[%s199 + $0x1eb8] sm:$0xff]
        %v1304 = vld [vmem:[%s199 + $0x1ec0] sm:$0xff]
        %v1305 = vld [vmem:[%s199 + $0x1ec8] sm:$0xff]
        %v1306 = vld [vmem:[%s199 + $0x1ed0] sm:$0xff]
        %v1307 = vld [vmem:[%s199 + $0x1ed8] sm:$0xff]
        %v1308 = vld [vmem:[%s199 + $0x1ee0] sm:$0xff]
        %v1309 = vld [vmem:[%s199 + $0x1ee8] sm:$0xff]
        %v1310 = vld [vmem:[%s199 + $0x1ef0] sm:$0xff]
        %v1311 = vld [vmem:[%s199 + $0x1ef8] sm:$0xff]
        %v1312 = vld [vmem:[%s199 + $0x1f00] sm:$0xff]
        %v1313 = vld [vmem:[%s199 + $0x1f08] sm:$0xff]
        %v1314 = vld [vmem:[%s199 + $0x1f10] sm:$0xff]
        %v1315 = vld [vmem:[%s199 + $0x1f18] sm:$0xff]
        %v1316 = vld [vmem:[%s199 + $0x1f20] sm:$0xff]
        %v1317 = vld [vmem:[%s199 + $0x1f28] sm:$0xff]
        %v1318 = vld [vmem:[%s199 + $0x1f30] sm:$0xff]
        %v1319 = vld [vmem:[%s199 + $0x1f38] sm:$0xff]
        %v1320 = vld [vmem:[%s199 + $0x1f40] sm:$0xff]
        %v1321 = vld [vmem:[%s199 + $0x1f48] sm:$0xff]
        %v1322 = vld [vmem:[%s199 + $0x1f50] sm:$0xff]
        %v1323 = vld [vmem:[%s199 + $0x1f58] sm:$0xff]
        %v1324 = vld [vmem:[%s199 + $0x1f60] sm:$0xff]
        %v1325 = vld [vmem:[%s199 + $0x1f68] sm:$0xff]
        %v1326 = vld [vmem:[%s199 + $0x1f70] sm:$0xff]
        %v1327 = vld [vmem:[%s199 + $0x1f78] sm:$0xff]
        %v1328 = vld [vmem:[%s199 + $0x1f80] sm:$0xff]
        %v1329 = vld [vmem:[%s199 + $0x1f88] sm:$0xff]
        %v1330 = vld [vmem:[%s199 + $0x1f90] sm:$0xff]
        %v1331 = vld [vmem:[%s199 + $0x1f98] sm:$0xff]
        %v1332 = vld [vmem:[%s199 + $0x1fa0] sm:$0xff]
        %v1333 = vld [vmem:[%s199 + $0x1fa8] sm:$0xff]
        %v1334 = vld [vmem:[%s199 + $0x1fb0] sm:$0xff]
        %v1335 = vld [vmem:[%s199 + $0x1fb8] sm:$0xff]
        %v1336 = vld [vmem:[%s199 + $0x1fc0] sm:$0xff]
        %v1337 = vld [vmem:[%s199 + $0x1fc8] sm:$0xff]
        %v1338 = vld [vmem:[%s199 + $0x1fd0] sm:$0xff]
        %v1339 = vld [vmem:[%s199 + $0x1fd8] sm:$0xff]
        %v1340 = vld [vmem:[%s199 + $0x1fe0] sm:$0xff]
        %v1341 = vld [vmem:[%s199 + $0x1fe8] sm:$0xff]
        %v1342 = vld [vmem:[%s199 + $0x1ff0] sm:$0xff]
        %v1343 = vld [vmem:[%s199 + $0x1ff8] sm:$0xff]
        %v1344 = vld [vmem:[%s199 + $0x2000] sm:$0xff]
        %v1345 = vld [vmem:[%s199 + $0x2008] sm:$0xff]
        %v1346 = vld [vmem:[%s199 + $0x2010] sm:$0xff]
        %v1347 = vld [vmem:[%s199 + $0x2018] sm:$0xff]
        %v1348 = vld [vmem:[%s199 + $0x2020] sm:$0xff]
        %v1349 = vld [vmem:[%s199 + $0x2028] sm:$0xff]
        %v1350 = vld [vmem:[%s199 + $0x2030] sm:$0xff]
        %v1351 = vld [vmem:[%s199 + $0x2038] sm:$0xff]
        %v1352 = vld [vmem:[%s199 + $0x2040] sm:$0xff]
        %v1353 = vld [vmem:[%s199 + $0x2048] sm:$0xff]
        %v1354 = vld [vmem:[%s199 + $0x2050] sm:$0xff]
        %v1355 = vld [vmem:[%s199 + $0x2058] sm:$0xff]
        %v1356 = vld [vmem:[%s199 + $0x2060] sm:$0xff]
        %v1357 = vld [vmem:[%s199 + $0x2068] sm:$0xff]
        %v1358 = vld [vmem:[%s199 + $0x2070] sm:$0xff]
        %v1359 = vld [vmem:[%s199 + $0x2078] sm:$0xff]
        %v1360 = vld [vmem:[%s199 + $0x2080] sm:$0xff]
        %v1361 = vld [vmem:[%s199 + $0x2088] sm:$0xff]
        %v1362 = vld [vmem:[%s199 + $0x2090] sm:$0xff]
        %v1363 = vld [vmem:[%s199 + $0x2098] sm:$0xff]
        %v1364 = vld [vmem:[%s199 + $0x20a0] sm:$0xff]
        %v1365 = vld [vmem:[%s199 + $0x20a8] sm:$0xff]
        %v1366 = vld [vmem:[%s199 + $0x20b0] sm:$0xff]
        %v1367 = vld [vmem:[%s199 + $0x20b8] sm:$0xff]
        %v1368 = vld [vmem:[%s199 + $0x20c0] sm:$0xff]
        %v1369 = vld [vmem:[%s199 + $0x20c8] sm:$0xff]
        %v1370 = vld [vmem:[%s199 + $0x20d0] sm:$0xff]
        %v1371 = vld [vmem:[%s199 + $0x20d8] sm:$0xff]
        %v1372 = vld [vmem:[%s199 + $0x20e0] sm:$0xff]
        %v1373 = vld [vmem:[%s199 + $0x20e8] sm:$0xff]
        %v1374 = vld [vmem:[%s199 + $0x20f0] sm:$0xff]
        %v1375 = vld [vmem:[%s199 + $0x20f8] sm:$0xff]
        %v1376 = vld [vmem:[%s199 + $0x2100] sm:$0xff]
        %v1377 = vld [vmem:[%s199 + $0x2108] sm:$0xff]
        %v1378 = vld [vmem:[%s199 + $0x2110] sm:$0xff]
        %v1379 = vld [vmem:[%s199 + $0x2118] sm:$0xff]
        %v1380 = vld [vmem:[%s199 + $0x2120] sm:$0xff]
        %v1381 = vld [vmem:[%s199 + $0x2128] sm:$0xff]
        %v1382 = vld [vmem:[%s199 + $0x2130] sm:$0xff]
        %v1383 = vld [vmem:[%s199 + $0x2138] sm:$0xff]
        %v1384 = vld [vmem:[%s199 + $0x2140] sm:$0xff]
        %v1385 = vld [vmem:[%s199 + $0x2148] sm:$0xff]
        %v1386 = vld [vmem:[%s199 + $0x2150] sm:$0xff]
        %v1387 = vld [vmem:[%s199 + $0x2158] sm:$0xff]
        %v1388 = vld [vmem:[%s199 + $0x2160] sm:$0xff]
        %v1389 = vld [vmem:[%s199 + $0x2168] sm:$0xff]
        %v1390 = vld [vmem:[%s199 + $0x2170] sm:$0xff]
        %v1391 = vld [vmem:[%s199 + $0x2178] sm:$0xff]
        %v1392 = vld [vmem:[%s199 + $0x2180] sm:$0xff]
        %v1393 = vld [vmem:[%s199 + $0x2188] sm:$0xff]
        %v1394 = vld [vmem:[%s199 + $0x2190] sm:$0xff]
        %v1395 = vld [vmem:[%s199 + $0x2198] sm:$0xff]
        %v1396 = vld [vmem:[%s199 + $0x21a0] sm:$0xff]
        %v1397 = vld [vmem:[%s199 + $0x21a8] sm:$0xff]
        %v1398 = vld [vmem:[%s199 + $0x21b0] sm:$0xff]
        %v1399 = vld [vmem:[%s199 + $0x21b8] sm:$0xff]
        %v1400 = vld [vmem:[%s199 + $0x21c0] sm:$0xff]
        %v1401 = vld [vmem:[%s199 + $0x21c8] sm:$0xff]
        %v1402 = vld [vmem:[%s199 + $0x21d0] sm:$0xff]
        %v1403 = vld [vmem:[%s199 + $0x21d8] sm:$0xff]
        %v1404 = vld [vmem:[%s199 + $0x21e0] sm:$0xff]
        %v1405 = vld [vmem:[%s199 + $0x21e8] sm:$0xff]
        %v1406 = vld [vmem:[%s199 + $0x21f0] sm:$0xff]
        %v1407 = vld [vmem:[%s199 + $0x21f8] sm:$0xff]
        %v1408 = vld [vmem:[%s199 + $0x2200] sm:$0xff]
        %v1409 = vld [vmem:[%s199 + $0x2208] sm:$0xff]
        %v1410 = vld [vmem:[%s199 + $0x2210] sm:$0xff]
        %v1411 = vld [vmem:[%s199 + $0x2218] sm:$0xff]
        %v1412 = vld [vmem:[%s199 + $0x2220] sm:$0xff]
        %v1413 = vld [vmem:[%s199 + $0x2228] sm:$0xff]
        %v1414 = vld [vmem:[%s199 + $0x2230] sm:$0xff]
        %v1415 = vld [vmem:[%s199 + $0x2238] sm:$0xff]
        %v1416 = vld [vmem:[%s199 + $0x2240] sm:$0xff]
        %v1417 = vld [vmem:[%s199 + $0x2248] sm:$0xff]
        %v1418 = vld [vmem:[%s199 + $0x2250] sm:$0xff]
        %v1419 = vld [vmem:[%s199 + $0x2258] sm:$0xff]
        %v1420 = vld [vmem:[%s199 + $0x2260] sm:$0xff]
        %v1421 = vld [vmem:[%s199 + $0x2268] sm:$0xff]
        %v1422 = vld [vmem:[%s199 + $0x2270] sm:$0xff]
        %v1423 = vld [vmem:[%s199 + $0x2278] sm:$0xff]
        %v1424 = vld [vmem:[%s199 + $0x2280] sm:$0xff]
        %v1425 = vld [vmem:[%s199 + $0x2288] sm:$0xff]
        %v1426 = vld [vmem:[%s199 + $0x2290] sm:$0xff]
        %v1427 = vld [vmem:[%s199 + $0x2298] sm:$0xff]
        %v1428 = vld [vmem:[%s199 + $0x22a0] sm:$0xff]
        %v1429 = vld [vmem:[%s199 + $0x22a8] sm:$0xff]
        %v1430 = vld [vmem:[%s199 + $0x22b0] sm:$0xff]
        %v1431 = vld [vmem:[%s199 + $0x22b8] sm:$0xff]
        %v1432 = vld [vmem:[%s199 + $0x22c0] sm:$0xff]
        %v1433 = vld [vmem:[%s199 + $0x22c8] sm:$0xff]
        %v1434 = vld [vmem:[%s199 + $0x22d0] sm:$0xff]
        %v1435 = vld [vmem:[%s199 + $0x22d8] sm:$0xff]
        %v1436 = vld [vmem:[%s199 + $0x22e0] sm:$0xff]
        %v1437 = vld [vmem:[%s199 + $0x22e8] sm:$0xff]
        %v1438 = vld [vmem:[%s199 + $0x22f0] sm:$0xff]
        %v1439 = vld [vmem:[%s199 + $0x22f8] sm:$0xff]
        %v1440 = vld [vmem:[%s199 + $0x2300] sm:$0xff]
        %v1441 = vld [vmem:[%s199 + $0x2308] sm:$0xff]
        %v1442 = vld [vmem:[%s199 + $0x2310] sm:$0xff]
        %v1443 = vld [vmem:[%s199 + $0x2318] sm:$0xff]
        %v1444 = vld [vmem:[%s199 + $0x2320] sm:$0xff]
        %v1445 = vld [vmem:[%s199 + $0x2328] sm:$0xff]
        %v1446 = vld [vmem:[%s199 + $0x2330] sm:$0xff]
        %v1447 = vld [vmem:[%s199 + $0x2338] sm:$0xff]
        %v1448 = vld [vmem:[%s199 + $0x2340] sm:$0xff]
        %v1449 = vld [vmem:[%s199 + $0x2348] sm:$0xff]
        %v1450 = vld [vmem:[%s199 + $0x2350] sm:$0xff]
        %v1451 = vld [vmem:[%s199 + $0x2358] sm:$0xff]
        %v1452 = vld [vmem:[%s199 + $0x2360] sm:$0xff]
        %v1453 = vld [vmem:[%s199 + $0x2368] sm:$0xff]
        %v1454 = vld [vmem:[%s199 + $0x2370] sm:$0xff]
        %v1455 = vld [vmem:[%s199 + $0x2378] sm:$0xff]
        %v1456 = vld [vmem:[%s199 + $0x2380] sm:$0xff]
        %v1457 = vld [vmem:[%s199 + $0x2388] sm:$0xff]
        %v1458 = vld [vmem:[%s199 + $0x2390] sm:$0xff]
        %v1459 = vld [vmem:[%s199 + $0x2398] sm:$0xff]
        %v1460 = vld [vmem:[%s199 + $0x23a0] sm:$0xff]
        %v1461 = vld [vmem:[%s199 + $0x23a8] sm:$0xff]
        %v1462 = vld [vmem:[%s199 + $0x23b0] sm:$0xff]
        %v1463 = vld [vmem:[%s199 + $0x23b8] sm:$0xff]
        %v1464 = vld [vmem:[%s199 + $0x23c0] sm:$0xff]
        %v1465 = vld [vmem:[%s199 + $0x23c8] sm:$0xff]
        %v1466 = vld [vmem:[%s199 + $0x23d0] sm:$0xff]
        %v1467 = vld [vmem:[%s199 + $0x23d8] sm:$0xff]
        %v1468 = vld [vmem:[%s199 + $0x23e0] sm:$0xff]
        %v1469 = vld [vmem:[%s199 + $0x23e8] sm:$0xff]
        %v1470 = vld [vmem:[%s199 + $0x23f0] sm:$0xff]
        %v1471 = vld [vmem:[%s199 + $0x23f8] sm:$0xff]
        %v1472 = vld [vmem:[%s199 + $0x2400] sm:$0xff]
        %v1473 = vld [vmem:[%s199 + $0x2408] sm:$0xff]
        %v1474 = vld [vmem:[%s199 + $0x2410] sm:$0xff]
        %v1475 = vld [vmem:[%s199 + $0x2418] sm:$0xff]
        %v1476 = vld [vmem:[%s199 + $0x2420] sm:$0xff]
        %v1477 = vld [vmem:[%s199 + $0x2428] sm:$0xff]
        %v1478 = vld [vmem:[%s199 + $0x2430] sm:$0xff]
        %v1479 = vld [vmem:[%s199 + $0x2438] sm:$0xff]
        %v1480 = vld [vmem:[%s199 + $0x2440] sm:$0xff]
        %v1481 = vld [vmem:[%s199 + $0x2448] sm:$0xff]
        %v1482 = vld [vmem:[%s199 + $0x2450] sm:$0xff]
        %v1483 = vld [vmem:[%s199 + $0x2458] sm:$0xff]
        %v1484 = vld [vmem:[%s199 + $0x2460] sm:$0xff]
        %v1485 = vld [vmem:[%s199 + $0x2468] sm:$0xff]
        %v1486 = vld [vmem:[%s199 + $0x2470] sm:$0xff]
        %v1487 = vld [vmem:[%s199 + $0x2478] sm:$0xff]
        %v1488 = vld [vmem:[%s199 + $0x2480] sm:$0xff]
        %v1489 = vld [vmem:[%s199 + $0x2488] sm:$0xff]
        %v1490 = vld [vmem:[%s199 + $0x2490] sm:$0xff]
        %v1491 = vld [vmem:[%s199 + $0x2498] sm:$0xff]
        %v1492 = vld [vmem:[%s199 + $0x24a0] sm:$0xff]
        %v1493 = vld [vmem:[%s199 + $0x24a8] sm:$0xff]
        %v1494 = vld [vmem:[%s199 + $0x24b0] sm:$0xff]
        %v1495 = vld [vmem:[%s199 + $0x24b8] sm:$0xff]
        %v1496 = vld [vmem:[%s199 + $0x24c0] sm:$0xff]
        %v1497 = vld [vmem:[%s199 + $0x24c8] sm:$0xff]
        %v1498 = vld [vmem:[%s199 + $0x24d0] sm:$0xff]
        %v1499 = vld [vmem:[%s199 + $0x24d8] sm:$0xff]
        %v1500 = vld [vmem:[%s199 + $0x24e0] sm:$0xff]
        %v1501 = vld [vmem:[%s199 + $0x24e8] sm:$0xff]
        %v1502 = vld [vmem:[%s199 + $0x24f0] sm:$0xff]
        %v1503 = vld [vmem:[%s199 + $0x24f8] sm:$0xff]
        %v1504 = vld [vmem:[%s199 + $0x2500] sm:$0xff]
        %v1505 = vld [vmem:[%s199 + $0x2508] sm:$0xff]
        %v1506 = vld [vmem:[%s199 + $0x2510] sm:$0xff]
        %v1507 = vld [vmem:[%s199 + $0x2518] sm:$0xff]
        %v1508 = vld [vmem:[%s199 + $0x2520] sm:$0xff]
        %v1509 = vld [vmem:[%s199 + $0x2528] sm:$0xff]
        %v1510 = vld [vmem:[%s199 + $0x2530] sm:$0xff]
        %v1511 = vld [vmem:[%s199 + $0x2538] sm:$0xff]
        %v1512 = vld [vmem:[%s199 + $0x2540] sm:$0xff]
        %v1513 = vld [vmem:[%s199 + $0x2548] sm:$0xff]
        %v1514 = vld [vmem:[%s199 + $0x2550] sm:$0xff]
        %v1515 = vld [vmem:[%s199 + $0x2558] sm:$0xff]
        %v1516 = vld [vmem:[%s199 + $0x2560] sm:$0xff]
        %v1517 = vld [vmem:[%s199 + $0x2568] sm:$0xff]
        %v1518 = vld [vmem:[%s199 + $0x2570] sm:$0xff]
        %v1519 = vld [vmem:[%s199 + $0x2578] sm:$0xff]
        %v1520 = vld [vmem:[%s199 + $0x2580] sm:$0xff]
        %v1521 = vld [vmem:[%s199 + $0x2588] sm:$0xff]
        %v1522 = vld [vmem:[%s199 + $0x2590] sm:$0xff]
        %v1523 = vld [vmem:[%s199 + $0x2598] sm:$0xff]
        %v1524 = vld [vmem:[%s199 + $0x25a0] sm:$0xff]
        %v1525 = vld [vmem:[%s199 + $0x25a8] sm:$0xff]
        %v1526 = vld [vmem:[%s199 + $0x25b0] sm:$0xff]
        %v1527 = vld [vmem:[%s199 + $0x25b8] sm:$0xff]
        %v1528 = vld [vmem:[%s199 + $0x25c0] sm:$0xff]
        %v1529 = vld [vmem:[%s199 + $0x25c8] sm:$0xff]
        %v1530 = vld [vmem:[%s199 + $0x25d0] sm:$0xff]
        %v1531 = vld [vmem:[%s199 + $0x25d8] sm:$0xff]
        %v1532 = vld [vmem:[%s199 + $0x25e0] sm:$0xff]
        %v1533 = vld [vmem:[%s199 + $0x25e8] sm:$0xff]
        %v1534 = vld [vmem:[%s199 + $0x25f0] sm:$0xff]
        %v1535 = vld [vmem:[%s199 + $0x25f8] sm:$0xff]
        %v1536 = vld [vmem:[%s199 + $0x2600] sm:$0xff]
        %v1537 = vld [vmem:[%s199 + $0x2608] sm:$0xff]
        %v1538 = vld [vmem:[%s199 + $0x2610] sm:$0xff]
        %v1539 = vld [vmem:[%s199 + $0x2618] sm:$0xff]
        %v1540 = vld [vmem:[%s199 + $0x2620] sm:$0xff]
        %v1541 = vld [vmem:[%s199 + $0x2628] sm:$0xff]
        %v1542 = vld [vmem:[%s199 + $0x2630] sm:$0xff]
        %v1543 = vld [vmem:[%s199 + $0x2638] sm:$0xff]
        %v1544 = vld [vmem:[%s199 + $0x2640] sm:$0xff]
        %v1545 = vld [vmem:[%s199 + $0x2648] sm:$0xff]
        %v1546 = vld [vmem:[%s199 + $0x2650] sm:$0xff]
        %v1547 = vld [vmem:[%s199 + $0x2658] sm:$0xff]
        %v1548 = vld [vmem:[%s199 + $0x2660] sm:$0xff]
        %v1549 = vld [vmem:[%s199 + $0x2668] sm:$0xff]
        %v1550 = vld [vmem:[%s199 + $0x2670] sm:$0xff]
        %v1551 = vld [vmem:[%s199 + $0x2678] sm:$0xff]
        %v1552 = vld [vmem:[%s199 + $0x2680] sm:$0xff]
        %v1553 = vld [vmem:[%s199 + $0x2688] sm:$0xff]
        %v1554 = vld [vmem:[%s199 + $0x2690] sm:$0xff]
        %v1555 = vld [vmem:[%s199 + $0x2698] sm:$0xff]
        %v1556 = vld [vmem:[%s199 + $0x26a0] sm:$0xff]
        %v1557 = vld [vmem:[%s199 + $0x26a8] sm:$0xff]
        %v1558 = vld [vmem:[%s199 + $0x26b0] sm:$0xff]
        %v1559 = vld [vmem:[%s199 + $0x26b8] sm:$0xff]
        %v1560 = vld [vmem:[%s199 + $0x26c0] sm:$0xff]
        %v1561 = vld [vmem:[%s199 + $0x26c8] sm:$0xff]
        %v1562 = vld [vmem:[%s199 + $0x26d0] sm:$0xff]
        %v1563 = vld [vmem:[%s199 + $0x26d8] sm:$0xff]
        %v1564 = vld [vmem:[%s199 + $0x26e0] sm:$0xff]
        %v1565 = vld [vmem:[%s199 + $0x26e8] sm:$0xff]
        %v1566 = vld [vmem:[%s199 + $0x26f0] sm:$0xff]
        %v1567 = vld [vmem:[%s199 + $0x26f8] sm:$0xff]
        %v1568 = vld [vmem:[%s199 + $0x2700] sm:$0xff]
        %v1569 = vld [vmem:[%s199 + $0x2708] sm:$0xff]
        %v1570 = vld [vmem:[%s199 + $0x2710] sm:$0xff]
        %v1571 = vld [vmem:[%s199 + $0x2718] sm:$0xff]
        %v1572 = vld [vmem:[%s199 + $0x2720] sm:$0xff]
        %v1573 = vld [vmem:[%s199 + $0x2728] sm:$0xff]
        %v1574 = vld [vmem:[%s199 + $0x2730] sm:$0xff]
        %v1575 = vld [vmem:[%s199 + $0x2738] sm:$0xff]
        %v1576 = vld [vmem:[%s199 + $0x2740] sm:$0xff]
        %v1577 = vld [vmem:[%s199 + $0x2748] sm:$0xff]
        %v1578 = vld [vmem:[%s199 + $0x2750] sm:$0xff]
        %v1579 = vld [vmem:[%s199 + $0x2758] sm:$0xff]
        %v1580 = vld [vmem:[%s199 + $0x2760] sm:$0xff]
        %v1581 = vld [vmem:[%s199 + $0x2768] sm:$0xff]
        %v1582 = vld [vmem:[%s199 + $0x2770] sm:$0xff]
        %v1583 = vld [vmem:[%s199 + $0x2778] sm:$0xff]
        %v1584 = vld [vmem:[%s199 + $0x2780] sm:$0xff]
        %v1585 = vld [vmem:[%s199 + $0x2788] sm:$0xff]
        %v1586 = vld [vmem:[%s199 + $0x2790] sm:$0xff]
        %v1587 = vld [vmem:[%s199 + $0x2798] sm:$0xff]
        %v1588 = vld [vmem:[%s199 + $0x27a0] sm:$0xff]
        %v1589 = vld [vmem:[%s199 + $0x27a8] sm:$0xff]
        %v1590 = vld [vmem:[%s199 + $0x27b0] sm:$0xff]
        %v1591 = vld [vmem:[%s199 + $0x27b8] sm:$0xff]
        %v1592 = vld [vmem:[%s199 + $0x27c0] sm:$0xff]
        %v1593 = vld [vmem:[%s199 + $0x27c8] sm:$0xff]
        %v1594 = vld [vmem:[%s199 + $0x27d0] sm:$0xff]
        %v1595 = vld [vmem:[%s199 + $0x27d8] sm:$0xff]
        %v1596 = vld [vmem:[%s199 + $0x27e0] sm:$0xff]
        %v1597 = vld [vmem:[%s199 + $0x27e8] sm:$0xff]
        %v1598 = vld [vmem:[%s199 + $0x27f0] sm:$0xff]
        %v1599 = vld [vmem:[%s199 + $0x27f8] sm:$0xff]
        %v1600 = vld [vmem:[%s199 + $0x2800] sm:$0xff]
        %v1601 = vld [vmem:[%s199 + $0x2808] sm:$0xff]
        %v1602 = vld [vmem:[%s199 + $0x2810] sm:$0xff]
        %v1603 = vld [vmem:[%s199 + $0x2818] sm:$0xff]
        %v1604 = vld [vmem:[%s199 + $0x2820] sm:$0xff]
        %v1605 = vld [vmem:[%s199 + $0x2828] sm:$0xff]
        %v1606 = vld [vmem:[%s199 + $0x2830] sm:$0xff]
        %v1607 = vld [vmem:[%s199 + $0x2838] sm:$0xff]
        %v1608 = vld [vmem:[%s199 + $0x2840] sm:$0xff]
        %v1609 = vld [vmem:[%s199 + $0x2848] sm:$0xff]
        %v1610 = vld [vmem:[%s199 + $0x2850] sm:$0xff]
        %v1611 = vld [vmem:[%s199 + $0x2858] sm:$0xff]
        %v1612 = vld [vmem:[%s199 + $0x2860] sm:$0xff]
        %v1613 = vld [vmem:[%s199 + $0x2868] sm:$0xff]
        %v1614 = vld [vmem:[%s199 + $0x2870] sm:$0xff]
        %v1615 = vld [vmem:[%s199 + $0x2878] sm:$0xff]
        %v1616 = vld [vmem:[%s199 + $0x2880] sm:$0xff]
        %v1617 = vld [vmem:[%s199 + $0x2888] sm:$0xff]
        %v1618 = vld [vmem:[%s199 + $0x2890] sm:$0xff]
        %v1619 = vld [vmem:[%s199 + $0x2898] sm:$0xff]
        %v1620 = vld [vmem:[%s199 + $0x28a0] sm:$0xff]
        %v1621 = vld [vmem:[%s199 + $0x28a8] sm:$0xff]
        %v1622 = vld [vmem:[%s199 + $0x28b0] sm:$0xff]
        %v1623 = vld [vmem:[%s199 + $0x28b8] sm:$0xff]
        %v1624 = vld [vmem:[%s199 + $0x28c0] sm:$0xff]
        %v1625 = vld [vmem:[%s199 + $0x28c8] sm:$0xff]
        %v1626 = vld [vmem:[%s199 + $0x28d0] sm:$0xff]
        %v1627 = vld [vmem:[%s199 + $0x28d8] sm:$0xff]
        %v1628 = vld [vmem:[%s199 + $0x28e0] sm:$0xff]
        %v1629 = vld [vmem:[%s199 + $0x28e8] sm:$0xff]
        %v1630 = vld [vmem:[%s199 + $0x28f0] sm:$0xff]
        %v1631 = vld [vmem:[%s199 + $0x28f8] sm:$0xff]
        %v1632 = vld [vmem:[%s199 + $0x2900] sm:$0xff]
        %v1633 = vld [vmem:[%s199 + $0x2908] sm:$0xff]
        %v1634 = vld [vmem:[%s199 + $0x2910] sm:$0xff]
        %v1635 = vld [vmem:[%s199 + $0x2918] sm:$0xff]
        %v1636 = vld [vmem:[%s199 + $0x2920] sm:$0xff]
        %v1637 = vld [vmem:[%s199 + $0x2928] sm:$0xff]
        %v1638 = vld [vmem:[%s199 + $0x2930] sm:$0xff]
        %v1639 = vld [vmem:[%s199 + $0x2938] sm:$0xff]
        %v1640 = vld [vmem:[%s199 + $0x2940] sm:$0xff]
        %v1641 = vld [vmem:[%s199 + $0x2948] sm:$0xff]
        %v1642 = vld [vmem:[%s199 + $0x2950] sm:$0xff]
        %v1643 = vld [vmem:[%s199 + $0x2958] sm:$0xff]
        %v1644 = vld [vmem:[%s199 + $0x2960] sm:$0xff]
        %v1645 = vld [vmem:[%s199 + $0x2968] sm:$0xff]
        %v1646 = vld [vmem:[%s199 + $0x2970] sm:$0xff]
        %v1647 = vld [vmem:[%s199 + $0x2978] sm:$0xff]
        %v1648 = vld [vmem:[%s199 + $0x2980] sm:$0xff]
        %v1649 = vld [vmem:[%s199 + $0x2988] sm:$0xff]
        %v1650 = vld [vmem:[%s199 + $0x2990] sm:$0xff]
        %v1651 = vld [vmem:[%s199 + $0x2998] sm:$0xff]
        %v1652 = vld [vmem:[%s199 + $0x29a0] sm:$0xff]
        %v1653 = vld [vmem:[%s199 + $0x29a8] sm:$0xff]
        %v1654 = vld [vmem:[%s199 + $0x29b0] sm:$0xff]
        %v1655 = vld [vmem:[%s199 + $0x29b8] sm:$0xff]
        %v1656 = vld [vmem:[%s199 + $0x29c0] sm:$0xff]
        %v1657 = vld [vmem:[%s199 + $0x29c8] sm:$0xff]
        %v1658 = vld [vmem:[%s199 + $0x29d0] sm:$0xff]
        %v1659 = vld [vmem:[%s199 + $0x29d8] sm:$0xff]
        %v1660 = vld [vmem:[%s199 + $0x29e0] sm:$0xff]
        %v1661 = vld [vmem:[%s199 + $0x29e8] sm:$0xff]
        %v1662 = vld [vmem:[%s199 + $0x29f0] sm:$0xff]
        %v1663 = vld [vmem:[%s199 + $0x29f8] sm:$0xff]
        %v1664 = vld [vmem:[%s199 + $0x2a00] sm:$0xff]
        %v1665 = vld [vmem:[%s199 + $0x2a08] sm:$0xff]
        %v1666 = vld [vmem:[%s199 + $0x2a10] sm:$0xff]
        %v1667 = vld [vmem:[%s199 + $0x2a18] sm:$0xff]
        %v1668 = vld [vmem:[%s199 + $0x2a20] sm:$0xff]
        %v1669 = vld [vmem:[%s199 + $0x2a28] sm:$0xff]
        %v1670 = vld [vmem:[%s199 + $0x2a30] sm:$0xff]
        %v1671 = vld [vmem:[%s199 + $0x2a38] sm:$0xff]
        %v1672 = vld [vmem:[%s199 + $0x2a40] sm:$0xff]
        %v1673 = vld [vmem:[%s199 + $0x2a48] sm:$0xff]
        %v1674 = vld [vmem:[%s199 + $0x2a50] sm:$0xff]
        %v1675 = vld [vmem:[%s199 + $0x2a58] sm:$0xff]
        %v1676 = vld [vmem:[%s199 + $0x2a60] sm:$0xff]
        %v1677 = vld [vmem:[%s199 + $0x2a68] sm:$0xff]
        %v1678 = vld [vmem:[%s199 + $0x2a70] sm:$0xff]
        %v1679 = vld [vmem:[%s199 + $0x2a78] sm:$0xff]
        %v1680 = vld [vmem:[%s199 + $0x2a80] sm:$0xff]
        %v1681 = vld [vmem:[%s199 + $0x2a88] sm:$0xff]
        %v1682 = vld [vmem:[%s199 + $0x2a90] sm:$0xff]
        %v1683 = vld [vmem:[%s199 + $0x2a98] sm:$0xff]
        %v1684 = vld [vmem:[%s199 + $0x2aa0] sm:$0xff]
        %v1685 = vld [vmem:[%s199 + $0x2aa8] sm:$0xff]
        %v1686 = vld [vmem:[%s199 + $0x2ab0] sm:$0xff]
        %v1687 = vld [vmem:[%s199 + $0x2ab8] sm:$0xff]
        %v1688 = vld [vmem:[%s199 + $0x2ac0] sm:$0xff]
        %v1689 = vld [vmem:[%s199 + $0x2ac8] sm:$0xff]
        %v1690 = vld [vmem:[%s199 + $0x2ad0] sm:$0xff]
        %v1691 = vld [vmem:[%s199 + $0x2ad8] sm:$0xff]
        %v1692 = vld [vmem:[%s199 + $0x2ae0] sm:$0xff]
        %v1693 = vld [vmem:[%s199 + $0x2ae8] sm:$0xff]
        %v1694 = vld [vmem:[%s199 + $0x2af0] sm:$0xff]
        %v1695 = vld [vmem:[%s199 + $0x2af8] sm:$0xff]
        %v1696 = vld [vmem:[%s199 + $0x2b00] sm:$0xff]
        %v1697 = vld [vmem:[%s199 + $0x2b08] sm:$0xff]
        %v1698 = vld [vmem:[%s199 + $0x2b10] sm:$0xff]
        %v1699 = vld [vmem:[%s199 + $0x2b18] sm:$0xff]
        %v1700 = vld [vmem:[%s199 + $0x2b20] sm:$0xff]
        %v1701 = vld [vmem:[%s199 + $0x2b28] sm:$0xff]
        %v1702 = vld [vmem:[%s199 + $0x2b30] sm:$0xff]
        %v1703 = vld [vmem:[%s199 + $0x2b38] sm:$0xff]
        %v1704 = vld [vmem:[%s199 + $0x2b40] sm:$0xff]
        %v1705 = vld [vmem:[%s199 + $0x2b48] sm:$0xff]
        %v1706 = vld [vmem:[%s199 + $0x2b50] sm:$0xff]
        %v1707 = vld [vmem:[%s199 + $0x2b58] sm:$0xff]
        %v1708 = vld [vmem:[%s199 + $0x2b60] sm:$0xff]
        %v1709 = vld [vmem:[%s199 + $0x2b68] sm:$0xff]
        %v1710 = vld [vmem:[%s199 + $0x2b70] sm:$0xff]
        %v1711 = vld [vmem:[%s199 + $0x2b78] sm:$0xff]
        %v1712 = vld [vmem:[%s199 + $0x2b80] sm:$0xff]
        %v1713 = vld [vmem:[%s199 + $0x2b88] sm:$0xff]
        %v1714 = vld [vmem:[%s199 + $0x2b90] sm:$0xff]
        %v1715 = vld [vmem:[%s199 + $0x2b98] sm:$0xff]
        %v1716 = vld [vmem:[%s199 + $0x2ba0] sm:$0xff]
        %v1717 = vld [vmem:[%s199 + $0x2ba8] sm:$0xff]
        %v1718 = vld [vmem:[%s199 + $0x2bb0] sm:$0xff]
        %v1719 = vld [vmem:[%s199 + $0x2bb8] sm:$0xff]
        %v1720 = vld [vmem:[%s199 + $0x2bc0] sm:$0xff]
        %v1721 = vld [vmem:[%s199 + $0x2bc8] sm:$0xff]
        %v1722 = vld [vmem:[%s199 + $0x2bd0] sm:$0xff]
        %v1723 = vld [vmem:[%s199 + $0x2bd8] sm:$0xff]
        %v1724 = vld [vmem:[%s199 + $0x2be0] sm:$0xff]
        %v1725 = vld [vmem:[%s199 + $0x2be8] sm:$0xff]
        %v1726 = vld [vmem:[%s199 + $0x2bf0] sm:$0xff]
        %v1727 = vld [vmem:[%s199 + $0x2bf8] sm:$0xff]
        %v1728 = vld [vmem:[%s199 + $0x2c00] sm:$0xff]
        %v1729 = vld [vmem:[%s199 + $0x2c08] sm:$0xff]
        %v1730 = vld [vmem:[%s199 + $0x2c10] sm:$0xff]
        %v1731 = vld [vmem:[%s199 + $0x2c18] sm:$0xff]
        %v1732 = vld [vmem:[%s199 + $0x2c20] sm:$0xff]
        %v1733 = vld [vmem:[%s199 + $0x2c28] sm:$0xff]
        %v1734 = vld [vmem:[%s199 + $0x2c30] sm:$0xff]
        %v1735 = vld [vmem:[%s199 + $0x2c38] sm:$0xff]
        %v1736 = vld [vmem:[%s199 + $0x2c40] sm:$0xff]
        %v1737 = vld [vmem:[%s199 + $0x2c48] sm:$0xff]
        %v1738 = vld [vmem:[%s199 + $0x2c50] sm:$0xff]
        %v1739 = vld [vmem:[%s199 + $0x2c58] sm:$0xff]
        %v1740 = vld [vmem:[%s199 + $0x2c60] sm:$0xff]
        %v1741 = vld [vmem:[%s199 + $0x2c68] sm:$0xff]
        %v1742 = vld [vmem:[%s199 + $0x2c70] sm:$0xff]
        %v1743 = vld [vmem:[%s199 + $0x2c78] sm:$0xff]
        %v1744 = vld [vmem:[%s199 + $0x2c80] sm:$0xff]
        %v1745 = vld [vmem:[%s199 + $0x2c88] sm:$0xff]
        %v1746 = vld [vmem:[%s199 + $0x2c90] sm:$0xff]
        %v1747 = vld [vmem:[%s199 + $0x2c98] sm:$0xff]
        %v1748 = vld [vmem:[%s199 + $0x2ca0] sm:$0xff]
        %v1749 = vld [vmem:[%s199 + $0x2ca8] sm:$0xff]
        %v1750 = vld [vmem:[%s199 + $0x2cb0] sm:$0xff]
        %v1751 = vld [vmem:[%s199 + $0x2cb8] sm:$0xff]
        %v1752 = vld [vmem:[%s199 + $0x2cc0] sm:$0xff]
        %v1753 = vld [vmem:[%s199 + $0x2cc8] sm:$0xff]
        %v1754 = vld [vmem:[%s199 + $0x2cd0] sm:$0xff]
        %v1755 = vld [vmem:[%s199 + $0x2cd8] sm:$0xff]
        %v1756 = vld [vmem:[%s199 + $0x2ce0] sm:$0xff]
        %v1757 = vld [vmem:[%s199 + $0x2ce8] sm:$0xff]
        %v1758 = vld [vmem:[%s199 + $0x2cf0] sm:$0xff]
        %v1759 = vld [vmem:[%s199 + $0x2cf8] sm:$0xff]
        %v1760 = vld [vmem:[%s199 + $0x2d00] sm:$0xff]
        %v1761 = vld [vmem:[%s199 + $0x2d08] sm:$0xff]
        %v1762 = vld [vmem:[%s199 + $0x2d10] sm:$0xff]
        %v1763 = vld [vmem:[%s199 + $0x2d18] sm:$0xff]
        %v1764 = vld [vmem:[%s199 + $0x2d20] sm:$0xff]
        %v1765 = vld [vmem:[%s199 + $0x2d28] sm:$0xff]
        %v1766 = vld [vmem:[%s199 + $0x2d30] sm:$0xff]
        %v1767 = vld [vmem:[%s199 + $0x2d38] sm:$0xff]
        %v1768 = vld [vmem:[%s199 + $0x2d40] sm:$0xff]
        %v1769 = vld [vmem:[%s199 + $0x2d48] sm:$0xff]
        %v1770 = vld [vmem:[%s199 + $0x2d50] sm:$0xff]
        %v1771 = vld [vmem:[%s199 + $0x2d58] sm:$0xff]
        %v1772 = vld [vmem:[%s199 + $0x2d60] sm:$0xff]
        %v1773 = vld [vmem:[%s199 + $0x2d68] sm:$0xff]
        %v1774 = vld [vmem:[%s199 + $0x2d70] sm:$0xff]
        %v1775 = vld [vmem:[%s199 + $0x2d78] sm:$0xff]
        %v1776 = vld [vmem:[%s199 + $0x2d80] sm:$0xff]
        %v1777 = vld [vmem:[%s199 + $0x2d88] sm:$0xff]
        %v1778 = vld [vmem:[%s199 + $0x2d90] sm:$0xff]
        %v1779 = vld [vmem:[%s199 + $0x2d98] sm:$0xff]
        %v1780 = vld [vmem:[%s199 + $0x2da0] sm:$0xff]
        %v1781 = vld [vmem:[%s199 + $0x2da8] sm:$0xff]
        %v1782 = vld [vmem:[%s199 + $0x2db0] sm:$0xff]
        %v1783 = vld [vmem:[%s199 + $0x2db8] sm:$0xff]
        %v1784 = vld [vmem:[%s199 + $0x2dc0] sm:$0xff]
        %v1785 = vld [vmem:[%s199 + $0x2dc8] sm:$0xff]
        %v1786 = vld [vmem:[%s199 + $0x2dd0] sm:$0xff]
        %v1787 = vld [vmem:[%s199 + $0x2dd8] sm:$0xff]
        %v1788 = vld [vmem:[%s199 + $0x2de0] sm:$0xff]
        %v1789 = vld [vmem:[%s199 + $0x2de8] sm:$0xff]
        %v1790 = vld [vmem:[%s199 + $0x2df0] sm:$0xff]
        %v1791 = vld [vmem:[%s199 + $0x2df8] sm:$0xff]
        %v1792 = vld [vmem:[%s199 + $0x2e00] sm:$0xff]
        %v1793 = vld [vmem:[%s199 + $0x2e08] sm:$0xff]
        %v1794 = vld [vmem:[%s199 + $0x2e10] sm:$0xff]
        %v1795 = vld [vmem:[%s199 + $0x2e18] sm:$0xff]
        %v1796 = vld [vmem:[%s199 + $0x2e20] sm:$0xff]
        %v1797 = vld [vmem:[%s199 + $0x2e28] sm:$0xff]
        %v1798 = vld [vmem:[%s199 + $0x2e30] sm:$0xff]
        %v1799 = vld [vmem:[%s199 + $0x2e38] sm:$0xff]
        %v1800 = vld [vmem:[%s199 + $0x2e40] sm:$0xff]
        %v1801 = vld [vmem:[%s199 + $0x2e48] sm:$0xff]
        %v1802 = vld [vmem:[%s199 + $0x2e50] sm:$0xff]
        %v1803 = vld [vmem:[%s199 + $0x2e58] sm:$0xff]
        %v1804 = vld [vmem:[%s199 + $0x2e60] sm:$0xff]
        %v1805 = vld [vmem:[%s199 + $0x2e68] sm:$0xff]
        %v1806 = vld [vmem:[%s199 + $0x2e70] sm:$0xff]
        %v1807 = vld [vmem:[%s199 + $0x2e78] sm:$0xff]
        %v1808 = vld [vmem:[%s199 + $0x2e80] sm:$0xff]
        %v1809 = vld [vmem:[%s199 + $0x2e88] sm:$0xff]
        %v1810 = vld [vmem:[%s199 + $0x2e90] sm:$0xff]
        %v1811 = vld [vmem:[%s199 + $0x2e98] sm:$0xff]
        %v1812 = vld [vmem:[%s199 + $0x2ea0] sm:$0xff]
        %v1813 = vld [vmem:[%s199 + $0x2ea8] sm:$0xff]
        %v1814 = vld [vmem:[%s199 + $0x2eb0] sm:$0xff]
        %v1815 = vld [vmem:[%s199 + $0x2eb8] sm:$0xff]
        %v1816 = vld [vmem:[%s199 + $0x2ec0] sm:$0xff]
        %v1817 = vld [vmem:[%s199 + $0x2ec8] sm:$0xff]
        %v1818 = vld [vmem:[%s199 + $0x2ed0] sm:$0xff]
        %v1819 = vld [vmem:[%s199 + $0x2ed8] sm:$0xff]
        %v1820 = vld [vmem:[%s199 + $0x2ee0] sm:$0xff]
        %v1821 = vld [vmem:[%s199 + $0x2ee8] sm:$0xff]
        %v1822 = vld [vmem:[%s199 + $0x2ef0] sm:$0xff]
        %v1823 = vld [vmem:[%s199 + $0x2ef8] sm:$0xff]
        %v1824 = vld [vmem:[%s199 + $0x2f00] sm:$0xff]
        %v1825 = vld [vmem:[%s199 + $0x2f08] sm:$0xff]
        %v1826 = vld [vmem:[%s199 + $0x2f10] sm:$0xff]
        %v1827 = vld [vmem:[%s199 + $0x2f18] sm:$0xff]
        %v1828 = vld [vmem:[%s199 + $0x2f20] sm:$0xff]
        %v1829 = vld [vmem:[%s199 + $0x2f28] sm:$0xff]
        %v1830 = vld [vmem:[%s199 + $0x2f30] sm:$0xff]
        %v1831 = vld [vmem:[%s199 + $0x2f38] sm:$0xff]
        %v1832 = vld [vmem:[%s199 + $0x2f40] sm:$0xff]
        %v1833 = vld [vmem:[%s199 + $0x2f48] sm:$0xff]
        %v1834 = vld [vmem:[%s199 + $0x2f50] sm:$0xff]
        %v1835 = vld [vmem:[%s199 + $0x2f58] sm:$0xff]
        %v1836 = vld [vmem:[%s199 + $0x2f60] sm:$0xff]
        %v1837 = vld [vmem:[%s199 + $0x2f68] sm:$0xff]
        %v1838 = vld [vmem:[%s199 + $0x2f70] sm:$0xff]
        %v1839 = vld [vmem:[%s199 + $0x2f78] sm:$0xff]
        %v1840 = vld [vmem:[%s199 + $0x2f80] sm:$0xff]
        %v1841 = vld [vmem:[%s199 + $0x2f88] sm:$0xff]
        %v1842 = vld [vmem:[%s199 + $0x2f90] sm:$0xff]
        %v1843 = vld [vmem:[%s199 + $0x2f98] sm:$0xff]
        %v1844 = vld [vmem:[%s199 + $0x2fa0] sm:$0xff]
        %v1845 = vld [vmem:[%s199 + $0x2fa8] sm:$0xff]
        %v1846 = vld [vmem:[%s199 + $0x2fb0] sm:$0xff]
        %v1847 = vld [vmem:[%s199 + $0x2fb8] sm:$0xff]
        %v1848 = vld [vmem:[%s199 + $0x2fc0] sm:$0xff]
        %v1849 = vld [vmem:[%s199 + $0x2fc8] sm:$0xff]
        %v1850 = vld [vmem:[%s199 + $0x2fd0] sm:$0xff]
        %v1851 = vld [vmem:[%s199 + $0x2fd8] sm:$0xff]
        %v1852 = vld [vmem:[%s199 + $0x2fe0] sm:$0xff]
        %v1853 = vld [vmem:[%s199 + $0x2fe8] sm:$0xff]
        %v1854 = vld [vmem:[%s199 + $0x2ff0] sm:$0xff]
        %v1855 = vld [vmem:[%s199 + $0x2ff8] sm:$0xff]
        %v1856 = vld [vmem:[%s1] sm:$0xff]
        %v1857 = vld [vmem:[%s1 + $0x8] sm:$0xff]
        %v1858 = vld [vmem:[%s1 + $0x10] sm:$0xff]
        %v1859 = vld [vmem:[%s1 + $0x18] sm:$0xff]
        %v1860 = vld [vmem:[%s1 + $0x20] sm:$0xff]
        %v1861 = vld [vmem:[%s1 + $0x28] sm:$0xff]
        %v1862 = vld [vmem:[%s1 + $0x30] sm:$0xff]
        %v1863 = vld [vmem:[%s1 + $0x38] sm:$0xff]
        %1865 = vset.pattern.permute.xlu0 0
        %1866 = vperm.xlu0 %1865, %v1856
        %v1867 = vpop.permute.xlu0 %1866
        %1870 = vset.pattern.permute.xlu0 0
        %1871 = vperm.xlu0 %1870, %v1857
        %v1872 = vpop.permute.xlu0 %1871
        %1875 = vset.pattern.permute.xlu0 0
        %1876 = vperm.xlu0 %1875, %v1858
        %v1877 = vpop.permute.xlu0 %1876
        %1880 = vset.pattern.permute.xlu0 0
        %1881 = vperm.xlu0 %1880, %v1859
        %v1882 = vpop.permute.xlu0 %1881
        %1885 = vset.pattern.permute.xlu0 0
        %1886 = vperm.xlu0 %1885, %v1860
        %v1887 = vpop.permute.xlu0 %1886
        %1890 = vset.pattern.permute.xlu0 0
        %1891 = vperm.xlu0 %1890, %v1861
        %v1892 = vpop.permute.xlu0 %1891
        %1895 = vset.pattern.permute.xlu0 0
        %1896 = vperm.xlu0 %1895, %v1862
        %v1897 = vpop.permute.xlu0 %1896
        %1900 = vset.pattern.permute.xlu0 0
        %1901 = vperm.xlu0 %1900, %v1863
        %v1902 = vpop.permute.xlu0 %1901
        %1904 = vmatprep.subr.mxu0 %v321
        %1905 = vmatpush1.msra.mxu0 %v320
        %1906 = vmatprep.subr.mxu0 %v329
        %1907 = vmatpush1.msra.mxu0 %v328
        %1908 = vmatprep.subr.mxu0 %v337
        %1909 = vmatpush1.msra.mxu0 %v336
        %1910 = vmatprep.subr.mxu0 %v345
        %1911 = vmatpush1.msra.mxu0 %v344
        %1912 = vmatprep.subr.mxu0 %v353
        %1913 = vmatpush1.msra.mxu0 %v352
        %1914 = vmatprep.subr.mxu0 %v361
        %1915 = vmatpush1.msra.mxu0 %v360
        %1916 = vmatprep.subr.mxu0 %v369
        %1917 = vmatpush1.msra.mxu0 %v368
        %1918 = vmatprep.subr.mxu0 %v377
        %1919 = vmatpush1.msra.mxu0 %v376
        %1920 = vmatprep.subr.mxu0 %v385
        %1921 = vmatpush1.msra.mxu0 %v384
        %1922 = vmatprep.subr.mxu0 %v393
        %1923 = vmatpush1.msra.mxu0 %v392
        %1924 = vmatprep.subr.mxu0 %v401
        %1925 = vmatpush1.msra.mxu0 %v400
        %1926 = vmatprep.subr.mxu0 %v409
        %1927 = vmatpush1.msra.mxu0 %v408
        %1928 = vmatprep.subr.mxu0 %v417
        %1929 = vmatpush1.msra.mxu0 %v416
        %1930 = vmatprep.subr.mxu0 %v425
        %1931 = vmatpush1.msra.mxu0 %v424
        %1932 = vmatprep.subr.mxu0 %v433
        %1933 = vmatpush1.msra.mxu0 %v432
        %1934 = vmatprep.subr.mxu0 %v441
        %1935 = vmatpush1.msra.mxu0 %v440
        %1936 = vmatprep.subr.mxu0 %v449
        %1937 = vmatpush1.msra.mxu0 %v448
        %1938 = vmatprep.subr.mxu0 %v457
        %1939 = vmatpush1.msra.mxu0 %v456
        %1940 = vmatprep.subr.mxu0 %v465
        %1941 = vmatpush1.msra.mxu0 %v464
        %1942 = vmatprep.subr.mxu0 %v473
        %1943 = vmatpush1.msra.mxu0 %v472
        %1944 = vmatprep.subr.mxu0 %v481
        %1945 = vmatpush1.msra.mxu0 %v480
        %1946 = vmatprep.subr.mxu0 %v489
        %1947 = vmatpush1.msra.mxu0 %v488
        %1948 = vmatprep.subr.mxu0 %v497
        %1949 = vmatpush1.msra.mxu0 %v496
        %1950 = vmatprep.subr.mxu0 %v505
        %1951 = vmatpush1.msra.mxu0 %v504
        %1952 = vmatprep.subr.mxu0 %v513
        %1953 = vmatpush1.msra.mxu0 %v512
        %1954 = vmatprep.subr.mxu0 %v521
        %1955 = vmatpush1.msra.mxu0 %v520
        %1956 = vmatprep.subr.mxu0 %v529
        %1957 = vmatpush1.msra.mxu0 %v528
        %1958 = vmatprep.subr.mxu0 %v537
        %1959 = vmatpush1.msra.mxu0 %v536
        %1960 = vmatprep.subr.mxu0 %v545
        %1961 = vmatpush1.msra.mxu0 %v544
        %1962 = vmatprep.subr.mxu0 %v553
        %1963 = vmatpush1.msra.mxu0 %v552
        %1964 = vmatprep.subr.mxu0 %v561
        %1965 = vmatpush1.msra.mxu0 %v560
        %1966 = vmatprep.subr.mxu0 %v569
        %1967 = vmatpush1.msra.mxu0 %v568
        %1968 = vmatprep.mubr.f32.mxu0 %v225
        %1969 = vmatmul.mubr.f32.gmra.mrb[0].mxu0 %v224
        %v1970 = vpop.f32.mrb[0].mxu0
        %v1971 = vadd.f32 %v1867, %v1970
        %v1972 = vpop.f32.mrb[0].mxu0
        %v1973 = vadd.f32 %v1867, %v1972
        %1974 = vmatprep.mubr.f32.mxu0 %v237
        %1975 = vmatmul.mubr.f32.gmra.mrb[0].mxu0 %v236
        %v1976 = vpop.f32.mrb[0].mxu0
        %v1977 = vadd.f32 %v1872, %v1976
        %v1978 = vpop.f32.mrb[0].mxu0
        %v1979 = vadd.f32 %v1872, %v1978
        %1980 = vmatprep.mubr.f32.mxu0 %v249
        %1981 = vmatmul.mubr.f32.gmra.mrb[0].mxu0 %v248
        %v1982 = vpop.f32.mrb[0].mxu0
        %v1983 = vadd.f32 %v1877, %v1982
        %v1984 = vpop.f32.mrb[0].mxu0
        %v1985 = vadd.f32 %v1877, %v1984
        %1986 = vmatprep.mubr.f32.mxu0 %v261
        %1987 = vmatmul.mubr.f32.gmra.mrb[0].mxu0 %v260
        %v1988 = vpop.f32.mrb[0].mxu0
        %v1989 = vadd.f32 %v1882, %v1988
        %v1990 = vpop.f32.mrb[0].mxu0
        %v1991 = vadd.f32 %v1882, %v1990
        %1992 = vmatprep.mubr.f32.mxu0 %v273
        %1993 = vmatmul.mubr.f32.gmra.mrb[0].mxu0 %v272
        %v1994 = vpop.f32.mrb[0].mxu0
        %v1995 = vadd.f32 %v1887, %v1994
        %v1996 = vpop.f32.mrb[0].mxu0
        %v1997 = vadd.f32 %v1887, %v1996
        %1998 = vmatprep.mubr.f32.mxu0 %v285
        %1999 = vmatmul.mubr.f32.gmra.mrb[0].mxu0 %v284
        %v2000 = vpop.f32.mrb[0].mxu0
        %v2001 = vadd.f32 %v1892, %v2000
        %v2002 = vpop.f32.mrb[0].mxu0
        %v2003 = vadd.f32 %v1892, %v2002
        %2004 = vmatprep.mubr.f32.mxu0 %v297
        %2005 = vmatmul.mubr.f32.gmra.mrb[0].mxu0 %v296
        %v2006 = vpop.f32.mrb[0].mxu0
        %v2007 = vadd.f32 %v1897, %v2006
        %v2008 = vpop.f32.mrb[0].mxu0
        %v2009 = vadd.f32 %v1897, %v2008
        %2010 = vmatprep.mubr.f32.mxu0 %v309
        %2011 = vmatmul.mubr.f32.gmra.mrb[0].mxu0 %v308
        %v2012 = vpop.f32.mrb[0].mxu0
        %v2013 = vadd.f32 %v1902, %v2012
        %v2014 = vpop.f32.mrb[0].mxu0
        %v2015 = vadd.f32 %v1902, %v2014
        %2016 = vdwg.mxu0
        %2017 = vmatprep.subr.mxu0 %v577
        %2018 = vmatpush1.msra.mxu0 %v576
        %2019 = vmatprep.subr.mxu0 %v585
        %2020 = vmatpush1.msra.mxu0 %v584
        %2021 = vmatprep.subr.mxu0 %v593
        %2022 = vmatpush1.msra.mxu0 %v592
        %2023 = vmatprep.subr.mxu0 %v601
        %2024 = vmatpush1.msra.mxu0 %v600
        %2025 = vmatprep.subr.mxu0 %v609
        %2026 = vmatpush1.msra.mxu0 %v608
        %2027 = vmatprep.subr.mxu0 %v617
        %2028 = vmatpush1.msra.mxu0 %v616
        %2029 = vmatprep.subr.mxu0 %v625
        %2030 = vmatpush1.msra.mxu0 %v624
        %2031 = vmatprep.subr.mxu0 %v633
        %2032 = vmatpush1.msra.mxu0 %v632
        %2033 = vmatprep.subr.mxu0 %v641
        %2034 = vmatpush1.msra.mxu0 %v640
        %2035 = vmatprep.subr.mxu0 %v649
        %2036 = vmatpush1.msra.mxu0 %v648
        %2037 = vmatprep.subr.mxu0 %v657
        %2038 = vmatpush1.msra.mxu0 %v656
        %2039 = vmatprep.subr.mxu0 %v665
        %2040 = vmatpush1.msra.mxu0 %v664
        %2041 = vmatprep.subr.mxu0 %v673
        %2042 = vmatpush1.msra.mxu0 %v672
        %2043 = vmatprep.subr.mxu0 %v681
        %2044 = vmatpush1.msra.mxu0 %v680
        %2045 = vmatprep.subr.mxu0 %v689
        %2046 = vmatpush1.msra.mxu0 %v688
        %2047 = vmatprep.subr.mxu0 %v697
        %2048 = vmatpush1.msra.mxu0 %v696
        %2049 = vmatprep.subr.mxu0 %v705
        %2050 = vmatpush1.msra.mxu0 %v704
        %2051 = vmatprep.subr.mxu0 %v713
        %2052 = vmatpush1.msra.mxu0 %v712
        %2053 = vmatprep.subr.mxu0 %v721
        %2054 = vmatpush1.msra.mxu0 %v720
        %2055 = vmatprep.subr.mxu0 %v729
        %2056 = vmatpush1.msra.mxu0 %v728
        %2057 = vmatprep.subr.mxu0 %v737
        %2058 = vmatpush1.msra.mxu0 %v736
        %2059 = vmatprep.subr.mxu0 %v745
        %2060 = vmatpush1.msra.mxu0 %v744
        %2061 = vmatprep.subr.mxu0 %v753
        %2062 = vmatpush1.msra.mxu0 %v752
        %2063 = vmatprep.subr.mxu0 %v761
        %2064 = vmatpush1.msra.mxu0 %v760
        %2065 = vmatprep.subr.mxu0 %v769
        %2066 = vmatpush1.msra.mxu0 %v768
        %2067 = vmatprep.subr.mxu0 %v777
        %2068 = vmatpush1.msra.mxu0 %v776
        %2069 = vmatprep.subr.mxu0 %v785
        %2070 = vmatpush1.msra.mxu0 %v784
        %2071 = vmatprep.subr.mxu0 %v793
        %2072 = vmatpush1.msra.mxu0 %v792
        %2073 = vmatprep.subr.mxu0 %v801
        %2074 = vmatpush1.msra.mxu0 %v800
        %2075 = vmatprep.subr.mxu0 %v809
        %2076 = vmatpush1.msra.mxu0 %v808
        %2077 = vmatprep.subr.mxu0 %v817
        %2078 = vmatpush1.msra.mxu0 %v816
        %2079 = vmatprep.subr.mxu0 %v825
        %2080 = vmatpush1.msra.mxu0 %v824
        %2081 = vmatprep.mubr.f32.mxu0 %v227
        %2082 = vmatmul.mubr.f32.gmra.mrb[0].mxu0 %v226
        %v2083 = vpop.f32.mrb[0].mxu0
        %v2084 = vadd.f32 %v1971, %v2083
        %v2085 = vpop.f32.mrb[0].mxu0
        %v2086 = vadd.f32 %v1973, %v2085
        %2087 = vmatprep.mubr.f32.mxu0 %v239
        %2088 = vmatmul.mubr.f32.gmra.mrb[0].mxu0 %v238
        %v2089 = vpop.f32.mrb[0].mxu0
        %v2090 = vadd.f32 %v1977, %v2089
        %v2091 = vpop.f32.mrb[0].mxu0
        %v2092 = vadd.f32 %v1979, %v2091
        %2093 = vmatprep.mubr.f32.mxu0 %v251
        %2094 = vmatmul.mubr.f32.gmra.mrb[0].mxu0 %v250
        %v2095 = vpop.f32.mrb[0].mxu0
        %v2096 = vadd.f32 %v1983, %v2095
        %v2097 = vpop.f32.mrb[0].mxu0
        %v2098 = vadd.f32 %v1985, %v2097
        %2099 = vmatprep.mubr.f32.mxu0 %v263
        %2100 = vmatmul.mubr.f32.gmra.mrb[0].mxu0 %v262
        %v2101 = vpop.f32.mrb[0].mxu0
        %v2102 = vadd.f32 %v1989, %v2101
        %v2103 = vpop.f32.mrb[0].mxu0
        %v2104 = vadd.f32 %v1991, %v2103
        %2105 = vmatprep.mubr.f32.mxu0 %v275
        %2106 = vmatmul.mubr.f32.gmra.mrb[0].mxu0 %v274
        %v2107 = vpop.f32.mrb[0].mxu0
        %v2108 = vadd.f32 %v1995, %v2107
        %v2109 = vpop.f32.mrb[0].mxu0
        %v2110 = vadd.f32 %v1997, %v2109
        %2111 = vmatprep.mubr.f32.mxu0 %v287
        %2112 = vmatmul.mubr.f32.gmra.mrb[0].mxu0 %v286
        %v2113 = vpop.f32.mrb[0].mxu0
        %v2114 = vadd.f32 %v2001, %v2113
        %v2115 = vpop.f32.mrb[0].mxu0
        %v2116 = vadd.f32 %v2003, %v2115
        %2117 = vmatprep.mubr.f32.mxu0 %v299
        %2118 = vmatmul.mubr.f32.gmra.mrb[0].mxu0 %v298
        %v2119 = vpop.f32.mrb[0].mxu0
        %v2120 = vadd.f32 %v2007, %v2119
        %v2121 = vpop.f32.mrb[0].mxu0
        %v2122 = vadd.f32 %v2009, %v2121
        %2123 = vmatprep.mubr.f32.mxu0 %v311
        %2124 = vmatmul.mubr.f32.gmra.mrb[0].mxu0 %v310
        %v2125 = vpop.f32.mrb[0].mxu0
        %v2126 = vadd.f32 %v2013, %v2125
        %v2127 = vpop.f32.mrb[0].mxu0
        %v2128 = vadd.f32 %v2015, %v2127
        %2129 = vdwg.mxu0
        %2130 = vmatprep.subr.mxu0 %v833
        %2131 = vmatpush1.msra.mxu0 %v832
        %2132 = vmatprep.subr.mxu0 %v841
        %2133 = vmatpush1.msra.mxu0 %v840
        %2134 = vmatprep.subr.mxu0 %v849
        %2135 = vmatpush1.msra.mxu0 %v848
        %2136 = vmatprep.subr.mxu0 %v857
        %2137 = vmatpush1.msra.mxu0 %v856
        %2138 = vmatprep.subr.mxu0 %v865
        %2139 = vmatpush1.msra.mxu0 %v864
        %2140 = vmatprep.subr.mxu0 %v873
        %2141 = vmatpush1.msra.mxu0 %v872
        %2142 = vmatprep.subr.mxu0 %v881
        %2143 = vmatpush1.msra.mxu0 %v880
        %2144 = vmatprep.subr.mxu0 %v889
        %2145 = vmatpush1.msra.mxu0 %v888
        %2146 = vmatprep.subr.mxu0 %v897
        %2147 = vmatpush1.msra.mxu0 %v896
        %2148 = vmatprep.subr.mxu0 %v905
        %2149 = vmatpush1.msra.mxu0 %v904
        %2150 = vmatprep.subr.mxu0 %v913
        %2151 = vmatpush1.msra.mxu0 %v912
        %2152 = vmatprep.subr.mxu0 %v921
        %2153 = vmatpush1.msra.mxu0 %v920
        %2154 = vmatprep.subr.mxu0 %v929
        %2155 = vmatpush1.msra.mxu0 %v928
        %2156 = vmatprep.subr.mxu0 %v937
        %2157 = vmatpush1.msra.mxu0 %v936
        %2158 = vmatprep.subr.mxu0 %v945
        %2159 = vmatpush1.msra.mxu0 %v944
        %2160 = vmatprep.subr.mxu0 %v953
        %2161 = vmatpush1.msra.mxu0 %v952
        %2162 = vmatprep.subr.mxu0 %v961
        %2163 = vmatpush1.msra.mxu0 %v960
        %2164 = vmatprep.subr.mxu0 %v969
        %2165 = vmatpush1.msra.mxu0 %v968
        %2166 = vmatprep.subr.mxu0 %v977
        %2167 = vmatpush1.msra.mxu0 %v976
        %2168 = vmatprep.subr.mxu0 %v985
        %2169 = vmatpush1.msra.mxu0 %v984
        %2170 = vmatprep.subr.mxu0 %v993
        %2171 = vmatpush1.msra.mxu0 %v992
        %2172 = vmatprep.subr.mxu0 %v1001
        %2173 = vmatpush1.msra.mxu0 %v1000
        %2174 = vmatprep.subr.mxu0 %v1009
        %2175 = vmatpush1.msra.mxu0 %v1008
        %2176 = vmatprep.subr.mxu0 %v1017
        %2177 = vmatpush1.msra.mxu0 %v1016
        %2178 = vmatprep.subr.mxu0 %v1025
        %2179 = vmatpush1.msra.mxu0 %v1024
        %2180 = vmatprep.subr.mxu0 %v1033
        %2181 = vmatpush1.msra.mxu0 %v1032
        %2182 = vmatprep.subr.mxu0 %v1041
        %2183 = vmatpush1.msra.mxu0 %v1040
        %2184 = vmatprep.subr.mxu0 %v1049
        %2185 = vmatpush1.msra.mxu0 %v1048
        %2186 = vmatprep.subr.mxu0 %v1057
        %2187 = vmatpush1.msra.mxu0 %v1056
        %2188 = vmatprep.subr.mxu0 %v1065
        %2189 = vmatpush1.msra.mxu0 %v1064
        %2190 = vmatprep.subr.mxu0 %v1073
        %2191 = vmatpush1.msra.mxu0 %v1072
        %2192 = vmatprep.subr.mxu0 %v1081
        %2193 = vmatpush1.msra.mxu0 %v1080
        %2194 = vmatprep.mubr.f32.mxu0 %v229
        %2195 = vmatmul.mubr.f32.gmra.mrb[0].mxu0 %v228
        %v2196 = vpop.f32.mrb[0].mxu0
        %v2197 = vadd.f32 %v2084, %v2196
        %v2198 = vpop.f32.mrb[0].mxu0
        %v2199 = vadd.f32 %v2086, %v2198
        %2200 = vmatprep.mubr.f32.mxu0 %v241
        %2201 = vmatmul.mubr.f32.gmra.mrb[0].mxu0 %v240
        %v2202 = vpop.f32.mrb[0].mxu0
        %v2203 = vadd.f32 %v2090, %v2202
        %v2204 = vpop.f32.mrb[0].mxu0
        %v2205 = vadd.f32 %v2092, %v2204
        %2206 = vmatprep.mubr.f32.mxu0 %v253
        %2207 = vmatmul.mubr.f32.gmra.mrb[0].mxu0 %v252
        %v2208 = vpop.f32.mrb[0].mxu0
        %v2209 = vadd.f32 %v2096, %v2208
        %v2210 = vpop.f32.mrb[0].mxu0
        %v2211 = vadd.f32 %v2098, %v2210
        %2212 = vmatprep.mubr.f32.mxu0 %v265
        %2213 = vmatmul.mubr.f32.gmra.mrb[0].mxu0 %v264
        %v2214 = vpop.f32.mrb[0].mxu0
        %v2215 = vadd.f32 %v2102, %v2214
        %v2216 = vpop.f32.mrb[0].mxu0
        %v2217 = vadd.f32 %v2104, %v2216
        %2218 = vmatprep.mubr.f32.mxu0 %v277
        %2219 = vmatmul.mubr.f32.gmra.mrb[0].mxu0 %v276
        %v2220 = vpop.f32.mrb[0].mxu0
        %v2221 = vadd.f32 %v2108, %v2220
        %v2222 = vpop.f32.mrb[0].mxu0
        %v2223 = vadd.f32 %v2110, %v2222
        %2224 = vmatprep.mubr.f32.mxu0 %v289
        %2225 = vmatmul.mubr.f32.gmra.mrb[0].mxu0 %v288
        %v2226 = vpop.f32.mrb[0].mxu0
        %v2227 = vadd.f32 %v2114, %v2226
        %v2228 = vpop.f32.mrb[0].mxu0
        %v2229 = vadd.f32 %v2116, %v2228
        %2230 = vmatprep.mubr.f32.mxu0 %v301
        %2231 = vmatmul.mubr.f32.gmra.mrb[0].mxu0 %v300
        %v2232 = vpop.f32.mrb[0].mxu0
        %v2233 = vadd.f32 %v2120, %v2232
        %v2234 = vpop.f32.mrb[0].mxu0
        %v2235 = vadd.f32 %v2122, %v2234
        %2236 = vmatprep.mubr.f32.mxu0 %v313
        %2237 = vmatmul.mubr.f32.gmra.mrb[0].mxu0 %v312
        %v2238 = vpop.f32.mrb[0].mxu0
        %v2239 = vadd.f32 %v2126, %v2238
        %v2240 = vpop.f32.mrb[0].mxu0
        %v2241 = vadd.f32 %v2128, %v2240
        %2242 = vdwg.mxu0
        %2243 = vmatprep.subr.mxu0 %v1089
        %2244 = vmatpush1.msra.mxu0 %v1088
        %2245 = vmatprep.subr.mxu0 %v1097
        %2246 = vmatpush1.msra.mxu0 %v1096
        %2247 = vmatprep.subr.mxu0 %v1105
        %2248 = vmatpush1.msra.mxu0 %v1104
        %2249 = vmatprep.subr.mxu0 %v1113
        %2250 = vmatpush1.msra.mxu0 %v1112
        %2251 = vmatprep.subr.mxu0 %v1121
        %2252 = vmatpush1.msra.mxu0 %v1120
        %2253 = vmatprep.subr.mxu0 %v1129
        %2254 = vmatpush1.msra.mxu0 %v1128
        %2255 = vmatprep.subr.mxu0 %v1137
        %2256 = vmatpush1.msra.mxu0 %v1136
        %2257 = vmatprep.subr.mxu0 %v1145
        %2258 = vmatpush1.msra.mxu0 %v1144
        %2259 = vmatprep.subr.mxu0 %v1153
        %2260 = vmatpush1.msra.mxu0 %v1152
        %2261 = vmatprep.subr.mxu0 %v1161
        %2262 = vmatpush1.msra.mxu0 %v1160
        %2263 = vmatprep.subr.mxu0 %v1169
        %2264 = vmatpush1.msra.mxu0 %v1168
        %2265 = vmatprep.subr.mxu0 %v1177
        %2266 = vmatpush1.msra.mxu0 %v1176
        %2267 = vmatprep.subr.mxu0 %v1185
        %2268 = vmatpush1.msra.mxu0 %v1184
        %2269 = vmatprep.subr.mxu0 %v1193
        %2270 = vmatpush1.msra.mxu0 %v1192
        %2271 = vmatprep.subr.mxu0 %v1201
        %2272 = vmatpush1.msra.mxu0 %v1200
        %2273 = vmatprep.subr.mxu0 %v1209
        %2274 = vmatpush1.msra.mxu0 %v1208
        %2275 = vmatprep.subr.mxu0 %v1217
        %2276 = vmatpush1.msra.mxu0 %v1216
        %2277 = vmatprep.subr.mxu0 %v1225
        %2278 = vmatpush1.msra.mxu0 %v1224
        %2279 = vmatprep.subr.mxu0 %v1233
        %2280 = vmatpush1.msra.mxu0 %v1232
        %2281 = vmatprep.subr.mxu0 %v1241
        %2282 = vmatpush1.msra.mxu0 %v1240
        %2283 = vmatprep.subr.mxu0 %v1249
        %2284 = vmatpush1.msra.mxu0 %v1248
        %2285 = vmatprep.subr.mxu0 %v1257
        %2286 = vmatpush1.msra.mxu0 %v1256
        %2287 = vmatprep.subr.mxu0 %v1265
        %2288 = vmatpush1.msra.mxu0 %v1264
        %2289 = vmatprep.subr.mxu0 %v1273
        %2290 = vmatpush1.msra.mxu0 %v1272
        %2291 = vmatprep.subr.mxu0 %v1281
        %2292 = vmatpush1.msra.mxu0 %v1280
        %2293 = vmatprep.subr.mxu0 %v1289
        %2294 = vmatpush1.msra.mxu0 %v1288
        %2295 = vmatprep.subr.mxu0 %v1297
        %2296 = vmatpush1.msra.mxu0 %v1296
        %2297 = vmatprep.subr.mxu0 %v1305
        %2298 = vmatpush1.msra.mxu0 %v1304
        %2299 = vmatprep.subr.mxu0 %v1313
        %2300 = vmatpush1.msra.mxu0 %v1312
        %2301 = vmatprep.subr.mxu0 %v1321
        %2302 = vmatpush1.msra.mxu0 %v1320
        %2303 = vmatprep.subr.mxu0 %v1329
        %2304 = vmatpush1.msra.mxu0 %v1328
        %2305 = vmatprep.subr.mxu0 %v1337
        %2306 = vmatpush1.msra.mxu0 %v1336
        %2307 = vmatprep.mubr.f32.mxu0 %v231
        %2308 = vmatmul.mubr.f32.gmra.mrb[0].mxu0 %v230
        %v2309 = vpop.f32.mrb[0].mxu0
        %v2310 = vadd.f32 %v2197, %v2309
        %v2311 = vpop.f32.mrb[0].mxu0
        %v2312 = vadd.f32 %v2199, %v2311
        %2313 = vmatprep.mubr.f32.mxu0 %v243
        %2314 = vmatmul.mubr.f32.gmra.mrb[0].mxu0 %v242
        %v2315 = vpop.f32.mrb[0].mxu0
        %v2316 = vadd.f32 %v2203, %v2315
        %v2317 = vpop.f32.mrb[0].mxu0
        %v2318 = vadd.f32 %v2205, %v2317
        %2319 = vmatprep.mubr.f32.mxu0 %v255
        %2320 = vmatmul.mubr.f32.gmra.mrb[0].mxu0 %v254
        %v2321 = vpop.f32.mrb[0].mxu0
        %v2322 = vadd.f32 %v2209, %v2321
        %v2323 = vpop.f32.mrb[0].mxu0
        %v2324 = vadd.f32 %v2211, %v2323
        %2325 = vmatprep.mubr.f32.mxu0 %v267
        %2326 = vmatmul.mubr.f32.gmra.mrb[0].mxu0 %v266
        %v2327 = vpop.f32.mrb[0].mxu0
        %v2328 = vadd.f32 %v2215, %v2327
        %v2329 = vpop.f32.mrb[0].mxu0
        %v2330 = vadd.f32 %v2217, %v2329
        %2331 = vmatprep.mubr.f32.mxu0 %v279
        %2332 = vmatmul.mubr.f32.gmra.mrb[0].mxu0 %v278
        %v2333 = vpop.f32.mrb[0].mxu0
        %v2334 = vadd.f32 %v2221, %v2333
        %v2335 = vpop.f32.mrb[0].mxu0
        %v2336 = vadd.f32 %v2223, %v2335
        %2337 = vmatprep.mubr.f32.mxu0 %v291
        %2338 = vmatmul.mubr.f32.gmra.mrb[0].mxu0 %v290
        %v2339 = vpop.f32.mrb[0].mxu0
        %v2340 = vadd.f32 %v2227, %v2339
        %v2341 = vpop.f32.mrb[0].mxu0
        %v2342 = vadd.f32 %v2229, %v2341
        %2343 = vmatprep.mubr.f32.mxu0 %v303
        %2344 = vmatmul.mubr.f32.gmra.mrb[0].mxu0 %v302
        %v2345 = vpop.f32.mrb[0].mxu0
        %v2346 = vadd.f32 %v2233, %v2345
        %v2347 = vpop.f32.mrb[0].mxu0
        %v2348 = vadd.f32 %v2235, %v2347
        %2349 = vmatprep.mubr.f32.mxu0 %v315
        %2350 = vmatmul.mubr.f32.gmra.mrb[0].mxu0 %v314
        %v2351 = vpop.f32.mrb[0].mxu0
        %v2352 = vadd.f32 %v2239, %v2351
        %v2353 = vpop.f32.mrb[0].mxu0
        %v2354 = vadd.f32 %v2241, %v2353
        %2355 = vdwg.mxu0
        %2356 = vmatprep.subr.mxu0 %v1345
        %2357 = vmatpush1.msra.mxu0 %v1344
        %2358 = vmatprep.subr.mxu0 %v1353
        %2359 = vmatpush1.msra.mxu0 %v1352
        %2360 = vmatprep.subr.mxu0 %v1361
        %2361 = vmatpush1.msra.mxu0 %v1360
        %2362 = vmatprep.subr.mxu0 %v1369
        %2363 = vmatpush1.msra.mxu0 %v1368
        %2364 = vmatprep.subr.mxu0 %v1377
        %2365 = vmatpush1.msra.mxu0 %v1376
        %2366 = vmatprep.subr.mxu0 %v1385
        %2367 = vmatpush1.msra.mxu0 %v1384
        %2368 = vmatprep.subr.mxu0 %v1393
        %2369 = vmatpush1.msra.mxu0 %v1392
        %2370 = vmatprep.subr.mxu0 %v1401
        %2371 = vmatpush1.msra.mxu0 %v1400
        %2372 = vmatprep.subr.mxu0 %v1409
        %2373 = vmatpush1.msra.mxu0 %v1408
        %2374 = vmatprep.subr.mxu0 %v1417
        %2375 = vmatpush1.msra.mxu0 %v1416
        %2376 = vmatprep.subr.mxu0 %v1425
        %2377 = vmatpush1.msra.mxu0 %v1424
        %2378 = vmatprep.subr.mxu0 %v1433
        %2379 = vmatpush1.msra.mxu0 %v1432
        %2380 = vmatprep.subr.mxu0 %v1441
        %2381 = vmatpush1.msra.mxu0 %v1440
        %2382 = vmatprep.subr.mxu0 %v1449
        %2383 = vmatpush1.msra.mxu0 %v1448
        %2384 = vmatprep.subr.mxu0 %v1457
        %2385 = vmatpush1.msra.mxu0 %v1456
        %2386 = vmatprep.subr.mxu0 %v1465
        %2387 = vmatpush1.msra.mxu0 %v1464
        %2388 = vmatprep.subr.mxu0 %v1473
        %2389 = vmatpush1.msra.mxu0 %v1472
        %2390 = vmatprep.subr.mxu0 %v1481
        %2391 = vmatpush1.msra.mxu0 %v1480
        %2392 = vmatprep.subr.mxu0 %v1489
        %2393 = vmatpush1.msra.mxu0 %v1488
        %2394 = vmatprep.subr.mxu0 %v1497
        %2395 = vmatpush1.msra.mxu0 %v1496
        %2396 = vmatprep.subr.mxu0 %v1505
        %2397 = vmatpush1.msra.mxu0 %v1504
        %2398 = vmatprep.subr.mxu0 %v1513
        %2399 = vmatpush1.msra.mxu0 %v1512
        %2400 = vmatprep.subr.mxu0 %v1521
        %2401 = vmatpush1.msra.mxu0 %v1520
        %2402 = vmatprep.subr.mxu0 %v1529
        %2403 = vmatpush1.msra.mxu0 %v1528
        %2404 = vmatprep.subr.mxu0 %v1537
        %2405 = vmatpush1.msra.mxu0 %v1536
        %2406 = vmatprep.subr.mxu0 %v1545
        %2407 = vmatpush1.msra.mxu0 %v1544
        %2408 = vmatprep.subr.mxu0 %v1553
        %2409 = vmatpush1.msra.mxu0 %v1552
        %2410 = vmatprep.subr.mxu0 %v1561
        %2411 = vmatpush1.msra.mxu0 %v1560
        %2412 = vmatprep.subr.mxu0 %v1569
        %2413 = vmatpush1.msra.mxu0 %v1568
        %2414 = vmatprep.subr.mxu0 %v1577
        %2415 = vmatpush1.msra.mxu0 %v1576
        %2416 = vmatprep.subr.mxu0 %v1585
        %2417 = vmatpush1.msra.mxu0 %v1584
        %2418 = vmatprep.subr.mxu0 %v1593
        %2419 = vmatpush1.msra.mxu0 %v1592
        %2420 = vmatprep.mubr.f32.mxu0 %v233
        %2421 = vmatmul.mubr.f32.gmra.mrb[0].mxu0 %v232
        %v2422 = vpop.f32.mrb[0].mxu0
        %v2423 = vadd.f32 %v2310, %v2422
        %v2424 = vpop.f32.mrb[0].mxu0
        %v2425 = vadd.f32 %v2312, %v2424
        %2426 = vmatprep.mubr.f32.mxu0 %v245
        %2427 = vmatmul.mubr.f32.gmra.mrb[0].mxu0 %v244
        %v2428 = vpop.f32.mrb[0].mxu0
        %v2429 = vadd.f32 %v2316, %v2428
        %v2430 = vpop.f32.mrb[0].mxu0
        %v2431 = vadd.f32 %v2318, %v2430
        %2432 = vmatprep.mubr.f32.mxu0 %v257
        %2433 = vmatmul.mubr.f32.gmra.mrb[0].mxu0 %v256
        %v2434 = vpop.f32.mrb[0].mxu0
        %v2435 = vadd.f32 %v2322, %v2434
        %v2436 = vpop.f32.mrb[0].mxu0
        %v2437 = vadd.f32 %v2324, %v2436
        %2438 = vmatprep.mubr.f32.mxu0 %v269
        %2439 = vmatmul.mubr.f32.gmra.mrb[0].mxu0 %v268
        %v2440 = vpop.f32.mrb[0].mxu0
        %v2441 = vadd.f32 %v2328, %v2440
        %v2442 = vpop.f32.mrb[0].mxu0
        %v2443 = vadd.f32 %v2330, %v2442
        %2444 = vmatprep.mubr.f32.mxu0 %v281
        %2445 = vmatmul.mubr.f32.gmra.mrb[0].mxu0 %v280
        %v2446 = vpop.f32.mrb[0].mxu0
        %v2447 = vadd.f32 %v2334, %v2446
        %v2448 = vpop.f32.mrb[0].mxu0
        %v2449 = vadd.f32 %v2336, %v2448
        %2450 = vmatprep.mubr.f32.mxu0 %v293
        %2451 = vmatmul.mubr.f32.gmra.mrb[0].mxu0 %v292
        %v2452 = vpop.f32.mrb[0].mxu0
        %v2453 = vadd.f32 %v2340, %v2452
        %v2454 = vpop.f32.mrb[0].mxu0
        %v2455 = vadd.f32 %v2342, %v2454
        %2456 = vmatprep.mubr.f32.mxu0 %v305
        %2457 = vmatmul.mubr.f32.gmra.mrb[0].mxu0 %v304
        %v2458 = vpop.f32.mrb[0].mxu0
        %v2459 = vadd.f32 %v2346, %v2458
        %v2460 = vpop.f32.mrb[0].mxu0
        %v2461 = vadd.f32 %v2348, %v2460
        %2462 = vmatprep.mubr.f32.mxu0 %v317
        %2463 = vmatmul.mubr.f32.gmra.mrb[0].mxu0 %v316
        %v2464 = vpop.f32.mrb[0].mxu0
        %v2465 = vadd.f32 %v2352, %v2464
        %v2466 = vpop.f32.mrb[0].mxu0
        %v2467 = vadd.f32 %v2354, %v2466
        %2468 = vdwg.mxu0
        %2469 = vmatprep.subr.mxu0 %v1601
        %2470 = vmatpush1.msra.mxu0 %v1600
        %2471 = vmatprep.subr.mxu0 %v1609
        %2472 = vmatpush1.msra.mxu0 %v1608
        %2473 = vmatprep.subr.mxu0 %v1617
        %2474 = vmatpush1.msra.mxu0 %v1616
        %2475 = vmatprep.subr.mxu0 %v1625
        %2476 = vmatpush1.msra.mxu0 %v1624
        %2477 = vmatprep.subr.mxu0 %v1633
        %2478 = vmatpush1.msra.mxu0 %v1632
        %2479 = vmatprep.subr.mxu0 %v1641
        %2480 = vmatpush1.msra.mxu0 %v1640
        %2481 = vmatprep.subr.mxu0 %v1649
        %2482 = vmatpush1.msra.mxu0 %v1648
        %2483 = vmatprep.subr.mxu0 %v1657
        %2484 = vmatpush1.msra.mxu0 %v1656
        %2485 = vmatprep.subr.mxu0 %v1665
        %2486 = vmatpush1.msra.mxu0 %v1664
        %2487 = vmatprep.subr.mxu0 %v1673
        %2488 = vmatpush1.msra.mxu0 %v1672
        %2489 = vmatprep.subr.mxu0 %v1681
        %2490 = vmatpush1.msra.mxu0 %v1680
        %2491 = vmatprep.subr.mxu0 %v1689
        %2492 = vmatpush1.msra.mxu0 %v1688
        %2493 = vmatprep.subr.mxu0 %v1697
        %2494 = vmatpush1.msra.mxu0 %v1696
        %2495 = vmatprep.subr.mxu0 %v1705
        %2496 = vmatpush1.msra.mxu0 %v1704
        %2497 = vmatprep.subr.mxu0 %v1713
        %2498 = vmatpush1.msra.mxu0 %v1712
        %2499 = vmatprep.subr.mxu0 %v1721
        %2500 = vmatpush1.msra.mxu0 %v1720
        %2501 = vmatprep.subr.mxu0 %v1729
        %2502 = vmatpush1.msra.mxu0 %v1728
        %2503 = vmatprep.subr.mxu0 %v1737
        %2504 = vmatpush1.msra.mxu0 %v1736
        %2505 = vmatprep.subr.mxu0 %v1745
        %2506 = vmatpush1.msra.mxu0 %v1744
        %2507 = vmatprep.subr.mxu0 %v1753
        %2508 = vmatpush1.msra.mxu0 %v1752
        %2509 = vmatprep.subr.mxu0 %v1761
        %2510 = vmatpush1.msra.mxu0 %v1760
        %2511 = vmatprep.subr.mxu0 %v1769
        %2512 = vmatpush1.msra.mxu0 %v1768
        %2513 = vmatprep.subr.mxu0 %v1777
        %2514 = vmatpush1.msra.mxu0 %v1776
        %2515 = vmatprep.subr.mxu0 %v1785
        %2516 = vmatpush1.msra.mxu0 %v1784
        %2517 = vmatprep.subr.mxu0 %v1793
        %2518 = vmatpush1.msra.mxu0 %v1792
        %2519 = vmatprep.subr.mxu0 %v1801
        %2520 = vmatpush1.msra.mxu0 %v1800
        %2521 = vmatprep.subr.mxu0 %v1809
        %2522 = vmatpush1.msra.mxu0 %v1808
        %2523 = vmatprep.subr.mxu0 %v1817
        %2524 = vmatpush1.msra.mxu0 %v1816
        %2525 = vmatprep.subr.mxu0 %v1825
        %2526 = vmatpush1.msra.mxu0 %v1824
        %2527 = vmatprep.subr.mxu0 %v1833
        %2528 = vmatpush1.msra.mxu0 %v1832
        %2529 = vmatprep.subr.mxu0 %v1841
        %2530 = vmatpush1.msra.mxu0 %v1840
        %2531 = vmatprep.subr.mxu0 %v1849
        %2532 = vmatpush1.msra.mxu0 %v1848
        %2533 = vmatprep.mubr.f32.mxu0 %v235
        %2534 = vmatmul.mubr.f32.gmra.mrb[0].mxu0 %v234
        %v2535 = vpop.f32.mrb[0].mxu0
        %v2536 = vadd.f32 %v2423, %v2535
        %v2537 = vpop.f32.mrb[0].mxu0
        %v2538 = vadd.f32 %v2425, %v2537
        %2539 = vmatprep.mubr.f32.mxu0 %v247
        %2540 = vmatmul.mubr.f32.gmra.mrb[0].mxu0 %v246
        %v2541 = vpop.f32.mrb[0].mxu0
        %v2542 = vadd.f32 %v2429, %v2541
        %v2543 = vpop.f32.mrb[0].mxu0
        %v2544 = vadd.f32 %v2431, %v2543
        %2545 = vmatprep.mubr.f32.mxu0 %v259
        %2546 = vmatmul.mubr.f32.gmra.mrb[0].mxu0 %v258
        %v2547 = vpop.f32.mrb[0].mxu0
        %v2548 = vadd.f32 %v2435, %v2547
        %v2549 = vpop.f32.mrb[0].mxu0
        %v2550 = vadd.f32 %v2437, %v2549
        %2551 = vmatprep.mubr.f32.mxu0 %v271
        %2552 = vmatmul.mubr.f32.gmra.mrb[0].mxu0 %v270
        %v2553 = vpop.f32.mrb[0].mxu0
        %v2554 = vadd.f32 %v2441, %v2553
        %v2555 = vpop.f32.mrb[0].mxu0
        %v2556 = vadd.f32 %v2443, %v2555
        %2557 = vmatprep.mubr.f32.mxu0 %v283
        %2558 = vmatmul.mubr.f32.gmra.mrb[0].mxu0 %v282
        %v2559 = vpop.f32.mrb[0].mxu0
        %v2560 = vadd.f32 %v2447, %v2559
        %v2561 = vpop.f32.mrb[0].mxu0
        %v2562 = vadd.f32 %v2449, %v2561
        %2563 = vmatprep.mubr.f32.mxu0 %v295
        %2564 = vmatmul.mubr.f32.gmra.mrb[0].mxu0 %v294
        %v2565 = vpop.f32.mrb[0].mxu0
        %v2566 = vadd.f32 %v2453, %v2565
        %v2567 = vpop.f32.mrb[0].mxu0
        %v2568 = vadd.f32 %v2455, %v2567
        %2569 = vmatprep.mubr.f32.mxu0 %v307
        %2570 = vmatmul.mubr.f32.gmra.mrb[0].mxu0 %v306
        %v2571 = vpop.f32.mrb[0].mxu0
        %v2572 = vadd.f32 %v2459, %v2571
        %v2573 = vpop.f32.mrb[0].mxu0
        %v2574 = vadd.f32 %v2461, %v2573
        %2575 = vmatprep.mubr.f32.mxu0 %v319
        %2576 = vmatmul.mubr.f32.gmra.mrb[0].mxu0 %v318
        %v2577 = vpop.f32.mrb[0].mxu0
        %v2578 = vadd.f32 %v2465, %v2577
        %v2579 = vpop.f32.mrb[0].mxu0
        %v2580 = vadd.f32 %v2467, %v2579
        %2581 = vdwg.mxu0
        %2582 = vmatprep.subr.mxu0 %v323
        %2583 = vmatpush1.msra.mxu0 %v322
        %2584 = vmatprep.subr.mxu0 %v331
        %2585 = vmatpush1.msra.mxu0 %v330
        %2586 = vmatprep.subr.mxu0 %v339
        %2587 = vmatpush1.msra.mxu0 %v338
        %2588 = vmatprep.subr.mxu0 %v347
        %2589 = vmatpush1.msra.mxu0 %v346
        %2590 = vmatprep.subr.mxu0 %v355
        %2591 = vmatpush1.msra.mxu0 %v354
        %2592 = vmatprep.subr.mxu0 %v363
        %2593 = vmatpush1.msra.mxu0 %v362
        %2594 = vmatprep.subr.mxu0 %v371
        %2595 = vmatpush1.msra.mxu0 %v370
        %2596 = vmatprep.subr.mxu0 %v379
        %2597 = vmatpush1.msra.mxu0 %v378
        %2598 = vmatprep.subr.mxu0 %v387
        %2599 = vmatpush1.msra.mxu0 %v386
        %2600 = vmatprep.subr.mxu0 %v395
        %2601 = vmatpush1.msra.mxu0 %v394
        %2602 = vmatprep.subr.mxu0 %v403
        %2603 = vmatpush1.msra.mxu0 %v402
        %2604 = vmatprep.subr.mxu0 %v411
        %2605 = vmatpush1.msra.mxu0 %v410
        %2606 = vmatprep.subr.mxu0 %v419
        %2607 = vmatpush1.msra.mxu0 %v418
        %2608 = vmatprep.subr.mxu0 %v427
        %2609 = vmatpush1.msra.mxu0 %v426
        %2610 = vmatprep.subr.mxu0 %v435
        %2611 = vmatpush1.msra.mxu0 %v434
        %2612 = vmatprep.subr.mxu0 %v443
        %2613 = vmatpush1.msra.mxu0 %v442
        %2614 = vmatprep.subr.mxu0 %v451
        %2615 = vmatpush1.msra.mxu0 %v450
        %2616 = vmatprep.subr.mxu0 %v459
        %2617 = vmatpush1.msra.mxu0 %v458
        %2618 = vmatprep.subr.mxu0 %v467
        %2619 = vmatpush1.msra.mxu0 %v466
        %2620 = vmatprep.subr.mxu0 %v475
        %2621 = vmatpush1.msra.mxu0 %v474
        %2622 = vmatprep.subr.mxu0 %v483
        %2623 = vmatpush1.msra.mxu0 %v482
        %2624 = vmatprep.subr.mxu0 %v491
        %2625 = vmatpush1.msra.mxu0 %v490
        %2626 = vmatprep.subr.mxu0 %v499
        %2627 = vmatpush1.msra.mxu0 %v498
        %2628 = vmatprep.subr.mxu0 %v507
        %2629 = vmatpush1.msra.mxu0 %v506
        %2630 = vmatprep.subr.mxu0 %v515
        %2631 = vmatpush1.msra.mxu0 %v514
        %2632 = vmatprep.subr.mxu0 %v523
        %2633 = vmatpush1.msra.mxu0 %v522
        %2634 = vmatprep.subr.mxu0 %v531
        %2635 = vmatpush1.msra.mxu0 %v530
        %2636 = vmatprep.subr.mxu0 %v539
        %2637 = vmatpush1.msra.mxu0 %v538
        %2638 = vmatprep.subr.mxu0 %v547
        %2639 = vmatpush1.msra.mxu0 %v546
        %2640 = vmatprep.subr.mxu0 %v555
        %2641 = vmatpush1.msra.mxu0 %v554
        %2642 = vmatprep.subr.mxu0 %v563
        %2643 = vmatpush1.msra.mxu0 %v562
        %2644 = vmatprep.subr.mxu0 %v571
        %2645 = vmatpush1.msra.mxu0 %v570
        %2646 = vmatprep.mubr.f32.mxu0 %v225
        %2647 = vmatmul.mubr.f32.gmra.mrb[0].mxu0 %v224
        %v2648 = vpop.f32.mrb[0].mxu0
        %v2649 = vadd.f32 %v1867, %v2648
        %v2650 = vpop.f32.mrb[0].mxu0
        %v2651 = vadd.f32 %v1867, %v2650
        %2652 = vmatprep.mubr.f32.mxu0 %v237
        %2653 = vmatmul.mubr.f32.gmra.mrb[0].mxu0 %v236
        %v2654 = vpop.f32.mrb[0].mxu0
        %v2655 = vadd.f32 %v1872, %v2654
        %v2656 = vpop.f32.mrb[0].mxu0
        %v2657 = vadd.f32 %v1872, %v2656
        %2658 = vmatprep.mubr.f32.mxu0 %v249
        %2659 = vmatmul.mubr.f32.gmra.mrb[0].mxu0 %v248
        %v2660 = vpop.f32.mrb[0].mxu0
        %v2661 = vadd.f32 %v1877, %v2660
        %v2662 = vpop.f32.mrb[0].mxu0
        %v2663 = vadd.f32 %v1877, %v2662
        %2664 = vmatprep.mubr.f32.mxu0 %v261
        %2665 = vmatmul.mubr.f32.gmra.mrb[0].mxu0 %v260
        %v2666 = vpop.f32.mrb[0].mxu0
        %v2667 = vadd.f32 %v1882, %v2666
        %v2668 = vpop.f32.mrb[0].mxu0
        %v2669 = vadd.f32 %v1882, %v2668
        %2670 = vmatprep.mubr.f32.mxu0 %v273
        %2671 = vmatmul.mubr.f32.gmra.mrb[0].mxu0 %v272
        %v2672 = vpop.f32.mrb[0].mxu0
        %v2673 = vadd.f32 %v1887, %v2672
        %v2674 = vpop.f32.mrb[0].mxu0
        %v2675 = vadd.f32 %v1887, %v2674
        %2676 = vmatprep.mubr.f32.mxu0 %v285
        %2677 = vmatmul.mubr.f32.gmra.mrb[0].mxu0 %v284
        %v2678 = vpop.f32.mrb[0].mxu0
        %v2679 = vadd.f32 %v1892, %v2678
        %v2680 = vpop.f32.mrb[0].mxu0
        %v2681 = vadd.f32 %v1892, %v2680
        %2682 = vmatprep.mubr.f32.mxu0 %v297
        %2683 = vmatmul.mubr.f32.gmra.mrb[0].mxu0 %v296
        %v2684 = vpop.f32.mrb[0].mxu0
        %v2685 = vadd.f32 %v1897, %v2684
        %v2686 = vpop.f32.mrb[0].mxu0
        %v2687 = vadd.f32 %v1897, %v2686
        %2688 = vmatprep.mubr.f32.mxu0 %v309
        %2689 = vmatmul.mubr.f32.gmra.mrb[0].mxu0 %v308
        %v2690 = vpop.f32.mrb[0].mxu0
        %v2691 = vadd.f32 %v1902, %v2690
        %v2692 = vpop.f32.mrb[0].mxu0
        %v2693 = vadd.f32 %v1902, %v2692
        %2694 = vdwg.mxu0
        %2695 = vmatprep.subr.mxu0 %v579
        %2696 = vmatpush1.msra.mxu0 %v578
        %2697 = vmatprep.subr.mxu0 %v587
        %2698 = vmatpush1.msra.mxu0 %v586
        %2699 = vmatprep.subr.mxu0 %v595
        %2700 = vmatpush1.msra.mxu0 %v594
        %2701 = vmatprep.subr.mxu0 %v603
        %2702 = vmatpush1.msra.mxu0 %v602
        %2703 = vmatprep.subr.mxu0 %v611
        %2704 = vmatpush1.msra.mxu0 %v610
        %2705 = vmatprep.subr.mxu0 %v619
        %2706 = vmatpush1.msra.mxu0 %v618
        %2707 = vmatprep.subr.mxu0 %v627
        %2708 = vmatpush1.msra.mxu0 %v626
        %2709 = vmatprep.subr.mxu0 %v635
        %2710 = vmatpush1.msra.mxu0 %v634
        %2711 = vmatprep.subr.mxu0 %v643
        %2712 = vmatpush1.msra.mxu0 %v642
        %2713 = vmatprep.subr.mxu0 %v651
        %2714 = vmatpush1.msra.mxu0 %v650
        %2715 = vmatprep.subr.mxu0 %v659
        %2716 = vmatpush1.msra.mxu0 %v658
        %2717 = vmatprep.subr.mxu0 %v667
        %2718 = vmatpush1.msra.mxu0 %v666
        %2719 = vmatprep.subr.mxu0 %v675
        %2720 = vmatpush1.msra.mxu0 %v674
        %2721 = vmatprep.subr.mxu0 %v683
        %2722 = vmatpush1.msra.mxu0 %v682
        %2723 = vmatprep.subr.mxu0 %v691
        %2724 = vmatpush1.msra.mxu0 %v690
        %2725 = vmatprep.subr.mxu0 %v699
        %2726 = vmatpush1.msra.mxu0 %v698
        %2727 = vmatprep.subr.mxu0 %v707
        %2728 = vmatpush1.msra.mxu0 %v706
        %2729 = vmatprep.subr.mxu0 %v715
        %2730 = vmatpush1.msra.mxu0 %v714
        %2731 = vmatprep.subr.mxu0 %v723
        %2732 = vmatpush1.msra.mxu0 %v722
        %2733 = vmatprep.subr.mxu0 %v731
        %2734 = vmatpush1.msra.mxu0 %v730
        %2735 = vmatprep.subr.mxu0 %v739
        %2736 = vmatpush1.msra.mxu0 %v738
        %2737 = vmatprep.subr.mxu0 %v747
        %2738 = vmatpush1.msra.mxu0 %v746
        %2739 = vmatprep.subr.mxu0 %v755
        %2740 = vmatpush1.msra.mxu0 %v754
        %2741 = vmatprep.subr.mxu0 %v763
        %2742 = vmatpush1.msra.mxu0 %v762
        %2743 = vmatprep.subr.mxu0 %v771
        %2744 = vmatpush1.msra.mxu0 %v770
        %2745 = vmatprep.subr.mxu0 %v779
        %2746 = vmatpush1.msra.mxu0 %v778
        %2747 = vmatprep.subr.mxu0 %v787
        %2748 = vmatpush1.msra.mxu0 %v786
        %2749 = vmatprep.subr.mxu0 %v795
        %2750 = vmatpush1.msra.mxu0 %v794
        %2751 = vmatprep.subr.mxu0 %v803
        %2752 = vmatpush1.msra.mxu0 %v802
        %2753 = vmatprep.subr.mxu0 %v811
        %2754 = vmatpush1.msra.mxu0 %v810
        %2755 = vmatprep.subr.mxu0 %v819
        %2756 = vmatpush1.msra.mxu0 %v818
        %2757 = vmatprep.subr.mxu0 %v827
        %2758 = vmatpush1.msra.mxu0 %v826
        %2759 = vmatprep.mubr.f32.mxu0 %v227
        %2760 = vmatmul.mubr.f32.gmra.mrb[0].mxu0 %v226
        %v2761 = vpop.f32.mrb[0].mxu0
        %v2762 = vadd.f32 %v2649, %v2761
        %v2763 = vpop.f32.mrb[0].mxu0
        %v2764 = vadd.f32 %v2651, %v2763
        %2765 = vmatprep.mubr.f32.mxu0 %v239
        %2766 = vmatmul.mubr.f32.gmra.mrb[0].mxu0 %v238
        %v2767 = vpop.f32.mrb[0].mxu0
        %v2768 = vadd.f32 %v2655, %v2767
        %v2769 = vpop.f32.mrb[0].mxu0
        %v2770 = vadd.f32 %v2657, %v2769
        %2771 = vmatprep.mubr.f32.mxu0 %v251
        %2772 = vmatmul.mubr.f32.gmra.mrb[0].mxu0 %v250
        %v2773 = vpop.f32.mrb[0].mxu0
        %v2774 = vadd.f32 %v2661, %v2773
        %v2775 = vpop.f32.mrb[0].mxu0
        %v2776 = vadd.f32 %v2663, %v2775
        %2777 = vmatprep.mubr.f32.mxu0 %v263
        %2778 = vmatmul.mubr.f32.gmra.mrb[0].mxu0 %v262
        %v2779 = vpop.f32.mrb[0].mxu0
        %v2780 = vadd.f32 %v2667, %v2779
        %v2781 = vpop.f32.mrb[0].mxu0
        %v2782 = vadd.f32 %v2669, %v2781
        %2783 = vmatprep.mubr.f32.mxu0 %v275
        %2784 = vmatmul.mubr.f32.gmra.mrb[0].mxu0 %v274
        %v2785 = vpop.f32.mrb[0].mxu0
        %v2786 = vadd.f32 %v2673, %v2785
        %v2787 = vpop.f32.mrb[0].mxu0
        %v2788 = vadd.f32 %v2675, %v2787
        %2789 = vmatprep.mubr.f32.mxu0 %v287
        %2790 = vmatmul.mubr.f32.gmra.mrb[0].mxu0 %v286
        %v2791 = vpop.f32.mrb[0].mxu0
        %v2792 = vadd.f32 %v2679, %v2791
        %v2793 = vpop.f32.mrb[0].mxu0
        %v2794 = vadd.f32 %v2681, %v2793
        %2795 = vmatprep.mubr.f32.mxu0 %v299
        %2796 = vmatmul.mubr.f32.gmra.mrb[0].mxu0 %v298
        %v2797 = vpop.f32.mrb[0].mxu0
        %v2798 = vadd.f32 %v2685, %v2797
        %v2799 = vpop.f32.mrb[0].mxu0
        %v2800 = vadd.f32 %v2687, %v2799
        %2801 = vmatprep.mubr.f32.mxu0 %v311
        %2802 = vmatmul.mubr.f32.gmra.mrb[0].mxu0 %v310
        %v2803 = vpop.f32.mrb[0].mxu0
        %v2804 = vadd.f32 %v2691, %v2803
        %v2805 = vpop.f32.mrb[0].mxu0
        %v2806 = vadd.f32 %v2693, %v2805
        %2807 = vdwg.mxu0
        %2808 = vmatprep.subr.mxu0 %v835
        %2809 = vmatpush1.msra.mxu0 %v834
        %2810 = vmatprep.subr.mxu0 %v843
        %2811 = vmatpush1.msra.mxu0 %v842
        %2812 = vmatprep.subr.mxu0 %v851
        %2813 = vmatpush1.msra.mxu0 %v850
        %2814 = vmatprep.subr.mxu0 %v859
        %2815 = vmatpush1.msra.mxu0 %v858
        %2816 = vmatprep.subr.mxu0 %v867
        %2817 = vmatpush1.msra.mxu0 %v866
        %2818 = vmatprep.subr.mxu0 %v875
        %2819 = vmatpush1.msra.mxu0 %v874
        %2820 = vmatprep.subr.mxu0 %v883
        %2821 = vmatpush1.msra.mxu0 %v882
        %2822 = vmatprep.subr.mxu0 %v891
        %2823 = vmatpush1.msra.mxu0 %v890
        %2824 = vmatprep.subr.mxu0 %v899
        %2825 = vmatpush1.msra.mxu0 %v898
        %2826 = vmatprep.subr.mxu0 %v907
        %2827 = vmatpush1.msra.mxu0 %v906
        %2828 = vmatprep.subr.mxu0 %v915
        %2829 = vmatpush1.msra.mxu0 %v914
        %2830 = vmatprep.subr.mxu0 %v923
        %2831 = vmatpush1.msra.mxu0 %v922
        %2832 = vmatprep.subr.mxu0 %v931
        %2833 = vmatpush1.msra.mxu0 %v930
        %2834 = vmatprep.subr.mxu0 %v939
        %2835 = vmatpush1.msra.mxu0 %v938
        %2836 = vmatprep.subr.mxu0 %v947
        %2837 = vmatpush1.msra.mxu0 %v946
        %2838 = vmatprep.subr.mxu0 %v955
        %2839 = vmatpush1.msra.mxu0 %v954
        %2840 = vmatprep.subr.mxu0 %v963
        %2841 = vmatpush1.msra.mxu0 %v962
        %2842 = vmatprep.subr.mxu0 %v971
        %2843 = vmatpush1.msra.mxu0 %v970
        %2844 = vmatprep.subr.mxu0 %v979
        %2845 = vmatpush1.msra.mxu0 %v978
        %2846 = vmatprep.subr.mxu0 %v987
        %2847 = vmatpush1.msra.mxu0 %v986
        %2848 = vmatprep.subr.mxu0 %v995
        %2849 = vmatpush1.msra.mxu0 %v994
        %2850 = vmatprep.subr.mxu0 %v1003
        %2851 = vmatpush1.msra.mxu0 %v1002
        %2852 = vmatprep.subr.mxu0 %v1011
        %2853 = vmatpush1.msra.mxu0 %v1010
        %2854 = vmatprep.subr.mxu0 %v1019
        %2855 = vmatpush1.msra.mxu0 %v1018
        %2856 = vmatprep.subr.mxu0 %v1027
        %2857 = vmatpush1.msra.mxu0 %v1026
        %2858 = vmatprep.subr.mxu0 %v1035
        %2859 = vmatpush1.msra.mxu0 %v1034
        %2860 = vmatprep.subr.mxu0 %v1043
        %2861 = vmatpush1.msra.mxu0 %v1042
        %2862 = vmatprep.subr.mxu0 %v1051
        %2863 = vmatpush1.msra.mxu0 %v1050
        %2864 = vmatprep.subr.mxu0 %v1059
        %2865 = vmatpush1.msra.mxu0 %v1058
        %2866 = vmatprep.subr.mxu0 %v1067
        %2867 = vmatpush1.msra.mxu0 %v1066
        %2868 = vmatprep.subr.mxu0 %v1075
        %2869 = vmatpush1.msra.mxu0 %v1074
        %2870 = vmatprep.subr.mxu0 %v1083
        %2871 = vmatpush1.msra.mxu0 %v1082
        %2872 = vmatprep.mubr.f32.mxu0 %v229
        %2873 = vmatmul.mubr.f32.gmra.mrb[0].mxu0 %v228
        %v2874 = vpop.f32.mrb[0].mxu0
        %v2875 = vadd.f32 %v2762, %v2874
        %v2876 = vpop.f32.mrb[0].mxu0
        %v2877 = vadd.f32 %v2764, %v2876
        %2878 = vmatprep.mubr.f32.mxu0 %v241
        %2879 = vmatmul.mubr.f32.gmra.mrb[0].mxu0 %v240
        %v2880 = vpop.f32.mrb[0].mxu0
        %v2881 = vadd.f32 %v2768, %v2880
        %v2882 = vpop.f32.mrb[0].mxu0
        %v2883 = vadd.f32 %v2770, %v2882
        %2884 = vmatprep.mubr.f32.mxu0 %v253
        %2885 = vmatmul.mubr.f32.gmra.mrb[0].mxu0 %v252
        %v2886 = vpop.f32.mrb[0].mxu0
        %v2887 = vadd.f32 %v2774, %v2886
        %v2888 = vpop.f32.mrb[0].mxu0
        %v2889 = vadd.f32 %v2776, %v2888
        %2890 = vmatprep.mubr.f32.mxu0 %v265
        %2891 = vmatmul.mubr.f32.gmra.mrb[0].mxu0 %v264
        %v2892 = vpop.f32.mrb[0].mxu0
        %v2893 = vadd.f32 %v2780, %v2892
        %v2894 = vpop.f32.mrb[0].mxu0
        %v2895 = vadd.f32 %v2782, %v2894
        %2896 = vmatprep.mubr.f32.mxu0 %v277
        %2897 = vmatmul.mubr.f32.gmra.mrb[0].mxu0 %v276
        %v2898 = vpop.f32.mrb[0].mxu0
        %v2899 = vadd.f32 %v2786, %v2898
        %v2900 = vpop.f32.mrb[0].mxu0
        %v2901 = vadd.f32 %v2788, %v2900
        %2902 = vmatprep.mubr.f32.mxu0 %v289
        %2903 = vmatmul.mubr.f32.gmra.mrb[0].mxu0 %v288
        %v2904 = vpop.f32.mrb[0].mxu0
        %v2905 = vadd.f32 %v2792, %v2904
        %v2906 = vpop.f32.mrb[0].mxu0
        %v2907 = vadd.f32 %v2794, %v2906
        %2908 = vmatprep.mubr.f32.mxu0 %v301
        %2909 = vmatmul.mubr.f32.gmra.mrb[0].mxu0 %v300
        %v2910 = vpop.f32.mrb[0].mxu0
        %v2911 = vadd.f32 %v2798, %v2910
        %v2912 = vpop.f32.mrb[0].mxu0
        %v2913 = vadd.f32 %v2800, %v2912
        %2914 = vmatprep.mubr.f32.mxu0 %v313
        %2915 = vmatmul.mubr.f32.gmra.mrb[0].mxu0 %v312
        %v2916 = vpop.f32.mrb[0].mxu0
        %v2917 = vadd.f32 %v2804, %v2916
        %v2918 = vpop.f32.mrb[0].mxu0
        %v2919 = vadd.f32 %v2806, %v2918
        %2920 = vdwg.mxu0
        %2921 = vmatprep.subr.mxu0 %v1091
        %2922 = vmatpush1.msra.mxu0 %v1090
        %2923 = vmatprep.subr.mxu0 %v1099
        %2924 = vmatpush1.msra.mxu0 %v1098
        %2925 = vmatprep.subr.mxu0 %v1107
        %2926 = vmatpush1.msra.mxu0 %v1106
        %2927 = vmatprep.subr.mxu0 %v1115
        %2928 = vmatpush1.msra.mxu0 %v1114
        %2929 = vmatprep.subr.mxu0 %v1123
        %2930 = vmatpush1.msra.mxu0 %v1122
        %2931 = vmatprep.subr.mxu0 %v1131
        %2932 = vmatpush1.msra.mxu0 %v1130
        %2933 = vmatprep.subr.mxu0 %v1139
        %2934 = vmatpush1.msra.mxu0 %v1138
        %2935 = vmatprep.subr.mxu0 %v1147
        %2936 = vmatpush1.msra.mxu0 %v1146
        %2937 = vmatprep.subr.mxu0 %v1155
        %2938 = vmatpush1.msra.mxu0 %v1154
        %2939 = vmatprep.subr.mxu0 %v1163
        %2940 = vmatpush1.msra.mxu0 %v1162
        %2941 = vmatprep.subr.mxu0 %v1171
        %2942 = vmatpush1.msra.mxu0 %v1170
        %2943 = vmatprep.subr.mxu0 %v1179
        %2944 = vmatpush1.msra.mxu0 %v1178
        %2945 = vmatprep.subr.mxu0 %v1187
        %2946 = vmatpush1.msra.mxu0 %v1186
        %2947 = vmatprep.subr.mxu0 %v1195
        %2948 = vmatpush1.msra.mxu0 %v1194
        %2949 = vmatprep.subr.mxu0 %v1203
        %2950 = vmatpush1.msra.mxu0 %v1202
        %2951 = vmatprep.subr.mxu0 %v1211
        %2952 = vmatpush1.msra.mxu0 %v1210
        %2953 = vmatprep.subr.mxu0 %v1219
        %2954 = vmatpush1.msra.mxu0 %v1218
        %2955 = vmatprep.subr.mxu0 %v1227
        %2956 = vmatpush1.msra.mxu0 %v1226
        %2957 = vmatprep.subr.mxu0 %v1235
        %2958 = vmatpush1.msra.mxu0 %v1234
        %2959 = vmatprep.subr.mxu0 %v1243
        %2960 = vmatpush1.msra.mxu0 %v1242
        %2961 = vmatprep.subr.mxu0 %v1251
        %2962 = vmatpush1.msra.mxu0 %v1250
        %2963 = vmatprep.subr.mxu0 %v1259
        %2964 = vmatpush1.msra.mxu0 %v1258
        %2965 = vmatprep.subr.mxu0 %v1267
        %2966 = vmatpush1.msra.mxu0 %v1266
        %2967 = vmatprep.subr.mxu0 %v1275
        %2968 = vmatpush1.msra.mxu0 %v1274
        %2969 = vmatprep.subr.mxu0 %v1283
        %2970 = vmatpush1.msra.mxu0 %v1282
        %2971 = vmatprep.subr.mxu0 %v1291
        %2972 = vmatpush1.msra.mxu0 %v1290
        %2973 = vmatprep.subr.mxu0 %v1299
        %2974 = vmatpush1.msra.mxu0 %v1298
        %2975 = vmatprep.subr.mxu0 %v1307
        %2976 = vmatpush1.msra.mxu0 %v1306
        %2977 = vmatprep.subr.mxu0 %v1315
        %2978 = vmatpush1.msra.mxu0 %v1314
        %2979 = vmatprep.subr.mxu0 %v1323
        %2980 = vmatpush1.msra.mxu0 %v1322
        %2981 = vmatprep.subr.mxu0 %v1331
        %2982 = vmatpush1.msra.mxu0 %v1330
        %2983 = vmatprep.subr.mxu0 %v1339
        %2984 = vmatpush1.msra.mxu0 %v1338
        %2985 = vmatprep.mubr.f32.mxu0 %v231
        %2986 = vmatmul.mubr.f32.gmra.mrb[0].mxu0 %v230
        %v2987 = vpop.f32.mrb[0].mxu0
        %v2988 = vadd.f32 %v2875, %v2987
        %v2989 = vpop.f32.mrb[0].mxu0
        %v2990 = vadd.f32 %v2877, %v2989
        %2991 = vmatprep.mubr.f32.mxu0 %v243
        %2992 = vmatmul.mubr.f32.gmra.mrb[0].mxu0 %v242
        %v2993 = vpop.f32.mrb[0].mxu0
        %v2994 = vadd.f32 %v2881, %v2993
        %v2995 = vpop.f32.mrb[0].mxu0
        %v2996 = vadd.f32 %v2883, %v2995
        %2997 = vmatprep.mubr.f32.mxu0 %v255
        %2998 = vmatmul.mubr.f32.gmra.mrb[0].mxu0 %v254
        %v2999 = vpop.f32.mrb[0].mxu0
        %v3000 = vadd.f32 %v2887, %v2999
        %v3001 = vpop.f32.mrb[0].mxu0
        %v3002 = vadd.f32 %v2889, %v3001
        %3003 = vmatprep.mubr.f32.mxu0 %v267
        %3004 = vmatmul.mubr.f32.gmra.mrb[0].mxu0 %v266
        %v3005 = vpop.f32.mrb[0].mxu0
        %v3006 = vadd.f32 %v2893, %v3005
        %v3007 = vpop.f32.mrb[0].mxu0
        %v3008 = vadd.f32 %v2895, %v3007
        %3009 = vmatprep.mubr.f32.mxu0 %v279
        %3010 = vmatmul.mubr.f32.gmra.mrb[0].mxu0 %v278
        %v3011 = vpop.f32.mrb[0].mxu0
        %v3012 = vadd.f32 %v2899, %v3011
        %v3013 = vpop.f32.mrb[0].mxu0
        %v3014 = vadd.f32 %v2901, %v3013
        %3015 = vmatprep.mubr.f32.mxu0 %v291
        %3016 = vmatmul.mubr.f32.gmra.mrb[0].mxu0 %v290
        %v3017 = vpop.f32.mrb[0].mxu0
        %v3018 = vadd.f32 %v2905, %v3017
        %v3019 = vpop.f32.mrb[0].mxu0
        %v3020 = vadd.f32 %v2907, %v3019
        %3021 = vmatprep.mubr.f32.mxu0 %v303
        %3022 = vmatmul.mubr.f32.gmra.mrb[0].mxu0 %v302
        %v3023 = vpop.f32.mrb[0].mxu0
        %v3024 = vadd.f32 %v2911, %v3023
        %v3025 = vpop.f32.mrb[0].mxu0
        %v3026 = vadd.f32 %v2913, %v3025
        %3027 = vmatprep.mubr.f32.mxu0 %v315
        %3028 = vmatmul.mubr.f32.gmra.mrb[0].mxu0 %v314
        %v3029 = vpop.f32.mrb[0].mxu0
        %v3030 = vadd.f32 %v2917, %v3029
        %v3031 = vpop.f32.mrb[0].mxu0
        %v3032 = vadd.f32 %v2919, %v3031
        %3033 = vdwg.mxu0
        %3034 = vmatprep.subr.mxu0 %v1347
        %3035 = vmatpush1.msra.mxu0 %v1346
        %3036 = vmatprep.subr.mxu0 %v1355
        %3037 = vmatpush1.msra.mxu0 %v1354
        %3038 = vmatprep.subr.mxu0 %v1363
        %3039 = vmatpush1.msra.mxu0 %v1362
        %3040 = vmatprep.subr.mxu0 %v1371
        %3041 = vmatpush1.msra.mxu0 %v1370
        %3042 = vmatprep.subr.mxu0 %v1379
        %3043 = vmatpush1.msra.mxu0 %v1378
        %3044 = vmatprep.subr.mxu0 %v1387
        %3045 = vmatpush1.msra.mxu0 %v1386
        %3046 = vmatprep.subr.mxu0 %v1395
        %3047 = vmatpush1.msra.mxu0 %v1394
        %3048 = vmatprep.subr.mxu0 %v1403
        %3049 = vmatpush1.msra.mxu0 %v1402
        %3050 = vmatprep.subr.mxu0 %v1411
        %3051 = vmatpush1.msra.mxu0 %v1410
        %3052 = vmatprep.subr.mxu0 %v1419
        %3053 = vmatpush1.msra.mxu0 %v1418
        %3054 = vmatprep.subr.mxu0 %v1427
        %3055 = vmatpush1.msra.mxu0 %v1426
        %3056 = vmatprep.subr.mxu0 %v1435
        %3057 = vmatpush1.msra.mxu0 %v1434
        %3058 = vmatprep.subr.mxu0 %v1443
        %3059 = vmatpush1.msra.mxu0 %v1442
        %3060 = vmatprep.subr.mxu0 %v1451
        %3061 = vmatpush1.msra.mxu0 %v1450
        %3062 = vmatprep.subr.mxu0 %v1459
        %3063 = vmatpush1.msra.mxu0 %v1458
        %3064 = vmatprep.subr.mxu0 %v1467
        %3065 = vmatpush1.msra.mxu0 %v1466
        %3066 = vmatprep.subr.mxu0 %v1475
        %3067 = vmatpush1.msra.mxu0 %v1474
        %3068 = vmatprep.subr.mxu0 %v1483
        %3069 = vmatpush1.msra.mxu0 %v1482
        %3070 = vmatprep.subr.mxu0 %v1491
        %3071 = vmatpush1.msra.mxu0 %v1490
        %3072 = vmatprep.subr.mxu0 %v1499
        %3073 = vmatpush1.msra.mxu0 %v1498
        %3074 = vmatprep.subr.mxu0 %v1507
        %3075 = vmatpush1.msra.mxu0 %v1506
        %3076 = vmatprep.subr.mxu0 %v1515
        %3077 = vmatpush1.msra.mxu0 %v1514
        %3078 = vmatprep.subr.mxu0 %v1523
        %3079 = vmatpush1.msra.mxu0 %v1522
        %3080 = vmatprep.subr.mxu0 %v1531
        %3081 = vmatpush1.msra.mxu0 %v1530
        %3082 = vmatprep.subr.mxu0 %v1539
        %3083 = vmatpush1.msra.mxu0 %v1538
        %3084 = vmatprep.subr.mxu0 %v1547
        %3085 = vmatpush1.msra.mxu0 %v1546
        %3086 = vmatprep.subr.mxu0 %v1555
        %3087 = vmatpush1.msra.mxu0 %v1554
        %3088 = vmatprep.subr.mxu0 %v1563
        %3089 = vmatpush1.msra.mxu0 %v1562
        %3090 = vmatprep.subr.mxu0 %v1571
        %3091 = vmatpush1.msra.mxu0 %v1570
        %3092 = vmatprep.subr.mxu0 %v1579
        %3093 = vmatpush1.msra.mxu0 %v1578
        %3094 = vmatprep.subr.mxu0 %v1587
        %3095 = vmatpush1.msra.mxu0 %v1586
        %3096 = vmatprep.subr.mxu0 %v1595
        %3097 = vmatpush1.msra.mxu0 %v1594
        %3098 = vmatprep.mubr.f32.mxu0 %v233
        %3099 = vmatmul.mubr.f32.gmra.mrb[0].mxu0 %v232
        %v3100 = vpop.f32.mrb[0].mxu0
        %v3101 = vadd.f32 %v2988, %v3100
        %v3102 = vpop.f32.mrb[0].mxu0
        %v3103 = vadd.f32 %v2990, %v3102
        %3104 = vmatprep.mubr.f32.mxu0 %v245
        %3105 = vmatmul.mubr.f32.gmra.mrb[0].mxu0 %v244
        %v3106 = vpop.f32.mrb[0].mxu0
        %v3107 = vadd.f32 %v2994, %v3106
        %v3108 = vpop.f32.mrb[0].mxu0
        %v3109 = vadd.f32 %v2996, %v3108
        %3110 = vmatprep.mubr.f32.mxu0 %v257
        %3111 = vmatmul.mubr.f32.gmra.mrb[0].mxu0 %v256
        %v3112 = vpop.f32.mrb[0].mxu0
        %v3113 = vadd.f32 %v3000, %v3112
        %v3114 = vpop.f32.mrb[0].mxu0
        %v3115 = vadd.f32 %v3002, %v3114
        %3116 = vmatprep.mubr.f32.mxu0 %v269
        %3117 = vmatmul.mubr.f32.gmra.mrb[0].mxu0 %v268
        %v3118 = vpop.f32.mrb[0].mxu0
        %v3119 = vadd.f32 %v3006, %v3118
        %v3120 = vpop.f32.mrb[0].mxu0
        %v3121 = vadd.f32 %v3008, %v3120
        %3122 = vmatprep.mubr.f32.mxu0 %v281
        %3123 = vmatmul.mubr.f32.gmra.mrb[0].mxu0 %v280
        %v3124 = vpop.f32.mrb[0].mxu0
        %v3125 = vadd.f32 %v3012, %v3124
        %v3126 = vpop.f32.mrb[0].mxu0
        %v3127 = vadd.f32 %v3014, %v3126
        %3128 = vmatprep.mubr.f32.mxu0 %v293
        %3129 = vmatmul.mubr.f32.gmra.mrb[0].mxu0 %v292
        %v3130 = vpop.f32.mrb[0].mxu0
        %v3131 = vadd.f32 %v3018, %v3130
        %v3132 = vpop.f32.mrb[0].mxu0
        %v3133 = vadd.f32 %v3020, %v3132
        %3134 = vmatprep.mubr.f32.mxu0 %v305
        %3135 = vmatmul.mubr.f32.gmra.mrb[0].mxu0 %v304
        %v3136 = vpop.f32.mrb[0].mxu0
        %v3137 = vadd.f32 %v3024, %v3136
        %v3138 = vpop.f32.mrb[0].mxu0
        %v3139 = vadd.f32 %v3026, %v3138
        %3140 = vmatprep.mubr.f32.mxu0 %v317
        %3141 = vmatmul.mubr.f32.gmra.mrb[0].mxu0 %v316
        %v3142 = vpop.f32.mrb[0].mxu0
        %v3143 = vadd.f32 %v3030, %v3142
        %v3144 = vpop.f32.mrb[0].mxu0
        %v3145 = vadd.f32 %v3032, %v3144
        %3146 = vdwg.mxu0
        %3147 = vmatprep.subr.mxu0 %v1603
        %3148 = vmatpush1.msra.mxu0 %v1602
        %3149 = vmatprep.subr.mxu0 %v1611
        %3150 = vmatpush1.msra.mxu0 %v1610
        %3151 = vmatprep.subr.mxu0 %v1619
        %3152 = vmatpush1.msra.mxu0 %v1618
        %3153 = vmatprep.subr.mxu0 %v1627
        %3154 = vmatpush1.msra.mxu0 %v1626
        %3155 = vmatprep.subr.mxu0 %v1635
        %3156 = vmatpush1.msra.mxu0 %v1634
        %3157 = vmatprep.subr.mxu0 %v1643
        %3158 = vmatpush1.msra.mxu0 %v1642
        %3159 = vmatprep.subr.mxu0 %v1651
        %3160 = vmatpush1.msra.mxu0 %v1650
        %3161 = vmatprep.subr.mxu0 %v1659
        %3162 = vmatpush1.msra.mxu0 %v1658
        %3163 = vmatprep.subr.mxu0 %v1667
        %3164 = vmatpush1.msra.mxu0 %v1666
        %3165 = vmatprep.subr.mxu0 %v1675
        %3166 = vmatpush1.msra.mxu0 %v1674
        %3167 = vmatprep.subr.mxu0 %v1683
        %3168 = vmatpush1.msra.mxu0 %v1682
        %3169 = vmatprep.subr.mxu0 %v1691
        %3170 = vmatpush1.msra.mxu0 %v1690
        %3171 = vmatprep.subr.mxu0 %v1699
        %3172 = vmatpush1.msra.mxu0 %v1698
        %3173 = vmatprep.subr.mxu0 %v1707
        %3174 = vmatpush1.msra.mxu0 %v1706
        %3175 = vmatprep.subr.mxu0 %v1715
        %3176 = vmatpush1.msra.mxu0 %v1714
        %3177 = vmatprep.subr.mxu0 %v1723
        %3178 = vmatpush1.msra.mxu0 %v1722
        %3179 = vmatprep.subr.mxu0 %v1731
        %3180 = vmatpush1.msra.mxu0 %v1730
        %3181 = vmatprep.subr.mxu0 %v1739
        %3182 = vmatpush1.msra.mxu0 %v1738
        %3183 = vmatprep.subr.mxu0 %v1747
        %3184 = vmatpush1.msra.mxu0 %v1746
        %3185 = vmatprep.subr.mxu0 %v1755
        %3186 = vmatpush1.msra.mxu0 %v1754
        %3187 = vmatprep.subr.mxu0 %v1763
        %3188 = vmatpush1.msra.mxu0 %v1762
        %3189 = vmatprep.subr.mxu0 %v1771
        %3190 = vmatpush1.msra.mxu0 %v1770
        %3191 = vmatprep.subr.mxu0 %v1779
        %3192 = vmatpush1.msra.mxu0 %v1778
        %3193 = vmatprep.subr.mxu0 %v1787
        %3194 = vmatpush1.msra.mxu0 %v1786
        %3195 = vmatprep.subr.mxu0 %v1795
        %3196 = vmatpush1.msra.mxu0 %v1794
        %3197 = vmatprep.subr.mxu0 %v1803
        %3198 = vmatpush1.msra.mxu0 %v1802
        %3199 = vmatprep.subr.mxu0 %v1811
        %3200 = vmatpush1.msra.mxu0 %v1810
        %3201 = vmatprep.subr.mxu0 %v1819
        %3202 = vmatpush1.msra.mxu0 %v1818
        %3203 = vmatprep.subr.mxu0 %v1827
        %3204 = vmatpush1.msra.mxu0 %v1826
        %3205 = vmatprep.subr.mxu0 %v1835
        %3206 = vmatpush1.msra.mxu0 %v1834
        %3207 = vmatprep.subr.mxu0 %v1843
        %3208 = vmatpush1.msra.mxu0 %v1842
        %3209 = vmatprep.subr.mxu0 %v1851
        %3210 = vmatpush1.msra.mxu0 %v1850
        %3211 = vmatprep.mubr.f32.mxu0 %v235
        %3212 = vmatmul.mubr.f32.gmra.mrb[0].mxu0 %v234
        %v3213 = vpop.f32.mrb[0].mxu0
        %v3214 = vadd.f32 %v3101, %v3213
        %v3215 = vpop.f32.mrb[0].mxu0
        %v3216 = vadd.f32 %v3103, %v3215
        %3217 = vmatprep.mubr.f32.mxu0 %v247
        %3218 = vmatmul.mubr.f32.gmra.mrb[0].mxu0 %v246
        %v3219 = vpop.f32.mrb[0].mxu0
        %v3220 = vadd.f32 %v3107, %v3219
        %v3221 = vpop.f32.mrb[0].mxu0
        %v3222 = vadd.f32 %v3109, %v3221
        %3223 = vmatprep.mubr.f32.mxu0 %v259
        %3224 = vmatmul.mubr.f32.gmra.mrb[0].mxu0 %v258
        %v3225 = vpop.f32.mrb[0].mxu0
        %v3226 = vadd.f32 %v3113, %v3225
        %v3227 = vpop.f32.mrb[0].mxu0
        %v3228 = vadd.f32 %v3115, %v3227
        %3229 = vmatprep.mubr.f32.mxu0 %v271
        %3230 = vmatmul.mubr.f32.gmra.mrb[0].mxu0 %v270
        %v3231 = vpop.f32.mrb[0].mxu0
        %v3232 = vadd.f32 %v3119, %v3231
        %v3233 = vpop.f32.mrb[0].mxu0
        %v3234 = vadd.f32 %v3121, %v3233
        %3235 = vmatprep.mubr.f32.mxu0 %v283
        %3236 = vmatmul.mubr.f32.gmra.mrb[0].mxu0 %v282
        %v3237 = vpop.f32.mrb[0].mxu0
        %v3238 = vadd.f32 %v3125, %v3237
        %v3239 = vpop.f32.mrb[0].mxu0
        %v3240 = vadd.f32 %v3127, %v3239
        %3241 = vmatprep.mubr.f32.mxu0 %v295
        %3242 = vmatmul.mubr.f32.gmra.mrb[0].mxu0 %v294
        %v3243 = vpop.f32.mrb[0].mxu0
        %v3244 = vadd.f32 %v3131, %v3243
        %v3245 = vpop.f32.mrb[0].mxu0
        %v3246 = vadd.f32 %v3133, %v3245
        %3247 = vmatprep.mubr.f32.mxu0 %v307
        %3248 = vmatmul.mubr.f32.gmra.mrb[0].mxu0 %v306
        %v3249 = vpop.f32.mrb[0].mxu0
        %v3250 = vadd.f32 %v3137, %v3249
        %v3251 = vpop.f32.mrb[0].mxu0
        %v3252 = vadd.f32 %v3139, %v3251
        %3253 = vmatprep.mubr.f32.mxu0 %v319
        %3254 = vmatmul.mubr.f32.gmra.mrb[0].mxu0 %v318
        %v3255 = vpop.f32.mrb[0].mxu0
        %v3256 = vadd.f32 %v3143, %v3255
        %v3257 = vpop.f32.mrb[0].mxu0
        %v3258 = vadd.f32 %v3145, %v3257
        %3259 = vdwg.mxu0
        %3260 = vmatprep.subr.mxu0 %v325
        %3261 = vmatpush1.msra.mxu0 %v324
        %3262 = vmatprep.subr.mxu0 %v333
        %3263 = vmatpush1.msra.mxu0 %v332
        %3264 = vmatprep.subr.mxu0 %v341
        %3265 = vmatpush1.msra.mxu0 %v340
        %3266 = vmatprep.subr.mxu0 %v349
        %3267 = vmatpush1.msra.mxu0 %v348
        %3268 = vmatprep.subr.mxu0 %v357
        %3269 = vmatpush1.msra.mxu0 %v356
        %3270 = vmatprep.subr.mxu0 %v365
        %3271 = vmatpush1.msra.mxu0 %v364
        %3272 = vmatprep.subr.mxu0 %v373
        %3273 = vmatpush1.msra.mxu0 %v372
        %3274 = vmatprep.subr.mxu0 %v381
        %3275 = vmatpush1.msra.mxu0 %v380
        %3276 = vmatprep.subr.mxu0 %v389
        %3277 = vmatpush1.msra.mxu0 %v388
        %3278 = vmatprep.subr.mxu0 %v397
        %3279 = vmatpush1.msra.mxu0 %v396
        %3280 = vmatprep.subr.mxu0 %v405
        %3281 = vmatpush1.msra.mxu0 %v404
        %3282 = vmatprep.subr.mxu0 %v413
        %3283 = vmatpush1.msra.mxu0 %v412
        %3284 = vmatprep.subr.mxu0 %v421
        %3285 = vmatpush1.msra.mxu0 %v420
        %3286 = vmatprep.subr.mxu0 %v429
        %3287 = vmatpush1.msra.mxu0 %v428
        %3288 = vmatprep.subr.mxu0 %v437
        %3289 = vmatpush1.msra.mxu0 %v436
        %3290 = vmatprep.subr.mxu0 %v445
        %3291 = vmatpush1.msra.mxu0 %v444
        %3292 = vmatprep.subr.mxu0 %v453
        %3293 = vmatpush1.msra.mxu0 %v452
        %3294 = vmatprep.subr.mxu0 %v461
        %3295 = vmatpush1.msra.mxu0 %v460
        %3296 = vmatprep.subr.mxu0 %v469
        %3297 = vmatpush1.msra.mxu0 %v468
        %3298 = vmatprep.subr.mxu0 %v477
        %3299 = vmatpush1.msra.mxu0 %v476
        %3300 = vmatprep.subr.mxu0 %v485
        %3301 = vmatpush1.msra.mxu0 %v484
        %3302 = vmatprep.subr.mxu0 %v493
        %3303 = vmatpush1.msra.mxu0 %v492
        %3304 = vmatprep.subr.mxu0 %v501
        %3305 = vmatpush1.msra.mxu0 %v500
        %3306 = vmatprep.subr.mxu0 %v509
        %3307 = vmatpush1.msra.mxu0 %v508
        %3308 = vmatprep.subr.mxu0 %v517
        %3309 = vmatpush1.msra.mxu0 %v516
        %3310 = vmatprep.subr.mxu0 %v525
        %3311 = vmatpush1.msra.mxu0 %v524
        %3312 = vmatprep.subr.mxu0 %v533
        %3313 = vmatpush1.msra.mxu0 %v532
        %3314 = vmatprep.subr.mxu0 %v541
        %3315 = vmatpush1.msra.mxu0 %v540
        %3316 = vmatprep.subr.mxu0 %v549
        %3317 = vmatpush1.msra.mxu0 %v548
        %3318 = vmatprep.subr.mxu0 %v557
        %3319 = vmatpush1.msra.mxu0 %v556
        %3320 = vmatprep.subr.mxu0 %v565
        %3321 = vmatpush1.msra.mxu0 %v564
        %3322 = vmatprep.subr.mxu0 %v573
        %3323 = vmatpush1.msra.mxu0 %v572
        %3324 = vmatprep.mubr.f32.mxu0 %v225
        %3325 = vmatmul.mubr.f32.gmra.mrb[0].mxu0 %v224
        %v3326 = vpop.f32.mrb[0].mxu0
        %v3327 = vadd.f32 %v1867, %v3326
        %v3328 = vpop.f32.mrb[0].mxu0
        %v3329 = vadd.f32 %v1867, %v3328
        %3330 = vmatprep.mubr.f32.mxu0 %v237
        %3331 = vmatmul.mubr.f32.gmra.mrb[0].mxu0 %v236
        %v3332 = vpop.f32.mrb[0].mxu0
        %v3333 = vadd.f32 %v1872, %v3332
        %v3334 = vpop.f32.mrb[0].mxu0
        %v3335 = vadd.f32 %v1872, %v3334
        %3336 = vmatprep.mubr.f32.mxu0 %v249
        %3337 = vmatmul.mubr.f32.gmra.mrb[0].mxu0 %v248
        %v3338 = vpop.f32.mrb[0].mxu0
        %v3339 = vadd.f32 %v1877, %v3338
        %v3340 = vpop.f32.mrb[0].mxu0
        %v3341 = vadd.f32 %v1877, %v3340
        %3342 = vmatprep.mubr.f32.mxu0 %v261
        %3343 = vmatmul.mubr.f32.gmra.mrb[0].mxu0 %v260
        %v3344 = vpop.f32.mrb[0].mxu0
        %v3345 = vadd.f32 %v1882, %v3344
        %v3346 = vpop.f32.mrb[0].mxu0
        %v3347 = vadd.f32 %v1882, %v3346
        %3348 = vmatprep.mubr.f32.mxu0 %v273
        %3349 = vmatmul.mubr.f32.gmra.mrb[0].mxu0 %v272
        %v3350 = vpop.f32.mrb[0].mxu0
        %v3351 = vadd.f32 %v1887, %v3350
        %v3352 = vpop.f32.mrb[0].mxu0
        %v3353 = vadd.f32 %v1887, %v3352
        %3354 = vmatprep.mubr.f32.mxu0 %v285
        %3355 = vmatmul.mubr.f32.gmra.mrb[0].mxu0 %v284
        %v3356 = vpop.f32.mrb[0].mxu0
        %v3357 = vadd.f32 %v1892, %v3356
        %v3358 = vpop.f32.mrb[0].mxu0
        %v3359 = vadd.f32 %v1892, %v3358
        %3360 = vmatprep.mubr.f32.mxu0 %v297
        %3361 = vmatmul.mubr.f32.gmra.mrb[0].mxu0 %v296
        %v3362 = vpop.f32.mrb[0].mxu0
        %v3363 = vadd.f32 %v1897, %v3362
        %v3364 = vpop.f32.mrb[0].mxu0
        %v3365 = vadd.f32 %v1897, %v3364
        %3366 = vmatprep.mubr.f32.mxu0 %v309
        %3367 = vmatmul.mubr.f32.gmra.mrb[0].mxu0 %v308
        %v3368 = vpop.f32.mrb[0].mxu0
        %v3369 = vadd.f32 %v1902, %v3368
        %v3370 = vpop.f32.mrb[0].mxu0
        %v3371 = vadd.f32 %v1902, %v3370
        %3372 = vdwg.mxu0
        %3373 = vmatprep.subr.mxu0 %v581
        %3374 = vmatpush1.msra.mxu0 %v580
        %3375 = vmatprep.subr.mxu0 %v589
        %3376 = vmatpush1.msra.mxu0 %v588
        %3377 = vmatprep.subr.mxu0 %v597
        %3378 = vmatpush1.msra.mxu0 %v596
        %3379 = vmatprep.subr.mxu0 %v605
        %3380 = vmatpush1.msra.mxu0 %v604
        %3381 = vmatprep.subr.mxu0 %v613
        %3382 = vmatpush1.msra.mxu0 %v612
        %3383 = vmatprep.subr.mxu0 %v621
        %3384 = vmatpush1.msra.mxu0 %v620
        %3385 = vmatprep.subr.mxu0 %v629
        %3386 = vmatpush1.msra.mxu0 %v628
        %3387 = vmatprep.subr.mxu0 %v637
        %3388 = vmatpush1.msra.mxu0 %v636
        %3389 = vmatprep.subr.mxu0 %v645
        %3390 = vmatpush1.msra.mxu0 %v644
        %3391 = vmatprep.subr.mxu0 %v653
        %3392 = vmatpush1.msra.mxu0 %v652
        %3393 = vmatprep.subr.mxu0 %v661
        %3394 = vmatpush1.msra.mxu0 %v660
        %3395 = vmatprep.subr.mxu0 %v669
        %3396 = vmatpush1.msra.mxu0 %v668
        %3397 = vmatprep.subr.mxu0 %v677
        %3398 = vmatpush1.msra.mxu0 %v676
        %3399 = vmatprep.subr.mxu0 %v685
        %3400 = vmatpush1.msra.mxu0 %v684
        %3401 = vmatprep.subr.mxu0 %v693
        %3402 = vmatpush1.msra.mxu0 %v692
        %3403 = vmatprep.subr.mxu0 %v701
        %3404 = vmatpush1.msra.mxu0 %v700
        %3405 = vmatprep.subr.mxu0 %v709
        %3406 = vmatpush1.msra.mxu0 %v708
        %3407 = vmatprep.subr.mxu0 %v717
        %3408 = vmatpush1.msra.mxu0 %v716
        %3409 = vmatprep.subr.mxu0 %v725
        %3410 = vmatpush1.msra.mxu0 %v724
        %3411 = vmatprep.subr.mxu0 %v733
        %3412 = vmatpush1.msra.mxu0 %v732
        %3413 = vmatprep.subr.mxu0 %v741
        %3414 = vmatpush1.msra.mxu0 %v740
        %3415 = vmatprep.subr.mxu0 %v749
        %3416 = vmatpush1.msra.mxu0 %v748
        %3417 = vmatprep.subr.mxu0 %v757
        %3418 = vmatpush1.msra.mxu0 %v756
        %3419 = vmatprep.subr.mxu0 %v765
        %3420 = vmatpush1.msra.mxu0 %v764
        %3421 = vmatprep.subr.mxu0 %v773
        %3422 = vmatpush1.msra.mxu0 %v772
        %3423 = vmatprep.subr.mxu0 %v781
        %3424 = vmatpush1.msra.mxu0 %v780
        %3425 = vmatprep.subr.mxu0 %v789
        %3426 = vmatpush1.msra.mxu0 %v788
        %3427 = vmatprep.subr.mxu0 %v797
        %3428 = vmatpush1.msra.mxu0 %v796
        %3429 = vmatprep.subr.mxu0 %v805
        %3430 = vmatpush1.msra.mxu0 %v804
        %3431 = vmatprep.subr.mxu0 %v813
        %3432 = vmatpush1.msra.mxu0 %v812
        %3433 = vmatprep.subr.mxu0 %v821
        %3434 = vmatpush1.msra.mxu0 %v820
        %3435 = vmatprep.subr.mxu0 %v829
        %3436 = vmatpush1.msra.mxu0 %v828
        %3437 = vmatprep.mubr.f32.mxu0 %v227
        %3438 = vmatmul.mubr.f32.gmra.mrb[0].mxu0 %v226
        %v3439 = vpop.f32.mrb[0].mxu0
        %v3440 = vadd.f32 %v3327, %v3439
        %v3441 = vpop.f32.mrb[0].mxu0
        %v3442 = vadd.f32 %v3329, %v3441
        %3443 = vmatprep.mubr.f32.mxu0 %v239
        %3444 = vmatmul.mubr.f32.gmra.mrb[0].mxu0 %v238
        %v3445 = vpop.f32.mrb[0].mxu0
        %v3446 = vadd.f32 %v3333, %v3445
        %v3447 = vpop.f32.mrb[0].mxu0
        %v3448 = vadd.f32 %v3335, %v3447
        %3449 = vmatprep.mubr.f32.mxu0 %v251
        %3450 = vmatmul.mubr.f32.gmra.mrb[0].mxu0 %v250
        %v3451 = vpop.f32.mrb[0].mxu0
        %v3452 = vadd.f32 %v3339, %v3451
        %v3453 = vpop.f32.mrb[0].mxu0
        %v3454 = vadd.f32 %v3341, %v3453
        %3455 = vmatprep.mubr.f32.mxu0 %v263
        %3456 = vmatmul.mubr.f32.gmra.mrb[0].mxu0 %v262
        %v3457 = vpop.f32.mrb[0].mxu0
        %v3458 = vadd.f32 %v3345, %v3457
        %v3459 = vpop.f32.mrb[0].mxu0
        %v3460 = vadd.f32 %v3347, %v3459
        %3461 = vmatprep.mubr.f32.mxu0 %v275
        %3462 = vmatmul.mubr.f32.gmra.mrb[0].mxu0 %v274
        %v3463 = vpop.f32.mrb[0].mxu0
        %v3464 = vadd.f32 %v3351, %v3463
        %v3465 = vpop.f32.mrb[0].mxu0
        %v3466 = vadd.f32 %v3353, %v3465
        %3467 = vmatprep.mubr.f32.mxu0 %v287
        %3468 = vmatmul.mubr.f32.gmra.mrb[0].mxu0 %v286
        %v3469 = vpop.f32.mrb[0].mxu0
        %v3470 = vadd.f32 %v3357, %v3469
        %v3471 = vpop.f32.mrb[0].mxu0
        %v3472 = vadd.f32 %v3359, %v3471
        %3473 = vmatprep.mubr.f32.mxu0 %v299
        %3474 = vmatmul.mubr.f32.gmra.mrb[0].mxu0 %v298
        %v3475 = vpop.f32.mrb[0].mxu0
        %v3476 = vadd.f32 %v3363, %v3475
        %v3477 = vpop.f32.mrb[0].mxu0
        %v3478 = vadd.f32 %v3365, %v3477
        %3479 = vmatprep.mubr.f32.mxu0 %v311
        %3480 = vmatmul.mubr.f32.gmra.mrb[0].mxu0 %v310
        %v3481 = vpop.f32.mrb[0].mxu0
        %v3482 = vadd.f32 %v3369, %v3481
        %v3483 = vpop.f32.mrb[0].mxu0
        %v3484 = vadd.f32 %v3371, %v3483
        %3485 = vdwg.mxu0
        %3486 = vmatprep.subr.mxu0 %v837
        %3487 = vmatpush1.msra.mxu0 %v836
        %3488 = vmatprep.subr.mxu0 %v845
        %3489 = vmatpush1.msra.mxu0 %v844
        %3490 = vmatprep.subr.mxu0 %v853
        %3491 = vmatpush1.msra.mxu0 %v852
        %3492 = vmatprep.subr.mxu0 %v861
        %3493 = vmatpush1.msra.mxu0 %v860
        %3494 = vmatprep.subr.mxu0 %v869
        %3495 = vmatpush1.msra.mxu0 %v868
        %3496 = vmatprep.subr.mxu0 %v877
        %3497 = vmatpush1.msra.mxu0 %v876
        %3498 = vmatprep.subr.mxu0 %v885
        %3499 = vmatpush1.msra.mxu0 %v884
        %3500 = vmatprep.subr.mxu0 %v893
        %3501 = vmatpush1.msra.mxu0 %v892
        %3502 = vmatprep.subr.mxu0 %v901
        %3503 = vmatpush1.msra.mxu0 %v900
        %3504 = vmatprep.subr.mxu0 %v909
        %3505 = vmatpush1.msra.mxu0 %v908
        %3506 = vmatprep.subr.mxu0 %v917
        %3507 = vmatpush1.msra.mxu0 %v916
        %3508 = vmatprep.subr.mxu0 %v925
        %3509 = vmatpush1.msra.mxu0 %v924
        %3510 = vmatprep.subr.mxu0 %v933
        %3511 = vmatpush1.msra.mxu0 %v932
        %3512 = vmatprep.subr.mxu0 %v941
        %3513 = vmatpush1.msra.mxu0 %v940
        %3514 = vmatprep.subr.mxu0 %v949
        %3515 = vmatpush1.msra.mxu0 %v948
        %3516 = vmatprep.subr.mxu0 %v957
        %3517 = vmatpush1.msra.mxu0 %v956
        %3518 = vmatprep.subr.mxu0 %v965
        %3519 = vmatpush1.msra.mxu0 %v964
        %3520 = vmatprep.subr.mxu0 %v973
        %3521 = vmatpush1.msra.mxu0 %v972
        %3522 = vmatprep.subr.mxu0 %v981
        %3523 = vmatpush1.msra.mxu0 %v980
        %3524 = vmatprep.subr.mxu0 %v989
        %3525 = vmatpush1.msra.mxu0 %v988
        %3526 = vmatprep.subr.mxu0 %v997
        %3527 = vmatpush1.msra.mxu0 %v996
        %3528 = vmatprep.subr.mxu0 %v1005
        %3529 = vmatpush1.msra.mxu0 %v1004
        %3530 = vmatprep.subr.mxu0 %v1013
        %3531 = vmatpush1.msra.mxu0 %v1012
        %3532 = vmatprep.subr.mxu0 %v1021
        %3533 = vmatpush1.msra.mxu0 %v1020
        %3534 = vmatprep.subr.mxu0 %v1029
        %3535 = vmatpush1.msra.mxu0 %v1028
        %3536 = vmatprep.subr.mxu0 %v1037
        %3537 = vmatpush1.msra.mxu0 %v1036
        %3538 = vmatprep.subr.mxu0 %v1045
        %3539 = vmatpush1.msra.mxu0 %v1044
        %3540 = vmatprep.subr.mxu0 %v1053
        %3541 = vmatpush1.msra.mxu0 %v1052
        %3542 = vmatprep.subr.mxu0 %v1061
        %3543 = vmatpush1.msra.mxu0 %v1060
        %3544 = vmatprep.subr.mxu0 %v1069
        %3545 = vmatpush1.msra.mxu0 %v1068
        %3546 = vmatprep.subr.mxu0 %v1077
        %3547 = vmatpush1.msra.mxu0 %v1076
        %3548 = vmatprep.subr.mxu0 %v1085
        %3549 = vmatpush1.msra.mxu0 %v1084
        %3550 = vmatprep.mubr.f32.mxu0 %v229
        %3551 = vmatmul.mubr.f32.gmra.mrb[0].mxu0 %v228
        %v3552 = vpop.f32.mrb[0].mxu0
        %v3553 = vadd.f32 %v3440, %v3552
        %v3554 = vpop.f32.mrb[0].mxu0
        %v3555 = vadd.f32 %v3442, %v3554
        %3556 = vmatprep.mubr.f32.mxu0 %v241
        %3557 = vmatmul.mubr.f32.gmra.mrb[0].mxu0 %v240
        %v3558 = vpop.f32.mrb[0].mxu0
        %v3559 = vadd.f32 %v3446, %v3558
        %v3560 = vpop.f32.mrb[0].mxu0
        %v3561 = vadd.f32 %v3448, %v3560
        %3562 = vmatprep.mubr.f32.mxu0 %v253
        %3563 = vmatmul.mubr.f32.gmra.mrb[0].mxu0 %v252
        %v3564 = vpop.f32.mrb[0].mxu0
        %v3565 = vadd.f32 %v3452, %v3564
        %v3566 = vpop.f32.mrb[0].mxu0
        %v3567 = vadd.f32 %v3454, %v3566
        %3568 = vmatprep.mubr.f32.mxu0 %v265
        %3569 = vmatmul.mubr.f32.gmra.mrb[0].mxu0 %v264
        %v3570 = vpop.f32.mrb[0].mxu0
        %v3571 = vadd.f32 %v3458, %v3570
        %v3572 = vpop.f32.mrb[0].mxu0
        %v3573 = vadd.f32 %v3460, %v3572
        %3574 = vmatprep.mubr.f32.mxu0 %v277
        %3575 = vmatmul.mubr.f32.gmra.mrb[0].mxu0 %v276
        %v3576 = vpop.f32.mrb[0].mxu0
        %v3577 = vadd.f32 %v3464, %v3576
        %v3578 = vpop.f32.mrb[0].mxu0
        %v3579 = vadd.f32 %v3466, %v3578
        %3580 = vmatprep.mubr.f32.mxu0 %v289
        %3581 = vmatmul.mubr.f32.gmra.mrb[0].mxu0 %v288
        %v3582 = vpop.f32.mrb[0].mxu0
        %v3583 = vadd.f32 %v3470, %v3582
        %v3584 = vpop.f32.mrb[0].mxu0
        %v3585 = vadd.f32 %v3472, %v3584
        %3586 = vmatprep.mubr.f32.mxu0 %v301
        %3587 = vmatmul.mubr.f32.gmra.mrb[0].mxu0 %v300
        %v3588 = vpop.f32.mrb[0].mxu0
        %v3589 = vadd.f32 %v3476, %v3588
        %v3590 = vpop.f32.mrb[0].mxu0
        %v3591 = vadd.f32 %v3478, %v3590
        %3592 = vmatprep.mubr.f32.mxu0 %v313
        %3593 = vmatmul.mubr.f32.gmra.mrb[0].mxu0 %v312
        %v3594 = vpop.f32.mrb[0].mxu0
        %v3595 = vadd.f32 %v3482, %v3594
        %v3596 = vpop.f32.mrb[0].mxu0
        %v3597 = vadd.f32 %v3484, %v3596
        %3598 = vdwg.mxu0
        %3599 = vmatprep.subr.mxu0 %v1093
        %3600 = vmatpush1.msra.mxu0 %v1092
        %3601 = vmatprep.subr.mxu0 %v1101
        %3602 = vmatpush1.msra.mxu0 %v1100
        %3603 = vmatprep.subr.mxu0 %v1109
        %3604 = vmatpush1.msra.mxu0 %v1108
        %3605 = vmatprep.subr.mxu0 %v1117
        %3606 = vmatpush1.msra.mxu0 %v1116
        %3607 = vmatprep.subr.mxu0 %v1125
        %3608 = vmatpush1.msra.mxu0 %v1124
        %3609 = vmatprep.subr.mxu0 %v1133
        %3610 = vmatpush1.msra.mxu0 %v1132
        %3611 = vmatprep.subr.mxu0 %v1141
        %3612 = vmatpush1.msra.mxu0 %v1140
        %3613 = vmatprep.subr.mxu0 %v1149
        %3614 = vmatpush1.msra.mxu0 %v1148
        %3615 = vmatprep.subr.mxu0 %v1157
        %3616 = vmatpush1.msra.mxu0 %v1156
        %3617 = vmatprep.subr.mxu0 %v1165
        %3618 = vmatpush1.msra.mxu0 %v1164
        %3619 = vmatprep.subr.mxu0 %v1173
        %3620 = vmatpush1.msra.mxu0 %v1172
        %3621 = vmatprep.subr.mxu0 %v1181
        %3622 = vmatpush1.msra.mxu0 %v1180
        %3623 = vmatprep.subr.mxu0 %v1189
        %3624 = vmatpush1.msra.mxu0 %v1188
        %3625 = vmatprep.subr.mxu0 %v1197
        %3626 = vmatpush1.msra.mxu0 %v1196
        %3627 = vmatprep.subr.mxu0 %v1205
        %3628 = vmatpush1.msra.mxu0 %v1204
        %3629 = vmatprep.subr.mxu0 %v1213
        %3630 = vmatpush1.msra.mxu0 %v1212
        %3631 = vmatprep.subr.mxu0 %v1221
        %3632 = vmatpush1.msra.mxu0 %v1220
        %3633 = vmatprep.subr.mxu0 %v1229
        %3634 = vmatpush1.msra.mxu0 %v1228
        %3635 = vmatprep.subr.mxu0 %v1237
        %3636 = vmatpush1.msra.mxu0 %v1236
        %3637 = vmatprep.subr.mxu0 %v1245
        %3638 = vmatpush1.msra.mxu0 %v1244
        %3639 = vmatprep.subr.mxu0 %v1253
        %3640 = vmatpush1.msra.mxu0 %v1252
        %3641 = vmatprep.subr.mxu0 %v1261
        %3642 = vmatpush1.msra.mxu0 %v1260
        %3643 = vmatprep.subr.mxu0 %v1269
        %3644 = vmatpush1.msra.mxu0 %v1268
        %3645 = vmatprep.subr.mxu0 %v1277
        %3646 = vmatpush1.msra.mxu0 %v1276
        %3647 = vmatprep.subr.mxu0 %v1285
        %3648 = vmatpush1.msra.mxu0 %v1284
        %3649 = vmatprep.subr.mxu0 %v1293
        %3650 = vmatpush1.msra.mxu0 %v1292
        %3651 = vmatprep.subr.mxu0 %v1301
        %3652 = vmatpush1.msra.mxu0 %v1300
        %3653 = vmatprep.subr.mxu0 %v1309
        %3654 = vmatpush1.msra.mxu0 %v1308
        %3655 = vmatprep.subr.mxu0 %v1317
        %3656 = vmatpush1.msra.mxu0 %v1316
        %3657 = vmatprep.subr.mxu0 %v1325
        %3658 = vmatpush1.msra.mxu0 %v1324
        %3659 = vmatprep.subr.mxu0 %v1333
        %3660 = vmatpush1.msra.mxu0 %v1332
        %3661 = vmatprep.subr.mxu0 %v1341
        %3662 = vmatpush1.msra.mxu0 %v1340
        %3663 = vmatprep.mubr.f32.mxu0 %v231
        %3664 = vmatmul.mubr.f32.gmra.mrb[0].mxu0 %v230
        %v3665 = vpop.f32.mrb[0].mxu0
        %v3666 = vadd.f32 %v3553, %v3665
        %v3667 = vpop.f32.mrb[0].mxu0
        %v3668 = vadd.f32 %v3555, %v3667
        %3669 = vmatprep.mubr.f32.mxu0 %v243
        %3670 = vmatmul.mubr.f32.gmra.mrb[0].mxu0 %v242
        %v3671 = vpop.f32.mrb[0].mxu0
        %v3672 = vadd.f32 %v3559, %v3671
        %v3673 = vpop.f32.mrb[0].mxu0
        %v3674 = vadd.f32 %v3561, %v3673
        %3675 = vmatprep.mubr.f32.mxu0 %v255
        %3676 = vmatmul.mubr.f32.gmra.mrb[0].mxu0 %v254
        %v3677 = vpop.f32.mrb[0].mxu0
        %v3678 = vadd.f32 %v3565, %v3677
        %v3679 = vpop.f32.mrb[0].mxu0
        %v3680 = vadd.f32 %v3567, %v3679
        %3681 = vmatprep.mubr.f32.mxu0 %v267
        %3682 = vmatmul.mubr.f32.gmra.mrb[0].mxu0 %v266
        %v3683 = vpop.f32.mrb[0].mxu0
        %v3684 = vadd.f32 %v3571, %v3683
        %v3685 = vpop.f32.mrb[0].mxu0
        %v3686 = vadd.f32 %v3573, %v3685
        %3687 = vmatprep.mubr.f32.mxu0 %v279
        %3688 = vmatmul.mubr.f32.gmra.mrb[0].mxu0 %v278
        %v3689 = vpop.f32.mrb[0].mxu0
        %v3690 = vadd.f32 %v3577, %v3689
        %v3691 = vpop.f32.mrb[0].mxu0
        %v3692 = vadd.f32 %v3579, %v3691
        %3693 = vmatprep.mubr.f32.mxu0 %v291
        %3694 = vmatmul.mubr.f32.gmra.mrb[0].mxu0 %v290
        %v3695 = vpop.f32.mrb[0].mxu0
        %v3696 = vadd.f32 %v3583, %v3695
        %v3697 = vpop.f32.mrb[0].mxu0
        %v3698 = vadd.f32 %v3585, %v3697
        %3699 = vmatprep.mubr.f32.mxu0 %v303
        %3700 = vmatmul.mubr.f32.gmra.mrb[0].mxu0 %v302
        %v3701 = vpop.f32.mrb[0].mxu0
        %v3702 = vadd.f32 %v3589, %v3701
        %v3703 = vpop.f32.mrb[0].mxu0
        %v3704 = vadd.f32 %v3591, %v3703
        %3705 = vmatprep.mubr.f32.mxu0 %v315
        %3706 = vmatmul.mubr.f32.gmra.mrb[0].mxu0 %v314
        %v3707 = vpop.f32.mrb[0].mxu0
        %v3708 = vadd.f32 %v3595, %v3707
        %v3709 = vpop.f32.mrb[0].mxu0
        %v3710 = vadd.f32 %v3597, %v3709
        %3711 = vdwg.mxu0
        %3712 = vmatprep.subr.mxu0 %v1349
        %3713 = vmatpush1.msra.mxu0 %v1348
        %3714 = vmatprep.subr.mxu0 %v1357
        %3715 = vmatpush1.msra.mxu0 %v1356
        %3716 = vmatprep.subr.mxu0 %v1365
        %3717 = vmatpush1.msra.mxu0 %v1364
        %3718 = vmatprep.subr.mxu0 %v1373
        %3719 = vmatpush1.msra.mxu0 %v1372
        %3720 = vmatprep.subr.mxu0 %v1381
        %3721 = vmatpush1.msra.mxu0 %v1380
        %3722 = vmatprep.subr.mxu0 %v1389
        %3723 = vmatpush1.msra.mxu0 %v1388
        %3724 = vmatprep.subr.mxu0 %v1397
        %3725 = vmatpush1.msra.mxu0 %v1396
        %3726 = vmatprep.subr.mxu0 %v1405
        %3727 = vmatpush1.msra.mxu0 %v1404
        %3728 = vmatprep.subr.mxu0 %v1413
        %3729 = vmatpush1.msra.mxu0 %v1412
        %3730 = vmatprep.subr.mxu0 %v1421
        %3731 = vmatpush1.msra.mxu0 %v1420
        %3732 = vmatprep.subr.mxu0 %v1429
        %3733 = vmatpush1.msra.mxu0 %v1428
        %3734 = vmatprep.subr.mxu0 %v1437
        %3735 = vmatpush1.msra.mxu0 %v1436
        %3736 = vmatprep.subr.mxu0 %v1445
        %3737 = vmatpush1.msra.mxu0 %v1444
        %3738 = vmatprep.subr.mxu0 %v1453
        %3739 = vmatpush1.msra.mxu0 %v1452
        %3740 = vmatprep.subr.mxu0 %v1461
        %3741 = vmatpush1.msra.mxu0 %v1460
        %3742 = vmatprep.subr.mxu0 %v1469
        %3743 = vmatpush1.msra.mxu0 %v1468
        %3744 = vmatprep.subr.mxu0 %v1477
        %3745 = vmatpush1.msra.mxu0 %v1476
        %3746 = vmatprep.subr.mxu0 %v1485
        %3747 = vmatpush1.msra.mxu0 %v1484
        %3748 = vmatprep.subr.mxu0 %v1493
        %3749 = vmatpush1.msra.mxu0 %v1492
        %3750 = vmatprep.subr.mxu0 %v1501
        %3751 = vmatpush1.msra.mxu0 %v1500
        %3752 = vmatprep.subr.mxu0 %v1509
        %3753 = vmatpush1.msra.mxu0 %v1508
        %3754 = vmatprep.subr.mxu0 %v1517
        %3755 = vmatpush1.msra.mxu0 %v1516
        %3756 = vmatprep.subr.mxu0 %v1525
        %3757 = vmatpush1.msra.mxu0 %v1524
        %3758 = vmatprep.subr.mxu0 %v1533
        %3759 = vmatpush1.msra.mxu0 %v1532
        %3760 = vmatprep.subr.mxu0 %v1541
        %3761 = vmatpush1.msra.mxu0 %v1540
        %3762 = vmatprep.subr.mxu0 %v1549
        %3763 = vmatpush1.msra.mxu0 %v1548
        %3764 = vmatprep.subr.mxu0 %v1557
        %3765 = vmatpush1.msra.mxu0 %v1556
        %3766 = vmatprep.subr.mxu0 %v1565
        %3767 = vmatpush1.msra.mxu0 %v1564
        %3768 = vmatprep.subr.mxu0 %v1573
        %3769 = vmatpush1.msra.mxu0 %v1572
        %3770 = vmatprep.subr.mxu0 %v1581
        %3771 = vmatpush1.msra.mxu0 %v1580
        %3772 = vmatprep.subr.mxu0 %v1589
        %3773 = vmatpush1.msra.mxu0 %v1588
        %3774 = vmatprep.subr.mxu0 %v1597
        %3775 = vmatpush1.msra.mxu0 %v1596
        %3776 = vmatprep.mubr.f32.mxu0 %v233
        %3777 = vmatmul.mubr.f32.gmra.mrb[0].mxu0 %v232
        %v3778 = vpop.f32.mrb[0].mxu0
        %v3779 = vadd.f32 %v3666, %v3778
        %v3780 = vpop.f32.mrb[0].mxu0
        %v3781 = vadd.f32 %v3668, %v3780
        %3782 = vmatprep.mubr.f32.mxu0 %v245
        %3783 = vmatmul.mubr.f32.gmra.mrb[0].mxu0 %v244
        %v3784 = vpop.f32.mrb[0].mxu0
        %v3785 = vadd.f32 %v3672, %v3784
        %v3786 = vpop.f32.mrb[0].mxu0
        %v3787 = vadd.f32 %v3674, %v3786
        %3788 = vmatprep.mubr.f32.mxu0 %v257
        %3789 = vmatmul.mubr.f32.gmra.mrb[0].mxu0 %v256
        %v3790 = vpop.f32.mrb[0].mxu0
        %v3791 = vadd.f32 %v3678, %v3790
        %v3792 = vpop.f32.mrb[0].mxu0
        %v3793 = vadd.f32 %v3680, %v3792
        %3794 = vmatprep.mubr.f32.mxu0 %v269
        %3795 = vmatmul.mubr.f32.gmra.mrb[0].mxu0 %v268
        %v3796 = vpop.f32.mrb[0].mxu0
        %v3797 = vadd.f32 %v3684, %v3796
        %v3798 = vpop.f32.mrb[0].mxu0
        %v3799 = vadd.f32 %v3686, %v3798
        %3800 = vmatprep.mubr.f32.mxu0 %v281
        %3801 = vmatmul.mubr.f32.gmra.mrb[0].mxu0 %v280
        %v3802 = vpop.f32.mrb[0].mxu0
        %v3803 = vadd.f32 %v3690, %v3802
        %v3804 = vpop.f32.mrb[0].mxu0
        %v3805 = vadd.f32 %v3692, %v3804
        %3806 = vmatprep.mubr.f32.mxu0 %v293
        %3807 = vmatmul.mubr.f32.gmra.mrb[0].mxu0 %v292
        %v3808 = vpop.f32.mrb[0].mxu0
        %v3809 = vadd.f32 %v3696, %v3808
        %v3810 = vpop.f32.mrb[0].mxu0
        %v3811 = vadd.f32 %v3698, %v3810
        %3812 = vmatprep.mubr.f32.mxu0 %v305
        %3813 = vmatmul.mubr.f32.gmra.mrb[0].mxu0 %v304
        %v3814 = vpop.f32.mrb[0].mxu0
        %v3815 = vadd.f32 %v3702, %v3814
        %v3816 = vpop.f32.mrb[0].mxu0
        %v3817 = vadd.f32 %v3704, %v3816
        %3818 = vmatprep.mubr.f32.mxu0 %v317
        %3819 = vmatmul.mubr.f32.gmra.mrb[0].mxu0 %v316
        %v3820 = vpop.f32.mrb[0].mxu0
        %v3821 = vadd.f32 %v3708, %v3820
        %v3822 = vpop.f32.mrb[0].mxu0
        %v3823 = vadd.f32 %v3710, %v3822
        %3824 = vdwg.mxu0
        %3825 = vmatprep.subr.mxu0 %v1605
        %3826 = vmatpush1.msra.mxu0 %v1604
        %3827 = vmatprep.subr.mxu0 %v1613
        %3828 = vmatpush1.msra.mxu0 %v1612
        %3829 = vmatprep.subr.mxu0 %v1621
        %3830 = vmatpush1.msra.mxu0 %v1620
        %3831 = vmatprep.subr.mxu0 %v1629
        %3832 = vmatpush1.msra.mxu0 %v1628
        %3833 = vmatprep.subr.mxu0 %v1637
        %3834 = vmatpush1.msra.mxu0 %v1636
        %3835 = vmatprep.subr.mxu0 %v1645
        %3836 = vmatpush1.msra.mxu0 %v1644
        %3837 = vmatprep.subr.mxu0 %v1653
        %3838 = vmatpush1.msra.mxu0 %v1652
        %3839 = vmatprep.subr.mxu0 %v1661
        %3840 = vmatpush1.msra.mxu0 %v1660
        %3841 = vmatprep.subr.mxu0 %v1669
        %3842 = vmatpush1.msra.mxu0 %v1668
        %3843 = vmatprep.subr.mxu0 %v1677
        %3844 = vmatpush1.msra.mxu0 %v1676
        %3845 = vmatprep.subr.mxu0 %v1685
        %3846 = vmatpush1.msra.mxu0 %v1684
        %3847 = vmatprep.subr.mxu0 %v1693
        %3848 = vmatpush1.msra.mxu0 %v1692
        %3849 = vmatprep.subr.mxu0 %v1701
        %3850 = vmatpush1.msra.mxu0 %v1700
        %3851 = vmatprep.subr.mxu0 %v1709
        %3852 = vmatpush1.msra.mxu0 %v1708
        %3853 = vmatprep.subr.mxu0 %v1717
        %3854 = vmatpush1.msra.mxu0 %v1716
        %3855 = vmatprep.subr.mxu0 %v1725
        %3856 = vmatpush1.msra.mxu0 %v1724
        %3857 = vmatprep.subr.mxu0 %v1733
        %3858 = vmatpush1.msra.mxu0 %v1732
        %3859 = vmatprep.subr.mxu0 %v1741
        %3860 = vmatpush1.msra.mxu0 %v1740
        %3861 = vmatprep.subr.mxu0 %v1749
        %3862 = vmatpush1.msra.mxu0 %v1748
        %3863 = vmatprep.subr.mxu0 %v1757
        %3864 = vmatpush1.msra.mxu0 %v1756
        %3865 = vmatprep.subr.mxu0 %v1765
        %3866 = vmatpush1.msra.mxu0 %v1764
        %3867 = vmatprep.subr.mxu0 %v1773
        %3868 = vmatpush1.msra.mxu0 %v1772
        %3869 = vmatprep.subr.mxu0 %v1781
        %3870 = vmatpush1.msra.mxu0 %v1780
        %3871 = vmatprep.subr.mxu0 %v1789
        %3872 = vmatpush1.msra.mxu0 %v1788
        %3873 = vmatprep.subr.mxu0 %v1797
        %3874 = vmatpush1.msra.mxu0 %v1796
        %3875 = vmatprep.subr.mxu0 %v1805
        %3876 = vmatpush1.msra.mxu0 %v1804
        %3877 = vmatprep.subr.mxu0 %v1813
        %3878 = vmatpush1.msra.mxu0 %v1812
        %3879 = vmatprep.subr.mxu0 %v1821
        %3880 = vmatpush1.msra.mxu0 %v1820
        %3881 = vmatprep.subr.mxu0 %v1829
        %3882 = vmatpush1.msra.mxu0 %v1828
        %3883 = vmatprep.subr.mxu0 %v1837
        %3884 = vmatpush1.msra.mxu0 %v1836
        %3885 = vmatprep.subr.mxu0 %v1845
        %3886 = vmatpush1.msra.mxu0 %v1844
        %3887 = vmatprep.subr.mxu0 %v1853
        %3888 = vmatpush1.msra.mxu0 %v1852
        %3889 = vmatprep.mubr.f32.mxu0 %v235
        %3890 = vmatmul.mubr.f32.gmra.mrb[0].mxu0 %v234
        %v3891 = vpop.f32.mrb[0].mxu0
        %v3892 = vadd.f32 %v3779, %v3891
        %v3893 = vpop.f32.mrb[0].mxu0
        %v3894 = vadd.f32 %v3781, %v3893
        %3895 = vmatprep.mubr.f32.mxu0 %v247
        %3896 = vmatmul.mubr.f32.gmra.mrb[0].mxu0 %v246
        %v3897 = vpop.f32.mrb[0].mxu0
        %v3898 = vadd.f32 %v3785, %v3897
        %v3899 = vpop.f32.mrb[0].mxu0
        %v3900 = vadd.f32 %v3787, %v3899
        %3901 = vmatprep.mubr.f32.mxu0 %v259
        %3902 = vmatmul.mubr.f32.gmra.mrb[0].mxu0 %v258
        %v3903 = vpop.f32.mrb[0].mxu0
        %v3904 = vadd.f32 %v3791, %v3903
        %v3905 = vpop.f32.mrb[0].mxu0
        %v3906 = vadd.f32 %v3793, %v3905
        %3907 = vmatprep.mubr.f32.mxu0 %v271
        %3908 = vmatmul.mubr.f32.gmra.mrb[0].mxu0 %v270
        %v3909 = vpop.f32.mrb[0].mxu0
        %v3910 = vadd.f32 %v3797, %v3909
        %v3911 = vpop.f32.mrb[0].mxu0
        %v3912 = vadd.f32 %v3799, %v3911
        %3913 = vmatprep.mubr.f32.mxu0 %v283
        %3914 = vmatmul.mubr.f32.gmra.mrb[0].mxu0 %v282
        %v3915 = vpop.f32.mrb[0].mxu0
        %v3916 = vadd.f32 %v3803, %v3915
        %v3917 = vpop.f32.mrb[0].mxu0
        %v3918 = vadd.f32 %v3805, %v3917
        %3919 = vmatprep.mubr.f32.mxu0 %v295
        %3920 = vmatmul.mubr.f32.gmra.mrb[0].mxu0 %v294
        %v3921 = vpop.f32.mrb[0].mxu0
        %v3922 = vadd.f32 %v3809, %v3921
        %v3923 = vpop.f32.mrb[0].mxu0
        %v3924 = vadd.f32 %v3811, %v3923
        %3925 = vmatprep.mubr.f32.mxu0 %v307
        %3926 = vmatmul.mubr.f32.gmra.mrb[0].mxu0 %v306
        %v3927 = vpop.f32.mrb[0].mxu0
        %v3928 = vadd.f32 %v3815, %v3927
        %v3929 = vpop.f32.mrb[0].mxu0
        %v3930 = vadd.f32 %v3817, %v3929
        %3931 = vmatprep.mubr.f32.mxu0 %v319
        %3932 = vmatmul.mubr.f32.gmra.mrb[0].mxu0 %v318
        %v3933 = vpop.f32.mrb[0].mxu0
        %v3934 = vadd.f32 %v3821, %v3933
        %v3935 = vpop.f32.mrb[0].mxu0
        %v3936 = vadd.f32 %v3823, %v3935
        %3937 = vdwg.mxu0
        %3938 = vmatprep.subr.mxu0 %v327
        %3939 = vmatpush1.msra.mxu0 %v326
        %3940 = vmatprep.subr.mxu0 %v335
        %3941 = vmatpush1.msra.mxu0 %v334
        %3942 = vmatprep.subr.mxu0 %v343
        %3943 = vmatpush1.msra.mxu0 %v342
        %3944 = vmatprep.subr.mxu0 %v351
        %3945 = vmatpush1.msra.mxu0 %v350
        %3946 = vmatprep.subr.mxu0 %v359
        %3947 = vmatpush1.msra.mxu0 %v358
        %3948 = vmatprep.subr.mxu0 %v367
        %3949 = vmatpush1.msra.mxu0 %v366
        %3950 = vmatprep.subr.mxu0 %v375
        %3951 = vmatpush1.msra.mxu0 %v374
        %3952 = vmatprep.subr.mxu0 %v383
        %3953 = vmatpush1.msra.mxu0 %v382
        %3954 = vmatprep.subr.mxu0 %v391
        %3955 = vmatpush1.msra.mxu0 %v390
        %3956 = vmatprep.subr.mxu0 %v399
        %3957 = vmatpush1.msra.mxu0 %v398
        %3958 = vmatprep.subr.mxu0 %v407
        %3959 = vmatpush1.msra.mxu0 %v406
        %3960 = vmatprep.subr.mxu0 %v415
        %3961 = vmatpush1.msra.mxu0 %v414
        %3962 = vmatprep.subr.mxu0 %v423
        %3963 = vmatpush1.msra.mxu0 %v422
        %3964 = vmatprep.subr.mxu0 %v431
        %3965 = vmatpush1.msra.mxu0 %v430
        %3966 = vmatprep.subr.mxu0 %v439
        %3967 = vmatpush1.msra.mxu0 %v438
        %3968 = vmatprep.subr.mxu0 %v447
        %3969 = vmatpush1.msra.mxu0 %v446
        %3970 = vmatprep.subr.mxu0 %v455
        %3971 = vmatpush1.msra.mxu0 %v454
        %3972 = vmatprep.subr.mxu0 %v463
        %3973 = vmatpush1.msra.mxu0 %v462
        %3974 = vmatprep.subr.mxu0 %v471
        %3975 = vmatpush1.msra.mxu0 %v470
        %3976 = vmatprep.subr.mxu0 %v479
        %3977 = vmatpush1.msra.mxu0 %v478
        %3978 = vmatprep.subr.mxu0 %v487
        %3979 = vmatpush1.msra.mxu0 %v486
        %3980 = vmatprep.subr.mxu0 %v495
        %3981 = vmatpush1.msra.mxu0 %v494
        %3982 = vmatprep.subr.mxu0 %v503
        %3983 = vmatpush1.msra.mxu0 %v502
        %3984 = vmatprep.subr.mxu0 %v511
        %3985 = vmatpush1.msra.mxu0 %v510
        %3986 = vmatprep.subr.mxu0 %v519
        %3987 = vmatpush1.msra.mxu0 %v518
        %3988 = vmatprep.subr.mxu0 %v527
        %3989 = vmatpush1.msra.mxu0 %v526
        %3990 = vmatprep.subr.mxu0 %v535
        %3991 = vmatpush1.msra.mxu0 %v534
        %3992 = vmatprep.subr.mxu0 %v543
        %3993 = vmatpush1.msra.mxu0 %v542
        %3994 = vmatprep.subr.mxu0 %v551
        %3995 = vmatpush1.msra.mxu0 %v550
        %3996 = vmatprep.subr.mxu0 %v559
        %3997 = vmatpush1.msra.mxu0 %v558
        %3998 = vmatprep.subr.mxu0 %v567
        %3999 = vmatpush1.msra.mxu0 %v566
        %4000 = vmatprep.subr.mxu0 %v575
        %4001 = vmatpush1.msra.mxu0 %v574
        %4002 = vmatprep.mubr.f32.mxu0 %v225
        %4003 = vmatmul.mubr.f32.gmra.mrb[0].mxu0 %v224
        %v4004 = vpop.f32.mrb[0].mxu0
        %v4005 = vadd.f32 %v1867, %v4004
        %v4006 = vpop.f32.mrb[0].mxu0
        %v4007 = vadd.f32 %v1867, %v4006
        %4008 = vmatprep.mubr.f32.mxu0 %v237
        %4009 = vmatmul.mubr.f32.gmra.mrb[0].mxu0 %v236
        %v4010 = vpop.f32.mrb[0].mxu0
        %v4011 = vadd.f32 %v1872, %v4010
        %v4012 = vpop.f32.mrb[0].mxu0
        %v4013 = vadd.f32 %v1872, %v4012
        %4014 = vmatprep.mubr.f32.mxu0 %v249
        %4015 = vmatmul.mubr.f32.gmra.mrb[0].mxu0 %v248
        %v4016 = vpop.f32.mrb[0].mxu0
        %v4017 = vadd.f32 %v1877, %v4016
        %v4018 = vpop.f32.mrb[0].mxu0
        %v4019 = vadd.f32 %v1877, %v4018
        %4020 = vmatprep.mubr.f32.mxu0 %v261
        %4021 = vmatmul.mubr.f32.gmra.mrb[0].mxu0 %v260
        %v4022 = vpop.f32.mrb[0].mxu0
        %v4023 = vadd.f32 %v1882, %v4022
        %v4024 = vpop.f32.mrb[0].mxu0
        %v4025 = vadd.f32 %v1882, %v4024
        %4026 = vmatprep.mubr.f32.mxu0 %v273
        %4027 = vmatmul.mubr.f32.gmra.mrb[0].mxu0 %v272
        %v4028 = vpop.f32.mrb[0].mxu0
        %v4029 = vadd.f32 %v1887, %v4028
        %v4030 = vpop.f32.mrb[0].mxu0
        %v4031 = vadd.f32 %v1887, %v4030
        %4032 = vmatprep.mubr.f32.mxu0 %v285
        %4033 = vmatmul.mubr.f32.gmra.mrb[0].mxu0 %v284
        %v4034 = vpop.f32.mrb[0].mxu0
        %v4035 = vadd.f32 %v1892, %v4034
        %v4036 = vpop.f32.mrb[0].mxu0
        %v4037 = vadd.f32 %v1892, %v4036
        %4038 = vmatprep.mubr.f32.mxu0 %v297
        %4039 = vmatmul.mubr.f32.gmra.mrb[0].mxu0 %v296
        %v4040 = vpop.f32.mrb[0].mxu0
        %v4041 = vadd.f32 %v1897, %v4040
        %v4042 = vpop.f32.mrb[0].mxu0
        %v4043 = vadd.f32 %v1897, %v4042
        %4044 = vmatprep.mubr.f32.mxu0 %v309
        %4045 = vmatmul.mubr.f32.gmra.mrb[0].mxu0 %v308
        %v4046 = vpop.f32.mrb[0].mxu0
        %v4047 = vadd.f32 %v1902, %v4046
        %v4048 = vpop.f32.mrb[0].mxu0
        %v4049 = vadd.f32 %v1902, %v4048
        %4050 = vdwg.mxu0
        %4051 = vmatprep.subr.mxu0 %v583
        %4052 = vmatpush1.msra.mxu0 %v582
        %4053 = vmatprep.subr.mxu0 %v591
        %4054 = vmatpush1.msra.mxu0 %v590
        %4055 = vmatprep.subr.mxu0 %v599
        %4056 = vmatpush1.msra.mxu0 %v598
        %4057 = vmatprep.subr.mxu0 %v607
        %4058 = vmatpush1.msra.mxu0 %v606
        %4059 = vmatprep.subr.mxu0 %v615
        %4060 = vmatpush1.msra.mxu0 %v614
        %4061 = vmatprep.subr.mxu0 %v623
        %4062 = vmatpush1.msra.mxu0 %v622
        %4063 = vmatprep.subr.mxu0 %v631
        %4064 = vmatpush1.msra.mxu0 %v630
        %4065 = vmatprep.subr.mxu0 %v639
        %4066 = vmatpush1.msra.mxu0 %v638
        %4067 = vmatprep.subr.mxu0 %v647
        %4068 = vmatpush1.msra.mxu0 %v646
        %4069 = vmatprep.subr.mxu0 %v655
        %4070 = vmatpush1.msra.mxu0 %v654
        %4071 = vmatprep.subr.mxu0 %v663
        %4072 = vmatpush1.msra.mxu0 %v662
        %4073 = vmatprep.subr.mxu0 %v671
        %4074 = vmatpush1.msra.mxu0 %v670
        %4075 = vmatprep.subr.mxu0 %v679
        %4076 = vmatpush1.msra.mxu0 %v678
        %4077 = vmatprep.subr.mxu0 %v687
        %4078 = vmatpush1.msra.mxu0 %v686
        %4079 = vmatprep.subr.mxu0 %v695
        %4080 = vmatpush1.msra.mxu0 %v694
        %4081 = vmatprep.subr.mxu0 %v703
        %4082 = vmatpush1.msra.mxu0 %v702
        %4083 = vmatprep.subr.mxu0 %v711
        %4084 = vmatpush1.msra.mxu0 %v710
        %4085 = vmatprep.subr.mxu0 %v719
        %4086 = vmatpush1.msra.mxu0 %v718
        %4087 = vmatprep.subr.mxu0 %v727
        %4088 = vmatpush1.msra.mxu0 %v726
        %4089 = vmatprep.subr.mxu0 %v735
        %4090 = vmatpush1.msra.mxu0 %v734
        %4091 = vmatprep.subr.mxu0 %v743
        %4092 = vmatpush1.msra.mxu0 %v742
        %4093 = vmatprep.subr.mxu0 %v751
        %4094 = vmatpush1.msra.mxu0 %v750
        %4095 = vmatprep.subr.mxu0 %v759
        %4096 = vmatpush1.msra.mxu0 %v758
        %4097 = vmatprep.subr.mxu0 %v767
        %4098 = vmatpush1.msra.mxu0 %v766
        %4099 = vmatprep.subr.mxu0 %v775
        %4100 = vmatpush1.msra.mxu0 %v774
        %4101 = vmatprep.subr.mxu0 %v783
        %4102 = vmatpush1.msra.mxu0 %v782
        %4103 = vmatprep.subr.mxu0 %v791
        %4104 = vmatpush1.msra.mxu0 %v790
        %4105 = vmatprep.subr.mxu0 %v799
        %4106 = vmatpush1.msra.mxu0 %v798
        %4107 = vmatprep.subr.mxu0 %v807
        %4108 = vmatpush1.msra.mxu0 %v806
        %4109 = vmatprep.subr.mxu0 %v815
        %4110 = vmatpush1.msra.mxu0 %v814
        %4111 = vmatprep.subr.mxu0 %v823
        %4112 = vmatpush1.msra.mxu0 %v822
        %4113 = vmatprep.subr.mxu0 %v831
        %4114 = vmatpush1.msra.mxu0 %v830
        %4115 = vmatprep.mubr.f32.mxu0 %v227
        %4116 = vmatmul.mubr.f32.gmra.mrb[0].mxu0 %v226
        %v4117 = vpop.f32.mrb[0].mxu0
        %v4118 = vadd.f32 %v4005, %v4117
        %v4119 = vpop.f32.mrb[0].mxu0
        %v4120 = vadd.f32 %v4007, %v4119
        %4121 = vmatprep.mubr.f32.mxu0 %v239
        %4122 = vmatmul.mubr.f32.gmra.mrb[0].mxu0 %v238
        %v4123 = vpop.f32.mrb[0].mxu0
        %v4124 = vadd.f32 %v4011, %v4123
        %v4125 = vpop.f32.mrb[0].mxu0
        %v4126 = vadd.f32 %v4013, %v4125
        %4127 = vmatprep.mubr.f32.mxu0 %v251
        %4128 = vmatmul.mubr.f32.gmra.mrb[0].mxu0 %v250
        %v4129 = vpop.f32.mrb[0].mxu0
        %v4130 = vadd.f32 %v4017, %v4129
        %v4131 = vpop.f32.mrb[0].mxu0
        %v4132 = vadd.f32 %v4019, %v4131
        %4133 = vmatprep.mubr.f32.mxu0 %v263
        %4134 = vmatmul.mubr.f32.gmra.mrb[0].mxu0 %v262
        %v4135 = vpop.f32.mrb[0].mxu0
        %v4136 = vadd.f32 %v4023, %v4135
        %v4137 = vpop.f32.mrb[0].mxu0
        %v4138 = vadd.f32 %v4025, %v4137
        %4139 = vmatprep.mubr.f32.mxu0 %v275
        %4140 = vmatmul.mubr.f32.gmra.mrb[0].mxu0 %v274
        %v4141 = vpop.f32.mrb[0].mxu0
        %v4142 = vadd.f32 %v4029, %v4141
        %v4143 = vpop.f32.mrb[0].mxu0
        %v4144 = vadd.f32 %v4031, %v4143
        %4145 = vmatprep.mubr.f32.mxu0 %v287
        %4146 = vmatmul.mubr.f32.gmra.mrb[0].mxu0 %v286
        %v4147 = vpop.f32.mrb[0].mxu0
        %v4148 = vadd.f32 %v4035, %v4147
        %v4149 = vpop.f32.mrb[0].mxu0
        %v4150 = vadd.f32 %v4037, %v4149
        %4151 = vmatprep.mubr.f32.mxu0 %v299
        %4152 = vmatmul.mubr.f32.gmra.mrb[0].mxu0 %v298
        %v4153 = vpop.f32.mrb[0].mxu0
        %v4154 = vadd.f32 %v4041, %v4153
        %v4155 = vpop.f32.mrb[0].mxu0
        %v4156 = vadd.f32 %v4043, %v4155
        %4157 = vmatprep.mubr.f32.mxu0 %v311
        %4158 = vmatmul.mubr.f32.gmra.mrb[0].mxu0 %v310
        %v4159 = vpop.f32.mrb[0].mxu0
        %v4160 = vadd.f32 %v4047, %v4159
        %v4161 = vpop.f32.mrb[0].mxu0
        %v4162 = vadd.f32 %v4049, %v4161
        %4163 = vdwg.mxu0
        %4164 = vmatprep.subr.mxu0 %v839
        %4165 = vmatpush1.msra.mxu0 %v838
        %4166 = vmatprep.subr.mxu0 %v847
        %4167 = vmatpush1.msra.mxu0 %v846
        %4168 = vmatprep.subr.mxu0 %v855
        %4169 = vmatpush1.msra.mxu0 %v854
        %4170 = vmatprep.subr.mxu0 %v863
        %4171 = vmatpush1.msra.mxu0 %v862
        %4172 = vmatprep.subr.mxu0 %v871
        %4173 = vmatpush1.msra.mxu0 %v870
        %4174 = vmatprep.subr.mxu0 %v879
        %4175 = vmatpush1.msra.mxu0 %v878
        %4176 = vmatprep.subr.mxu0 %v887
        %4177 = vmatpush1.msra.mxu0 %v886
        %4178 = vmatprep.subr.mxu0 %v895
        %4179 = vmatpush1.msra.mxu0 %v894
        %4180 = vmatprep.subr.mxu0 %v903
        %4181 = vmatpush1.msra.mxu0 %v902
        %4182 = vmatprep.subr.mxu0 %v911
        %4183 = vmatpush1.msra.mxu0 %v910
        %4184 = vmatprep.subr.mxu0 %v919
        %4185 = vmatpush1.msra.mxu0 %v918
        %4186 = vmatprep.subr.mxu0 %v927
        %4187 = vmatpush1.msra.mxu0 %v926
        %4188 = vmatprep.subr.mxu0 %v935
        %4189 = vmatpush1.msra.mxu0 %v934
        %4190 = vmatprep.subr.mxu0 %v943
        %4191 = vmatpush1.msra.mxu0 %v942
        %4192 = vmatprep.subr.mxu0 %v951
        %4193 = vmatpush1.msra.mxu0 %v950
        %4194 = vmatprep.subr.mxu0 %v959
        %4195 = vmatpush1.msra.mxu0 %v958
        %4196 = vmatprep.subr.mxu0 %v967
        %4197 = vmatpush1.msra.mxu0 %v966
        %4198 = vmatprep.subr.mxu0 %v975
        %4199 = vmatpush1.msra.mxu0 %v974
        %4200 = vmatprep.subr.mxu0 %v983
        %4201 = vmatpush1.msra.mxu0 %v982
        %4202 = vmatprep.subr.mxu0 %v991
        %4203 = vmatpush1.msra.mxu0 %v990
        %4204 = vmatprep.subr.mxu0 %v999
        %4205 = vmatpush1.msra.mxu0 %v998
        %4206 = vmatprep.subr.mxu0 %v1007
        %4207 = vmatpush1.msra.mxu0 %v1006
        %4208 = vmatprep.subr.mxu0 %v1015
        %4209 = vmatpush1.msra.mxu0 %v1014
        %4210 = vmatprep.subr.mxu0 %v1023
        %4211 = vmatpush1.msra.mxu0 %v1022
        %4212 = vmatprep.subr.mxu0 %v1031
        %4213 = vmatpush1.msra.mxu0 %v1030
        %4214 = vmatprep.subr.mxu0 %v1039
        %4215 = vmatpush1.msra.mxu0 %v1038
        %4216 = vmatprep.subr.mxu0 %v1047
        %4217 = vmatpush1.msra.mxu0 %v1046
        %4218 = vmatprep.subr.mxu0 %v1055
        %4219 = vmatpush1.msra.mxu0 %v1054
        %4220 = vmatprep.subr.mxu0 %v1063
        %4221 = vmatpush1.msra.mxu0 %v1062
        %4222 = vmatprep.subr.mxu0 %v1071
        %4223 = vmatpush1.msra.mxu0 %v1070
        %4224 = vmatprep.subr.mxu0 %v1079
        %4225 = vmatpush1.msra.mxu0 %v1078
        %4226 = vmatprep.subr.mxu0 %v1087
        %4227 = vmatpush1.msra.mxu0 %v1086
        %4228 = vmatprep.mubr.f32.mxu0 %v229
        %4229 = vmatmul.mubr.f32.gmra.mrb[0].mxu0 %v228
        %v4230 = vpop.f32.mrb[0].mxu0
        %v4231 = vadd.f32 %v4118, %v4230
        %v4232 = vpop.f32.mrb[0].mxu0
        %v4233 = vadd.f32 %v4120, %v4232
        %4234 = vmatprep.mubr.f32.mxu0 %v241
        %4235 = vmatmul.mubr.f32.gmra.mrb[0].mxu0 %v240
        %v4236 = vpop.f32.mrb[0].mxu0
        %v4237 = vadd.f32 %v4124, %v4236
        %v4238 = vpop.f32.mrb[0].mxu0
        %v4239 = vadd.f32 %v4126, %v4238
        %4240 = vmatprep.mubr.f32.mxu0 %v253
        %4241 = vmatmul.mubr.f32.gmra.mrb[0].mxu0 %v252
        %v4242 = vpop.f32.mrb[0].mxu0
        %v4243 = vadd.f32 %v4130, %v4242
        %v4244 = vpop.f32.mrb[0].mxu0
        %v4245 = vadd.f32 %v4132, %v4244
        %4246 = vmatprep.mubr.f32.mxu0 %v265
        %4247 = vmatmul.mubr.f32.gmra.mrb[0].mxu0 %v264
        %v4248 = vpop.f32.mrb[0].mxu0
        %v4249 = vadd.f32 %v4136, %v4248
        %v4250 = vpop.f32.mrb[0].mxu0
        %v4251 = vadd.f32 %v4138, %v4250
        %4252 = vmatprep.mubr.f32.mxu0 %v277
        %4253 = vmatmul.mubr.f32.gmra.mrb[0].mxu0 %v276
        %v4254 = vpop.f32.mrb[0].mxu0
        %v4255 = vadd.f32 %v4142, %v4254
        %v4256 = vpop.f32.mrb[0].mxu0
        %v4257 = vadd.f32 %v4144, %v4256
        %4258 = vmatprep.mubr.f32.mxu0 %v289
        %4259 = vmatmul.mubr.f32.gmra.mrb[0].mxu0 %v288
        %v4260 = vpop.f32.mrb[0].mxu0
        %v4261 = vadd.f32 %v4148, %v4260
        %v4262 = vpop.f32.mrb[0].mxu0
        %v4263 = vadd.f32 %v4150, %v4262
        %4264 = vmatprep.mubr.f32.mxu0 %v301
        %4265 = vmatmul.mubr.f32.gmra.mrb[0].mxu0 %v300
        %v4266 = vpop.f32.mrb[0].mxu0
        %v4267 = vadd.f32 %v4154, %v4266
        %v4268 = vpop.f32.mrb[0].mxu0
        %v4269 = vadd.f32 %v4156, %v4268
        %4270 = vmatprep.mubr.f32.mxu0 %v313
        %4271 = vmatmul.mubr.f32.gmra.mrb[0].mxu0 %v312
        %v4272 = vpop.f32.mrb[0].mxu0
        %v4273 = vadd.f32 %v4160, %v4272
        %v4274 = vpop.f32.mrb[0].mxu0
        %v4275 = vadd.f32 %v4162, %v4274
        %4276 = vdwg.mxu0
        %4277 = vmatprep.subr.mxu0 %v1095
        %4278 = vmatpush1.msra.mxu0 %v1094
        %4279 = vmatprep.subr.mxu0 %v1103
        %4280 = vmatpush1.msra.mxu0 %v1102
        %4281 = vmatprep.subr.mxu0 %v1111
        %4282 = vmatpush1.msra.mxu0 %v1110
        %4283 = vmatprep.subr.mxu0 %v1119
        %4284 = vmatpush1.msra.mxu0 %v1118
        %4285 = vmatprep.subr.mxu0 %v1127
        %4286 = vmatpush1.msra.mxu0 %v1126
        %4287 = vmatprep.subr.mxu0 %v1135
        %4288 = vmatpush1.msra.mxu0 %v1134
        %4289 = vmatprep.subr.mxu0 %v1143
        %4290 = vmatpush1.msra.mxu0 %v1142
        %4291 = vmatprep.subr.mxu0 %v1151
        %4292 = vmatpush1.msra.mxu0 %v1150
        %4293 = vmatprep.subr.mxu0 %v1159
        %4294 = vmatpush1.msra.mxu0 %v1158
        %4295 = vmatprep.subr.mxu0 %v1167
        %4296 = vmatpush1.msra.mxu0 %v1166
        %4297 = vmatprep.subr.mxu0 %v1175
        %4298 = vmatpush1.msra.mxu0 %v1174
        %4299 = vmatprep.subr.mxu0 %v1183
        %4300 = vmatpush1.msra.mxu0 %v1182
        %4301 = vmatprep.subr.mxu0 %v1191
        %4302 = vmatpush1.msra.mxu0 %v1190
        %4303 = vmatprep.subr.mxu0 %v1199
        %4304 = vmatpush1.msra.mxu0 %v1198
        %4305 = vmatprep.subr.mxu0 %v1207
        %4306 = vmatpush1.msra.mxu0 %v1206
        %4307 = vmatprep.subr.mxu0 %v1215
        %4308 = vmatpush1.msra.mxu0 %v1214
        %4309 = vmatprep.subr.mxu0 %v1223
        %4310 = vmatpush1.msra.mxu0 %v1222
        %4311 = vmatprep.subr.mxu0 %v1231
        %4312 = vmatpush1.msra.mxu0 %v1230
        %4313 = vmatprep.subr.mxu0 %v1239
        %4314 = vmatpush1.msra.mxu0 %v1238
        %4315 = vmatprep.subr.mxu0 %v1247
        %4316 = vmatpush1.msra.mxu0 %v1246
        %4317 = vmatprep.subr.mxu0 %v1255
        %4318 = vmatpush1.msra.mxu0 %v1254
        %4319 = vmatprep.subr.mxu0 %v1263
        %4320 = vmatpush1.msra.mxu0 %v1262
        %4321 = vmatprep.subr.mxu0 %v1271
        %4322 = vmatpush1.msra.mxu0 %v1270
        %4323 = vmatprep.subr.mxu0 %v1279
        %4324 = vmatpush1.msra.mxu0 %v1278
        %4325 = vmatprep.subr.mxu0 %v1287
        %4326 = vmatpush1.msra.mxu0 %v1286
        %4327 = vmatprep.subr.mxu0 %v1295
        %4328 = vmatpush1.msra.mxu0 %v1294
        %4329 = vmatprep.subr.mxu0 %v1303
        %4330 = vmatpush1.msra.mxu0 %v1302
        %4331 = vmatprep.subr.mxu0 %v1311
        %4332 = vmatpush1.msra.mxu0 %v1310
        %4333 = vmatprep.subr.mxu0 %v1319
        %4334 = vmatpush1.msra.mxu0 %v1318
        %4335 = vmatprep.subr.mxu0 %v1327
        %4336 = vmatpush1.msra.mxu0 %v1326
        %4337 = vmatprep.subr.mxu0 %v1335
        %4338 = vmatpush1.msra.mxu0 %v1334
        %4339 = vmatprep.subr.mxu0 %v1343
        %4340 = vmatpush1.msra.mxu0 %v1342
        %4341 = vmatprep.mubr.f32.mxu0 %v231
        %4342 = vmatmul.mubr.f32.gmra.mrb[0].mxu0 %v230
        %v4343 = vpop.f32.mrb[0].mxu0
        %v4344 = vadd.f32 %v4231, %v4343
        %v4345 = vpop.f32.mrb[0].mxu0
        %v4346 = vadd.f32 %v4233, %v4345
        %4347 = vmatprep.mubr.f32.mxu0 %v243
        %4348 = vmatmul.mubr.f32.gmra.mrb[0].mxu0 %v242
        %v4349 = vpop.f32.mrb[0].mxu0
        %v4350 = vadd.f32 %v4237, %v4349
        %v4351 = vpop.f32.mrb[0].mxu0
        %v4352 = vadd.f32 %v4239, %v4351
        %4353 = vmatprep.mubr.f32.mxu0 %v255
        %4354 = vmatmul.mubr.f32.gmra.mrb[0].mxu0 %v254
        %v4355 = vpop.f32.mrb[0].mxu0
        %v4356 = vadd.f32 %v4243, %v4355
        %v4357 = vpop.f32.mrb[0].mxu0
        %v4358 = vadd.f32 %v4245, %v4357
        %4359 = vmatprep.mubr.f32.mxu0 %v267
        %4360 = vmatmul.mubr.f32.gmra.mrb[0].mxu0 %v266
        %v4361 = vpop.f32.mrb[0].mxu0
        %v4362 = vadd.f32 %v4249, %v4361
        %v4363 = vpop.f32.mrb[0].mxu0
        %v4364 = vadd.f32 %v4251, %v4363
        %4365 = vmatprep.mubr.f32.mxu0 %v279
        %4366 = vmatmul.mubr.f32.gmra.mrb[0].mxu0 %v278
        %v4367 = vpop.f32.mrb[0].mxu0
        %v4368 = vadd.f32 %v4255, %v4367
        %v4369 = vpop.f32.mrb[0].mxu0
        %v4370 = vadd.f32 %v4257, %v4369
        %4371 = vmatprep.mubr.f32.mxu0 %v291
        %4372 = vmatmul.mubr.f32.gmra.mrb[0].mxu0 %v290
        %v4373 = vpop.f32.mrb[0].mxu0
        %v4374 = vadd.f32 %v4261, %v4373
        %v4375 = vpop.f32.mrb[0].mxu0
        %v4376 = vadd.f32 %v4263, %v4375
        %4377 = vmatprep.mubr.f32.mxu0 %v303
        %4378 = vmatmul.mubr.f32.gmra.mrb[0].mxu0 %v302
        %v4379 = vpop.f32.mrb[0].mxu0
        %v4380 = vadd.f32 %v4267, %v4379
        %v4381 = vpop.f32.mrb[0].mxu0
        %v4382 = vadd.f32 %v4269, %v4381
        %4383 = vmatprep.mubr.f32.mxu0 %v315
        %4384 = vmatmul.mubr.f32.gmra.mrb[0].mxu0 %v314
        %v4385 = vpop.f32.mrb[0].mxu0
        %v4386 = vadd.f32 %v4273, %v4385
        %v4387 = vpop.f32.mrb[0].mxu0
        %v4388 = vadd.f32 %v4275, %v4387
        %4389 = vdwg.mxu0
        %4390 = vmatprep.subr.mxu0 %v1351
        %4391 = vmatpush1.msra.mxu0 %v1350
        %4392 = vmatprep.subr.mxu0 %v1359
        %4393 = vmatpush1.msra.mxu0 %v1358
        %4394 = vmatprep.subr.mxu0 %v1367
        %4395 = vmatpush1.msra.mxu0 %v1366
        %4396 = vmatprep.subr.mxu0 %v1375
        %4397 = vmatpush1.msra.mxu0 %v1374
        %4398 = vmatprep.subr.mxu0 %v1383
        %4399 = vmatpush1.msra.mxu0 %v1382
        %4400 = vmatprep.subr.mxu0 %v1391
        %4401 = vmatpush1.msra.mxu0 %v1390
        %4402 = vmatprep.subr.mxu0 %v1399
        %4403 = vmatpush1.msra.mxu0 %v1398
        %4404 = vmatprep.subr.mxu0 %v1407
        %4405 = vmatpush1.msra.mxu0 %v1406
        %4406 = vmatprep.subr.mxu0 %v1415
        %4407 = vmatpush1.msra.mxu0 %v1414
        %4408 = vmatprep.subr.mxu0 %v1423
        %4409 = vmatpush1.msra.mxu0 %v1422
        %4410 = vmatprep.subr.mxu0 %v1431
        %4411 = vmatpush1.msra.mxu0 %v1430
        %4412 = vmatprep.subr.mxu0 %v1439
        %4413 = vmatpush1.msra.mxu0 %v1438
        %4414 = vmatprep.subr.mxu0 %v1447
        %4415 = vmatpush1.msra.mxu0 %v1446
        %4416 = vmatprep.subr.mxu0 %v1455
        %4417 = vmatpush1.msra.mxu0 %v1454
        %4418 = vmatprep.subr.mxu0 %v1463
        %4419 = vmatpush1.msra.mxu0 %v1462
        %4420 = vmatprep.subr.mxu0 %v1471
        %4421 = vmatpush1.msra.mxu0 %v1470
        %4422 = vmatprep.subr.mxu0 %v1479
        %4423 = vmatpush1.msra.mxu0 %v1478
        %4424 = vmatprep.subr.mxu0 %v1487
        %4425 = vmatpush1.msra.mxu0 %v1486
        %4426 = vmatprep.subr.mxu0 %v1495
        %4427 = vmatpush1.msra.mxu0 %v1494
        %4428 = vmatprep.subr.mxu0 %v1503
        %4429 = vmatpush1.msra.mxu0 %v1502
        %4430 = vmatprep.subr.mxu0 %v1511
        %4431 = vmatpush1.msra.mxu0 %v1510
        %4432 = vmatprep.subr.mxu0 %v1519
        %4433 = vmatpush1.msra.mxu0 %v1518
        %4434 = vmatprep.subr.mxu0 %v1527
        %4435 = vmatpush1.msra.mxu0 %v1526
        %4436 = vmatprep.subr.mxu0 %v1535
        %4437 = vmatpush1.msra.mxu0 %v1534
        %4438 = vmatprep.subr.mxu0 %v1543
        %4439 = vmatpush1.msra.mxu0 %v1542
        %4440 = vmatprep.subr.mxu0 %v1551
        %4441 = vmatpush1.msra.mxu0 %v1550
        %4442 = vmatprep.subr.mxu0 %v1559
        %4443 = vmatpush1.msra.mxu0 %v1558
        %4444 = vmatprep.subr.mxu0 %v1567
        %4445 = vmatpush1.msra.mxu0 %v1566
        %4446 = vmatprep.subr.mxu0 %v1575
        %4447 = vmatpush1.msra.mxu0 %v1574
        %4448 = vmatprep.subr.mxu0 %v1583
        %4449 = vmatpush1.msra.mxu0 %v1582
        %4450 = vmatprep.subr.mxu0 %v1591
        %4451 = vmatpush1.msra.mxu0 %v1590
        %4452 = vmatprep.subr.mxu0 %v1599
        %4453 = vmatpush1.msra.mxu0 %v1598
        %4454 = vmatprep.mubr.f32.mxu0 %v233
        %4455 = vmatmul.mubr.f32.gmra.mrb[0].mxu0 %v232
        %v4456 = vpop.f32.mrb[0].mxu0
        %v4457 = vadd.f32 %v4344, %v4456
        %v4458 = vpop.f32.mrb[0].mxu0
        %v4459 = vadd.f32 %v4346, %v4458
        %4460 = vmatprep.mubr.f32.mxu0 %v245
        %4461 = vmatmul.mubr.f32.gmra.mrb[0].mxu0 %v244
        %v4462 = vpop.f32.mrb[0].mxu0
        %v4463 = vadd.f32 %v4350, %v4462
        %v4464 = vpop.f32.mrb[0].mxu0
        %v4465 = vadd.f32 %v4352, %v4464
        %4466 = vmatprep.mubr.f32.mxu0 %v257
        %4467 = vmatmul.mubr.f32.gmra.mrb[0].mxu0 %v256
        %v4468 = vpop.f32.mrb[0].mxu0
        %v4469 = vadd.f32 %v4356, %v4468
        %v4470 = vpop.f32.mrb[0].mxu0
        %v4471 = vadd.f32 %v4358, %v4470
        %4472 = vmatprep.mubr.f32.mxu0 %v269
        %4473 = vmatmul.mubr.f32.gmra.mrb[0].mxu0 %v268
        %v4474 = vpop.f32.mrb[0].mxu0
        %v4475 = vadd.f32 %v4362, %v4474
        %v4476 = vpop.f32.mrb[0].mxu0
        %v4477 = vadd.f32 %v4364, %v4476
        %4478 = vmatprep.mubr.f32.mxu0 %v281
        %4479 = vmatmul.mubr.f32.gmra.mrb[0].mxu0 %v280
        %v4480 = vpop.f32.mrb[0].mxu0
        %v4481 = vadd.f32 %v4368, %v4480
        %v4482 = vpop.f32.mrb[0].mxu0
        %v4483 = vadd.f32 %v4370, %v4482
        %4484 = vmatprep.mubr.f32.mxu0 %v293
        %4485 = vmatmul.mubr.f32.gmra.mrb[0].mxu0 %v292
        %v4486 = vpop.f32.mrb[0].mxu0
        %v4487 = vadd.f32 %v4374, %v4486
        %v4488 = vpop.f32.mrb[0].mxu0
        %v4489 = vadd.f32 %v4376, %v4488
        %4490 = vmatprep.mubr.f32.mxu0 %v305
        %4491 = vmatmul.mubr.f32.gmra.mrb[0].mxu0 %v304
        %v4492 = vpop.f32.mrb[0].mxu0
        %v4493 = vadd.f32 %v4380, %v4492
        %v4494 = vpop.f32.mrb[0].mxu0
        %v4495 = vadd.f32 %v4382, %v4494
        %4496 = vmatprep.mubr.f32.mxu0 %v317
        %4497 = vmatmul.mubr.f32.gmra.mrb[0].mxu0 %v316
        %v4498 = vpop.f32.mrb[0].mxu0
        %v4499 = vadd.f32 %v4386, %v4498
        %v4500 = vpop.f32.mrb[0].mxu0
        %v4501 = vadd.f32 %v4388, %v4500
        %4502 = vdwg.mxu0
        %4503 = vmatprep.subr.mxu0 %v1607
        %4504 = vmatpush1.msra.mxu0 %v1606
        %4505 = vmatprep.subr.mxu0 %v1615
        %4506 = vmatpush1.msra.mxu0 %v1614
        %4507 = vmatprep.subr.mxu0 %v1623
        %4508 = vmatpush1.msra.mxu0 %v1622
        %4509 = vmatprep.subr.mxu0 %v1631
        %4510 = vmatpush1.msra.mxu0 %v1630
        %4511 = vmatprep.subr.mxu0 %v1639
        %4512 = vmatpush1.msra.mxu0 %v1638
        %4513 = vmatprep.subr.mxu0 %v1647
        %4514 = vmatpush1.msra.mxu0 %v1646
        %4515 = vmatprep.subr.mxu0 %v1655
        %4516 = vmatpush1.msra.mxu0 %v1654
        %4517 = vmatprep.subr.mxu0 %v1663
        %4518 = vmatpush1.msra.mxu0 %v1662
        %4519 = vmatprep.subr.mxu0 %v1671
        %4520 = vmatpush1.msra.mxu0 %v1670
        %4521 = vmatprep.subr.mxu0 %v1679
        %4522 = vmatpush1.msra.mxu0 %v1678
        %4523 = vmatprep.subr.mxu0 %v1687
        %4524 = vmatpush1.msra.mxu0 %v1686
        %4525 = vmatprep.subr.mxu0 %v1695
        %4526 = vmatpush1.msra.mxu0 %v1694
        %4527 = vmatprep.subr.mxu0 %v1703
        %4528 = vmatpush1.msra.mxu0 %v1702
        %4529 = vmatprep.subr.mxu0 %v1711
        %4530 = vmatpush1.msra.mxu0 %v1710
        %4531 = vmatprep.subr.mxu0 %v1719
        %4532 = vmatpush1.msra.mxu0 %v1718
        %4533 = vmatprep.subr.mxu0 %v1727
        %4534 = vmatpush1.msra.mxu0 %v1726
        %4535 = vmatprep.subr.mxu0 %v1735
        %4536 = vmatpush1.msra.mxu0 %v1734
        %4537 = vmatprep.subr.mxu0 %v1743
        %4538 = vmatpush1.msra.mxu0 %v1742
        %4539 = vmatprep.subr.mxu0 %v1751
        %4540 = vmatpush1.msra.mxu0 %v1750
        %4541 = vmatprep.subr.mxu0 %v1759
        %4542 = vmatpush1.msra.mxu0 %v1758
        %4543 = vmatprep.subr.mxu0 %v1767
        %4544 = vmatpush1.msra.mxu0 %v1766
        %4545 = vmatprep.subr.mxu0 %v1775
        %4546 = vmatpush1.msra.mxu0 %v1774
        %4547 = vmatprep.subr.mxu0 %v1783
        %4548 = vmatpush1.msra.mxu0 %v1782
        %4549 = vmatprep.subr.mxu0 %v1791
        %4550 = vmatpush1.msra.mxu0 %v1790
        %4551 = vmatprep.subr.mxu0 %v1799
        %4552 = vmatpush1.msra.mxu0 %v1798
        %4553 = vmatprep.subr.mxu0 %v1807
        %4554 = vmatpush1.msra.mxu0 %v1806
        %4555 = vmatprep.subr.mxu0 %v1815
        %4556 = vmatpush1.msra.mxu0 %v1814
        %4557 = vmatprep.subr.mxu0 %v1823
        %4558 = vmatpush1.msra.mxu0 %v1822
        %4559 = vmatprep.subr.mxu0 %v1831
        %4560 = vmatpush1.msra.mxu0 %v1830
        %4561 = vmatprep.subr.mxu0 %v1839
        %4562 = vmatpush1.msra.mxu0 %v1838
        %4563 = vmatprep.subr.mxu0 %v1847
        %4564 = vmatpush1.msra.mxu0 %v1846
        %4565 = vmatprep.subr.mxu0 %v1855
        %4566 = vmatpush1.msra.mxu0 %v1854
        %4567 = vmatprep.mubr.f32.mxu0 %v235
        %4568 = vmatmul.mubr.f32.gmra.mrb[0].mxu0 %v234
        %v4569 = vpop.f32.mrb[0].mxu0
        %v4570 = vadd.f32 %v4457, %v4569
        %v4571 = vpop.f32.mrb[0].mxu0
        %v4572 = vadd.f32 %v4459, %v4571
        %4573 = vmatprep.mubr.f32.mxu0 %v247
        %4574 = vmatmul.mubr.f32.gmra.mrb[0].mxu0 %v246
        %v4575 = vpop.f32.mrb[0].mxu0
        %v4576 = vadd.f32 %v4463, %v4575
        %v4577 = vpop.f32.mrb[0].mxu0
        %v4578 = vadd.f32 %v4465, %v4577
        %4579 = vmatprep.mubr.f32.mxu0 %v259
        %4580 = vmatmul.mubr.f32.gmra.mrb[0].mxu0 %v258
        %v4581 = vpop.f32.mrb[0].mxu0
        %v4582 = vadd.f32 %v4469, %v4581
        %v4583 = vpop.f32.mrb[0].mxu0
        %v4584 = vadd.f32 %v4471, %v4583
        %4585 = vmatprep.mubr.f32.mxu0 %v271
        %4586 = vmatmul.mubr.f32.gmra.mrb[0].mxu0 %v270
        %v4587 = vpop.f32.mrb[0].mxu0
        %v4588 = vadd.f32 %v4475, %v4587
        %v4589 = vpop.f32.mrb[0].mxu0
        %v4590 = vadd.f32 %v4477, %v4589
        %4591 = vmatprep.mubr.f32.mxu0 %v283
        %4592 = vmatmul.mubr.f32.gmra.mrb[0].mxu0 %v282
        %v4593 = vpop.f32.mrb[0].mxu0
        %v4594 = vadd.f32 %v4481, %v4593
        %v4595 = vpop.f32.mrb[0].mxu0
        %v4596 = vadd.f32 %v4483, %v4595
        %4597 = vmatprep.mubr.f32.mxu0 %v295
        %4598 = vmatmul.mubr.f32.gmra.mrb[0].mxu0 %v294
        %v4599 = vpop.f32.mrb[0].mxu0
        %v4600 = vadd.f32 %v4487, %v4599
        %v4601 = vpop.f32.mrb[0].mxu0
        %v4602 = vadd.f32 %v4489, %v4601
        %4603 = vmatprep.mubr.f32.mxu0 %v307
        %4604 = vmatmul.mubr.f32.gmra.mrb[0].mxu0 %v306
        %v4605 = vpop.f32.mrb[0].mxu0
        %v4606 = vadd.f32 %v4493, %v4605
        %v4607 = vpop.f32.mrb[0].mxu0
        %v4608 = vadd.f32 %v4495, %v4607
        %4609 = vmatprep.mubr.f32.mxu0 %v319
        %4610 = vmatmul.mubr.f32.gmra.mrb[0].mxu0 %v318
        %v4611 = vpop.f32.mrb[0].mxu0
        %v4612 = vadd.f32 %v4499, %v4611
        %v4613 = vpop.f32.mrb[0].mxu0
        %v4614 = vadd.f32 %v4501, %v4613
        %4615 = vdwg.mxu0
        %4616 = vst [vmem:[%s221] sm:$0xff] %v2536
        %4617 = vst [vmem:[%s221 + $0x8] sm:$0xff] %v2538
        %4618 = vst [vmem:[%s221 + $0x10] sm:$0xff] %v3214
        %4619 = vst [vmem:[%s221 + $0x18] sm:$0xff] %v3216
        %4620 = vst [vmem:[%s221 + $0x20] sm:$0xff] %v3892
        %4621 = vst [vmem:[%s221 + $0x28] sm:$0xff] %v3894
        %4622 = vst [vmem:[%s221 + $0x30] sm:$0xff] %v4570
        %4623 = vst [vmem:[%s221 + $0x38] sm:$0xff] %v4572
        %4624 = vst [vmem:[%s221 + $0x40] sm:$0xff] %v2542
        %4625 = vst [vmem:[%s221 + $0x48] sm:$0xff] %v2544
        %4626 = vst [vmem:[%s221 + $0x50] sm:$0xff] %v3220
        %4627 = vst [vmem:[%s221 + $0x58] sm:$0xff] %v3222
        %4628 = vst [vmem:[%s221 + $0x60] sm:$0xff] %v3898
        %4629 = vst [vmem:[%s221 + $0x68] sm:$0xff] %v3900
        %4630 = vst [vmem:[%s221 + $0x70] sm:$0xff] %v4576
        %4631 = vst [vmem:[%s221 + $0x78] sm:$0xff] %v4578
        %4632 = vst [vmem:[%s221 + $0x80] sm:$0xff] %v2548
        %4633 = vst [vmem:[%s221 + $0x88] sm:$0xff] %v2550
        %4634 = vst [vmem:[%s221 + $0x90] sm:$0xff] %v3226
        %4635 = vst [vmem:[%s221 + $0x98] sm:$0xff] %v3228
        %4636 = vst [vmem:[%s221 + $0xa0] sm:$0xff] %v3904
        %4637 = vst [vmem:[%s221 + $0xa8] sm:$0xff] %v3906
        %4638 = vst [vmem:[%s221 + $0xb0] sm:$0xff] %v4582
        %4639 = vst [vmem:[%s221 + $0xb8] sm:$0xff] %v4584
        %4640 = vst [vmem:[%s221 + $0xc0] sm:$0xff] %v2554
        %4641 = vst [vmem:[%s221 + $0xc8] sm:$0xff] %v2556
        %4642 = vst [vmem:[%s221 + $0xd0] sm:$0xff] %v3232
        %4643 = vst [vmem:[%s221 + $0xd8] sm:$0xff] %v3234
        %4644 = vst [vmem:[%s221 + $0xe0] sm:$0xff] %v3910
        %4645 = vst [vmem:[%s221 + $0xe8] sm:$0xff] %v3912
        %4646 = vst [vmem:[%s221 + $0xf0] sm:$0xff] %v4588
        %4647 = vst [vmem:[%s221 + $0xf8] sm:$0xff] %v4590
        %4648 = vst [vmem:[%s221 + $0x100] sm:$0xff] %v2560
        %4649 = vst [vmem:[%s221 + $0x108] sm:$0xff] %v2562
        %4650 = vst [vmem:[%s221 + $0x110] sm:$0xff] %v3238
        %4651 = vst [vmem:[%s221 + $0x118] sm:$0xff] %v3240
        %4652 = vst [vmem:[%s221 + $0x120] sm:$0xff] %v3916
        %4653 = vst [vmem:[%s221 + $0x128] sm:$0xff] %v3918
        %4654 = vst [vmem:[%s221 + $0x130] sm:$0xff] %v4594
        %4655 = vst [vmem:[%s221 + $0x138] sm:$0xff] %v4596
        %4656 = vst [vmem:[%s221 + $0x140] sm:$0xff] %v2566
        %4657 = vst [vmem:[%s221 + $0x148] sm:$0xff] %v2568
        %4658 = vst [vmem:[%s221 + $0x150] sm:$0xff] %v3244
        %4659 = vst [vmem:[%s221 + $0x158] sm:$0xff] %v3246
        %4660 = vst [vmem:[%s221 + $0x160] sm:$0xff] %v3922
        %4661 = vst [vmem:[%s221 + $0x168] sm:$0xff] %v3924
        %4662 = vst [vmem:[%s221 + $0x170] sm:$0xff] %v4600
        %4663 = vst [vmem:[%s221 + $0x178] sm:$0xff] %v4602
        %4664 = vst [vmem:[%s221 + $0x180] sm:$0xff] %v2572
        %4665 = vst [vmem:[%s221 + $0x188] sm:$0xff] %v2574
        %4666 = vst [vmem:[%s221 + $0x190] sm:$0xff] %v3250
        %4667 = vst [vmem:[%s221 + $0x198] sm:$0xff] %v3252
        %4668 = vst [vmem:[%s221 + $0x1a0] sm:$0xff] %v3928
        %4669 = vst [vmem:[%s221 + $0x1a8] sm:$0xff] %v3930
        %4670 = vst [vmem:[%s221 + $0x1b0] sm:$0xff] %v4606
        %4671 = vst [vmem:[%s221 + $0x1b8] sm:$0xff] %v4608
        %4672 = vst [vmem:[%s221 + $0x1c0] sm:$0xff] %v2578
        %4673 = vst [vmem:[%s221 + $0x1c8] sm:$0xff] %v2580
        %4674 = vst [vmem:[%s221 + $0x1d0] sm:$0xff] %v3256
        %4675 = vst [vmem:[%s221 + $0x1d8] sm:$0xff] %v3258
        %4676 = vst [vmem:[%s221 + $0x1e0] sm:$0xff] %v3934
        %4677 = vst [vmem:[%s221 + $0x1e8] sm:$0xff] %v3936
        %4678 = vst [vmem:[%s221 + $0x1f0] sm:$0xff] %v4612
        %4679 = vst [vmem:[%s221 + $0x1f8] sm:$0xff] %v4614
        %s4680 = sand.u32 %s113, 1
        %s4681 = scalar_lea.sflag [#allocation4], %s4680
        %s4682 = sand.u32 %s113, 1
        %s4683 = smul.addr %s4682, 512
        %s4684 = scalar_lea.vmem [#allocation7], %s4683
        // Predicated region
        $region41: #{tpu_custom_call.1} parent=31 // pred_check
          %p4685 = pneg %p123
        $region42: #{tpu_custom_call.1} parent=31 // pred_check_branch
          %4687 = sbr.rel (%p4685) target = $region44
        $region43: #{tpu_custom_call.1} parent=31 // pred_region
          %s4688 = smul.u32 8, %s26
          %s4690 = ssub.s32 8192, 8192
          %4691 = vsyncadd %s4681, %s4690
          %s4692 = smul.addr %s25, 64
          %s4693 = sadd.s32 %s4688, %s4692
          %s4694 = smul.addr %s4693, 128
          %s4695 = scalar_lea.hbm %s3, %s4694
          %s4696 = sshll.u32 %s4684, 4
          %s4697 = int_to_ptr.vmem [resolvable:$true] %s4696
          %4702 = dma.vmem_to_hbm [thread:$0]  %s4697, 8192, %s4695, %s4681, 1024, 1024, 64
        $region44: #{tpu_custom_call.1} parent=31 // pred_fallthru
          _
      $region32: #{tpu_custom_call.1} parent=5 // pred_fallthru
        _
      %p4703 = scmp.le.s32.totalorder 2, %s16
      // Predicated region
      $region45: #{tpu_custom_call.1} parent=5 // pred_check
        %p4704 = pneg %p4703
      $region46: #{tpu_custom_call.1} parent=5 // pred_check_branch
        %4706 = sbr.rel (%p4704) target = $region48
      $region47: #{tpu_custom_call.1} parent=5 // pred_region
        %s4707 = ssub.s32 %s16, 2
        // Predicated region
        $region49: #{tpu_custom_call.1} parent=47 // pred_check
          %p4708 = pneg %p129
        $region50: #{tpu_custom_call.1} parent=47 // pred_check_branch
          %4710 = sbr.rel (%p4708) target = $region52
        $region51: #{tpu_custom_call.1} parent=47 // pred_region
          %s4711 = sand.u32 %s114, 1
          %s4712 = scalar_lea.sflag [#allocation4], %s4711
          %s4713 = sand.u32 %s114, 1
          %s4714 = smul.addr %s4713, 512
          %s4715 = scalar_lea.vmem [#allocation7], %s4714
          %4716 = dma.done %s4712, 8192
        $region52: #{tpu_custom_call.1} parent=47 // pred_fallthru
          _
      $region48: #{tpu_custom_call.1} parent=5 // pred_fallthru
        _
    $region6: #{tpu_custom_call.1} parent=1 // loop_footer
      %s20 = sadd.s32 1, %s16
    $region7: #{tpu_custom_call.1} parent=1 // loop_footer_branch
      %15 = sbr.rel target = $region3
    $region8: #{tpu_custom_call.1} parent=1 // loop_exit
      _
    %4717 = vsyncpa [#allocation3], 1
    %s4718 = scalar_lea.sflag [#allocation3], 1
    %4719 = vsyncpa %s4718, 1
    %4720 = vsyncpa [#allocation6], 1
    %s4721 = scalar_lea.sflag [#allocation6], 1
    %4722 = vsyncpa %s4721, 1
    %4723 = vsyncpa [#allocation4], 1
    %s4724 = scalar_lea.sflag [#allocation4], 1
    %4725 = vsyncpa %s4724, 1

// kernel: tpu_custom_call.1
$region0: #{tpu_custom_call.1}
  #allocation0 [shape = 'u32[]', space=smem, size = 0x4, offset = 0x4, fixed_abs, tag = 'smem constant byte address 0x4 - core index']
  #allocation1 [shape = 'u32[144,128]{1,0:T(1,128)}', space=vmem, size = 0x12000, scoped, tag = 'internal scratch']
  %s0 = inlined_call_operand.hbm [shape: f32[64,1536], index: 0, kind: input, shape index: {}]
  %s1 = inlined_call_operand.vmem [shape: f32[64,1], index: 1, kind: input, shape index: {}]
  %s2 = inlined_call_operand.hbm [shape: f32[2,1536,1024], index: 2, kind: input, shape index: {}]
  %s3 = inlined_call_operand.hbm [shape: f32[2,64,1024], index: 3, kind: output, shape index: {}]
  %s4 = sld [smem:[#allocation0]]
  $region53: #{tpu_custom_call.1} parent=0
    _
  %s6 = ssub.s32 1, %s4
  %s7 = scalar_select 0, %s6, %s4
  $region1: #{tpu_custom_call.1} parent=0
    #allocation2 [shape = 'u8[393216]{0}', space=vmem, size = 0x60000, scoped, tag = 'input window, operand 0, single buffered']
    #allocation3 [shape = 's32[2]{0}', space=sflag, size = 0x8, scoped, tag = 'scoped memory for tpu_custom_call.1']
    #allocation4 [shape = 's32[2]{0}', space=sflag, size = 0x8, scoped, tag = 'scoped memory for tpu_custom_call.1']
    #allocation5 [shape = 'u8[12582912]{0}', space=vmem, size = 0xc00000, scoped, tag = 'input window, operand 2']
    #allocation6 [shape = 's32[2]{0}', space=sflag, size = 0x8, scoped, tag = 'scoped memory for tpu_custom_call.1']
    #allocation7 [shape = 'u8[524288]{0}', space=vmem, size = 0x80000, scoped, tag = 'output window, operand 0']
    %8 = vsyncpa [#allocation3], 0
    %9 = vsyncpa [#allocation6], 0
    %s10 = scalar_lea.sflag [#allocation6], 1
    %11 = vsyncpa %s10, 0
    %12 = vsyncpa [#allocation4], 0
    %s13 = scalar_lea.sflag [#allocation4], 1
    %14 = vsyncpa %s13, 0
    loop: start=0, step=1, limit=4
    $region2: #{tpu_custom_call.1} parent=1 // loop_pre_header
      _
    $region3: #{tpu_custom_call.1} parent=1 // loop_header
      %s16 = sphi 0, %s20
      %p17 = scmp.ge.s32.totalorder %s16, 4
      %s23 = sphi 0, %s35
      %s24 = sphi 0, %s31
      %s25 = sphi 0, %s23
      %s26 = sphi 0, %s24
      %s27 = sphi 0, %s25
      %s28 = sphi 0, %s26
      %s36 = sphi 0, %s36
      %s38 = sphi 0, %s36
      %s39 = sphi 0, %s38
      %s53 = sphi 0, %s39
      %s57 = sphi 0, %s57
      %s59 = sphi 0, %s57
      %s60 = sphi 0, %s59
      %s74 = sphi 0, %s60
      %s82 = sphi 0, %s84
      %s85 = sphi 0, %s82
      %s86 = sphi 0, %s85
      %s102 = sphi 0, %s86
      %s110 = sphi 0, %s112
      %s113 = sphi 0, %s110
      %s114 = sphi 0, %s113
      %s130 = sphi 0, %s114
    $region4: #{tpu_custom_call.1} parent=1 // loop_header_branch
      %19 = sbr.rel (%p17) target = $region8
    $region5: #{tpu_custom_call.1} parent=1 // loop_body
      %s21 = ssub.s32 %s16, 1
      %s22 = ssub.s32 %s16, 2
      %s29 = sadd.s32 1, %s24
      %p30 = scmp.ge.s32.totalorder %s29, 1
      %s31 = scalar_select %p30, 0, %s29
      %s32 = sadd.s32 1, %s23
      %s33 = scalar_select %p30, %s32, %s23
      %p34 = scmp.ge.s32.totalorder %s33, 2
      %s35 = scalar_select %p34, 0, %s33
      %s37 = sadd.s32 %s36, 1
      %p40 = scmp.eq.s32.totalorder %s16, 1
      %p41 = scmp.ne.s32.totalorder %s36, %s38
      %p42 = scmp.eq.s32.totalorder %s16, 0
      %p43 = por %p41, %p42
      %p44 = scmp.ne.s32.totalorder %s36, %s38
      %p45 = scmp.eq.s32.totalorder %s21, 1
      %p46 = por %p44, %p45
      %p47 = scmp.ne.s32.totalorder %s38, %s39
      %p48 = scmp.eq.s32.totalorder %s21, 0
      %p49 = por %p47, %p48
      %p50 = scmp.ne.s32.totalorder %s38, %s39
      %p51 = scmp.eq.s32.totalorder %s22, 1
      %p52 = por %p50, %p51
      %p54 = scmp.ne.s32.totalorder %s39, %s53
      %p55 = scmp.eq.s32.totalorder %s22, 0
      %p56 = por %p54, %p55
      %s58 = sadd.s32 %s57, 1
      %p61 = scmp.eq.s32.totalorder %s16, 1
      %p62 = scmp.ne.s32.totalorder %s57, %s59
      %p63 = scmp.eq.s32.totalorder %s16, 0
      %p64 = por %p62, %p63
      %p65 = scmp.ne.s32.totalorder %s57, %s59
      %p66 = scmp.eq.s32.totalorder %s21, 1
      %p67 = por %p65, %p66
      %p68 = scmp.ne.s32.totalorder %s59, %s60
      %p69 = scmp.eq.s32.totalorder %s21, 0
      %p70 = por %p68, %p69
      %p71 = scmp.ne.s32.totalorder %s59, %s60
      %p72 = scmp.eq.s32.totalorder %s22, 1
      %p73 = por %p71, %p72
      %p75 = scmp.ne.s32.totalorder %s60, %s74
      %p76 = scmp.eq.s32.totalorder %s22, 0
      %p77 = por %p75, %p76
      %s78 = ssub.s32 %s23, %s35
      %s79 = ssub.s32 %s24, %s31
      %s80 = sor.u32 %s78, %s79
      %p81 = scmp.eq.s32.totalorder %s80, 0
      %s83 = sadd.s32 %s82, 1
      %s84 = scalar_select %p81, %s82, %s83
      %p87 = pneg %p81
      %p88 = scmp.eq.s32.totalorder %s16, 1
      %p89 = por %p87, %p88
      %p90 = scmp.ne.s32.totalorder %s82, %s85
      %p91 = scmp.eq.s32.totalorder %s16, 0
      %p92 = por %p90, %p91
      %p93 = scmp.ne.s32.totalorder %s82, %s85
      %p94 = scmp.eq.s32.totalorder %s21, 1
      %p95 = por %p93, %p94
      %p96 = scmp.ne.s32.totalorder %s85, %s86
      %p97 = scmp.eq.s32.totalorder %s21, 0
      %p98 = por %p96, %p97
      %p99 = scmp.ne.s32.totalorder %s85, %s86
      %p100 = scmp.eq.s32.totalorder %s22, 1
      %p101 = por %p99, %p100
      %p103 = scmp.ne.s32.totalorder %s86, %s102
      %p104 = scmp.eq.s32.totalorder %s22, 0
      %p105 = por %p103, %p104
      %s106 = ssub.s32 %s23, %s35
      %s107 = ssub.s32 %s24, %s31
      %s108 = sor.u32 %s106, %s107
      %p109 = scmp.eq.s32.totalorder %s108, 0
      %s111 = sadd.s32 %s110, 1
      %s112 = scalar_select %p109, %s110, %s111
      %p115 = pneg %p109
      %p116 = scmp.eq.s32.totalorder %s16, 1
      %p117 = por %p115, %p116
      %p118 = scmp.ne.s32.totalorder %s110, %s113
      %p119 = scmp.eq.s32.totalorder %s16, 0
      %p120 = por %p118, %p119
      %p121 = scmp.ne.s32.totalorder %s110, %s113
      %p122 = scmp.eq.s32.totalorder %s21, 1
      %p123 = por %p121, %p122
      %p124 = scmp.ne.s32.totalorder %s113, %s114
      %p125 = scmp.eq.s32.totalorder %s21, 0
      %p126 = por %p124, %p125
      %p127 = scmp.ne.s32.totalorder %s113, %s114
      %p128 = scmp.eq.s32.totalorder %s22, 1
      %p129 = por %p127, %p128
      %p131 = scmp.ne.s32.totalorder %s114, %s130
      %p132 = scmp.eq.s32.totalorder %s22, 0
      %p133 = por %p131, %p132
      %p134 = scmp.le.s32.totalorder 1, %s16
      %p135 = scmp.lt.s32.totalorder %s16, 3
      %p136 = pnand %p134, %p135
      %p137 = pneg %p136
      // Predicated region
      $region9: #{tpu_custom_call.1} parent=5 // pred_check
        _
      $region10: #{tpu_custom_call.1} parent=5 // pred_check_branch
        %139 = sbr.rel (%p136) target = $region12
      $region11: #{tpu_custom_call.1} parent=5 // pred_region
        %s140 = ssub.s32 %s16, 1
        // Predicated region
        $region13: #{tpu_custom_call.1} parent=11 // pred_check
          %p141 = pneg %p49
        $region14: #{tpu_custom_call.1} parent=11 // pred_check_branch
          %143 = sbr.rel (%p141) target = $region16
        $region15: #{tpu_custom_call.1} parent=11 // pred_region
          %s145 = ssub.s32 12288, 12288
          %146 = vsyncadd [#allocation3], %s145
          %s147 = sshll.u32 [#allocation2], 4
          %s148 = int_to_ptr.vmem [resolvable:$true] %s147
          %153 = dma.hbm_to_vmem [thread:$0]  %s0, 12288, %s148, [#allocation3], 1536, 1536, 96
        $region16: #{tpu_custom_call.1} parent=11 // pred_fallthru
          _
        // Predicated region
        $region17: #{tpu_custom_call.1} parent=11 // pred_check
          %p154 = pneg %p70
        $region18: #{tpu_custom_call.1} parent=11 // pred_check_branch
          %156 = sbr.rel (%p154) target = $region20
        $region19: #{tpu_custom_call.1} parent=11 // pred_region
          _
        $region20: #{tpu_custom_call.1} parent=11 // pred_fallthru
          _
      $region12: #{tpu_custom_call.1} parent=5 // pred_fallthru
        _
      %p157 = scmp.lt.s32.totalorder %s16, 2
      // Predicated region
      $region21: #{tpu_custom_call.1} parent=5 // pred_check
        %p158 = pneg %p157
      $region22: #{tpu_custom_call.1} parent=5 // pred_check_branch
        %160 = sbr.rel (%p158) target = $region24
      $region23: #{tpu_custom_call.1} parent=5 // pred_region
        // Predicated region
        $region25: #{tpu_custom_call.1} parent=23 // pred_check
          %p161 = pneg %p92
        $region26: #{tpu_custom_call.1} parent=23 // pred_check_branch
          %163 = sbr.rel (%p161) target = $region28
        $region27: #{tpu_custom_call.1} parent=23 // pred_region
          %s164 = sand.u32 %s82, 1
          %s165 = scalar_lea.sflag [#allocation6], %s164
          %s166 = sand.u32 %s82, 1
          %s167 = smul.addr %s166, 12288
          %s168 = scalar_lea.vmem [#allocation5], %s167
          %s169 = smul.u32 8, %s24
          %s171 = ssub.s32 196608, 196608
          %172 = vsyncadd %s165, %s171
          %s173 = smul.addr %s23, 1536
          %s174 = sadd.s32 %s169, %s173
          %s175 = smul.addr %s174, 128
          %s176 = scalar_lea.hbm %s2, %s175
          %s177 = sshll.u32 %s168, 4
          %s178 = int_to_ptr.vmem [resolvable:$true] %s177
          %183 = dma.hbm_to_vmem [thread:$0]  %s176, 196608, %s178, %s165, 1024, 1024, 64
        $region28: #{tpu_custom_call.1} parent=23 // pred_fallthru
          _
      $region24: #{tpu_custom_call.1} parent=5 // pred_fallthru
        _
      %p184 = scmp.le.s32.totalorder 1, %s16
      %p185 = scmp.lt.s32.totalorder %s16, 3
      %p186 = pnand %p184, %p185
      %p187 = pneg %p186
      // Predicated region
      $region29: #{tpu_custom_call.1} parent=5 // pred_check
        _
      $region30: #{tpu_custom_call.1} parent=5 // pred_check_branch
        %189 = sbr.rel (%p186) target = $region32
      $region31: #{tpu_custom_call.1} parent=5 // pred_region
        %s190 = ssub.s32 %s16, 1
        // Predicated region
        $region33: #{tpu_custom_call.1} parent=31 // pred_check
          %p191 = pneg %p49
        $region34: #{tpu_custom_call.1} parent=31 // pred_check_branch
          %193 = sbr.rel (%p191) target = $region36
        $region35: #{tpu_custom_call.1} parent=31 // pred_region
          %194 = dma.done [#allocation3], 12288
        $region36: #{tpu_custom_call.1} parent=31 // pred_fallthru
          _
        %s195 = sand.u32 %s85, 1
        %s196 = scalar_lea.sflag [#allocation6], %s195
        %s197 = sand.u32 %s85, 1
        %s198 = smul.addr %s197, 12288
        %s199 = scalar_lea.vmem [#allocation5], %s198
        // Predicated region
        $region37: #{tpu_custom_call.1} parent=31 // pred_check
          %p200 = pneg %p98
        $region38: #{tpu_custom_call.1} parent=31 // pred_check_branch
          %202 = sbr.rel (%p200) target = $region40
        $region39: #{tpu_custom_call.1} parent=31 // pred_region
          %203 = dma.done %s196, 196608
        $region40: #{tpu_custom_call.1} parent=31 // pred_fallthru
          _
        %p204 = pneg %p49
        %p205 = pneg %p46
        %p206 = pneg %p70
        %p207 = pneg %p67
        %s208 = sand.u32 %s85, 1
        %s209 = scalar_lea.sflag [#allocation6], %s208
        %s210 = sand.u32 %s85, 1
        %s211 = smul.addr %s210, 12288
        %s212 = scalar_lea.vmem [#allocation5], %s211
        %p213 = pneg %p98
        %p214 = pneg %p95
        %p215 = pneg %p126
        %p216 = pneg %p123
        %s217 = sand.u32 %s113, 1
        %s218 = scalar_lea.sflag [#allocation4], %s217
        %s219 = sand.u32 %s113, 1
        %s220 = smul.addr %s219, 512
        %s221 = scalar_lea.vmem [#allocation7], %s220
        %s222 = smul.u32 8, %s26
        %s223 = smul.u32 8, %s26
        %v224 = vld [vmem:[#allocation2] sm:$0xff]
        %v225 = vld [vmem:[#allocation2 + $0x8] sm:$0xff]
        %v226 = vld [vmem:[#allocation2 + $0x10] sm:$0xff]
        %v227 = vld [vmem:[#allocation2 + $0x18] sm:$0xff]
        %v228 = vld [vmem:[#allocation2 + $0x20] sm:$0xff]
        %v229 = vld [vmem:[#allocation2 + $0x28] sm:$0xff]
        %v230 = vld [vmem:[#allocation2 + $0x30] sm:$0xff]
        %v231 = vld [vmem:[#allocation2 + $0x38] sm:$0xff]
        %v232 = vld [vmem:[#allocation2 + $0x40] sm:$0xff]
        %v233 = vld [vmem:[#allocation2 + $0x48] sm:$0xff]
        %v234 = vld [vmem:[#allocation2 + $0x50] sm:$0xff]
        %v235 = vld [vmem:[#allocation2 + $0x58] sm:$0xff]
        %v236 = vld [vmem:[#allocation2 + $0x60] sm:$0xff]
        %v237 = vld [vmem:[#allocation2 + $0x68] sm:$0xff]
        %v238 = vld [vmem:[#allocation2 + $0x70] sm:$0xff]
        %v239 = vld [vmem:[#allocation2 + $0x78] sm:$0xff]
        %v240 = vld [vmem:[#allocation2 + $0x80] sm:$0xff]
        %v241 = vld [vmem:[#allocation2 + $0x88] sm:$0xff]
        %v242 = vld [vmem:[#allocation2 + $0x90] sm:$0xff]
        %v243 = vld [vmem:[#allocation2 + $0x98] sm:$0xff]
        %v244 = vld [vmem:[#allocation2 + $0xa0] sm:$0xff]
        %v245 = vld [vmem:[#allocation2 + $0xa8] sm:$0xff]
        %v246 = vld [vmem:[#allocation2 + $0xb0] sm:$0xff]
        %v247 = vld [vmem:[#allocation2 + $0xb8] sm:$0xff]
        %v248 = vld [vmem:[#allocation2 + $0xc0] sm:$0xff]
        %v249 = vld [vmem:[#allocation2 + $0xc8] sm:$0xff]
        %v250 = vld [vmem:[#allocation2 + $0xd0] sm:$0xff]
        %v251 = vld [vmem:[#allocation2 + $0xd8] sm:$0xff]
        %v252 = vld [vmem:[#allocation2 + $0xe0] sm:$0xff]
        %v253 = vld [vmem:[#allocation2 + $0xe8] sm:$0xff]
        %v254 = vld [vmem:[#allocation2 + $0xf0] sm:$0xff]
        %v255 = vld [vmem:[#allocation2 + $0xf8] sm:$0xff]
        %v256 = vld [vmem:[#allocation2 + $0x100] sm:$0xff]
        %v257 = vld [vmem:[#allocation2 + $0x108] sm:$0xff]
        %v258 = vld [vmem:[#allocation2 + $0x110] sm:$0xff]
        %v259 = vld [vmem:[#allocation2 + $0x118] sm:$0xff]
        %v260 = vld [vmem:[#allocation2 + $0x120] sm:$0xff]
        %v261 = vld [vmem:[#allocation2 + $0x128] sm:$0xff]
        %v262 = vld [vmem:[#allocation2 + $0x130] sm:$0xff]
        %v263 = vld [vmem:[#allocation2 + $0x138] sm:$0xff]
        %v264 = vld [vmem:[#allocation2 + $0x140] sm:$0xff]
        %v265 = vld [vmem:[#allocation2 + $0x148] sm:$0xff]
        %v266 = vld [vmem:[#allocation2 + $0x150] sm:$0xff]
        %v267 = vld [vmem:[#allocation2 + $0x158] sm:$0xff]
        %v268 = vld [vmem:[#allocation2 + $0x160] sm:$0xff]
        %v269 = vld [vmem:[#allocation2 + $0x168] sm:$0xff]
        %v270 = vld [vmem:[#allocation2 + $0x170] sm:$0xff]
        %v271 = vld [vmem:[#allocation2 + $0x178] sm:$0xff]
        %v272 = vld [vmem:[#allocation2 + $0x180] sm:$0xff]
        %v273 = vld [vmem:[#allocation2 + $0x188] sm:$0xff]
        %v274 = vld [vmem:[#allocation2 + $0x190] sm:$0xff]
        %v275 = vld [vmem:[#allocation2 + $0x198] sm:$0xff]
        %v276 = vld [vmem:[#allocation2 + $0x1a0] sm:$0xff]
        %v277 = vld [vmem:[#allocation2 + $0x1a8] sm:$0xff]
        %v278 = vld [vmem:[#allocation2 + $0x1b0] sm:$0xff]
        %v279 = vld [vmem:[#allocation2 + $0x1b8] sm:$0xff]
        %v280 = vld [vmem:[#allocation2 + $0x1c0] sm:$0xff]
        %v281 = vld [vmem:[#allocation2 + $0x1c8] sm:$0xff]
        %v282 = vld [vmem:[#allocation2 + $0x1d0] sm:$0xff]
        %v283 = vld [vmem:[#allocation2 + $0x1d8] sm:$0xff]
        %v284 = vld [vmem:[#allocation2 + $0x1e0] sm:$0xff]
        %v285 = vld [vmem:[#allocation2 + $0x1e8] sm:$0xff]
        %v286 = vld [vmem:[#allocation2 + $0x1f0] sm:$0xff]
        %v287 = vld [vmem:[#allocation2 + $0x1f8] sm:$0xff]
        %v288 = vld [vmem:[#allocation2 + $0x200] sm:$0xff]
        %v289 = vld [vmem:[#allocation2 + $0x208] sm:$0xff]
        %v290 = vld [vmem:[#allocation2 + $0x210] sm:$0xff]
        %v291 = vld [vmem:[#allocation2 + $0x218] sm:$0xff]
        %v292 = vld [vmem:[#allocation2 + $0x220] sm:$0xff]
        %v293 = vld [vmem:[#allocation2 + $0x228] sm:$0xff]
        %v294 = vld [vmem:[#allocation2 + $0x230] sm:$0xff]
        %v295 = vld [vmem:[#allocation2 + $0x238] sm:$0xff]
        %v296 = vld [vmem:[#allocation2 + $0x240] sm:$0xff]
        %v297 = vld [vmem:[#allocation2 + $0x248] sm:$0xff]
        %v298 = vld [vmem:[#allocation2 + $0x250] sm:$0xff]
        %v299 = vld [vmem:[#allocation2 + $0x258] sm:$0xff]
        %v300 = vld [vmem:[#allocation2 + $0x260] sm:$0xff]
        %v301 = vld [vmem:[#allocation2 + $0x268] sm:$0xff]
        %v302 = vld [vmem:[#allocation2 + $0x270] sm:$0xff]
        %v303 = vld [vmem:[#allocation2 + $0x278] sm:$0xff]
        %v304 = vld [vmem:[#allocation2 + $0x280] sm:$0xff]
        %v305 = vld [vmem:[#allocation2 + $0x288] sm:$0xff]
        %v306 = vld [vmem:[#allocation2 + $0x290] sm:$0xff]
        %v307 = vld [vmem:[#allocation2 + $0x298] sm:$0xff]
        %v308 = vld [vmem:[#allocation2 + $0x2a0] sm:$0xff]
        %v309 = vld [vmem:[#allocation2 + $0x2a8] sm:$0xff]
        %v310 = vld [vmem:[#allocation2 + $0x2b0] sm:$0xff]
        %v311 = vld [vmem:[#allocation2 + $0x2b8] sm:$0xff]
        %v312 = vld [vmem:[#allocation2 + $0x2c0] sm:$0xff]
        %v313 = vld [vmem:[#allocation2 + $0x2c8] sm:$0xff]
        %v314 = vld [vmem:[#allocation2 + $0x2d0] sm:$0xff]
        %v315 = vld [vmem:[#allocation2 + $0x2d8] sm:$0xff]
        %v316 = vld [vmem:[#allocation2 + $0x2e0] sm:$0xff]
        %v317 = vld [vmem:[#allocation2 + $0x2e8] sm:$0xff]
        %v318 = vld [vmem:[#allocation2 + $0x2f0] sm:$0xff]
        %v319 = vld [vmem:[#allocation2 + $0x2f8] sm:$0xff]
        %v320 = vld [vmem:[%s199] sm:$0xff]
        %v321 = vld [vmem:[%s199 + $0x8] sm:$0xff]
        %v322 = vld [vmem:[%s199 + $0x10] sm:$0xff]
        %v323 = vld [vmem:[%s199 + $0x18] sm:$0xff]
        %v324 = vld [vmem:[%s199 + $0x20] sm:$0xff]
        %v325 = vld [vmem:[%s199 + $0x28] sm:$0xff]
        %v326 = vld [vmem:[%s199 + $0x30] sm:$0xff]
        %v327 = vld [vmem:[%s199 + $0x38] sm:$0xff]
        %v328 = vld [vmem:[%s199 + $0x40] sm:$0xff]
        %v329 = vld [vmem:[%s199 + $0x48] sm:$0xff]
        %v330 = vld [vmem:[%s199 + $0x50] sm:$0xff]
        %v331 = vld [vmem:[%s199 + $0x58] sm:$0xff]
        %v332 = vld [vmem:[%s199 + $0x60] sm:$0xff]
        %v333 = vld [vmem:[%s199 + $0x68] sm:$0xff]
        %v334 = vld [vmem:[%s199 + $0x70] sm:$0xff]
        %v335 = vld [vmem:[%s199 + $0x78] sm:$0xff]
        %v336 = vld [vmem:[%s199 + $0x80] sm:$0xff]
        %v337 = vld [vmem:[%s199 + $0x88] sm:$0xff]
        %v338 = vld [vmem:[%s199 + $0x90] sm:$0xff]
        %v339 = vld [vmem:[%s199 + $0x98] sm:$0xff]
        %v340 = vld [vmem:[%s199 + $0xa0] sm:$0xff]
        %v341 = vld [vmem:[%s199 + $0xa8] sm:$0xff]
        %v342 = vld [vmem:[%s199 + $0xb0] sm:$0xff]
        %v343 = vld [vmem:[%s199 + $0xb8] sm:$0xff]
        %v344 = vld [vmem:[%s199 + $0xc0] sm:$0xff]
        %v345 = vld [vmem:[%s199 + $0xc8] sm:$0xff]
        %v346 = vld [vmem:[%s199 + $0xd0] sm:$0xff]
        %v347 = vld [vmem:[%s199 + $0xd8] sm:$0xff]
        %v348 = vld [vmem:[%s199 + $0xe0] sm:$0xff]
        %v349 = vld [vmem:[%s199 + $0xe8] sm:$0xff]
        %v350 = vld [vmem:[%s199 + $0xf0] sm:$0xff]
        %v351 = vld [vmem:[%s199 + $0xf8] sm:$0xff]
        %v352 = vld [vmem:[%s199 + $0x100] sm:$0xff]
        %v353 = vld [vmem:[%s199 + $0x108] sm:$0xff]
        %v354 = vld [vmem:[%s199 + $0x110] sm:$0xff]
        %v355 = vld [vmem:[%s199 + $0x118] sm:$0xff]
        %v356 = vld [vmem:[%s199 + $0x120] sm:$0xff]
        %v357 = vld [vmem:[%s199 + $0x128] sm:$0xff]
        %v358 = vld [vmem:[%s199 + $0x130] sm:$0xff]
        %v359 = vld [vmem:[%s199 + $0x138] sm:$0xff]
        %v360 = vld [vmem:[%s199 + $0x140] sm:$0xff]
        %v361 = vld [vmem:[%s199 + $0x148] sm:$0xff]
        %v362 = vld [vmem:[%s199 + $0x150] sm:$0xff]
        %v363 = vld [vmem:[%s199 + $0x158] sm:$0xff]
        %v364 = vld [vmem:[%s199 + $0x160] sm:$0xff]
        %v365 = vld [vmem:[%s199 + $0x168] sm:$0xff]
        %v366 = vld [vmem:[%s199 + $0x170] sm:$0xff]
        %v367 = vld [vmem:[%s199 + $0x178] sm:$0xff]
        %v368 = vld [vmem:[%s199 + $0x180] sm:$0xff]
        %v369 = vld [vmem:[%s199 + $0x188] sm:$0xff]
        %v370 = vld [vmem:[%s199 + $0x190] sm:$0xff]
        %v371 = vld [vmem:[%s199 + $0x198] sm:$0xff]
        %v372 = vld [vmem:[%s199 + $0x1a0] sm:$0xff]
        %v373 = vld [vmem:[%s199 + $0x1a8] sm:$0xff]
        %v374 = vld [vmem:[%s199 + $0x1b0] sm:$0xff]
        %v375 = vld [vmem:[%s199 + $0x1b8] sm:$0xff]
        %v376 = vld [vmem:[%s199 + $0x1c0] sm:$0xff]
        %v377 = vld [vmem:[%s199 + $0x1c8] sm:$0xff]
        %v378 = vld [vmem:[%s199 + $0x1d0] sm:$0xff]
        %v379 = vld [vmem:[%s199 + $0x1d8] sm:$0xff]
        %v380 = vld [vmem:[%s199 + $0x1e0] sm:$0xff]
        %v381 = vld [vmem:[%s199 + $0x1e8] sm:$0xff]
        %v382 = vld [vmem:[%s199 + $0x1f0] sm:$0xff]
        %v383 = vld [vmem:[%s199 + $0x1f8] sm:$0xff]
        %v384 = vld [vmem:[%s199 + $0x200] sm:$0xff]
        %v385 = vld [vmem:[%s199 + $0x208] sm:$0xff]
        %v386 = vld [vmem:[%s199 + $0x210] sm:$0xff]
        %v387 = vld [vmem:[%s199 + $0x218] sm:$0xff]
        %v388 = vld [vmem:[%s199 + $0x220] sm:$0xff]
        %v389 = vld [vmem:[%s199 + $0x228] sm:$0xff]
        %v390 = vld [vmem:[%s199 + $0x230] sm:$0xff]
        %v391 = vld [vmem:[%s199 + $0x238] sm:$0xff]
        %v392 = vld [vmem:[%s199 + $0x240] sm:$0xff]
        %v393 = vld [vmem:[%s199 + $0x248] sm:$0xff]
        %v394 = vld [vmem:[%s199 + $0x250] sm:$0xff]
        %v395 = vld [vmem:[%s199 + $0x258] sm:$0xff]
        %v396 = vld [vmem:[%s199 + $0x260] sm:$0xff]
        %v397 = vld [vmem:[%s199 + $0x268] sm:$0xff]
        %v398 = vld [vmem:[%s199 + $0x270] sm:$0xff]
        %v399 = vld [vmem:[%s199 + $0x278] sm:$0xff]
        %v400 = vld [vmem:[%s199 + $0x280] sm:$0xff]
        %v401 = vld [vmem:[%s199 + $0x288] sm:$0xff]
        %v402 = vld [vmem:[%s199 + $0x290] sm:$0xff]
        %v403 = vld [vmem:[%s199 + $0x298] sm:$0xff]
        %v404 = vld [vmem:[%s199 + $0x2a0] sm:$0xff]
        %v405 = vld [vmem:[%s199 + $0x2a8] sm:$0xff]
        %v406 = vld [vmem:[%s199 + $0x2b0] sm:$0xff]
        %v407 = vld [vmem:[%s199 + $0x2b8] sm:$0xff]
        %v408 = vld [vmem:[%s199 + $0x2c0] sm:$0xff]
        %v409 = vld [vmem:[%s199 + $0x2c8] sm:$0xff]
        %v410 = vld [vmem:[%s199 + $0x2d0] sm:$0xff]
        %v411 = vld [vmem:[%s199 + $0x2d8] sm:$0xff]
        %v412 = vld [vmem:[%s199 + $0x2e0] sm:$0xff]
        %v413 = vld [vmem:[%s199 + $0x2e8] sm:$0xff]
        %v414 = vld [vmem:[%s199 + $0x2f0] sm:$0xff]
        %v415 = vld [vmem:[%s199 + $0x2f8] sm:$0xff]
        %v416 = vld [vmem:[%s199 + $0x300] sm:$0xff]
        %v417 = vld [vmem:[%s199 + $0x308] sm:$0xff]
        %v418 = vld [vmem:[%s199 + $0x310] sm:$0xff]
        %v419 = vld [vmem:[%s199 + $0x318] sm:$0xff]
        %v420 = vld [vmem:[%s199 + $0x320] sm:$0xff]
        %v421 = vld [vmem:[%s199 + $0x328] sm:$0xff]
        %v422 = vld [vmem:[%s199 + $0x330] sm:$0xff]
        %v423 = vld [vmem:[%s199 + $0x338] sm:$0xff]
        %v424 = vld [vmem:[%s199 + $0x340] sm:$0xff]
        %v425 = vld [vmem:[%s199 + $0x348] sm:$0xff]
        %v426 = vld [vmem:[%s199 + $0x350] sm:$0xff]
        %v427 = vld [vmem:[%s199 + $0x358] sm:$0xff]
        %v428 = vld [vmem:[%s199 + $0x360] sm:$0xff]
        %v429 = vld [vmem:[%s199 + $0x368] sm:$0xff]
        %v430 = vld [vmem:[%s199 + $0x370] sm:$0xff]
        %v431 = vld [vmem:[%s199 + $0x378] sm:$0xff]
        %v432 = vld [vmem:[%s199 + $0x380] sm:$0xff]
        %v433 = vld [vmem:[%s199 + $0x388] sm:$0xff]
        %v434 = vld [vmem:[%s199 + $0x390] sm:$0xff]
        %v435 = vld [vmem:[%s199 + $0x398] sm:$0xff]
        %v436 = vld [vmem:[%s199 + $0x3a0] sm:$0xff]
        %v437 = vld [vmem:[%s199 + $0x3a8] sm:$0xff]
        %v438 = vld [vmem:[%s199 + $0x3b0] sm:$0xff]
        %v439 = vld [vmem:[%s199 + $0x3b8] sm:$0xff]
        %v440 = vld [vmem:[%s199 + $0x3c0] sm:$0xff]
        %v441 = vld [vmem:[%s199 + $0x3c8] sm:$0xff]
        %v442 = vld [vmem:[%s199 + $0x3d0] sm:$0xff]
        %v443 = vld [vmem:[%s199 + $0x3d8] sm:$0xff]
        %v444 = vld [vmem:[%s199 + $0x3e0] sm:$0xff]
        %v445 = vld [vmem:[%s199 + $0x3e8] sm:$0xff]
        %v446 = vld [vmem:[%s199 + $0x3f0] sm:$0xff]
        %v447 = vld [vmem:[%s199 + $0x3f8] sm:$0xff]
        %v448 = vld [vmem:[%s199 + $0x400] sm:$0xff]
        %v449 = vld [vmem:[%s199 + $0x408] sm:$0xff]
        %v450 = vld [vmem:[%s199 + $0x410] sm:$0xff]
        %v451 = vld [vmem:[%s199 + $0x418] sm:$0xff]
        %v452 = vld [vmem:[%s199 + $0x420] sm:$0xff]
        %v453 = vld [vmem:[%s199 + $0x428] sm:$0xff]
        %v454 = vld [vmem:[%s199 + $0x430] sm:$0xff]
        %v455 = vld [vmem:[%s199 + $0x438] sm:$0xff]
        %v456 = vld [vmem:[%s199 + $0x440] sm:$0xff]
        %v457 = vld [vmem:[%s199 + $0x448] sm:$0xff]
        %v458 = vld [vmem:[%s199 + $0x450] sm:$0xff]
        %v459 = vld [vmem:[%s199 + $0x458] sm:$0xff]
        %v460 = vld [vmem:[%s199 + $0x460] sm:$0xff]
        %v461 = vld [vmem:[%s199 + $0x468] sm:$0xff]
        %v462 = vld [vmem:[%s199 + $0x470] sm:$0xff]
        %v463 = vld [vmem:[%s199 + $0x478] sm:$0xff]
        %v464 = vld [vmem:[%s199 + $0x480] sm:$0xff]
        %v465 = vld [vmem:[%s199 + $0x488] sm:$0xff]
        %v466 = vld [vmem:[%s199 + $0x490] sm:$0xff]
        %v467 = vld [vmem:[%s199 + $0x498] sm:$0xff]
        %v468 = vld [vmem:[%s199 + $0x4a0] sm:$0xff]
        %v469 = vld [vmem:[%s199 + $0x4a8] sm:$0xff]
        %v470 = vld [vmem:[%s199 + $0x4b0] sm:$0xff]
        %v471 = vld [vmem:[%s199 + $0x4b8] sm:$0xff]
        %v472 = vld [vmem:[%s199 + $0x4c0] sm:$0xff]
        %v473 = vld [vmem:[%s199 + $0x4c8] sm:$0xff]
        %v474 = vld [vmem:[%s199 + $0x4d0] sm:$0xff]
        %v475 = vld [vmem:[%s199 + $0x4d8] sm:$0xff]
        %v476 = vld [vmem:[%s199 + $0x4e0] sm:$0xff]
        %v477 = vld [vmem:[%s199 + $0x4e8] sm:$0xff]
        %v478 = vld [vmem:[%s199 + $0x4f0] sm:$0xff]
        %v479 = vld [vmem:[%s199 + $0x4f8] sm:$0xff]
        %v480 = vld [vmem:[%s199 + $0x500] sm:$0xff]
        %v481 = vld [vmem:[%s199 + $0x508] sm:$0xff]
        %v482 = vld [vmem:[%s199 + $0x510] sm:$0xff]
        %v483 = vld [vmem:[%s199 + $0x518] sm:$0xff]
        %v484 = vld [vmem:[%s199 + $0x520] sm:$0xff]
        %v485 = vld [vmem:[%s199 + $0x528] sm:$0xff]
        %v486 = vld [vmem:[%s199 + $0x530] sm:$0xff]
        %v487 = vld [vmem:[%s199 + $0x538] sm:$0xff]
        %v488 = vld [vmem:[%s199 + $0x540] sm:$0xff]
        %v489 = vld [vmem:[%s199 + $0x548] sm:$0xff]
        %v490 = vld [vmem:[%s199 + $0x550] sm:$0xff]
        %v491 = vld [vmem:[%s199 + $0x558] sm:$0xff]
        %v492 = vld [vmem:[%s199 + $0x560] sm:$0xff]
        %v493 = vld [vmem:[%s199 + $0x568] sm:$0xff]
        %v494 = vld [vmem:[%s199 + $0x570] sm:$0xff]
        %v495 = vld [vmem:[%s199 + $0x578] sm:$0xff]
        %v496 = vld [vmem:[%s199 + $0x580] sm:$0xff]
        %v497 = vld [vmem:[%s199 + $0x588] sm:$0xff]
        %v498 = vld [vmem:[%s199 + $0x590] sm:$0xff]
        %v499 = vld [vmem:[%s199 + $0x598] sm:$0xff]
        %v500 = vld [vmem:[%s199 + $0x5a0] sm:$0xff]
        %v501 = vld [vmem:[%s199 + $0x5a8] sm:$0xff]
        %v502 = vld [vmem:[%s199 + $0x5b0] sm:$0xff]
        %v503 = vld [vmem:[%s199 + $0x5b8] sm:$0xff]
        %v504 = vld [vmem:[%s199 + $0x5c0] sm:$0xff]
        %v505 = vld [vmem:[%s199 + $0x5c8] sm:$0xff]
        %v506 = vld [vmem:[%s199 + $0x5d0] sm:$0xff]
        %v507 = vld [vmem:[%s199 + $0x5d8] sm:$0xff]
        %v508 = vld [vmem:[%s199 + $0x5e0] sm:$0xff]
        %v509 = vld [vmem:[%s199 + $0x5e8] sm:$0xff]
        %v510 = vld [vmem:[%s199 + $0x5f0] sm:$0xff]
        %v511 = vld [vmem:[%s199 + $0x5f8] sm:$0xff]
        %v512 = vld [vmem:[%s199 + $0x600] sm:$0xff]
        %v513 = vld [vmem:[%s199 + $0x608] sm:$0xff]
        %v514 = vld [vmem:[%s199 + $0x610] sm:$0xff]
        %v515 = vld [vmem:[%s199 + $0x618] sm:$0xff]
        %v516 = vld [vmem:[%s199 + $0x620] sm:$0xff]
        %v517 = vld [vmem:[%s199 + $0x628] sm:$0xff]
        %v518 = vld [vmem:[%s199 + $0x630] sm:$0xff]
        %v519 = vld [vmem:[%s199 + $0x638] sm:$0xff]
        %v520 = vld [vmem:[%s199 + $0x640] sm:$0xff]
        %v521 = vld [vmem:[%s199 + $0x648] sm:$0xff]
        %v522 = vld [vmem:[%s199 + $0x650] sm:$0xff]
        %v523 = vld [vmem:[%s199 + $0x658] sm:$0xff]
        %v524 = vld [vmem:[%s199 + $0x660] sm:$0xff]
        %v525 = vld [vmem:[%s199 + $0x668] sm:$0xff]
        %v526 = vld [vmem:[%s199 + $0x670] sm:$0xff]
        %v527 = vld [vmem:[%s199 + $0x678] sm:$0xff]
        %v528 = vld [vmem:[%s199 + $0x680] sm:$0xff]
        %v529 = vld [vmem:[%s199 + $0x688] sm:$0xff]
        %v530 = vld [vmem:[%s199 + $0x690] sm:$0xff]
        %v531 = vld [vmem:[%s199 + $0x698] sm:$0xff]
        %v532 = vld [vmem:[%s199 + $0x6a0] sm:$0xff]
        %v533 = vld [vmem:[%s199 + $0x6a8] sm:$0xff]
        %v534 = vld [vmem:[%s199 + $0x6b0] sm:$0xff]
        %v535 = vld [vmem:[%s199 + $0x6b8] sm:$0xff]
        %v536 = vld [vmem:[%s199 + $0x6c0] sm:$0xff]
        %v537 = vld [vmem:[%s199 + $0x6c8] sm:$0xff]
        %v538 = vld [vmem:[%s199 + $0x6d0] sm:$0xff]
        %v539 = vld [vmem:[%s199 + $0x6d8] sm:$0xff]
        %v540 = vld [vmem:[%s199 + $0x6e0] sm:$0xff]
        %v541 = vld [vmem:[%s199 + $0x6e8] sm:$0xff]
        %v542 = vld [vmem:[%s199 + $0x6f0] sm:$0xff]
        %v543 = vld [vmem:[%s199 + $0x6f8] sm:$0xff]
        %v544 = vld [vmem:[%s199 + $0x700] sm:$0xff]
        %v545 = vld [vmem:[%s199 + $0x708] sm:$0xff]
        %v546 = vld [vmem:[%s199 + $0x710] sm:$0xff]
        %v547 = vld [vmem:[%s199 + $0x718] sm:$0xff]
        %v548 = vld [vmem:[%s199 + $0x720] sm:$0xff]
        %v549 = vld [vmem:[%s199 + $0x728] sm:$0xff]
        %v550 = vld [vmem:[%s199 + $0x730] sm:$0xff]
        %v551 = vld [vmem:[%s199 + $0x738] sm:$0xff]
        %v552 = vld [vmem:[%s199 + $0x740] sm:$0xff]
        %v553 = vld [vmem:[%s199 + $0x748] sm:$0xff]
        %v554 = vld [vmem:[%s199 + $0x750] sm:$0xff]
        %v555 = vld [vmem:[%s199 + $0x758] sm:$0xff]
        %v556 = vld [vmem:[%s199 + $0x760] sm:$0xff]
        %v557 = vld [vmem:[%s199 + $0x768] sm:$0xff]
        %v558 = vld [vmem:[%s199 + $0x770] sm:$0xff]
        %v559 = vld [vmem:[%s199 + $0x778] sm:$0xff]
        %v560 = vld [vmem:[%s199 + $0x780] sm:$0xff]
        %v561 = vld [vmem:[%s199 + $0x788] sm:$0xff]
        %v562 = vld [vmem:[%s199 + $0x790] sm:$0xff]
        %v563 = vld [vmem:[%s199 + $0x798] sm:$0xff]
        %v564 = vld [vmem:[%s199 + $0x7a0] sm:$0xff]
        %v565 = vld [vmem:[%s199 + $0x7a8] sm:$0xff]
        %v566 = vld [vmem:[%s199 + $0x7b0] sm:$0xff]
        %v567 = vld [vmem:[%s199 + $0x7b8] sm:$0xff]
        %v568 = vld [vmem:[%s199 + $0x7c0] sm:$0xff]
        %v569 = vld [vmem:[%s199 + $0x7c8] sm:$0xff]
        %v570 = vld [vmem:[%s199 + $0x7d0] sm:$0xff]
        %v571 = vld [vmem:[%s199 + $0x7d8] sm:$0xff]
        %v572 = vld [vmem:[%s199 + $0x7e0] sm:$0xff]
        %v573 = vld [vmem:[%s199 + $0x7e8] sm:$0xff]
        %v574 = vld [vmem:[%s199 + $0x7f0] sm:$0xff]
        %v575 = vld [vmem:[%s199 + $0x7f8] sm:$0xff]
        %v576 = vld [vmem:[%s199 + $0x800] sm:$0xff]
        %v577 = vld [vmem:[%s199 + $0x808] sm:$0xff]
        %v578 = vld [vmem:[%s199 + $0x810] sm:$0xff]
        %v579 = vld [vmem:[%s199 + $0x818] sm:$0xff]
        %v580 = vld [vmem:[%s199 + $0x820] sm:$0xff]
        %v581 = vld [vmem:[%s199 + $0x828] sm:$0xff]
        %v582 = vld [vmem:[%s199 + $0x830] sm:$0xff]
        %v583 = vld [vmem:[%s199 + $0x838] sm:$0xff]
        %v584 = vld [vmem:[%s199 + $0x840] sm:$0xff]
        %v585 = vld [vmem:[%s199 + $0x848] sm:$0xff]
        %v586 = vld [vmem:[%s199 + $0x850] sm:$0xff]
        %v587 = vld [vmem:[%s199 + $0x858] sm:$0xff]
        %v588 = vld [vmem:[%s199 + $0x860] sm:$0xff]
        %v589 = vld [vmem:[%s199 + $0x868] sm:$0xff]
        %v590 = vld [vmem:[%s199 + $0x870] sm:$0xff]
        %v591 = vld [vmem:[%s199 + $0x878] sm:$0xff]
        %v592 = vld [vmem:[%s199 + $0x880] sm:$0xff]
        %v593 = vld [vmem:[%s199 + $0x888] sm:$0xff]
        %v594 = vld [vmem:[%s199 + $0x890] sm:$0xff]
        %v595 = vld [vmem:[%s199 + $0x898] sm:$0xff]
        %v596 = vld [vmem:[%s199 + $0x8a0] sm:$0xff]
        %v597 = vld [vmem:[%s199 + $0x8a8] sm:$0xff]
        %v598 = vld [vmem:[%s199 + $0x8b0] sm:$0xff]
        %v599 = vld [vmem:[%s199 + $0x8b8] sm:$0xff]
        %v600 = vld [vmem:[%s199 + $0x8c0] sm:$0xff]
        %v601 = vld [vmem:[%s199 + $0x8c8] sm:$0xff]
        %v602 = vld [vmem:[%s199 + $0x8d0] sm:$0xff]
        %v603 = vld [vmem:[%s199 + $0x8d8] sm:$0xff]
        %v604 = vld [vmem:[%s199 + $0x8e0] sm:$0xff]
        %v605 = vld [vmem:[%s199 + $0x8e8] sm:$0xff]
        %v606 = vld [vmem:[%s199 + $0x8f0] sm:$0xff]
        %v607 = vld [vmem:[%s199 + $0x8f8] sm:$0xff]
        %v608 = vld [vmem:[%s199 + $0x900] sm:$0xff]
        %v609 = vld [vmem:[%s199 + $0x908] sm:$0xff]
        %v610 = vld [vmem:[%s199 + $0x910] sm:$0xff]
        %v611 = vld [vmem:[%s199 + $0x918] sm:$0xff]
        %v612 = vld [vmem:[%s199 + $0x920] sm:$0xff]
        %v613 = vld [vmem:[%s199 + $0x928] sm:$0xff]
        %v614 = vld [vmem:[%s199 + $0x930] sm:$0xff]
        %v615 = vld [vmem:[%s199 + $0x938] sm:$0xff]
        %v616 = vld [vmem:[%s199 + $0x940] sm:$0xff]
        %v617 = vld [vmem:[%s199 + $0x948] sm:$0xff]
        %v618 = vld [vmem:[%s199 + $0x950] sm:$0xff]
        %v619 = vld [vmem:[%s199 + $0x958] sm:$0xff]
        %v620 = vld [vmem:[%s199 + $0x960] sm:$0xff]
        %v621 = vld [vmem:[%s199 + $0x968] sm:$0xff]
        %v622 = vld [vmem:[%s199 + $0x970] sm:$0xff]
        %v623 = vld [vmem:[%s199 + $0x978] sm:$0xff]
        %v624 = vld [vmem:[%s199 + $0x980] sm:$0xff]
        %v625 = vld [vmem:[%s199 + $0x988] sm:$0xff]
        %v626 = vld [vmem:[%s199 + $0x990] sm:$0xff]
        %v627 = vld [vmem:[%s199 + $0x998] sm:$0xff]
        %v628 = vld [vmem:[%s199 + $0x9a0] sm:$0xff]
        %v629 = vld [vmem:[%s199 + $0x9a8] sm:$0xff]
        %v630 = vld [vmem:[%s199 + $0x9b0] sm:$0xff]
        %v631 = vld [vmem:[%s199 + $0x9b8] sm:$0xff]
        %v632 = vld [vmem:[%s199 + $0x9c0] sm:$0xff]
        %v633 = vld [vmem:[%s199 + $0x9c8] sm:$0xff]
        %v634 = vld [vmem:[%s199 + $0x9d0] sm:$0xff]
        %v635 = vld [vmem:[%s199 + $0x9d8] sm:$0xff]
        %v636 = vld [vmem:[%s199 + $0x9e0] sm:$0xff]
        %v637 = vld [vmem:[%s199 + $0x9e8] sm:$0xff]
        %v638 = vld [vmem:[%s199 + $0x9f0] sm:$0xff]
        %v639 = vld [vmem:[%s199 + $0x9f8] sm:$0xff]
        %v640 = vld [vmem:[%s199 + $0xa00] sm:$0xff]
        %v641 = vld [vmem:[%s199 + $0xa08] sm:$0xff]
        %v642 = vld [vmem:[%s199 + $0xa10] sm:$0xff]
        %v643 = vld [vmem:[%s199 + $0xa18] sm:$0xff]
        %v644 = vld [vmem:[%s199 + $0xa20] sm:$0xff]
        %v645 = vld [vmem:[%s199 + $0xa28] sm:$0xff]
        %v646 = vld [vmem:[%s199 + $0xa30] sm:$0xff]
        %v647 = vld [vmem:[%s199 + $0xa38] sm:$0xff]
        %v648 = vld [vmem:[%s199 + $0xa40] sm:$0xff]
        %v649 = vld [vmem:[%s199 + $0xa48] sm:$0xff]
        %v650 = vld [vmem:[%s199 + $0xa50] sm:$0xff]
        %v651 = vld [vmem:[%s199 + $0xa58] sm:$0xff]
        %v652 = vld [vmem:[%s199 + $0xa60] sm:$0xff]
        %v653 = vld [vmem:[%s199 + $0xa68] sm:$0xff]
        %v654 = vld [vmem:[%s199 + $0xa70] sm:$0xff]
        %v655 = vld [vmem:[%s199 + $0xa78] sm:$0xff]
        %v656 = vld [vmem:[%s199 + $0xa80] sm:$0xff]
        %v657 = vld [vmem:[%s199 + $0xa88] sm:$0xff]
        %v658 = vld [vmem:[%s199 + $0xa90] sm:$0xff]
        %v659 = vld [vmem:[%s199 + $0xa98] sm:$0xff]
        %v660 = vld [vmem:[%s199 + $0xaa0] sm:$0xff]
        %v661 = vld [vmem:[%s199 + $0xaa8] sm:$0xff]
        %v662 = vld [vmem:[%s199 + $0xab0] sm:$0xff]
        %v663 = vld [vmem:[%s199 + $0xab8] sm:$0xff]
        %v664 = vld [vmem:[%s199 + $0xac0] sm:$0xff]
        %v665 = vld [vmem:[%s199 + $0xac8] sm:$0xff]
        %v666 = vld [vmem:[%s199 + $0xad0] sm:$0xff]
        %v667 = vld [vmem:[%s199 + $0xad8] sm:$0xff]
        %v668 = vld [vmem:[%s199 + $0xae0] sm:$0xff]
        %v669 = vld [vmem:[%s199 + $0xae8] sm:$0xff]
        %v670 = vld [vmem:[%s199 + $0xaf0] sm:$0xff]
        %v671 = vld [vmem:[%s199 + $0xaf8] sm:$0xff]
        %v672 = vld [vmem:[%s199 + $0xb00] sm:$0xff]
        %v673 = vld [vmem:[%s199 + $0xb08] sm:$0xff]
        %v674 = vld [vmem:[%s199 + $0xb10] sm:$0xff]
        %v675 = vld [vmem:[%s199 + $0xb18] sm:$0xff]
        %v676 = vld [vmem:[%s199 + $0xb20] sm:$0xff]
        %v677 = vld [vmem:[%s199 + $0xb28] sm:$0xff]
        %v678 = vld [vmem:[%s199 + $0xb30] sm:$0xff]
        %v679 = vld [vmem:[%s199 + $0xb38] sm:$0xff]
        %v680 = vld [vmem:[%s199 + $0xb40] sm:$0xff]
        %v681 = vld [vmem:[%s199 + $0xb48] sm:$0xff]
        %v682 = vld [vmem:[%s199 + $0xb50] sm:$0xff]
        %v683 = vld [vmem:[%s199 + $0xb58] sm:$0xff]
        %v684 = vld [vmem:[%s199 + $0xb60] sm:$0xff]
        %v685 = vld [vmem:[%s199 + $0xb68] sm:$0xff]
        %v686 = vld [vmem:[%s199 + $0xb70] sm:$0xff]
        %v687 = vld [vmem:[%s199 + $0xb78] sm:$0xff]
        %v688 = vld [vmem:[%s199 + $0xb80] sm:$0xff]
        %v689 = vld [vmem:[%s199 + $0xb88] sm:$0xff]
        %v690 = vld [vmem:[%s199 + $0xb90] sm:$0xff]
        %v691 = vld [vmem:[%s199 + $0xb98] sm:$0xff]
        %v692 = vld [vmem:[%s199 + $0xba0] sm:$0xff]
        %v693 = vld [vmem:[%s199 + $0xba8] sm:$0xff]
        %v694 = vld [vmem:[%s199 + $0xbb0] sm:$0xff]
        %v695 = vld [vmem:[%s199 + $0xbb8] sm:$0xff]
        %v696 = vld [vmem:[%s199 + $0xbc0] sm:$0xff]
        %v697 = vld [vmem:[%s199 + $0xbc8] sm:$0xff]
        %v698 = vld [vmem:[%s199 + $0xbd0] sm:$0xff]
        %v699 = vld [vmem:[%s199 + $0xbd8] sm:$0xff]
        %v700 = vld [vmem:[%s199 + $0xbe0] sm:$0xff]
        %v701 = vld [vmem:[%s199 + $0xbe8] sm:$0xff]
        %v702 = vld [vmem:[%s199 + $0xbf0] sm:$0xff]
        %v703 = vld [vmem:[%s199 + $0xbf8] sm:$0xff]
        %v704 = vld [vmem:[%s199 + $0xc00] sm:$0xff]
        %v705 = vld [vmem:[%s199 + $0xc08] sm:$0xff]
        %v706 = vld [vmem:[%s199 + $0xc10] sm:$0xff]
        %v707 = vld [vmem:[%s199 + $0xc18] sm:$0xff]
        %v708 = vld [vmem:[%s199 + $0xc20] sm:$0xff]
        %v709 = vld [vmem:[%s199 + $0xc28] sm:$0xff]
        %v710 = vld [vmem:[%s199 + $0xc30] sm:$0xff]
        %v711 = vld [vmem:[%s199 + $0xc38] sm:$0xff]
        %v712 = vld [vmem:[%s199 + $0xc40] sm:$0xff]
        %v713 = vld [vmem:[%s199 + $0xc48] sm:$0xff]
        %v714 = vld [vmem:[%s199 + $0xc50] sm:$0xff]
        %v715 = vld [vmem:[%s199 + $0xc58] sm:$0xff]
        %v716 = vld [vmem:[%s199 + $0xc60] sm:$0xff]
        %v717 = vld [vmem:[%s199 + $0xc68] sm:$0xff]
        %v718 = vld [vmem:[%s199 + $0xc70] sm:$0xff]
        %v719 = vld [vmem:[%s199 + $0xc78] sm:$0xff]
        %v720 = vld [vmem:[%s199 + $0xc80] sm:$0xff]
        %v721 = vld [vmem:[%s199 + $0xc88] sm:$0xff]
        %v722 = vld [vmem:[%s199 + $0xc90] sm:$0xff]
        %v723 = vld [vmem:[%s199 + $0xc98] sm:$0xff]
        %v724 = vld [vmem:[%s199 + $0xca0] sm:$0xff]
        %v725 = vld [vmem:[%s199 + $0xca8] sm:$0xff]
        %v726 = vld [vmem:[%s199 + $0xcb0] sm:$0xff]
        %v727 = vld [vmem:[%s199 + $0xcb8] sm:$0xff]
        %v728 = vld [vmem:[%s199 + $0xcc0] sm:$0xff]
        %v729 = vld [vmem:[%s199 + $0xcc8] sm:$0xff]
        %v730 = vld [vmem:[%s199 + $0xcd0] sm:$0xff]
        %v731 = vld [vmem:[%s199 + $0xcd8] sm:$0xff]
        %v732 = vld [vmem:[%s199 + $0xce0] sm:$0xff]
        %v733 = vld [vmem:[%s199 + $0xce8] sm:$0xff]
        %v734 = vld [vmem:[%s199 + $0xcf0] sm:$0xff]
        %v735 = vld [vmem:[%s199 + $0xcf8] sm:$0xff]
        %v736 = vld [vmem:[%s199 + $0xd00] sm:$0xff]
        %v737 = vld [vmem:[%s199 + $0xd08] sm:$0xff]
        %v738 = vld [vmem:[%s199 + $0xd10] sm:$0xff]
        %v739 = vld [vmem:[%s199 + $0xd18] sm:$0xff]
        %v740 = vld [vmem:[%s199 + $0xd20] sm:$0xff]
        %v741 = vld [vmem:[%s199 + $0xd28] sm:$0xff]
        %v742 = vld [vmem:[%s199 + $0xd30] sm:$0xff]
        %v743 = vld [vmem:[%s199 + $0xd38] sm:$0xff]
        %v744 = vld [vmem:[%s199 + $0xd40] sm:$0xff]
        %v745 = vld [vmem:[%s199 + $0xd48] sm:$0xff]
        %v746 = vld [vmem:[%s199 + $0xd50] sm:$0xff]
        %v747 = vld [vmem:[%s199 + $0xd58] sm:$0xff]
        %v748 = vld [vmem:[%s199 + $0xd60] sm:$0xff]
        %v749 = vld [vmem:[%s199 + $0xd68] sm:$0xff]
        %v750 = vld [vmem:[%s199 + $0xd70] sm:$0xff]
        %v751 = vld [vmem:[%s199 + $0xd78] sm:$0xff]
        %v752 = vld [vmem:[%s199 + $0xd80] sm:$0xff]
        %v753 = vld [vmem:[%s199 + $0xd88] sm:$0xff]
        %v754 = vld [vmem:[%s199 + $0xd90] sm:$0xff]
        %v755 = vld [vmem:[%s199 + $0xd98] sm:$0xff]
        %v756 = vld [vmem:[%s199 + $0xda0] sm:$0xff]
        %v757 = vld [vmem:[%s199 + $0xda8] sm:$0xff]
        %v758 = vld [vmem:[%s199 + $0xdb0] sm:$0xff]
        %v759 = vld [vmem:[%s199 + $0xdb8] sm:$0xff]
        %v760 = vld [vmem:[%s199 + $0xdc0] sm:$0xff]
        %v761 = vld [vmem:[%s199 + $0xdc8] sm:$0xff]
        %v762 = vld [vmem:[%s199 + $0xdd0] sm:$0xff]
        %v763 = vld [vmem:[%s199 + $0xdd8] sm:$0xff]
        %v764 = vld [vmem:[%s199 + $0xde0] sm:$0xff]
        %v765 = vld [vmem:[%s199 + $0xde8] sm:$0xff]
        %v766 = vld [vmem:[%s199 + $0xdf0] sm:$0xff]
        %v767 = vld [vmem:[%s199 + $0xdf8] sm:$0xff]
        %v768 = vld [vmem:[%s199 + $0xe00] sm:$0xff]
        %v769 = vld [vmem:[%s199 + $0xe08] sm:$0xff]
        %v770 = vld [vmem:[%s199 + $0xe10] sm:$0xff]
        %v771 = vld [vmem:[%s199 + $0xe18] sm:$0xff]
        %v772 = vld [vmem:[%s199 + $0xe20] sm:$0xff]
        %v773 = vld [vmem:[%s199 + $0xe28] sm:$0xff]
        %v774 = vld [vmem:[%s199 + $0xe30] sm:$0xff]
        %v775 = vld [vmem:[%s199 + $0xe38] sm:$0xff]
        %v776 = vld [vmem:[%s199 + $0xe40] sm:$0xff]
        %v777 = vld [vmem:[%s199 + $0xe48] sm:$0xff]
        %v778 = vld [vmem:[%s199 + $0xe50] sm:$0xff]
        %v779 = vld [vmem:[%s199 + $0xe58] sm:$0xff]
        %v780 = vld [vmem:[%s199 + $0xe60] sm:$0xff]
        %v781 = vld [vmem:[%s199 + $0xe68] sm:$0xff]
        %v782 = vld [vmem:[%s199 + $0xe70] sm:$0xff]
        %v783 = vld [vmem:[%s199 + $0xe78] sm:$0xff]
        %v784 = vld [vmem:[%s199 + $0xe80] sm:$0xff]
        %v785 = vld [vmem:[%s199 + $0xe88] sm:$0xff]
        %v786 = vld [vmem:[%s199 + $0xe90] sm:$0xff]
        %v787 = vld [vmem:[%s199 + $0xe98] sm:$0xff]
        %v788 = vld [vmem:[%s199 + $0xea0] sm:$0xff]
        %v789 = vld [vmem:[%s199 + $0xea8] sm:$0xff]
        %v790 = vld [vmem:[%s199 + $0xeb0] sm:$0xff]
        %v791 = vld [vmem:[%s199 + $0xeb8] sm:$0xff]
        %v792 = vld [vmem:[%s199 + $0xec0] sm:$0xff]
        %v793 = vld [vmem:[%s199 + $0xec8] sm:$0xff]
        %v794 = vld [vmem:[%s199 + $0xed0] sm:$0xff]
        %v795 = vld [vmem:[%s199 + $0xed8] sm:$0xff]
        %v796 = vld [vmem:[%s199 + $0xee0] sm:$0xff]
        %v797 = vld [vmem:[%s199 + $0xee8] sm:$0xff]
        %v798 = vld [vmem:[%s199 + $0xef0] sm:$0xff]
        %v799 = vld [vmem:[%s199 + $0xef8] sm:$0xff]
        %v800 = vld [vmem:[%s199 + $0xf00] sm:$0xff]
        %v801 = vld [vmem:[%s199 + $0xf08] sm:$0xff]
        %v802 = vld [vmem:[%s199 + $0xf10] sm:$0xff]
        %v803 = vld [vmem:[%s199 + $0xf18] sm:$0xff]
        %v804 = vld [vmem:[%s199 + $0xf20] sm:$0xff]
        %v805 = vld [vmem:[%s199 + $0xf28] sm:$0xff]
        %v806 = vld [vmem:[%s199 + $0xf30] sm:$0xff]
        %v807 = vld [vmem:[%s199 + $0xf38] sm:$0xff]
        %v808 = vld [vmem:[%s199 + $0xf40] sm:$0xff]
        %v809 = vld [vmem:[%s199 + $0xf48] sm:$0xff]
        %v810 = vld [vmem:[%s199 + $0xf50] sm:$0xff]
        %v811 = vld [vmem:[%s199 + $0xf58] sm:$0xff]
        %v812 = vld [vmem:[%s199 + $0xf60] sm:$0xff]
        %v813 = vld [vmem:[%s199 + $0xf68] sm:$0xff]
        %v814 = vld [vmem:[%s199 + $0xf70] sm:$0xff]
        %v815 = vld [vmem:[%s199 + $0xf78] sm:$0xff]
        %v816 = vld [vmem:[%s199 + $0xf80] sm:$0xff]
        %v817 = vld [vmem:[%s199 + $0xf88] sm:$0xff]
        %v818 = vld [vmem:[%s199 + $0xf90] sm:$0xff]
        %v819 = vld [vmem:[%s199 + $0xf98] sm:$0xff]
        %v820 = vld [vmem:[%s199 + $0xfa0] sm:$0xff]
        %v821 = vld [vmem:[%s199 + $0xfa8] sm:$0xff]
        %v822 = vld [vmem:[%s199 + $0xfb0] sm:$0xff]
        %v823 = vld [vmem:[%s199 + $0xfb8] sm:$0xff]
        %v824 = vld [vmem:[%s199 + $0xfc0] sm:$0xff]
        %v825 = vld [vmem:[%s199 + $0xfc8] sm:$0xff]
        %v826 = vld [vmem:[%s199 + $0xfd0] sm:$0xff]
        %v827 = vld [vmem:[%s199 + $0xfd8] sm:$0xff]
        %v828 = vld [vmem:[%s199 + $0xfe0] sm:$0xff]
        %v829 = vld [vmem:[%s199 + $0xfe8] sm:$0xff]
        %v830 = vld [vmem:[%s199 + $0xff0] sm:$0xff]
        %v831 = vld [vmem:[%s199 + $0xff8] sm:$0xff]
        %v832 = vld [vmem:[%s199 + $0x1000] sm:$0xff]
        %v833 = vld [vmem:[%s199 + $0x1008] sm:$0xff]
        %v834 = vld [vmem:[%s199 + $0x1010] sm:$0xff]
        %v835 = vld [vmem:[%s199 + $0x1018] sm:$0xff]
        %v836 = vld [vmem:[%s199 + $0x1020] sm:$0xff]
        %v837 = vld [vmem:[%s199 + $0x1028] sm:$0xff]
        %v838 = vld [vmem:[%s199 + $0x1030] sm:$0xff]
        %v839 = vld [vmem:[%s199 + $0x1038] sm:$0xff]
        %v840 = vld [vmem:[%s199 + $0x1040] sm:$0xff]
        %v841 = vld [vmem:[%s199 + $0x1048] sm:$0xff]
        %v842 = vld [vmem:[%s199 + $0x1050] sm:$0xff]
        %v843 = vld [vmem:[%s199 + $0x1058] sm:$0xff]
        %v844 = vld [vmem:[%s199 + $0x1060] sm:$0xff]
        %v845 = vld [vmem:[%s199 + $0x1068] sm:$0xff]
        %v846 = vld [vmem:[%s199 + $0x1070] sm:$0xff]
        %v847 = vld [vmem:[%s199 + $0x1078] sm:$0xff]
        %v848 = vld [vmem:[%s199 + $0x1080] sm:$0xff]
        %v849 = vld [vmem:[%s199 + $0x1088] sm:$0xff]
        %v850 = vld [vmem:[%s199 + $0x1090] sm:$0xff]
        %v851 = vld [vmem:[%s199 + $0x1098] sm:$0xff]
        %v852 = vld [vmem:[%s199 + $0x10a0] sm:$0xff]
        %v853 = vld [vmem:[%s199 + $0x10a8] sm:$0xff]
        %v854 = vld [vmem:[%s199 + $0x10b0] sm:$0xff]
        %v855 = vld [vmem:[%s199 + $0x10b8] sm:$0xff]
        %v856 = vld [vmem:[%s199 + $0x10c0] sm:$0xff]
        %v857 = vld [vmem:[%s199 + $0x10c8] sm:$0xff]
        %v858 = vld [vmem:[%s199 + $0x10d0] sm:$0xff]
        %v859 = vld [vmem:[%s199 + $0x10d8] sm:$0xff]
        %v860 = vld [vmem:[%s199 + $0x10e0] sm:$0xff]
        %v861 = vld [vmem:[%s199 + $0x10e8] sm:$0xff]
        %v862 = vld [vmem:[%s199 + $0x10f0] sm:$0xff]
        %v863 = vld [vmem:[%s199 + $0x10f8] sm:$0xff]
        %v864 = vld [vmem:[%s199 + $0x1100] sm:$0xff]
        %v865 = vld [vmem:[%s199 + $0x1108] sm:$0xff]
        %v866 = vld [vmem:[%s199 + $0x1110] sm:$0xff]
        %v867 = vld [vmem:[%s199 + $0x1118] sm:$0xff]
        %v868 = vld [vmem:[%s199 + $0x1120] sm:$0xff]
        %v869 = vld [vmem:[%s199 + $0x1128] sm:$0xff]
        %v870 = vld [vmem:[%s199 + $0x1130] sm:$0xff]
        %v871 = vld [vmem:[%s199 + $0x1138] sm:$0xff]
        %v872 = vld [vmem:[%s199 + $0x1140] sm:$0xff]
        %v873 = vld [vmem:[%s199 + $0x1148] sm:$0xff]
        %v874 = vld [vmem:[%s199 + $0x1150] sm:$0xff]
        %v875 = vld [vmem:[%s199 + $0x1158] sm:$0xff]
        %v876 = vld [vmem:[%s199 + $0x1160] sm:$0xff]
        %v877 = vld [vmem:[%s199 + $0x1168] sm:$0xff]
        %v878 = vld [vmem:[%s199 + $0x1170] sm:$0xff]
        %v879 = vld [vmem:[%s199 + $0x1178] sm:$0xff]
        %v880 = vld [vmem:[%s199 + $0x1180] sm:$0xff]
        %v881 = vld [vmem:[%s199 + $0x1188] sm:$0xff]
        %v882 = vld [vmem:[%s199 + $0x1190] sm:$0xff]
        %v883 = vld [vmem:[%s199 + $0x1198] sm:$0xff]
        %v884 = vld [vmem:[%s199 + $0x11a0] sm:$0xff]
        %v885 = vld [vmem:[%s199 + $0x11a8] sm:$0xff]
        %v886 = vld [vmem:[%s199 + $0x11b0] sm:$0xff]
        %v887 = vld [vmem:[%s199 + $0x11b8] sm:$0xff]
        %v888 = vld [vmem:[%s199 + $0x11c0] sm:$0xff]
        %v889 = vld [vmem:[%s199 + $0x11c8] sm:$0xff]
        %v890 = vld [vmem:[%s199 + $0x11d0] sm:$0xff]
        %v891 = vld [vmem:[%s199 + $0x11d8] sm:$0xff]
        %v892 = vld [vmem:[%s199 + $0x11e0] sm:$0xff]
        %v893 = vld [vmem:[%s199 + $0x11e8] sm:$0xff]
        %v894 = vld [vmem:[%s199 + $0x11f0] sm:$0xff]
        %v895 = vld [vmem:[%s199 + $0x11f8] sm:$0xff]
        %v896 = vld [vmem:[%s199 + $0x1200] sm:$0xff]
        %v897 = vld [vmem:[%s199 + $0x1208] sm:$0xff]
        %v898 = vld [vmem:[%s199 + $0x1210] sm:$0xff]
        %v899 = vld [vmem:[%s199 + $0x1218] sm:$0xff]
        %v900 = vld [vmem:[%s199 + $0x1220] sm:$0xff]
        %v901 = vld [vmem:[%s199 + $0x1228] sm:$0xff]
        %v902 = vld [vmem:[%s199 + $0x1230] sm:$0xff]
        %v903 = vld [vmem:[%s199 + $0x1238] sm:$0xff]
        %v904 = vld [vmem:[%s199 + $0x1240] sm:$0xff]
        %v905 = vld [vmem:[%s199 + $0x1248] sm:$0xff]
        %v906 = vld [vmem:[%s199 + $0x1250] sm:$0xff]
        %v907 = vld [vmem:[%s199 + $0x1258] sm:$0xff]
        %v908 = vld [vmem:[%s199 + $0x1260] sm:$0xff]
        %v909 = vld [vmem:[%s199 + $0x1268] sm:$0xff]
        %v910 = vld [vmem:[%s199 + $0x1270] sm:$0xff]
        %v911 = vld [vmem:[%s199 + $0x1278] sm:$0xff]
        %v912 = vld [vmem:[%s199 + $0x1280] sm:$0xff]
        %v913 = vld [vmem:[%s199 + $0x1288] sm:$0xff]
        %v914 = vld [vmem:[%s199 + $0x1290] sm:$0xff]
        %v915 = vld [vmem:[%s199 + $0x1298] sm:$0xff]
        %v916 = vld [vmem:[%s199 + $0x12a0] sm:$0xff]
        %v917 = vld [vmem:[%s199 + $0x12a8] sm:$0xff]
        %v918 = vld [vmem:[%s199 + $0x12b0] sm:$0xff]
        %v919 = vld [vmem:[%s199 + $0x12b8] sm:$0xff]
        %v920 = vld [vmem:[%s199 + $0x12c0] sm:$0xff]
        %v921 = vld [vmem:[%s199 + $0x12c8] sm:$0xff]
        %v922 = vld [vmem:[%s199 + $0x12d0] sm:$0xff]
        %v923 = vld [vmem:[%s199 + $0x12d8] sm:$0xff]
        %v924 = vld [vmem:[%s199 + $0x12e0] sm:$0xff]
        %v925 = vld [vmem:[%s199 + $0x12e8] sm:$0xff]
        %v926 = vld [vmem:[%s199 + $0x12f0] sm:$0xff]
        %v927 = vld [vmem:[%s199 + $0x12f8] sm:$0xff]
        %v928 = vld [vmem:[%s199 + $0x1300] sm:$0xff]
        %v929 = vld [vmem:[%s199 + $0x1308] sm:$0xff]
        %v930 = vld [vmem:[%s199 + $0x1310] sm:$0xff]
        %v931 = vld [vmem:[%s199 + $0x1318] sm:$0xff]
        %v932 = vld [vmem:[%s199 + $0x1320] sm:$0xff]
        %v933 = vld [vmem:[%s199 + $0x1328] sm:$0xff]
        %v934 = vld [vmem:[%s199 + $0x1330] sm:$0xff]
        %v935 = vld [vmem:[%s199 + $0x1338] sm:$0xff]
        %v936 = vld [vmem:[%s199 + $0x1340] sm:$0xff]
        %v937 = vld [vmem:[%s199 + $0x1348] sm:$0xff]
        %v938 = vld [vmem:[%s199 + $0x1350] sm:$0xff]
        %v939 = vld [vmem:[%s199 + $0x1358] sm:$0xff]
        %v940 = vld [vmem:[%s199 + $0x1360] sm:$0xff]
        %v941 = vld [vmem:[%s199 + $0x1368] sm:$0xff]
        %v942 = vld [vmem:[%s199 + $0x1370] sm:$0xff]
        %v943 = vld [vmem:[%s199 + $0x1378] sm:$0xff]
        %v944 = vld [vmem:[%s199 + $0x1380] sm:$0xff]
        %v945 = vld [vmem:[%s199 + $0x1388] sm:$0xff]
        %v946 = vld [vmem:[%s199 + $0x1390] sm:$0xff]
        %v947 = vld [vmem:[%s199 + $0x1398] sm:$0xff]
        %v948 = vld [vmem:[%s199 + $0x13a0] sm:$0xff]
        %v949 = vld [vmem:[%s199 + $0x13a8] sm:$0xff]
        %v950 = vld [vmem:[%s199 + $0x13b0] sm:$0xff]
        %v951 = vld [vmem:[%s199 + $0x13b8] sm:$0xff]
        %v952 = vld [vmem:[%s199 + $0x13c0] sm:$0xff]
        %v953 = vld [vmem:[%s199 + $0x13c8] sm:$0xff]
        %v954 = vld [vmem:[%s199 + $0x13d0] sm:$0xff]
        %v955 = vld [vmem:[%s199 + $0x13d8] sm:$0xff]
        %v956 = vld [vmem:[%s199 + $0x13e0] sm:$0xff]
        %v957 = vld [vmem:[%s199 + $0x13e8] sm:$0xff]
        %v958 = vld [vmem:[%s199 + $0x13f0] sm:$0xff]
        %v959 = vld [vmem:[%s199 + $0x13f8] sm:$0xff]
        %v960 = vld [vmem:[%s199 + $0x1400] sm:$0xff]
        %v961 = vld [vmem:[%s199 + $0x1408] sm:$0xff]
        %v962 = vld [vmem:[%s199 + $0x1410] sm:$0xff]
        %v963 = vld [vmem:[%s199 + $0x1418] sm:$0xff]
        %v964 = vld [vmem:[%s199 + $0x1420] sm:$0xff]
        %v965 = vld [vmem:[%s199 + $0x1428] sm:$0xff]
        %v966 = vld [vmem:[%s199 + $0x1430] sm:$0xff]
        %v967 = vld [vmem:[%s199 + $0x1438] sm:$0xff]
        %v968 = vld [vmem:[%s199 + $0x1440] sm:$0xff]
        %v969 = vld [vmem:[%s199 + $0x1448] sm:$0xff]
        %v970 = vld [vmem:[%s199 + $0x1450] sm:$0xff]
        %v971 = vld [vmem:[%s199 + $0x1458] sm:$0xff]
        %v972 = vld [vmem:[%s199 + $0x1460] sm:$0xff]
        %v973 = vld [vmem:[%s199 + $0x1468] sm:$0xff]
        %v974 = vld [vmem:[%s199 + $0x1470] sm:$0xff]
        %v975 = vld [vmem:[%s199 + $0x1478] sm:$0xff]
        %v976 = vld [vmem:[%s199 + $0x1480] sm:$0xff]
        %v977 = vld [vmem:[%s199 + $0x1488] sm:$0xff]
        %v978 = vld [vmem:[%s199 + $0x1490] sm:$0xff]
        %v979 = vld [vmem:[%s199 + $0x1498] sm:$0xff]
        %v980 = vld [vmem:[%s199 + $0x14a0] sm:$0xff]
        %v981 = vld [vmem:[%s199 + $0x14a8] sm:$0xff]
        %v982 = vld [vmem:[%s199 + $0x14b0] sm:$0xff]
        %v983 = vld [vmem:[%s199 + $0x14b8] sm:$0xff]
        %v984 = vld [vmem:[%s199 + $0x14c0] sm:$0xff]
        %v985 = vld [vmem:[%s199 + $0x14c8] sm:$0xff]
        %v986 = vld [vmem:[%s199 + $0x14d0] sm:$0xff]
        %v987 = vld [vmem:[%s199 + $0x14d8] sm:$0xff]
        %v988 = vld [vmem:[%s199 + $0x14e0] sm:$0xff]
        %v989 = vld [vmem:[%s199 + $0x14e8] sm:$0xff]
        %v990 = vld [vmem:[%s199 + $0x14f0] sm:$0xff]
        %v991 = vld [vmem:[%s199 + $0x14f8] sm:$0xff]
        %v992 = vld [vmem:[%s199 + $0x1500] sm:$0xff]
        %v993 = vld [vmem:[%s199 + $0x1508] sm:$0xff]
        %v994 = vld [vmem:[%s199 + $0x1510] sm:$0xff]
        %v995 = vld [vmem:[%s199 + $0x1518] sm:$0xff]
        %v996 = vld [vmem:[%s199 + $0x1520] sm:$0xff]
        %v997 = vld [vmem:[%s199 + $0x1528] sm:$0xff]
        %v998 = vld [vmem:[%s199 + $0x1530] sm:$0xff]
        %v999 = vld [vmem:[%s199 + $0x1538] sm:$0xff]
        %v1000 = vld [vmem:[%s199 + $0x1540] sm:$0xff]
        %v1001 = vld [vmem:[%s199 + $0x1548] sm:$0xff]
        %v1002 = vld [vmem:[%s199 + $0x1550] sm:$0xff]
        %v1003 = vld [vmem:[%s199 + $0x1558] sm:$0xff]
        %v1004 = vld [vmem:[%s199 + $0x1560] sm:$0xff]
        %v1005 = vld [vmem:[%s199 + $0x1568] sm:$0xff]
        %v1006 = vld [vmem:[%s199 + $0x1570] sm:$0xff]
        %v1007 = vld [vmem:[%s199 + $0x1578] sm:$0xff]
        %v1008 = vld [vmem:[%s199 + $0x1580] sm:$0xff]
        %v1009 = vld [vmem:[%s199 + $0x1588] sm:$0xff]
        %v1010 = vld [vmem:[%s199 + $0x1590] sm:$0xff]
        %v1011 = vld [vmem:[%s199 + $0x1598] sm:$0xff]
        %v1012 = vld [vmem:[%s199 + $0x15a0] sm:$0xff]
        %v1013 = vld [vmem:[%s199 + $0x15a8] sm:$0xff]
        %v1014 = vld [vmem:[%s199 + $0x15b0] sm:$0xff]
        %v1015 = vld [vmem:[%s199 + $0x15b8] sm:$0xff]
        %v1016 = vld [vmem:[%s199 + $0x15c0] sm:$0xff]
        %v1017 = vld [vmem:[%s199 + $0x15c8] sm:$0xff]
        %v1018 = vld [vmem:[%s199 + $0x15d0] sm:$0xff]
        %v1019 = vld [vmem:[%s199 + $0x15d8] sm:$0xff]
        %v1020 = vld [vmem:[%s199 + $0x15e0] sm:$0xff]
        %v1021 = vld [vmem:[%s199 + $0x15e8] sm:$0xff]
        %v1022 = vld [vmem:[%s199 + $0x15f0] sm:$0xff]
        %v1023 = vld [vmem:[%s199 + $0x15f8] sm:$0xff]
        %v1024 = vld [vmem:[%s199 + $0x1600] sm:$0xff]
        %v1025 = vld [vmem:[%s199 + $0x1608] sm:$0xff]
        %v1026 = vld [vmem:[%s199 + $0x1610] sm:$0xff]
        %v1027 = vld [vmem:[%s199 + $0x1618] sm:$0xff]
        %v1028 = vld [vmem:[%s199 + $0x1620] sm:$0xff]
        %v1029 = vld [vmem:[%s199 + $0x1628] sm:$0xff]
        %v1030 = vld [vmem:[%s199 + $0x1630] sm:$0xff]
        %v1031 = vld [vmem:[%s199 + $0x1638] sm:$0xff]
        %v1032 = vld [vmem:[%s199 + $0x1640] sm:$0xff]
        %v1033 = vld [vmem:[%s199 + $0x1648] sm:$0xff]
        %v1034 = vld [vmem:[%s199 + $0x1650] sm:$0xff]
        %v1035 = vld [vmem:[%s199 + $0x1658] sm:$0xff]
        %v1036 = vld [vmem:[%s199 + $0x1660] sm:$0xff]
        %v1037 = vld [vmem:[%s199 + $0x1668] sm:$0xff]
        %v1038 = vld [vmem:[%s199 + $0x1670] sm:$0xff]
        %v1039 = vld [vmem:[%s199 + $0x1678] sm:$0xff]
        %v1040 = vld [vmem:[%s199 + $0x1680] sm:$0xff]
        %v1041 = vld [vmem:[%s199 + $0x1688] sm:$0xff]
        %v1042 = vld [vmem:[%s199 + $0x1690] sm:$0xff]
        %v1043 = vld [vmem:[%s199 + $0x1698] sm:$0xff]
        %v1044 = vld [vmem:[%s199 + $0x16a0] sm:$0xff]
        %v1045 = vld [vmem:[%s199 + $0x16a8] sm:$0xff]
        %v1046 = vld [vmem:[%s199 + $0x16b0] sm:$0xff]
        %v1047 = vld [vmem:[%s199 + $0x16b8] sm:$0xff]
        %v1048 = vld [vmem:[%s199 + $0x16c0] sm:$0xff]
        %v1049 = vld [vmem:[%s199 + $0x16c8] sm:$0xff]
        %v1050 = vld [vmem:[%s199 + $0x16d0] sm:$0xff]
        %v1051 = vld [vmem:[%s199 + $0x16d8] sm:$0xff]
        %v1052 = vld [vmem:[%s199 + $0x16e0] sm:$0xff]
        %v1053 = vld [vmem:[%s199 + $0x16e8] sm:$0xff]
        %v1054 = vld [vmem:[%s199 + $0x16f0] sm:$0xff]
        %v1055 = vld [vmem:[%s199 + $0x16f8] sm:$0xff]
        %v1056 = vld [vmem:[%s199 + $0x1700] sm:$0xff]
        %v1057 = vld [vmem:[%s199 + $0x1708] sm:$0xff]
        %v1058 = vld [vmem:[%s199 + $0x1710] sm:$0xff]
        %v1059 = vld [vmem:[%s199 + $0x1718] sm:$0xff]
        %v1060 = vld [vmem:[%s199 + $0x1720] sm:$0xff]
        %v1061 = vld [vmem:[%s199 + $0x1728] sm:$0xff]
        %v1062 = vld [vmem:[%s199 + $0x1730] sm:$0xff]
        %v1063 = vld [vmem:[%s199 + $0x1738] sm:$0xff]
        %v1064 = vld [vmem:[%s199 + $0x1740] sm:$0xff]
        %v1065 = vld [vmem:[%s199 + $0x1748] sm:$0xff]
        %v1066 = vld [vmem:[%s199 + $0x1750] sm:$0xff]
        %v1067 = vld [vmem:[%s199 + $0x1758] sm:$0xff]
        %v1068 = vld [vmem:[%s199 + $0x1760] sm:$0xff]
        %v1069 = vld [vmem:[%s199 + $0x1768] sm:$0xff]
        %v1070 = vld [vmem:[%s199 + $0x1770] sm:$0xff]
        %v1071 = vld [vmem:[%s199 + $0x1778] sm:$0xff]
        %v1072 = vld [vmem:[%s199 + $0x1780] sm:$0xff]
        %v1073 = vld [vmem:[%s199 + $0x1788] sm:$0xff]
        %v1074 = vld [vmem:[%s199 + $0x1790] sm:$0xff]
        %v1075 = vld [vmem:[%s199 + $0x1798] sm:$0xff]
        %v1076 = vld [vmem:[%s199 + $0x17a0] sm:$0xff]
        %v1077 = vld [vmem:[%s199 + $0x17a8] sm:$0xff]
        %v1078 = vld [vmem:[%s199 + $0x17b0] sm:$0xff]
        %v1079 = vld [vmem:[%s199 + $0x17b8] sm:$0xff]
        %v1080 = vld [vmem:[%s199 + $0x17c0] sm:$0xff]
        %v1081 = vld [vmem:[%s199 + $0x17c8] sm:$0xff]
        %v1082 = vld [vmem:[%s199 + $0x17d0] sm:$0xff]
        %v1083 = vld [vmem:[%s199 + $0x17d8] sm:$0xff]
        %v1084 = vld [vmem:[%s199 + $0x17e0] sm:$0xff]
        %v1085 = vld [vmem:[%s199 + $0x17e8] sm:$0xff]
        %v1086 = vld [vmem:[%s199 + $0x17f0] sm:$0xff]
        %v1087 = vld [vmem:[%s199 + $0x17f8] sm:$0xff]
        %v1088 = vld [vmem:[%s199 + $0x1800] sm:$0xff]
        %v1089 = vld [vmem:[%s199 + $0x1808] sm:$0xff]
        %v1090 = vld [vmem:[%s199 + $0x1810] sm:$0xff]
        %v1091 = vld [vmem:[%s199 + $0x1818] sm:$0xff]
        %v1092 = vld [vmem:[%s199 + $0x1820] sm:$0xff]
        %v1093 = vld [vmem:[%s199 + $0x1828] sm:$0xff]
        %v1094 = vld [vmem:[%s199 + $0x1830] sm:$0xff]
        %v1095 = vld [vmem:[%s199 + $0x1838] sm:$0xff]
        %v1096 = vld [vmem:[%s199 + $0x1840] sm:$0xff]
        %v1097 = vld [vmem:[%s199 + $0x1848] sm:$0xff]
        %v1098 = vld [vmem:[%s199 + $0x1850] sm:$0xff]
        %v1099 = vld [vmem:[%s199 + $0x1858] sm:$0xff]
        %v1100 = vld [vmem:[%s199 + $0x1860] sm:$0xff]
        %v1101 = vld [vmem:[%s199 + $0x1868] sm:$0xff]
        %v1102 = vld [vmem:[%s199 + $0x1870] sm:$0xff]
        %v1103 = vld [vmem:[%s199 + $0x1878] sm:$0xff]
        %v1104 = vld [vmem:[%s199 + $0x1880] sm:$0xff]
        %v1105 = vld [vmem:[%s199 + $0x1888] sm:$0xff]
        %v1106 = vld [vmem:[%s199 + $0x1890] sm:$0xff]
        %v1107 = vld [vmem:[%s199 + $0x1898] sm:$0xff]
        %v1108 = vld [vmem:[%s199 + $0x18a0] sm:$0xff]
        %v1109 = vld [vmem:[%s199 + $0x18a8] sm:$0xff]
        %v1110 = vld [vmem:[%s199 + $0x18b0] sm:$0xff]
        %v1111 = vld [vmem:[%s199 + $0x18b8] sm:$0xff]
        %v1112 = vld [vmem:[%s199 + $0x18c0] sm:$0xff]
        %v1113 = vld [vmem:[%s199 + $0x18c8] sm:$0xff]
        %v1114 = vld [vmem:[%s199 + $0x18d0] sm:$0xff]
        %v1115 = vld [vmem:[%s199 + $0x18d8] sm:$0xff]
        %v1116 = vld [vmem:[%s199 + $0x18e0] sm:$0xff]
        %v1117 = vld [vmem:[%s199 + $0x18e8] sm:$0xff]
        %v1118 = vld [vmem:[%s199 + $0x18f0] sm:$0xff]
        %v1119 = vld [vmem:[%s199 + $0x18f8] sm:$0xff]
        %v1120 = vld [vmem:[%s199 + $0x1900] sm:$0xff]
        %v1121 = vld [vmem:[%s199 + $0x1908] sm:$0xff]
        %v1122 = vld [vmem:[%s199 + $0x1910] sm:$0xff]
        %v1123 = vld [vmem:[%s199 + $0x1918] sm:$0xff]
        %v1124 = vld [vmem:[%s199 + $0x1920] sm:$0xff]
        %v1125 = vld [vmem:[%s199 + $0x1928] sm:$0xff]
        %v1126 = vld [vmem:[%s199 + $0x1930] sm:$0xff]
        %v1127 = vld [vmem:[%s199 + $0x1938] sm:$0xff]
        %v1128 = vld [vmem:[%s199 + $0x1940] sm:$0xff]
        %v1129 = vld [vmem:[%s199 + $0x1948] sm:$0xff]
        %v1130 = vld [vmem:[%s199 + $0x1950] sm:$0xff]
        %v1131 = vld [vmem:[%s199 + $0x1958] sm:$0xff]
        %v1132 = vld [vmem:[%s199 + $0x1960] sm:$0xff]
        %v1133 = vld [vmem:[%s199 + $0x1968] sm:$0xff]
        %v1134 = vld [vmem:[%s199 + $0x1970] sm:$0xff]
        %v1135 = vld [vmem:[%s199 + $0x1978] sm:$0xff]
        %v1136 = vld [vmem:[%s199 + $0x1980] sm:$0xff]
        %v1137 = vld [vmem:[%s199 + $0x1988] sm:$0xff]
        %v1138 = vld [vmem:[%s199 + $0x1990] sm:$0xff]
        %v1139 = vld [vmem:[%s199 + $0x1998] sm:$0xff]
        %v1140 = vld [vmem:[%s199 + $0x19a0] sm:$0xff]
        %v1141 = vld [vmem:[%s199 + $0x19a8] sm:$0xff]
        %v1142 = vld [vmem:[%s199 + $0x19b0] sm:$0xff]
        %v1143 = vld [vmem:[%s199 + $0x19b8] sm:$0xff]
        %v1144 = vld [vmem:[%s199 + $0x19c0] sm:$0xff]
        %v1145 = vld [vmem:[%s199 + $0x19c8] sm:$0xff]
        %v1146 = vld [vmem:[%s199 + $0x19d0] sm:$0xff]
        %v1147 = vld [vmem:[%s199 + $0x19d8] sm:$0xff]
        %v1148 = vld [vmem:[%s199 + $0x19e0] sm:$0xff]
        %v1149 = vld [vmem:[%s199 + $0x19e8] sm:$0xff]
        %v1150 = vld [vmem:[%s199 + $0x19f0] sm:$0xff]
        %v1151 = vld [vmem:[%s199 + $0x19f8] sm:$0xff]
        %v1152 = vld [vmem:[%s199 + $0x1a00] sm:$0xff]
        %v1153 = vld [vmem:[%s199 + $0x1a08] sm:$0xff]
        %v1154 = vld [vmem:[%s199 + $0x1a10] sm:$0xff]
        %v1155 = vld [vmem:[%s199 + $0x1a18] sm:$0xff]
        %v1156 = vld [vmem:[%s199 + $0x1a20] sm:$0xff]
        %v1157 = vld [vmem:[%s199 + $0x1a28] sm:$0xff]
        %v1158 = vld [vmem:[%s199 + $0x1a30] sm:$0xff]
        %v1159 = vld [vmem:[%s199 + $0x1a38] sm:$0xff]
        %v1160 = vld [vmem:[%s199 + $0x1a40] sm:$0xff]
        %v1161 = vld [vmem:[%s199 + $0x1a48] sm:$0xff]
        %v1162 = vld [vmem:[%s199 + $0x1a50] sm:$0xff]
        %v1163 = vld [vmem:[%s199 + $0x1a58] sm:$0xff]
        %v1164 = vld [vmem:[%s199 + $0x1a60] sm:$0xff]
        %v1165 = vld [vmem:[%s199 + $0x1a68] sm:$0xff]
        %v1166 = vld [vmem:[%s199 + $0x1a70] sm:$0xff]
        %v1167 = vld [vmem:[%s199 + $0x1a78] sm:$0xff]
        %v1168 = vld [vmem:[%s199 + $0x1a80] sm:$0xff]
        %v1169 = vld [vmem:[%s199 + $0x1a88] sm:$0xff]
        %v1170 = vld [vmem:[%s199 + $0x1a90] sm:$0xff]
        %v1171 = vld [vmem:[%s199 + $0x1a98] sm:$0xff]
        %v1172 = vld [vmem:[%s199 + $0x1aa0] sm:$0xff]
        %v1173 = vld [vmem:[%s199 + $0x1aa8] sm:$0xff]
        %v1174 = vld [vmem:[%s199 + $0x1ab0] sm:$0xff]
        %v1175 = vld [vmem:[%s199 + $0x1ab8] sm:$0xff]
        %v1176 = vld [vmem:[%s199 + $0x1ac0] sm:$0xff]
        %v1177 = vld [vmem:[%s199 + $0x1ac8] sm:$0xff]
        %v1178 = vld [vmem:[%s199 + $0x1ad0] sm:$0xff]
        %v1179 = vld [vmem:[%s199 + $0x1ad8] sm:$0xff]
        %v1180 = vld [vmem:[%s199 + $0x1ae0] sm:$0xff]
        %v1181 = vld [vmem:[%s199 + $0x1ae8] sm:$0xff]
        %v1182 = vld [vmem:[%s199 + $0x1af0] sm:$0xff]
        %v1183 = vld [vmem:[%s199 + $0x1af8] sm:$0xff]
        %v1184 = vld [vmem:[%s199 + $0x1b00] sm:$0xff]
        %v1185 = vld [vmem:[%s199 + $0x1b08] sm:$0xff]
        %v1186 = vld [vmem:[%s199 + $0x1b10] sm:$0xff]
        %v1187 = vld [vmem:[%s199 + $0x1b18] sm:$0xff]
        %v1188 = vld [vmem:[%s199 + $0x1b20] sm:$0xff]
        %v1189 = vld [vmem:[%s199 + $0x1b28] sm:$0xff]
        %v1190 = vld [vmem:[%s199 + $0x1b30] sm:$0xff]
        %v1191 = vld [vmem:[%s199 + $0x1b38] sm:$0xff]
        %v1192 = vld [vmem:[%s199 + $0x1b40] sm:$0xff]
        %v1193 = vld [vmem:[%s199 + $0x1b48] sm:$0xff]
        %v1194 = vld [vmem:[%s199 + $0x1b50] sm:$0xff]
        %v1195 = vld [vmem:[%s199 + $0x1b58] sm:$0xff]
        %v1196 = vld [vmem:[%s199 + $0x1b60] sm:$0xff]
        %v1197 = vld [vmem:[%s199 + $0x1b68] sm:$0xff]
        %v1198 = vld [vmem:[%s199 + $0x1b70] sm:$0xff]
        %v1199 = vld [vmem:[%s199 + $0x1b78] sm:$0xff]
        %v1200 = vld [vmem:[%s199 + $0x1b80] sm:$0xff]
        %v1201 = vld [vmem:[%s199 + $0x1b88] sm:$0xff]
        %v1202 = vld [vmem:[%s199 + $0x1b90] sm:$0xff]
        %v1203 = vld [vmem:[%s199 + $0x1b98] sm:$0xff]
        %v1204 = vld [vmem:[%s199 + $0x1ba0] sm:$0xff]
        %v1205 = vld [vmem:[%s199 + $0x1ba8] sm:$0xff]
        %v1206 = vld [vmem:[%s199 + $0x1bb0] sm:$0xff]
        %v1207 = vld [vmem:[%s199 + $0x1bb8] sm:$0xff]
        %v1208 = vld [vmem:[%s199 + $0x1bc0] sm:$0xff]
        %v1209 = vld [vmem:[%s199 + $0x1bc8] sm:$0xff]
        %v1210 = vld [vmem:[%s199 + $0x1bd0] sm:$0xff]
        %v1211 = vld [vmem:[%s199 + $0x1bd8] sm:$0xff]
        %v1212 = vld [vmem:[%s199 + $0x1be0] sm:$0xff]
        %v1213 = vld [vmem:[%s199 + $0x1be8] sm:$0xff]
        %v1214 = vld [vmem:[%s199 + $0x1bf0] sm:$0xff]
        %v1215 = vld [vmem:[%s199 + $0x1bf8] sm:$0xff]
        %v1216 = vld [vmem:[%s199 + $0x1c00] sm:$0xff]
        %v1217 = vld [vmem:[%s199 + $0x1c08] sm:$0xff]
        %v1218 = vld [vmem:[%s199 + $0x1c10] sm:$0xff]
        %v1219 = vld [vmem:[%s199 + $0x1c18] sm:$0xff]
        %v1220 = vld [vmem:[%s199 + $0x1c20] sm:$0xff]
        %v1221 = vld [vmem:[%s199 + $0x1c28] sm:$0xff]
        %v1222 = vld [vmem:[%s199 + $0x1c30] sm:$0xff]
        %v1223 = vld [vmem:[%s199 + $0x1c38] sm:$0xff]
        %v1224 = vld [vmem:[%s199 + $0x1c40] sm:$0xff]
        %v1225 = vld [vmem:[%s199 + $0x1c48] sm:$0xff]
        %v1226 = vld [vmem:[%s199 + $0x1c50] sm:$0xff]
        %v1227 = vld [vmem:[%s199 + $0x1c58] sm:$0xff]
        %v1228 = vld [vmem:[%s199 + $0x1c60] sm:$0xff]
        %v1229 = vld [vmem:[%s199 + $0x1c68] sm:$0xff]
        %v1230 = vld [vmem:[%s199 + $0x1c70] sm:$0xff]
        %v1231 = vld [vmem:[%s199 + $0x1c78] sm:$0xff]
        %v1232 = vld [vmem:[%s199 + $0x1c80] sm:$0xff]
        %v1233 = vld [vmem:[%s199 + $0x1c88] sm:$0xff]
        %v1234 = vld [vmem:[%s199 + $0x1c90] sm:$0xff]
        %v1235 = vld [vmem:[%s199 + $0x1c98] sm:$0xff]
        %v1236 = vld [vmem:[%s199 + $0x1ca0] sm:$0xff]
        %v1237 = vld [vmem:[%s199 + $0x1ca8] sm:$0xff]
        %v1238 = vld [vmem:[%s199 + $0x1cb0] sm:$0xff]
        %v1239 = vld [vmem:[%s199 + $0x1cb8] sm:$0xff]
        %v1240 = vld [vmem:[%s199 + $0x1cc0] sm:$0xff]
        %v1241 = vld [vmem:[%s199 + $0x1cc8] sm:$0xff]
        %v1242 = vld [vmem:[%s199 + $0x1cd0] sm:$0xff]
        %v1243 = vld [vmem:[%s199 + $0x1cd8] sm:$0xff]
        %v1244 = vld [vmem:[%s199 + $0x1ce0] sm:$0xff]
        %v1245 = vld [vmem:[%s199 + $0x1ce8] sm:$0xff]
        %v1246 = vld [vmem:[%s199 + $0x1cf0] sm:$0xff]
        %v1247 = vld [vmem:[%s199 + $0x1cf8] sm:$0xff]
        %v1248 = vld [vmem:[%s199 + $0x1d00] sm:$0xff]
        %v1249 = vld [vmem:[%s199 + $0x1d08] sm:$0xff]
        %v1250 = vld [vmem:[%s199 + $0x1d10] sm:$0xff]
        %v1251 = vld [vmem:[%s199 + $0x1d18] sm:$0xff]
        %v1252 = vld [vmem:[%s199 + $0x1d20] sm:$0xff]
        %v1253 = vld [vmem:[%s199 + $0x1d28] sm:$0xff]
        %v1254 = vld [vmem:[%s199 + $0x1d30] sm:$0xff]
        %v1255 = vld [vmem:[%s199 + $0x1d38] sm:$0xff]
        %v1256 = vld [vmem:[%s199 + $0x1d40] sm:$0xff]
        %v1257 = vld [vmem:[%s199 + $0x1d48] sm:$0xff]
        %v1258 = vld [vmem:[%s199 + $0x1d50] sm:$0xff]
        %v1259 = vld [vmem:[%s199 + $0x1d58] sm:$0xff]
        %v1260 = vld [vmem:[%s199 + $0x1d60] sm:$0xff]
        %v1261 = vld [vmem:[%s199 + $0x1d68] sm:$0xff]
        %v1262 = vld [vmem:[%s199 + $0x1d70] sm:$0xff]
        %v1263 = vld [vmem:[%s199 + $0x1d78] sm:$0xff]
        %v1264 = vld [vmem:[%s199 + $0x1d80] sm:$0xff]
        %v1265 = vld [vmem:[%s199 + $0x1d88] sm:$0xff]
        %v1266 = vld [vmem:[%s199 + $0x1d90] sm:$0xff]
        %v1267 = vld [vmem:[%s199 + $0x1d98] sm:$0xff]
        %v1268 = vld [vmem:[%s199 + $0x1da0] sm:$0xff]
        %v1269 = vld [vmem:[%s199 + $0x1da8] sm:$0xff]
        %v1270 = vld [vmem:[%s199 + $0x1db0] sm:$0xff]
        %v1271 = vld [vmem:[%s199 + $0x1db8] sm:$0xff]
        %v1272 = vld [vmem:[%s199 + $0x1dc0] sm:$0xff]
        %v1273 = vld [vmem:[%s199 + $0x1dc8] sm:$0xff]
        %v1274 = vld [vmem:[%s199 + $0x1dd0] sm:$0xff]
        %v1275 = vld [vmem:[%s199 + $0x1dd8] sm:$0xff]
        %v1276 = vld [vmem:[%s199 + $0x1de0] sm:$0xff]
        %v1277 = vld [vmem:[%s199 + $0x1de8] sm:$0xff]
        %v1278 = vld [vmem:[%s199 + $0x1df0] sm:$0xff]
        %v1279 = vld [vmem:[%s199 + $0x1df8] sm:$0xff]
        %v1280 = vld [vmem:[%s199 + $0x1e00] sm:$0xff]
        %v1281 = vld [vmem:[%s199 + $0x1e08] sm:$0xff]
        %v1282 = vld [vmem:[%s199 + $0x1e10] sm:$0xff]
        %v1283 = vld [vmem:[%s199 + $0x1e18] sm:$0xff]
        %v1284 = vld [vmem:[%s199 + $0x1e20] sm:$0xff]
        %v1285 = vld [vmem:[%s199 + $0x1e28] sm:$0xff]
        %v1286 = vld [vmem:[%s199 + $0x1e30] sm:$0xff]
        %v1287 = vld [vmem:[%s199 + $0x1e38] sm:$0xff]
        %v1288 = vld [vmem:[%s199 + $0x1e40] sm:$0xff]
        %v1289 = vld [vmem:[%s199 + $0x1e48] sm:$0xff]
        %v1290 = vld [vmem:[%s199 + $0x1e50] sm:$0xff]
        %v1291 = vld [vmem:[%s199 + $0x1e58] sm:$0xff]
        %v1292 = vld [vmem:[%s199 + $0x1e60] sm:$0xff]
        %v1293 = vld [vmem:[%s199 + $0x1e68] sm:$0xff]
        %v1294 = vld [vmem:[%s199 + $0x1e70] sm:$0xff]
        %v1295 = vld [vmem:[%s199 + $0x1e78] sm:$0xff]
        %v1296 = vld [vmem:[%s199 + $0x1e80] sm:$0xff]
        %v1297 = vld [vmem:[%s199 + $0x1e88] sm:$0xff]
        %v1298 = vld [vmem:[%s199 + $0x1e90] sm:$0xff]
        %v1299 = vld [vmem:[%s199 + $0x1e98] sm:$0xff]
        %v1300 = vld [vmem:[%s199 + $0x1ea0] sm:$0xff]
        %v1301 = vld [vmem:[%s199 + $0x1ea8] sm:$0xff]
        %v1302 = vld [vmem:[%s199 + $0x1eb0] sm:$0xff]
        %v1303 = vld [vmem:[%s199 + $0x1eb8] sm:$0xff]
        %v1304 = vld [vmem:[%s199 + $0x1ec0] sm:$0xff]
        %v1305 = vld [vmem:[%s199 + $0x1ec8] sm:$0xff]
        %v1306 = vld [vmem:[%s199 + $0x1ed0] sm:$0xff]
        %v1307 = vld [vmem:[%s199 + $0x1ed8] sm:$0xff]
        %v1308 = vld [vmem:[%s199 + $0x1ee0] sm:$0xff]
        %v1309 = vld [vmem:[%s199 + $0x1ee8] sm:$0xff]
        %v1310 = vld [vmem:[%s199 + $0x1ef0] sm:$0xff]
        %v1311 = vld [vmem:[%s199 + $0x1ef8] sm:$0xff]
        %v1312 = vld [vmem:[%s199 + $0x1f00] sm:$0xff]
        %v1313 = vld [vmem:[%s199 + $0x1f08] sm:$0xff]
        %v1314 = vld [vmem:[%s199 + $0x1f10] sm:$0xff]
        %v1315 = vld [vmem:[%s199 + $0x1f18] sm:$0xff]
        %v1316 = vld [vmem:[%s199 + $0x1f20] sm:$0xff]
        %v1317 = vld [vmem:[%s199 + $0x1f28] sm:$0xff]
        %v1318 = vld [vmem:[%s199 + $0x1f30] sm:$0xff]
        %v1319 = vld [vmem:[%s199 + $0x1f38] sm:$0xff]
        %v1320 = vld [vmem:[%s199 + $0x1f40] sm:$0xff]
        %v1321 = vld [vmem:[%s199 + $0x1f48] sm:$0xff]
        %v1322 = vld [vmem:[%s199 + $0x1f50] sm:$0xff]
        %v1323 = vld [vmem:[%s199 + $0x1f58] sm:$0xff]
        %v1324 = vld [vmem:[%s199 + $0x1f60] sm:$0xff]
        %v1325 = vld [vmem:[%s199 + $0x1f68] sm:$0xff]
        %v1326 = vld [vmem:[%s199 + $0x1f70] sm:$0xff]
        %v1327 = vld [vmem:[%s199 + $0x1f78] sm:$0xff]
        %v1328 = vld [vmem:[%s199 + $0x1f80] sm:$0xff]
        %v1329 = vld [vmem:[%s199 + $0x1f88] sm:$0xff]
        %v1330 = vld [vmem:[%s199 + $0x1f90] sm:$0xff]
        %v1331 = vld [vmem:[%s199 + $0x1f98] sm:$0xff]
        %v1332 = vld [vmem:[%s199 + $0x1fa0] sm:$0xff]
        %v1333 = vld [vmem:[%s199 + $0x1fa8] sm:$0xff]
        %v1334 = vld [vmem:[%s199 + $0x1fb0] sm:$0xff]
        %v1335 = vld [vmem:[%s199 + $0x1fb8] sm:$0xff]
        %v1336 = vld [vmem:[%s199 + $0x1fc0] sm:$0xff]
        %v1337 = vld [vmem:[%s199 + $0x1fc8] sm:$0xff]
        %v1338 = vld [vmem:[%s199 + $0x1fd0] sm:$0xff]
        %v1339 = vld [vmem:[%s199 + $0x1fd8] sm:$0xff]
        %v1340 = vld [vmem:[%s199 + $0x1fe0] sm:$0xff]
        %v1341 = vld [vmem:[%s199 + $0x1fe8] sm:$0xff]
        %v1342 = vld [vmem:[%s199 + $0x1ff0] sm:$0xff]
        %v1343 = vld [vmem:[%s199 + $0x1ff8] sm:$0xff]
        %v1344 = vld [vmem:[%s199 + $0x2000] sm:$0xff]
        %v1345 = vld [vmem:[%s199 + $0x2008] sm:$0xff]
        %v1346 = vld [vmem:[%s199 + $0x2010] sm:$0xff]
        %v1347 = vld [vmem:[%s199 + $0x2018] sm:$0xff]
        %v1348 = vld [vmem:[%s199 + $0x2020] sm:$0xff]
        %v1349 = vld [vmem:[%s199 + $0x2028] sm:$0xff]
        %v1350 = vld [vmem:[%s199 + $0x2030] sm:$0xff]
        %v1351 = vld [vmem:[%s199 + $0x2038] sm:$0xff]
        %v1352 = vld [vmem:[%s199 + $0x2040] sm:$0xff]
        %v1353 = vld [vmem:[%s199 + $0x2048] sm:$0xff]
        %v1354 = vld [vmem:[%s199 + $0x2050] sm:$0xff]
        %v1355 = vld [vmem:[%s199 + $0x2058] sm:$0xff]
        %v1356 = vld [vmem:[%s199 + $0x2060] sm:$0xff]
        %v1357 = vld [vmem:[%s199 + $0x2068] sm:$0xff]
        %v1358 = vld [vmem:[%s199 + $0x2070] sm:$0xff]
        %v1359 = vld [vmem:[%s199 + $0x2078] sm:$0xff]
        %v1360 = vld [vmem:[%s199 + $0x2080] sm:$0xff]
        %v1361 = vld [vmem:[%s199 + $0x2088] sm:$0xff]
        %v1362 = vld [vmem:[%s199 + $0x2090] sm:$0xff]
        %v1363 = vld [vmem:[%s199 + $0x2098] sm:$0xff]
        %v1364 = vld [vmem:[%s199 + $0x20a0] sm:$0xff]
        %v1365 = vld [vmem:[%s199 + $0x20a8] sm:$0xff]
        %v1366 = vld [vmem:[%s199 + $0x20b0] sm:$0xff]
        %v1367 = vld [vmem:[%s199 + $0x20b8] sm:$0xff]
        %v1368 = vld [vmem:[%s199 + $0x20c0] sm:$0xff]
        %v1369 = vld [vmem:[%s199 + $0x20c8] sm:$0xff]
        %v1370 = vld [vmem:[%s199 + $0x20d0] sm:$0xff]
        %v1371 = vld [vmem:[%s199 + $0x20d8] sm:$0xff]
        %v1372 = vld [vmem:[%s199 + $0x20e0] sm:$0xff]
        %v1373 = vld [vmem:[%s199 + $0x20e8] sm:$0xff]
        %v1374 = vld [vmem:[%s199 + $0x20f0] sm:$0xff]
        %v1375 = vld [vmem:[%s199 + $0x20f8] sm:$0xff]
        %v1376 = vld [vmem:[%s199 + $0x2100] sm:$0xff]
        %v1377 = vld [vmem:[%s199 + $0x2108] sm:$0xff]
        %v1378 = vld [vmem:[%s199 + $0x2110] sm:$0xff]
        %v1379 = vld [vmem:[%s199 + $0x2118] sm:$0xff]
        %v1380 = vld [vmem:[%s199 + $0x2120] sm:$0xff]
        %v1381 = vld [vmem:[%s199 + $0x2128] sm:$0xff]
        %v1382 = vld [vmem:[%s199 + $0x2130] sm:$0xff]
        %v1383 = vld [vmem:[%s199 + $0x2138] sm:$0xff]
        %v1384 = vld [vmem:[%s199 + $0x2140] sm:$0xff]
        %v1385 = vld [vmem:[%s199 + $0x2148] sm:$0xff]
        %v1386 = vld [vmem:[%s199 + $0x2150] sm:$0xff]
        %v1387 = vld [vmem:[%s199 + $0x2158] sm:$0xff]
        %v1388 = vld [vmem:[%s199 + $0x2160] sm:$0xff]
        %v1389 = vld [vmem:[%s199 + $0x2168] sm:$0xff]
        %v1390 = vld [vmem:[%s199 + $0x2170] sm:$0xff]
        %v1391 = vld [vmem:[%s199 + $0x2178] sm:$0xff]
        %v1392 = vld [vmem:[%s199 + $0x2180] sm:$0xff]
        %v1393 = vld [vmem:[%s199 + $0x2188] sm:$0xff]
        %v1394 = vld [vmem:[%s199 + $0x2190] sm:$0xff]
        %v1395 = vld [vmem:[%s199 + $0x2198] sm:$0xff]
        %v1396 = vld [vmem:[%s199 + $0x21a0] sm:$0xff]
        %v1397 = vld [vmem:[%s199 + $0x21a8] sm:$0xff]
        %v1398 = vld [vmem:[%s199 + $0x21b0] sm:$0xff]
        %v1399 = vld [vmem:[%s199 + $0x21b8] sm:$0xff]
        %v1400 = vld [vmem:[%s199 + $0x21c0] sm:$0xff]
        %v1401 = vld [vmem:[%s199 + $0x21c8] sm:$0xff]
        %v1402 = vld [vmem:[%s199 + $0x21d0] sm:$0xff]
        %v1403 = vld [vmem:[%s199 + $0x21d8] sm:$0xff]
        %v1404 = vld [vmem:[%s199 + $0x21e0] sm:$0xff]
        %v1405 = vld [vmem:[%s199 + $0x21e8] sm:$0xff]
        %v1406 = vld [vmem:[%s199 + $0x21f0] sm:$0xff]
        %v1407 = vld [vmem:[%s199 + $0x21f8] sm:$0xff]
        %v1408 = vld [vmem:[%s199 + $0x2200] sm:$0xff]
        %v1409 = vld [vmem:[%s199 + $0x2208] sm:$0xff]
        %v1410 = vld [vmem:[%s199 + $0x2210] sm:$0xff]
        %v1411 = vld [vmem:[%s199 + $0x2218] sm:$0xff]
        %v1412 = vld [vmem:[%s199 + $0x2220] sm:$0xff]
        %v1413 = vld [vmem:[%s199 + $0x2228] sm:$0xff]
        %v1414 = vld [vmem:[%s199 + $0x2230] sm:$0xff]
        %v1415 = vld [vmem:[%s199 + $0x2238] sm:$0xff]
        %v1416 = vld [vmem:[%s199 + $0x2240] sm:$0xff]
        %v1417 = vld [vmem:[%s199 + $0x2248] sm:$0xff]
        %v1418 = vld [vmem:[%s199 + $0x2250] sm:$0xff]
        %v1419 = vld [vmem:[%s199 + $0x2258] sm:$0xff]
        %v1420 = vld [vmem:[%s199 + $0x2260] sm:$0xff]
        %v1421 = vld [vmem:[%s199 + $0x2268] sm:$0xff]
        %v1422 = vld [vmem:[%s199 + $0x2270] sm:$0xff]
        %v1423 = vld [vmem:[%s199 + $0x2278] sm:$0xff]
        %v1424 = vld [vmem:[%s199 + $0x2280] sm:$0xff]
        %v1425 = vld [vmem:[%s199 + $0x2288] sm:$0xff]
        %v1426 = vld [vmem:[%s199 + $0x2290] sm:$0xff]
        %v1427 = vld [vmem:[%s199 + $0x2298] sm:$0xff]
        %v1428 = vld [vmem:[%s199 + $0x22a0] sm:$0xff]
        %v1429 = vld [vmem:[%s199 + $0x22a8] sm:$0xff]
        %v1430 = vld [vmem:[%s199 + $0x22b0] sm:$0xff]
        %v1431 = vld [vmem:[%s199 + $0x22b8] sm:$0xff]
        %v1432 = vld [vmem:[%s199 + $0x22c0] sm:$0xff]
        %v1433 = vld [vmem:[%s199 + $0x22c8] sm:$0xff]
        %v1434 = vld [vmem:[%s199 + $0x22d0] sm:$0xff]
        %v1435 = vld [vmem:[%s199 + $0x22d8] sm:$0xff]
        %v1436 = vld [vmem:[%s199 + $0x22e0] sm:$0xff]
        %v1437 = vld [vmem:[%s199 + $0x22e8] sm:$0xff]
        %v1438 = vld [vmem:[%s199 + $0x22f0] sm:$0xff]
        %v1439 = vld [vmem:[%s199 + $0x22f8] sm:$0xff]
        %v1440 = vld [vmem:[%s199 + $0x2300] sm:$0xff]
        %v1441 = vld [vmem:[%s199 + $0x2308] sm:$0xff]
        %v1442 = vld [vmem:[%s199 + $0x2310] sm:$0xff]
        %v1443 = vld [vmem:[%s199 + $0x2318] sm:$0xff]
        %v1444 = vld [vmem:[%s199 + $0x2320] sm:$0xff]
        %v1445 = vld [vmem:[%s199 + $0x2328] sm:$0xff]
        %v1446 = vld [vmem:[%s199 + $0x2330] sm:$0xff]
        %v1447 = vld [vmem:[%s199 + $0x2338] sm:$0xff]
        %v1448 = vld [vmem:[%s199 + $0x2340] sm:$0xff]
        %v1449 = vld [vmem:[%s199 + $0x2348] sm:$0xff]
        %v1450 = vld [vmem:[%s199 + $0x2350] sm:$0xff]
        %v1451 = vld [vmem:[%s199 + $0x2358] sm:$0xff]
        %v1452 = vld [vmem:[%s199 + $0x2360] sm:$0xff]
        %v1453 = vld [vmem:[%s199 + $0x2368] sm:$0xff]
        %v1454 = vld [vmem:[%s199 + $0x2370] sm:$0xff]
        %v1455 = vld [vmem:[%s199 + $0x2378] sm:$0xff]
        %v1456 = vld [vmem:[%s199 + $0x2380] sm:$0xff]
        %v1457 = vld [vmem:[%s199 + $0x2388] sm:$0xff]
        %v1458 = vld [vmem:[%s199 + $0x2390] sm:$0xff]
        %v1459 = vld [vmem:[%s199 + $0x2398] sm:$0xff]
        %v1460 = vld [vmem:[%s199 + $0x23a0] sm:$0xff]
        %v1461 = vld [vmem:[%s199 + $0x23a8] sm:$0xff]
        %v1462 = vld [vmem:[%s199 + $0x23b0] sm:$0xff]
        %v1463 = vld [vmem:[%s199 + $0x23b8] sm:$0xff]
        %v1464 = vld [vmem:[%s199 + $0x23c0] sm:$0xff]
        %v1465 = vld [vmem:[%s199 + $0x23c8] sm:$0xff]
        %v1466 = vld [vmem:[%s199 + $0x23d0] sm:$0xff]
        %v1467 = vld [vmem:[%s199 + $0x23d8] sm:$0xff]
        %v1468 = vld [vmem:[%s199 + $0x23e0] sm:$0xff]
        %v1469 = vld [vmem:[%s199 + $0x23e8] sm:$0xff]
        %v1470 = vld [vmem:[%s199 + $0x23f0] sm:$0xff]
        %v1471 = vld [vmem:[%s199 + $0x23f8] sm:$0xff]
        %v1472 = vld [vmem:[%s199 + $0x2400] sm:$0xff]
        %v1473 = vld [vmem:[%s199 + $0x2408] sm:$0xff]
        %v1474 = vld [vmem:[%s199 + $0x2410] sm:$0xff]
        %v1475 = vld [vmem:[%s199 + $0x2418] sm:$0xff]
        %v1476 = vld [vmem:[%s199 + $0x2420] sm:$0xff]
        %v1477 = vld [vmem:[%s199 + $0x2428] sm:$0xff]
        %v1478 = vld [vmem:[%s199 + $0x2430] sm:$0xff]
        %v1479 = vld [vmem:[%s199 + $0x2438] sm:$0xff]
        %v1480 = vld [vmem:[%s199 + $0x2440] sm:$0xff]
        %v1481 = vld [vmem:[%s199 + $0x2448] sm:$0xff]
        %v1482 = vld [vmem:[%s199 + $0x2450] sm:$0xff]
        %v1483 = vld [vmem:[%s199 + $0x2458] sm:$0xff]
        %v1484 = vld [vmem:[%s199 + $0x2460] sm:$0xff]
        %v1485 = vld [vmem:[%s199 + $0x2468] sm:$0xff]
        %v1486 = vld [vmem:[%s199 + $0x2470] sm:$0xff]
        %v1487 = vld [vmem:[%s199 + $0x2478] sm:$0xff]
        %v1488 = vld [vmem:[%s199 + $0x2480] sm:$0xff]
        %v1489 = vld [vmem:[%s199 + $0x2488] sm:$0xff]
        %v1490 = vld [vmem:[%s199 + $0x2490] sm:$0xff]
        %v1491 = vld [vmem:[%s199 + $0x2498] sm:$0xff]
        %v1492 = vld [vmem:[%s199 + $0x24a0] sm:$0xff]
        %v1493 = vld [vmem:[%s199 + $0x24a8] sm:$0xff]
        %v1494 = vld [vmem:[%s199 + $0x24b0] sm:$0xff]
        %v1495 = vld [vmem:[%s199 + $0x24b8] sm:$0xff]
        %v1496 = vld [vmem:[%s199 + $0x24c0] sm:$0xff]
        %v1497 = vld [vmem:[%s199 + $0x24c8] sm:$0xff]
        %v1498 = vld [vmem:[%s199 + $0x24d0] sm:$0xff]
        %v1499 = vld [vmem:[%s199 + $0x24d8] sm:$0xff]
        %v1500 = vld [vmem:[%s199 + $0x24e0] sm:$0xff]
        %v1501 = vld [vmem:[%s199 + $0x24e8] sm:$0xff]
        %v1502 = vld [vmem:[%s199 + $0x24f0] sm:$0xff]
        %v1503 = vld [vmem:[%s199 + $0x24f8] sm:$0xff]
        %v1504 = vld [vmem:[%s199 + $0x2500] sm:$0xff]
        %v1505 = vld [vmem:[%s199 + $0x2508] sm:$0xff]
        %v1506 = vld [vmem:[%s199 + $0x2510] sm:$0xff]
        %v1507 = vld [vmem:[%s199 + $0x2518] sm:$0xff]
        %v1508 = vld [vmem:[%s199 + $0x2520] sm:$0xff]
        %v1509 = vld [vmem:[%s199 + $0x2528] sm:$0xff]
        %v1510 = vld [vmem:[%s199 + $0x2530] sm:$0xff]
        %v1511 = vld [vmem:[%s199 + $0x2538] sm:$0xff]
        %v1512 = vld [vmem:[%s199 + $0x2540] sm:$0xff]
        %v1513 = vld [vmem:[%s199 + $0x2548] sm:$0xff]
        %v1514 = vld [vmem:[%s199 + $0x2550] sm:$0xff]
        %v1515 = vld [vmem:[%s199 + $0x2558] sm:$0xff]
        %v1516 = vld [vmem:[%s199 + $0x2560] sm:$0xff]
        %v1517 = vld [vmem:[%s199 + $0x2568] sm:$0xff]
        %v1518 = vld [vmem:[%s199 + $0x2570] sm:$0xff]
        %v1519 = vld [vmem:[%s199 + $0x2578] sm:$0xff]
        %v1520 = vld [vmem:[%s199 + $0x2580] sm:$0xff]
        %v1521 = vld [vmem:[%s199 + $0x2588] sm:$0xff]
        %v1522 = vld [vmem:[%s199 + $0x2590] sm:$0xff]
        %v1523 = vld [vmem:[%s199 + $0x2598] sm:$0xff]
        %v1524 = vld [vmem:[%s199 + $0x25a0] sm:$0xff]
        %v1525 = vld [vmem:[%s199 + $0x25a8] sm:$0xff]
        %v1526 = vld [vmem:[%s199 + $0x25b0] sm:$0xff]
        %v1527 = vld [vmem:[%s199 + $0x25b8] sm:$0xff]
        %v1528 = vld [vmem:[%s199 + $0x25c0] sm:$0xff]
        %v1529 = vld [vmem:[%s199 + $0x25c8] sm:$0xff]
        %v1530 = vld [vmem:[%s199 + $0x25d0] sm:$0xff]
        %v1531 = vld [vmem:[%s199 + $0x25d8] sm:$0xff]
        %v1532 = vld [vmem:[%s199 + $0x25e0] sm:$0xff]
        %v1533 = vld [vmem:[%s199 + $0x25e8] sm:$0xff]
        %v1534 = vld [vmem:[%s199 + $0x25f0] sm:$0xff]
        %v1535 = vld [vmem:[%s199 + $0x25f8] sm:$0xff]
        %v1536 = vld [vmem:[%s199 + $0x2600] sm:$0xff]
        %v1537 = vld [vmem:[%s199 + $0x2608] sm:$0xff]
        %v1538 = vld [vmem:[%s199 + $0x2610] sm:$0xff]
        %v1539 = vld [vmem:[%s199 + $0x2618] sm:$0xff]
        %v1540 = vld [vmem:[%s199 + $0x2620] sm:$0xff]
        %v1541 = vld [vmem:[%s199 + $0x2628] sm:$0xff]
        %v1542 = vld [vmem:[%s199 + $0x2630] sm:$0xff]
        %v1543 = vld [vmem:[%s199 + $0x2638] sm:$0xff]
        %v1544 = vld [vmem:[%s199 + $0x2640] sm:$0xff]
        %v1545 = vld [vmem:[%s199 + $0x2648] sm:$0xff]
        %v1546 = vld [vmem:[%s199 + $0x2650] sm:$0xff]
        %v1547 = vld [vmem:[%s199 + $0x2658] sm:$0xff]
        %v1548 = vld [vmem:[%s199 + $0x2660] sm:$0xff]
        %v1549 = vld [vmem:[%s199 + $0x2668] sm:$0xff]
        %v1550 = vld [vmem:[%s199 + $0x2670] sm:$0xff]
        %v1551 = vld [vmem:[%s199 + $0x2678] sm:$0xff]
        %v1552 = vld [vmem:[%s199 + $0x2680] sm:$0xff]
        %v1553 = vld [vmem:[%s199 + $0x2688] sm:$0xff]
        %v1554 = vld [vmem:[%s199 + $0x2690] sm:$0xff]
        %v1555 = vld [vmem:[%s199 + $0x2698] sm:$0xff]
        %v1556 = vld [vmem:[%s199 + $0x26a0] sm:$0xff]
        %v1557 = vld [vmem:[%s199 + $0x26a8] sm:$0xff]
        %v1558 = vld [vmem:[%s199 + $0x26b0] sm:$0xff]
        %v1559 = vld [vmem:[%s199 + $0x26b8] sm:$0xff]
        %v1560 = vld [vmem:[%s199 + $0x26c0] sm:$0xff]
        %v1561 = vld [vmem:[%s199 + $0x26c8] sm:$0xff]
        %v1562 = vld [vmem:[%s199 + $0x26d0] sm:$0xff]
        %v1563 = vld [vmem:[%s199 + $0x26d8] sm:$0xff]
        %v1564 = vld [vmem:[%s199 + $0x26e0] sm:$0xff]
        %v1565 = vld [vmem:[%s199 + $0x26e8] sm:$0xff]
        %v1566 = vld [vmem:[%s199 + $0x26f0] sm:$0xff]
        %v1567 = vld [vmem:[%s199 + $0x26f8] sm:$0xff]
        %v1568 = vld [vmem:[%s199 + $0x2700] sm:$0xff]
        %v1569 = vld [vmem:[%s199 + $0x2708] sm:$0xff]
        %v1570 = vld [vmem:[%s199 + $0x2710] sm:$0xff]
        %v1571 = vld [vmem:[%s199 + $0x2718] sm:$0xff]
        %v1572 = vld [vmem:[%s199 + $0x2720] sm:$0xff]
        %v1573 = vld [vmem:[%s199 + $0x2728] sm:$0xff]
        %v1574 = vld [vmem:[%s199 + $0x2730] sm:$0xff]
        %v1575 = vld [vmem:[%s199 + $0x2738] sm:$0xff]
        %v1576 = vld [vmem:[%s199 + $0x2740] sm:$0xff]
        %v1577 = vld [vmem:[%s199 + $0x2748] sm:$0xff]
        %v1578 = vld [vmem:[%s199 + $0x2750] sm:$0xff]
        %v1579 = vld [vmem:[%s199 + $0x2758] sm:$0xff]
        %v1580 = vld [vmem:[%s199 + $0x2760] sm:$0xff]
        %v1581 = vld [vmem:[%s199 + $0x2768] sm:$0xff]
        %v1582 = vld [vmem:[%s199 + $0x2770] sm:$0xff]
        %v1583 = vld [vmem:[%s199 + $0x2778] sm:$0xff]
        %v1584 = vld [vmem:[%s199 + $0x2780] sm:$0xff]
        %v1585 = vld [vmem:[%s199 + $0x2788] sm:$0xff]
        %v1586 = vld [vmem:[%s199 + $0x2790] sm:$0xff]
        %v1587 = vld [vmem:[%s199 + $0x2798] sm:$0xff]
        %v1588 = vld [vmem:[%s199 + $0x27a0] sm:$0xff]
        %v1589 = vld [vmem:[%s199 + $0x27a8] sm:$0xff]
        %v1590 = vld [vmem:[%s199 + $0x27b0] sm:$0xff]
        %v1591 = vld [vmem:[%s199 + $0x27b8] sm:$0xff]
        %v1592 = vld [vmem:[%s199 + $0x27c0] sm:$0xff]
        %v1593 = vld [vmem:[%s199 + $0x27c8] sm:$0xff]
        %v1594 = vld [vmem:[%s199 + $0x27d0] sm:$0xff]
        %v1595 = vld [vmem:[%s199 + $0x27d8] sm:$0xff]
        %v1596 = vld [vmem:[%s199 + $0x27e0] sm:$0xff]
        %v1597 = vld [vmem:[%s199 + $0x27e8] sm:$0xff]
        %v1598 = vld [vmem:[%s199 + $0x27f0] sm:$0xff]
        %v1599 = vld [vmem:[%s199 + $0x27f8] sm:$0xff]
        %v1600 = vld [vmem:[%s199 + $0x2800] sm:$0xff]
        %v1601 = vld [vmem:[%s199 + $0x2808] sm:$0xff]
        %v1602 = vld [vmem:[%s199 + $0x2810] sm:$0xff]
        %v1603 = vld [vmem:[%s199 + $0x2818] sm:$0xff]
        %v1604 = vld [vmem:[%s199 + $0x2820] sm:$0xff]
        %v1605 = vld [vmem:[%s199 + $0x2828] sm:$0xff]
        %v1606 = vld [vmem:[%s199 + $0x2830] sm:$0xff]
        %v1607 = vld [vmem:[%s199 + $0x2838] sm:$0xff]
        %v1608 = vld [vmem:[%s199 + $0x2840] sm:$0xff]
        %v1609 = vld [vmem:[%s199 + $0x2848] sm:$0xff]
        %v1610 = vld [vmem:[%s199 + $0x2850] sm:$0xff]
        %v1611 = vld [vmem:[%s199 + $0x2858] sm:$0xff]
        %v1612 = vld [vmem:[%s199 + $0x2860] sm:$0xff]
        %v1613 = vld [vmem:[%s199 + $0x2868] sm:$0xff]
        %v1614 = vld [vmem:[%s199 + $0x2870] sm:$0xff]
        %v1615 = vld [vmem:[%s199 + $0x2878] sm:$0xff]
        %v1616 = vld [vmem:[%s199 + $0x2880] sm:$0xff]
        %v1617 = vld [vmem:[%s199 + $0x2888] sm:$0xff]
        %v1618 = vld [vmem:[%s199 + $0x2890] sm:$0xff]
        %v1619 = vld [vmem:[%s199 + $0x2898] sm:$0xff]
        %v1620 = vld [vmem:[%s199 + $0x28a0] sm:$0xff]
        %v1621 = vld [vmem:[%s199 + $0x28a8] sm:$0xff]
        %v1622 = vld [vmem:[%s199 + $0x28b0] sm:$0xff]
        %v1623 = vld [vmem:[%s199 + $0x28b8] sm:$0xff]
        %v1624 = vld [vmem:[%s199 + $0x28c0] sm:$0xff]
        %v1625 = vld [vmem:[%s199 + $0x28c8] sm:$0xff]
        %v1626 = vld [vmem:[%s199 + $0x28d0] sm:$0xff]
        %v1627 = vld [vmem:[%s199 + $0x28d8] sm:$0xff]
        %v1628 = vld [vmem:[%s199 + $0x28e0] sm:$0xff]
        %v1629 = vld [vmem:[%s199 + $0x28e8] sm:$0xff]
        %v1630 = vld [vmem:[%s199 + $0x28f0] sm:$0xff]
        %v1631 = vld [vmem:[%s199 + $0x28f8] sm:$0xff]
        %v1632 = vld [vmem:[%s199 + $0x2900] sm:$0xff]
        %v1633 = vld [vmem:[%s199 + $0x2908] sm:$0xff]
        %v1634 = vld [vmem:[%s199 + $0x2910] sm:$0xff]
        %v1635 = vld [vmem:[%s199 + $0x2918] sm:$0xff]
        %v1636 = vld [vmem:[%s199 + $0x2920] sm:$0xff]
        %v1637 = vld [vmem:[%s199 + $0x2928] sm:$0xff]
        %v1638 = vld [vmem:[%s199 + $0x2930] sm:$0xff]
        %v1639 = vld [vmem:[%s199 + $0x2938] sm:$0xff]
        %v1640 = vld [vmem:[%s199 + $0x2940] sm:$0xff]
        %v1641 = vld [vmem:[%s199 + $0x2948] sm:$0xff]
        %v1642 = vld [vmem:[%s199 + $0x2950] sm:$0xff]
        %v1643 = vld [vmem:[%s199 + $0x2958] sm:$0xff]
        %v1644 = vld [vmem:[%s199 + $0x2960] sm:$0xff]
        %v1645 = vld [vmem:[%s199 + $0x2968] sm:$0xff]
        %v1646 = vld [vmem:[%s199 + $0x2970] sm:$0xff]
        %v1647 = vld [vmem:[%s199 + $0x2978] sm:$0xff]
        %v1648 = vld [vmem:[%s199 + $0x2980] sm:$0xff]
        %v1649 = vld [vmem:[%s199 + $0x2988] sm:$0xff]
        %v1650 = vld [vmem:[%s199 + $0x2990] sm:$0xff]
        %v1651 = vld [vmem:[%s199 + $0x2998] sm:$0xff]
        %v1652 = vld [vmem:[%s199 + $0x29a0] sm:$0xff]
        %v1653 = vld [vmem:[%s199 + $0x29a8] sm:$0xff]
        %v1654 = vld [vmem:[%s199 + $0x29b0] sm:$0xff]
        %v1655 = vld [vmem:[%s199 + $0x29b8] sm:$0xff]
        %v1656 = vld [vmem:[%s199 + $0x29c0] sm:$0xff]
        %v1657 = vld [vmem:[%s199 + $0x29c8] sm:$0xff]
        %v1658 = vld [vmem:[%s199 + $0x29d0] sm:$0xff]
        %v1659 = vld [vmem:[%s199 + $0x29d8] sm:$0xff]
        %v1660 = vld [vmem:[%s199 + $0x29e0] sm:$0xff]
        %v1661 = vld [vmem:[%s199 + $0x29e8] sm:$0xff]
        %v1662 = vld [vmem:[%s199 + $0x29f0] sm:$0xff]
        %v1663 = vld [vmem:[%s199 + $0x29f8] sm:$0xff]
        %v1664 = vld [vmem:[%s199 + $0x2a00] sm:$0xff]
        %v1665 = vld [vmem:[%s199 + $0x2a08] sm:$0xff]
        %v1666 = vld [vmem:[%s199 + $0x2a10] sm:$0xff]
        %v1667 = vld [vmem:[%s199 + $0x2a18] sm:$0xff]
        %v1668 = vld [vmem:[%s199 + $0x2a20] sm:$0xff]
        %v1669 = vld [vmem:[%s199 + $0x2a28] sm:$0xff]
        %v1670 = vld [vmem:[%s199 + $0x2a30] sm:$0xff]
        %v1671 = vld [vmem:[%s199 + $0x2a38] sm:$0xff]
        %v1672 = vld [vmem:[%s199 + $0x2a40] sm:$0xff]
        %v1673 = vld [vmem:[%s199 + $0x2a48] sm:$0xff]
        %v1674 = vld [vmem:[%s199 + $0x2a50] sm:$0xff]
        %v1675 = vld [vmem:[%s199 + $0x2a58] sm:$0xff]
        %v1676 = vld [vmem:[%s199 + $0x2a60] sm:$0xff]
        %v1677 = vld [vmem:[%s199 + $0x2a68] sm:$0xff]
        %v1678 = vld [vmem:[%s199 + $0x2a70] sm:$0xff]
        %v1679 = vld [vmem:[%s199 + $0x2a78] sm:$0xff]
        %v1680 = vld [vmem:[%s199 + $0x2a80] sm:$0xff]
        %v1681 = vld [vmem:[%s199 + $0x2a88] sm:$0xff]
        %v1682 = vld [vmem:[%s199 + $0x2a90] sm:$0xff]
        %v1683 = vld [vmem:[%s199 + $0x2a98] sm:$0xff]
        %v1684 = vld [vmem:[%s199 + $0x2aa0] sm:$0xff]
        %v1685 = vld [vmem:[%s199 + $0x2aa8] sm:$0xff]
        %v1686 = vld [vmem:[%s199 + $0x2ab0] sm:$0xff]
        %v1687 = vld [vmem:[%s199 + $0x2ab8] sm:$0xff]
        %v1688 = vld [vmem:[%s199 + $0x2ac0] sm:$0xff]
        %v1689 = vld [vmem:[%s199 + $0x2ac8] sm:$0xff]
        %v1690 = vld [vmem:[%s199 + $0x2ad0] sm:$0xff]
        %v1691 = vld [vmem:[%s199 + $0x2ad8] sm:$0xff]
        %v1692 = vld [vmem:[%s199 + $0x2ae0] sm:$0xff]
        %v1693 = vld [vmem:[%s199 + $0x2ae8] sm:$0xff]
        %v1694 = vld [vmem:[%s199 + $0x2af0] sm:$0xff]
        %v1695 = vld [vmem:[%s199 + $0x2af8] sm:$0xff]
        %v1696 = vld [vmem:[%s199 + $0x2b00] sm:$0xff]
        %v1697 = vld [vmem:[%s199 + $0x2b08] sm:$0xff]
        %v1698 = vld [vmem:[%s199 + $0x2b10] sm:$0xff]
        %v1699 = vld [vmem:[%s199 + $0x2b18] sm:$0xff]
        %v1700 = vld [vmem:[%s199 + $0x2b20] sm:$0xff]
        %v1701 = vld [vmem:[%s199 + $0x2b28] sm:$0xff]
        %v1702 = vld [vmem:[%s199 + $0x2b30] sm:$0xff]
        %v1703 = vld [vmem:[%s199 + $0x2b38] sm:$0xff]
        %v1704 = vld [vmem:[%s199 + $0x2b40] sm:$0xff]
        %v1705 = vld [vmem:[%s199 + $0x2b48] sm:$0xff]
        %v1706 = vld [vmem:[%s199 + $0x2b50] sm:$0xff]
        %v1707 = vld [vmem:[%s199 + $0x2b58] sm:$0xff]
        %v1708 = vld [vmem:[%s199 + $0x2b60] sm:$0xff]
        %v1709 = vld [vmem:[%s199 + $0x2b68] sm:$0xff]
        %v1710 = vld [vmem:[%s199 + $0x2b70] sm:$0xff]
        %v1711 = vld [vmem:[%s199 + $0x2b78] sm:$0xff]
        %v1712 = vld [vmem:[%s199 + $0x2b80] sm:$0xff]
        %v1713 = vld [vmem:[%s199 + $0x2b88] sm:$0xff]
        %v1714 = vld [vmem:[%s199 + $0x2b90] sm:$0xff]
        %v1715 = vld [vmem:[%s199 + $0x2b98] sm:$0xff]
        %v1716 = vld [vmem:[%s199 + $0x2ba0] sm:$0xff]
        %v1717 = vld [vmem:[%s199 + $0x2ba8] sm:$0xff]
        %v1718 = vld [vmem:[%s199 + $0x2bb0] sm:$0xff]
        %v1719 = vld [vmem:[%s199 + $0x2bb8] sm:$0xff]
        %v1720 = vld [vmem:[%s199 + $0x2bc0] sm:$0xff]
        %v1721 = vld [vmem:[%s199 + $0x2bc8] sm:$0xff]
        %v1722 = vld [vmem:[%s199 + $0x2bd0] sm:$0xff]
        %v1723 = vld [vmem:[%s199 + $0x2bd8] sm:$0xff]
        %v1724 = vld [vmem:[%s199 + $0x2be0] sm:$0xff]
        %v1725 = vld [vmem:[%s199 + $0x2be8] sm:$0xff]
        %v1726 = vld [vmem:[%s199 + $0x2bf0] sm:$0xff]
        %v1727 = vld [vmem:[%s199 + $0x2bf8] sm:$0xff]
        %v1728 = vld [vmem:[%s199 + $0x2c00] sm:$0xff]
        %v1729 = vld [vmem:[%s199 + $0x2c08] sm:$0xff]
        %v1730 = vld [vmem:[%s199 + $0x2c10] sm:$0xff]
        %v1731 = vld [vmem:[%s199 + $0x2c18] sm:$0xff]
        %v1732 = vld [vmem:[%s199 + $0x2c20] sm:$0xff]
        %v1733 = vld [vmem:[%s199 + $0x2c28] sm:$0xff]
        %v1734 = vld [vmem:[%s199 + $0x2c30] sm:$0xff]
        %v1735 = vld [vmem:[%s199 + $0x2c38] sm:$0xff]
        %v1736 = vld [vmem:[%s199 + $0x2c40] sm:$0xff]
        %v1737 = vld [vmem:[%s199 + $0x2c48] sm:$0xff]
        %v1738 = vld [vmem:[%s199 + $0x2c50] sm:$0xff]
        %v1739 = vld [vmem:[%s199 + $0x2c58] sm:$0xff]
        %v1740 = vld [vmem:[%s199 + $0x2c60] sm:$0xff]
        %v1741 = vld [vmem:[%s199 + $0x2c68] sm:$0xff]
        %v1742 = vld [vmem:[%s199 + $0x2c70] sm:$0xff]
        %v1743 = vld [vmem:[%s199 + $0x2c78] sm:$0xff]
        %v1744 = vld [vmem:[%s199 + $0x2c80] sm:$0xff]
        %v1745 = vld [vmem:[%s199 + $0x2c88] sm:$0xff]
        %v1746 = vld [vmem:[%s199 + $0x2c90] sm:$0xff]
        %v1747 = vld [vmem:[%s199 + $0x2c98] sm:$0xff]
        %v1748 = vld [vmem:[%s199 + $0x2ca0] sm:$0xff]
        %v1749 = vld [vmem:[%s199 + $0x2ca8] sm:$0xff]
        %v1750 = vld [vmem:[%s199 + $0x2cb0] sm:$0xff]
        %v1751 = vld [vmem:[%s199 + $0x2cb8] sm:$0xff]
        %v1752 = vld [vmem:[%s199 + $0x2cc0] sm:$0xff]
        %v1753 = vld [vmem:[%s199 + $0x2cc8] sm:$0xff]
        %v1754 = vld [vmem:[%s199 + $0x2cd0] sm:$0xff]
        %v1755 = vld [vmem:[%s199 + $0x2cd8] sm:$0xff]
        %v1756 = vld [vmem:[%s199 + $0x2ce0] sm:$0xff]
        %v1757 = vld [vmem:[%s199 + $0x2ce8] sm:$0xff]
        %v1758 = vld [vmem:[%s199 + $0x2cf0] sm:$0xff]
        %v1759 = vld [vmem:[%s199 + $0x2cf8] sm:$0xff]
        %v1760 = vld [vmem:[%s199 + $0x2d00] sm:$0xff]
        %v1761 = vld [vmem:[%s199 + $0x2d08] sm:$0xff]
        %v1762 = vld [vmem:[%s199 + $0x2d10] sm:$0xff]
        %v1763 = vld [vmem:[%s199 + $0x2d18] sm:$0xff]
        %v1764 = vld [vmem:[%s199 + $0x2d20] sm:$0xff]
        %v1765 = vld [vmem:[%s199 + $0x2d28] sm:$0xff]
        %v1766 = vld [vmem:[%s199 + $0x2d30] sm:$0xff]
        %v1767 = vld [vmem:[%s199 + $0x2d38] sm:$0xff]
        %v1768 = vld [vmem:[%s199 + $0x2d40] sm:$0xff]
        %v1769 = vld [vmem:[%s199 + $0x2d48] sm:$0xff]
        %v1770 = vld [vmem:[%s199 + $0x2d50] sm:$0xff]
        %v1771 = vld [vmem:[%s199 + $0x2d58] sm:$0xff]
        %v1772 = vld [vmem:[%s199 + $0x2d60] sm:$0xff]
        %v1773 = vld [vmem:[%s199 + $0x2d68] sm:$0xff]
        %v1774 = vld [vmem:[%s199 + $0x2d70] sm:$0xff]
        %v1775 = vld [vmem:[%s199 + $0x2d78] sm:$0xff]
        %v1776 = vld [vmem:[%s199 + $0x2d80] sm:$0xff]
        %v1777 = vld [vmem:[%s199 + $0x2d88] sm:$0xff]
        %v1778 = vld [vmem:[%s199 + $0x2d90] sm:$0xff]
        %v1779 = vld [vmem:[%s199 + $0x2d98] sm:$0xff]
        %v1780 = vld [vmem:[%s199 + $0x2da0] sm:$0xff]
        %v1781 = vld [vmem:[%s199 + $0x2da8] sm:$0xff]
        %v1782 = vld [vmem:[%s199 + $0x2db0] sm:$0xff]
        %v1783 = vld [vmem:[%s199 + $0x2db8] sm:$0xff]
        %v1784 = vld [vmem:[%s199 + $0x2dc0] sm:$0xff]
        %v1785 = vld [vmem:[%s199 + $0x2dc8] sm:$0xff]
        %v1786 = vld [vmem:[%s199 + $0x2dd0] sm:$0xff]
        %v1787 = vld [vmem:[%s199 + $0x2dd8] sm:$0xff]
        %v1788 = vld [vmem:[%s199 + $0x2de0] sm:$0xff]
        %v1789 = vld [vmem:[%s199 + $0x2de8] sm:$0xff]
        %v1790 = vld [vmem:[%s199 + $0x2df0] sm:$0xff]
        %v1791 = vld [vmem:[%s199 + $0x2df8] sm:$0xff]
        %v1792 = vld [vmem:[%s199 + $0x2e00] sm:$0xff]
        %v1793 = vld [vmem:[%s199 + $0x2e08] sm:$0xff]
        %v1794 = vld [vmem:[%s199 + $0x2e10] sm:$0xff]
        %v1795 = vld [vmem:[%s199 + $0x2e18] sm:$0xff]
        %v1796 = vld [vmem:[%s199 + $0x2e20] sm:$0xff]
        %v1797 = vld [vmem:[%s199 + $0x2e28] sm:$0xff]
        %v1798 = vld [vmem:[%s199 + $0x2e30] sm:$0xff]
        %v1799 = vld [vmem:[%s199 + $0x2e38] sm:$0xff]
        %v1800 = vld [vmem:[%s199 + $0x2e40] sm:$0xff]
        %v1801 = vld [vmem:[%s199 + $0x2e48] sm:$0xff]
        %v1802 = vld [vmem:[%s199 + $0x2e50] sm:$0xff]
        %v1803 = vld [vmem:[%s199 + $0x2e58] sm:$0xff]
        %v1804 = vld [vmem:[%s199 + $0x2e60] sm:$0xff]
        %v1805 = vld [vmem:[%s199 + $0x2e68] sm:$0xff]
        %v1806 = vld [vmem:[%s199 + $0x2e70] sm:$0xff]
        %v1807 = vld [vmem:[%s199 + $0x2e78] sm:$0xff]
        %v1808 = vld [vmem:[%s199 + $0x2e80] sm:$0xff]
        %v1809 = vld [vmem:[%s199 + $0x2e88] sm:$0xff]
        %v1810 = vld [vmem:[%s199 + $0x2e90] sm:$0xff]
        %v1811 = vld [vmem:[%s199 + $0x2e98] sm:$0xff]
        %v1812 = vld [vmem:[%s199 + $0x2ea0] sm:$0xff]
        %v1813 = vld [vmem:[%s199 + $0x2ea8] sm:$0xff]
        %v1814 = vld [vmem:[%s199 + $0x2eb0] sm:$0xff]
        %v1815 = vld [vmem:[%s199 + $0x2eb8] sm:$0xff]
        %v1816 = vld [vmem:[%s199 + $0x2ec0] sm:$0xff]
        %v1817 = vld [vmem:[%s199 + $0x2ec8] sm:$0xff]
        %v1818 = vld [vmem:[%s199 + $0x2ed0] sm:$0xff]
        %v1819 = vld [vmem:[%s199 + $0x2ed8] sm:$0xff]
        %v1820 = vld [vmem:[%s199 + $0x2ee0] sm:$0xff]
        %v1821 = vld [vmem:[%s199 + $0x2ee8] sm:$0xff]
        %v1822 = vld [vmem:[%s199 + $0x2ef0] sm:$0xff]
        %v1823 = vld [vmem:[%s199 + $0x2ef8] sm:$0xff]
        %v1824 = vld [vmem:[%s199 + $0x2f00] sm:$0xff]
        %v1825 = vld [vmem:[%s199 + $0x2f08] sm:$0xff]
        %v1826 = vld [vmem:[%s199 + $0x2f10] sm:$0xff]
        %v1827 = vld [vmem:[%s199 + $0x2f18] sm:$0xff]
        %v1828 = vld [vmem:[%s199 + $0x2f20] sm:$0xff]
        %v1829 = vld [vmem:[%s199 + $0x2f28] sm:$0xff]
        %v1830 = vld [vmem:[%s199 + $0x2f30] sm:$0xff]
        %v1831 = vld [vmem:[%s199 + $0x2f38] sm:$0xff]
        %v1832 = vld [vmem:[%s199 + $0x2f40] sm:$0xff]
        %v1833 = vld [vmem:[%s199 + $0x2f48] sm:$0xff]
        %v1834 = vld [vmem:[%s199 + $0x2f50] sm:$0xff]
        %v1835 = vld [vmem:[%s199 + $0x2f58] sm:$0xff]
        %v1836 = vld [vmem:[%s199 + $0x2f60] sm:$0xff]
        %v1837 = vld [vmem:[%s199 + $0x2f68] sm:$0xff]
        %v1838 = vld [vmem:[%s199 + $0x2f70] sm:$0xff]
        %v1839 = vld [vmem:[%s199 + $0x2f78] sm:$0xff]
        %v1840 = vld [vmem:[%s199 + $0x2f80] sm:$0xff]
        %v1841 = vld [vmem:[%s199 + $0x2f88] sm:$0xff]
        %v1842 = vld [vmem:[%s199 + $0x2f90] sm:$0xff]
        %v1843 = vld [vmem:[%s199 + $0x2f98] sm:$0xff]
        %v1844 = vld [vmem:[%s199 + $0x2fa0] sm:$0xff]
        %v1845 = vld [vmem:[%s199 + $0x2fa8] sm:$0xff]
        %v1846 = vld [vmem:[%s199 + $0x2fb0] sm:$0xff]
        %v1847 = vld [vmem:[%s199 + $0x2fb8] sm:$0xff]
        %v1848 = vld [vmem:[%s199 + $0x2fc0] sm:$0xff]
        %v1849 = vld [vmem:[%s199 + $0x2fc8] sm:$0xff]
        %v1850 = vld [vmem:[%s199 + $0x2fd0] sm:$0xff]
        %v1851 = vld [vmem:[%s199 + $0x2fd8] sm:$0xff]
        %v1852 = vld [vmem:[%s199 + $0x2fe0] sm:$0xff]
        %v1853 = vld [vmem:[%s199 + $0x2fe8] sm:$0xff]
        %v1854 = vld [vmem:[%s199 + $0x2ff0] sm:$0xff]
        %v1855 = vld [vmem:[%s199 + $0x2ff8] sm:$0xff]
        %v1856 = vld [vmem:[%s1] sm:$0xff]
        %v1857 = vld [vmem:[%s1 + $0x8] sm:$0xff]
        %v1858 = vld [vmem:[%s1 + $0x10] sm:$0xff]
        %v1859 = vld [vmem:[%s1 + $0x18] sm:$0xff]
        %v1860 = vld [vmem:[%s1 + $0x20] sm:$0xff]
        %v1861 = vld [vmem:[%s1 + $0x28] sm:$0xff]
        %v1862 = vld [vmem:[%s1 + $0x30] sm:$0xff]
        %v1863 = vld [vmem:[%s1 + $0x38] sm:$0xff]
        %1865 = vset.pattern.permute.xlu0 0
        %1866 = vperm.xlu0 %1865, %v1856
        %v1867 = vpop.permute.xlu0 %1866
        %1870 = vset.pattern.permute.xlu0 0
        %1871 = vperm.xlu0 %1870, %v1857
        %v1872 = vpop.permute.xlu0 %1871
        %1875 = vset.pattern.permute.xlu0 0
        %1876 = vperm.xlu0 %1875, %v1858
        %v1877 = vpop.permute.xlu0 %1876
        %1880 = vset.pattern.permute.xlu0 0
        %1881 = vperm.xlu0 %1880, %v1859
        %v1882 = vpop.permute.xlu0 %1881
        %1885 = vset.pattern.permute.xlu0 0
        %1886 = vperm.xlu0 %1885, %v1860
        %v1887 = vpop.permute.xlu0 %1886
        %1890 = vset.pattern.permute.xlu0 0
        %1891 = vperm.xlu0 %1890, %v1861
        %v1892 = vpop.permute.xlu0 %1891
        %1895 = vset.pattern.permute.xlu0 0
        %1896 = vperm.xlu0 %1895, %v1862
        %v1897 = vpop.permute.xlu0 %1896
        %1900 = vset.pattern.permute.xlu0 0
        %1901 = vperm.xlu0 %1900, %v1863
        %v1902 = vpop.permute.xlu0 %1901
        %1904 = vmatprep.subr.mxu0 %v321
        %1905 = vmatpush1.msra.mxu0 %v320
        %1906 = vmatprep.subr.mxu0 %v329
        %1907 = vmatpush1.msra.mxu0 %v328
        %1908 = vmatprep.subr.mxu0 %v337
        %1909 = vmatpush1.msra.mxu0 %v336
        %1910 = vmatprep.subr.mxu0 %v345
        %1911 = vmatpush1.msra.mxu0 %v344
        %1912 = vmatprep.subr.mxu0 %v353
        %1913 = vmatpush1.msra.mxu0 %v352
        %1914 = vmatprep.subr.mxu0 %v361
        %1915 = vmatpush1.msra.mxu0 %v360
        %1916 = vmatprep.subr.mxu0 %v369
        %1917 = vmatpush1.msra.mxu0 %v368
        %1918 = vmatprep.subr.mxu0 %v377
        %1919 = vmatpush1.msra.mxu0 %v376
        %1920 = vmatprep.subr.mxu0 %v385
        %1921 = vmatpush1.msra.mxu0 %v384
        %1922 = vmatprep.subr.mxu0 %v393
        %1923 = vmatpush1.msra.mxu0 %v392
        %1924 = vmatprep.subr.mxu0 %v401
        %1925 = vmatpush1.msra.mxu0 %v400
        %1926 = vmatprep.subr.mxu0 %v409
        %1927 = vmatpush1.msra.mxu0 %v408
        %1928 = vmatprep.subr.mxu0 %v417
        %1929 = vmatpush1.msra.mxu0 %v416
        %1930 = vmatprep.subr.mxu0 %v425
        %1931 = vmatpush1.msra.mxu0 %v424
        %1932 = vmatprep.subr.mxu0 %v433
        %1933 = vmatpush1.msra.mxu0 %v432
        %1934 = vmatprep.subr.mxu0 %v441
        %1935 = vmatpush1.msra.mxu0 %v440
        %1936 = vmatprep.subr.mxu0 %v449
        %1937 = vmatpush1.msra.mxu0 %v448
        %1938 = vmatprep.subr.mxu0 %v457
        %1939 = vmatpush1.msra.mxu0 %v456
        %1940 = vmatprep.subr.mxu0 %v465
        %1941 = vmatpush1.msra.mxu0 %v464
        %1942 = vmatprep.subr.mxu0 %v473
        %1943 = vmatpush1.msra.mxu0 %v472
        %1944 = vmatprep.subr.mxu0 %v481
        %1945 = vmatpush1.msra.mxu0 %v480
        %1946 = vmatprep.subr.mxu0 %v489
        %1947 = vmatpush1.msra.mxu0 %v488
        %1948 = vmatprep.subr.mxu0 %v497
        %1949 = vmatpush1.msra.mxu0 %v496
        %1950 = vmatprep.subr.mxu0 %v505
        %1951 = vmatpush1.msra.mxu0 %v504
        %1952 = vmatprep.subr.mxu0 %v513
        %1953 = vmatpush1.msra.mxu0 %v512
        %1954 = vmatprep.subr.mxu0 %v521
        %1955 = vmatpush1.msra.mxu0 %v520
        %1956 = vmatprep.subr.mxu0 %v529
        %1957 = vmatpush1.msra.mxu0 %v528
        %1958 = vmatprep.subr.mxu0 %v537
        %1959 = vmatpush1.msra.mxu0 %v536
        %1960 = vmatprep.subr.mxu0 %v545
        %1961 = vmatpush1.msra.mxu0 %v544
        %1962 = vmatprep.subr.mxu0 %v553
        %1963 = vmatpush1.msra.mxu0 %v552
        %1964 = vmatprep.subr.mxu0 %v561
        %1965 = vmatpush1.msra.mxu0 %v560
        %1966 = vmatprep.subr.mxu0 %v569
        %1967 = vmatpush1.msra.mxu0 %v568
        %1968 = vmatprep.mubr.f32.mxu0 %v225
        %1969 = vmatmul.mubr.f32.gmra.mrb[0].mxu0 %v224
        %v1970 = vpop.f32.mrb[0].mxu0
        %v1971 = vadd.f32 %v1867, %v1970
        %v1972 = vpop.f32.mrb[0].mxu0
        %v1973 = vadd.f32 %v1867, %v1972
        %1974 = vmatprep.mubr.f32.mxu0 %v237
        %1975 = vmatmul.mubr.f32.gmra.mrb[0].mxu0 %v236
        %v1976 = vpop.f32.mrb[0].mxu0
        %v1977 = vadd.f32 %v1872, %v1976
        %v1978 = vpop.f32.mrb[0].mxu0
        %v1979 = vadd.f32 %v1872, %v1978
        %1980 = vmatprep.mubr.f32.mxu0 %v249
        %1981 = vmatmul.mubr.f32.gmra.mrb[0].mxu0 %v248
        %v1982 = vpop.f32.mrb[0].mxu0
        %v1983 = vadd.f32 %v1877, %v1982
        %v1984 = vpop.f32.mrb[0].mxu0
        %v1985 = vadd.f32 %v1877, %v1984
        %1986 = vmatprep.mubr.f32.mxu0 %v261
        %1987 = vmatmul.mubr.f32.gmra.mrb[0].mxu0 %v260
        %v1988 = vpop.f32.mrb[0].mxu0
        %v1989 = vadd.f32 %v1882, %v1988
        %v1990 = vpop.f32.mrb[0].mxu0
        %v1991 = vadd.f32 %v1882, %v1990
        %1992 = vmatprep.mubr.f32.mxu0 %v273
        %1993 = vmatmul.mubr.f32.gmra.mrb[0].mxu0 %v272
        %v1994 = vpop.f32.mrb[0].mxu0
        %v1995 = vadd.f32 %v1887, %v1994
        %v1996 = vpop.f32.mrb[0].mxu0
        %v1997 = vadd.f32 %v1887, %v1996
        %1998 = vmatprep.mubr.f32.mxu0 %v285
        %1999 = vmatmul.mubr.f32.gmra.mrb[0].mxu0 %v284
        %v2000 = vpop.f32.mrb[0].mxu0
        %v2001 = vadd.f32 %v1892, %v2000
        %v2002 = vpop.f32.mrb[0].mxu0
        %v2003 = vadd.f32 %v1892, %v2002
        %2004 = vmatprep.mubr.f32.mxu0 %v297
        %2005 = vmatmul.mubr.f32.gmra.mrb[0].mxu0 %v296
        %v2006 = vpop.f32.mrb[0].mxu0
        %v2007 = vadd.f32 %v1897, %v2006
        %v2008 = vpop.f32.mrb[0].mxu0
        %v2009 = vadd.f32 %v1897, %v2008
        %2010 = vmatprep.mubr.f32.mxu0 %v309
        %2011 = vmatmul.mubr.f32.gmra.mrb[0].mxu0 %v308
        %v2012 = vpop.f32.mrb[0].mxu0
        %v2013 = vadd.f32 %v1902, %v2012
        %v2014 = vpop.f32.mrb[0].mxu0
        %v2015 = vadd.f32 %v1902, %v2014
        %2016 = vdwg.mxu0
        %2017 = vmatprep.subr.mxu0 %v577
        %2018 = vmatpush1.msra.mxu0 %v576
        %2019 = vmatprep.subr.mxu0 %v585
        %2020 = vmatpush1.msra.mxu0 %v584
        %2021 = vmatprep.subr.mxu0 %v593
        %2022 = vmatpush1.msra.mxu0 %v592
        %2023 = vmatprep.subr.mxu0 %v601
        %2024 = vmatpush1.msra.mxu0 %v600
        %2025 = vmatprep.subr.mxu0 %v609
        %2026 = vmatpush1.msra.mxu0 %v608
        %2027 = vmatprep.subr.mxu0 %v617
        %2028 = vmatpush1.msra.mxu0 %v616
        %2029 = vmatprep.subr.mxu0 %v625
        %2030 = vmatpush1.msra.mxu0 %v624
        %2031 = vmatprep.subr.mxu0 %v633
        %2032 = vmatpush1.msra.mxu0 %v632
        %2033 = vmatprep.subr.mxu0 %v641
        %2034 = vmatpush1.msra.mxu0 %v640
        %2035 = vmatprep.subr.mxu0 %v649
        %2036 = vmatpush1.msra.mxu0 %v648
        %2037 = vmatprep.subr.mxu0 %v657
        %2038 = vmatpush1.msra.mxu0 %v656
        %2039 = vmatprep.subr.mxu0 %v665
        %2040 = vmatpush1.msra.mxu0 %v664
        %2041 = vmatprep.subr.mxu0 %v673
        %2042 = vmatpush1.msra.mxu0 %v672
        %2043 = vmatprep.subr.mxu0 %v681
        %2044 = vmatpush1.msra.mxu0 %v680
        %2045 = vmatprep.subr.mxu0 %v689
        %2046 = vmatpush1.msra.mxu0 %v688
        %2047 = vmatprep.subr.mxu0 %v697
        %2048 = vmatpush1.msra.mxu0 %v696
        %2049 = vmatprep.subr.mxu0 %v705
        %2050 = vmatpush1.msra.mxu0 %v704
        %2051 = vmatprep.subr.mxu0 %v713
        %2052 = vmatpush1.msra.mxu0 %v712
        %2053 = vmatprep.subr.mxu0 %v721
        %2054 = vmatpush1.msra.mxu0 %v720
        %2055 = vmatprep.subr.mxu0 %v729
        %2056 = vmatpush1.msra.mxu0 %v728
        %2057 = vmatprep.subr.mxu0 %v737
        %2058 = vmatpush1.msra.mxu0 %v736
        %2059 = vmatprep.subr.mxu0 %v745
        %2060 = vmatpush1.msra.mxu0 %v744
        %2061 = vmatprep.subr.mxu0 %v753
        %2062 = vmatpush1.msra.mxu0 %v752
        %2063 = vmatprep.subr.mxu0 %v761
        %2064 = vmatpush1.msra.mxu0 %v760
        %2065 = vmatprep.subr.mxu0 %v769
        %2066 = vmatpush1.msra.mxu0 %v768
        %2067 = vmatprep.subr.mxu0 %v777
        %2068 = vmatpush1.msra.mxu0 %v776
        %2069 = vmatprep.subr.mxu0 %v785
        %2070 = vmatpush1.msra.mxu0 %v784
        %2071 = vmatprep.subr.mxu0 %v793
        %2072 = vmatpush1.msra.mxu0 %v792
        %2073 = vmatprep.subr.mxu0 %v801
        %2074 = vmatpush1.msra.mxu0 %v800
        %2075 = vmatprep.subr.mxu0 %v809
        %2076 = vmatpush1.msra.mxu0 %v808
        %2077 = vmatprep.subr.mxu0 %v817
        %2078 = vmatpush1.msra.mxu0 %v816
        %2079 = vmatprep.subr.mxu0 %v825
        %2080 = vmatpush1.msra.mxu0 %v824
        %2081 = vmatprep.mubr.f32.mxu0 %v227
        %2082 = vmatmul.mubr.f32.gmra.mrb[0].mxu0 %v226
        %v2083 = vpop.f32.mrb[0].mxu0
        %v2084 = vadd.f32 %v1971, %v2083
        %v2085 = vpop.f32.mrb[0].mxu0
        %v2086 = vadd.f32 %v1973, %v2085
        %2087 = vmatprep.mubr.f32.mxu0 %v239
        %2088 = vmatmul.mubr.f32.gmra.mrb[0].mxu0 %v238
        %v2089 = vpop.f32.mrb[0].mxu0
        %v2090 = vadd.f32 %v1977, %v2089
        %v2091 = vpop.f32.mrb[0].mxu0
        %v2092 = vadd.f32 %v1979, %v2091
        %2093 = vmatprep.mubr.f32.mxu0 %v251
        %2094 = vmatmul.mubr.f32.gmra.mrb[0].mxu0 %v250
        %v2095 = vpop.f32.mrb[0].mxu0
        %v2096 = vadd.f32 %v1983, %v2095
        %v2097 = vpop.f32.mrb[0].mxu0
        %v2098 = vadd.f32 %v1985, %v2097
        %2099 = vmatprep.mubr.f32.mxu0 %v263
        %2100 = vmatmul.mubr.f32.gmra.mrb[0].mxu0 %v262
        %v2101 = vpop.f32.mrb[0].mxu0
        %v2102 = vadd.f32 %v1989, %v2101
        %v2103 = vpop.f32.mrb[0].mxu0
        %v2104 = vadd.f32 %v1991, %v2103
        %2105 = vmatprep.mubr.f32.mxu0 %v275
        %2106 = vmatmul.mubr.f32.gmra.mrb[0].mxu0 %v274
        %v2107 = vpop.f32.mrb[0].mxu0
        %v2108 = vadd.f32 %v1995, %v2107
        %v2109 = vpop.f32.mrb[0].mxu0
        %v2110 = vadd.f32 %v1997, %v2109
        %2111 = vmatprep.mubr.f32.mxu0 %v287
        %2112 = vmatmul.mubr.f32.gmra.mrb[0].mxu0 %v286
        %v2113 = vpop.f32.mrb[0].mxu0
        %v2114 = vadd.f32 %v2001, %v2113
        %v2115 = vpop.f32.mrb[0].mxu0
        %v2116 = vadd.f32 %v2003, %v2115
        %2117 = vmatprep.mubr.f32.mxu0 %v299
        %2118 = vmatmul.mubr.f32.gmra.mrb[0].mxu0 %v298
        %v2119 = vpop.f32.mrb[0].mxu0
        %v2120 = vadd.f32 %v2007, %v2119
        %v2121 = vpop.f32.mrb[0].mxu0
        %v2122 = vadd.f32 %v2009, %v2121
        %2123 = vmatprep.mubr.f32.mxu0 %v311
        %2124 = vmatmul.mubr.f32.gmra.mrb[0].mxu0 %v310
        %v2125 = vpop.f32.mrb[0].mxu0
        %v2126 = vadd.f32 %v2013, %v2125
        %v2127 = vpop.f32.mrb[0].mxu0
        %v2128 = vadd.f32 %v2015, %v2127
        %2129 = vdwg.mxu0
        %2130 = vmatprep.subr.mxu0 %v833
        %2131 = vmatpush1.msra.mxu0 %v832
        %2132 = vmatprep.subr.mxu0 %v841
        %2133 = vmatpush1.msra.mxu0 %v840
        %2134 = vmatprep.subr.mxu0 %v849
        %2135 = vmatpush1.msra.mxu0 %v848
        %2136 = vmatprep.subr.mxu0 %v857
        %2137 = vmatpush1.msra.mxu0 %v856
        %2138 = vmatprep.subr.mxu0 %v865
        %2139 = vmatpush1.msra.mxu0 %v864
        %2140 = vmatprep.subr.mxu0 %v873
        %2141 = vmatpush1.msra.mxu0 %v872
        %2142 = vmatprep.subr.mxu0 %v881
        %2143 = vmatpush1.msra.mxu0 %v880
        %2144 = vmatprep.subr.mxu0 %v889
        %2145 = vmatpush1.msra.mxu0 %v888
        %2146 = vmatprep.subr.mxu0 %v897
        %2147 = vmatpush1.msra.mxu0 %v896
        %2148 = vmatprep.subr.mxu0 %v905
        %2149 = vmatpush1.msra.mxu0 %v904
        %2150 = vmatprep.subr.mxu0 %v913
        %2151 = vmatpush1.msra.mxu0 %v912
        %2152 = vmatprep.subr.mxu0 %v921
        %2153 = vmatpush1.msra.mxu0 %v920
        %2154 = vmatprep.subr.mxu0 %v929
        %2155 = vmatpush1.msra.mxu0 %v928
        %2156 = vmatprep.subr.mxu0 %v937
        %2157 = vmatpush1.msra.mxu0 %v936
        %2158 = vmatprep.subr.mxu0 %v945
        %2159 = vmatpush1.msra.mxu0 %v944
        %2160 = vmatprep.subr.mxu0 %v953
        %2161 = vmatpush1.msra.mxu0 %v952
        %2162 = vmatprep.subr.mxu0 %v961
        %2163 = vmatpush1.msra.mxu0 %v960
        %2164 = vmatprep.subr.mxu0 %v969
        %2165 = vmatpush1.msra.mxu0 %v968
        %2166 = vmatprep.subr.mxu0 %v977
        %2167 = vmatpush1.msra.mxu0 %v976
        %2168 = vmatprep.subr.mxu0 %v985
        %2169 = vmatpush1.msra.mxu0 %v984
        %2170 = vmatprep.subr.mxu0 %v993
        %2171 = vmatpush1.msra.mxu0 %v992
        %2172 = vmatprep.subr.mxu0 %v1001
        %2173 = vmatpush1.msra.mxu0 %v1000
        %2174 = vmatprep.subr.mxu0 %v1009
        %2175 = vmatpush1.msra.mxu0 %v1008
        %2176 = vmatprep.subr.mxu0 %v1017
        %2177 = vmatpush1.msra.mxu0 %v1016
        %2178 = vmatprep.subr.mxu0 %v1025
        %2179 = vmatpush1.msra.mxu0 %v1024
        %2180 = vmatprep.subr.mxu0 %v1033
        %2181 = vmatpush1.msra.mxu0 %v1032
        %2182 = vmatprep.subr.mxu0 %v1041
        %2183 = vmatpush1.msra.mxu0 %v1040
        %2184 = vmatprep.subr.mxu0 %v1049
        %2185 = vmatpush1.msra.mxu0 %v1048
        %2186 = vmatprep.subr.mxu0 %v1057
        %2187 = vmatpush1.msra.mxu0 %v1056
        %2188 = vmatprep.subr.mxu0 %v1065
        %2189 = vmatpush1.msra.mxu0 %v1064
        %2190 = vmatprep.subr.mxu0 %v1073
        %2191 = vmatpush1.msra.mxu0 %v1072
        %2192 = vmatprep.subr.mxu0 %v1081
        %2193 = vmatpush1.msra.mxu0 %v1080
        %2194 = vmatprep.mubr.f32.mxu0 %v229
        %2195 = vmatmul.mubr.f32.gmra.mrb[0].mxu0 %v228
        %v2196 = vpop.f32.mrb[0].mxu0
        %v2197 = vadd.f32 %v2084, %v2196
        %v2198 = vpop.f32.mrb[0].mxu0
        %v2199 = vadd.f32 %v2086, %v2198
        %2200 = vmatprep.mubr.f32.mxu0 %v241
        %2201 = vmatmul.mubr.f32.gmra.mrb[0].mxu0 %v240
        %v2202 = vpop.f32.mrb[0].mxu0
        %v2203 = vadd.f32 %v2090, %v2202
        %v2204 = vpop.f32.mrb[0].mxu0
        %v2205 = vadd.f32 %v2092, %v2204
        %2206 = vmatprep.mubr.f32.mxu0 %v253
        %2207 = vmatmul.mubr.f32.gmra.mrb[0].mxu0 %v252
        %v2208 = vpop.f32.mrb[0].mxu0
        %v2209 = vadd.f32 %v2096, %v2208
        %v2210 = vpop.f32.mrb[0].mxu0
        %v2211 = vadd.f32 %v2098, %v2210
        %2212 = vmatprep.mubr.f32.mxu0 %v265
        %2213 = vmatmul.mubr.f32.gmra.mrb[0].mxu0 %v264
        %v2214 = vpop.f32.mrb[0].mxu0
        %v2215 = vadd.f32 %v2102, %v2214
        %v2216 = vpop.f32.mrb[0].mxu0
        %v2217 = vadd.f32 %v2104, %v2216
        %2218 = vmatprep.mubr.f32.mxu0 %v277
        %2219 = vmatmul.mubr.f32.gmra.mrb[0].mxu0 %v276
        %v2220 = vpop.f32.mrb[0].mxu0
        %v2221 = vadd.f32 %v2108, %v2220
        %v2222 = vpop.f32.mrb[0].mxu0
        %v2223 = vadd.f32 %v2110, %v2222
        %2224 = vmatprep.mubr.f32.mxu0 %v289
        %2225 = vmatmul.mubr.f32.gmra.mrb[0].mxu0 %v288
        %v2226 = vpop.f32.mrb[0].mxu0
        %v2227 = vadd.f32 %v2114, %v2226
        %v2228 = vpop.f32.mrb[0].mxu0
        %v2229 = vadd.f32 %v2116, %v2228
        %2230 = vmatprep.mubr.f32.mxu0 %v301
        %2231 = vmatmul.mubr.f32.gmra.mrb[0].mxu0 %v300
        %v2232 = vpop.f32.mrb[0].mxu0
        %v2233 = vadd.f32 %v2120, %v2232
        %v2234 = vpop.f32.mrb[0].mxu0
        %v2235 = vadd.f32 %v2122, %v2234
        %2236 = vmatprep.mubr.f32.mxu0 %v313
        %2237 = vmatmul.mubr.f32.gmra.mrb[0].mxu0 %v312
        %v2238 = vpop.f32.mrb[0].mxu0
        %v2239 = vadd.f32 %v2126, %v2238
        %v2240 = vpop.f32.mrb[0].mxu0
        %v2241 = vadd.f32 %v2128, %v2240
        %2242 = vdwg.mxu0
        %2243 = vmatprep.subr.mxu0 %v1089
        %2244 = vmatpush1.msra.mxu0 %v1088
        %2245 = vmatprep.subr.mxu0 %v1097
        %2246 = vmatpush1.msra.mxu0 %v1096
        %2247 = vmatprep.subr.mxu0 %v1105
        %2248 = vmatpush1.msra.mxu0 %v1104
        %2249 = vmatprep.subr.mxu0 %v1113
        %2250 = vmatpush1.msra.mxu0 %v1112
        %2251 = vmatprep.subr.mxu0 %v1121
        %2252 = vmatpush1.msra.mxu0 %v1120
        %2253 = vmatprep.subr.mxu0 %v1129
        %2254 = vmatpush1.msra.mxu0 %v1128
        %2255 = vmatprep.subr.mxu0 %v1137
        %2256 = vmatpush1.msra.mxu0 %v1136
        %2257 = vmatprep.subr.mxu0 %v1145
        %2258 = vmatpush1.msra.mxu0 %v1144
        %2259 = vmatprep.subr.mxu0 %v1153
        %2260 = vmatpush1.msra.mxu0 %v1152
        %2261 = vmatprep.subr.mxu0 %v1161
        %2262 = vmatpush1.msra.mxu0 %v1160
        %2263 = vmatprep.subr.mxu0 %v1169
        %2264 = vmatpush1.msra.mxu0 %v1168
        %2265 = vmatprep.subr.mxu0 %v1177
        %2266 = vmatpush1.msra.mxu0 %v1176
        %2267 = vmatprep.subr.mxu0 %v1185
        %2268 = vmatpush1.msra.mxu0 %v1184
        %2269 = vmatprep.subr.mxu0 %v1193
        %2270 = vmatpush1.msra.mxu0 %v1192
        %2271 = vmatprep.subr.mxu0 %v1201
        %2272 = vmatpush1.msra.mxu0 %v1200
        %2273 = vmatprep.subr.mxu0 %v1209
        %2274 = vmatpush1.msra.mxu0 %v1208
        %2275 = vmatprep.subr.mxu0 %v1217
        %2276 = vmatpush1.msra.mxu0 %v1216
        %2277 = vmatprep.subr.mxu0 %v1225
        %2278 = vmatpush1.msra.mxu0 %v1224
        %2279 = vmatprep.subr.mxu0 %v1233
        %2280 = vmatpush1.msra.mxu0 %v1232
        %2281 = vmatprep.subr.mxu0 %v1241
        %2282 = vmatpush1.msra.mxu0 %v1240
        %2283 = vmatprep.subr.mxu0 %v1249
        %2284 = vmatpush1.msra.mxu0 %v1248
        %2285 = vmatprep.subr.mxu0 %v1257
        %2286 = vmatpush1.msra.mxu0 %v1256
        %2287 = vmatprep.subr.mxu0 %v1265
        %2288 = vmatpush1.msra.mxu0 %v1264
        %2289 = vmatprep.subr.mxu0 %v1273
        %2290 = vmatpush1.msra.mxu0 %v1272
        %2291 = vmatprep.subr.mxu0 %v1281
        %2292 = vmatpush1.msra.mxu0 %v1280
        %2293 = vmatprep.subr.mxu0 %v1289
        %2294 = vmatpush1.msra.mxu0 %v1288
        %2295 = vmatprep.subr.mxu0 %v1297
        %2296 = vmatpush1.msra.mxu0 %v1296
        %2297 = vmatprep.subr.mxu0 %v1305
        %2298 = vmatpush1.msra.mxu0 %v1304
        %2299 = vmatprep.subr.mxu0 %v1313
        %2300 = vmatpush1.msra.mxu0 %v1312
        %2301 = vmatprep.subr.mxu0 %v1321
        %2302 = vmatpush1.msra.mxu0 %v1320
        %2303 = vmatprep.subr.mxu0 %v1329
        %2304 = vmatpush1.msra.mxu0 %v1328
        %2305 = vmatprep.subr.mxu0 %v1337
        %2306 = vmatpush1.msra.mxu0 %v1336
        %2307 = vmatprep.mubr.f32.mxu0 %v231
        %2308 = vmatmul.mubr.f32.gmra.mrb[0].mxu0 %v230
        %v2309 = vpop.f32.mrb[0].mxu0
        %v2310 = vadd.f32 %v2197, %v2309
        %v2311 = vpop.f32.mrb[0].mxu0
        %v2312 = vadd.f32 %v2199, %v2311
        %2313 = vmatprep.mubr.f32.mxu0 %v243
        %2314 = vmatmul.mubr.f32.gmra.mrb[0].mxu0 %v242
        %v2315 = vpop.f32.mrb[0].mxu0
        %v2316 = vadd.f32 %v2203, %v2315
        %v2317 = vpop.f32.mrb[0].mxu0
        %v2318 = vadd.f32 %v2205, %v2317
        %2319 = vmatprep.mubr.f32.mxu0 %v255
        %2320 = vmatmul.mubr.f32.gmra.mrb[0].mxu0 %v254
        %v2321 = vpop.f32.mrb[0].mxu0
        %v2322 = vadd.f32 %v2209, %v2321
        %v2323 = vpop.f32.mrb[0].mxu0
        %v2324 = vadd.f32 %v2211, %v2323
        %2325 = vmatprep.mubr.f32.mxu0 %v267
        %2326 = vmatmul.mubr.f32.gmra.mrb[0].mxu0 %v266
        %v2327 = vpop.f32.mrb[0].mxu0
        %v2328 = vadd.f32 %v2215, %v2327
        %v2329 = vpop.f32.mrb[0].mxu0
        %v2330 = vadd.f32 %v2217, %v2329
        %2331 = vmatprep.mubr.f32.mxu0 %v279
        %2332 = vmatmul.mubr.f32.gmra.mrb[0].mxu0 %v278
        %v2333 = vpop.f32.mrb[0].mxu0
        %v2334 = vadd.f32 %v2221, %v2333
        %v2335 = vpop.f32.mrb[0].mxu0
        %v2336 = vadd.f32 %v2223, %v2335
        %2337 = vmatprep.mubr.f32.mxu0 %v291
        %2338 = vmatmul.mubr.f32.gmra.mrb[0].mxu0 %v290
        %v2339 = vpop.f32.mrb[0].mxu0
        %v2340 = vadd.f32 %v2227, %v2339
        %v2341 = vpop.f32.mrb[0].mxu0
        %v2342 = vadd.f32 %v2229, %v2341
        %2343 = vmatprep.mubr.f32.mxu0 %v303
        %2344 = vmatmul.mubr.f32.gmra.mrb[0].mxu0 %v302
        %v2345 = vpop.f32.mrb[0].mxu0
        %v2346 = vadd.f32 %v2233, %v2345
        %v2347 = vpop.f32.mrb[0].mxu0
        %v2348 = vadd.f32 %v2235, %v2347
        %2349 = vmatprep.mubr.f32.mxu0 %v315
        %2350 = vmatmul.mubr.f32.gmra.mrb[0].mxu0 %v314
        %v2351 = vpop.f32.mrb[0].mxu0
        %v2352 = vadd.f32 %v2239, %v2351
        %v2353 = vpop.f32.mrb[0].mxu0
        %v2354 = vadd.f32 %v2241, %v2353
        %2355 = vdwg.mxu0
        %2356 = vmatprep.subr.mxu0 %v1345
        %2357 = vmatpush1.msra.mxu0 %v1344
        %2358 = vmatprep.subr.mxu0 %v1353
        %2359 = vmatpush1.msra.mxu0 %v1352
        %2360 = vmatprep.subr.mxu0 %v1361
        %2361 = vmatpush1.msra.mxu0 %v1360
        %2362 = vmatprep.subr.mxu0 %v1369
        %2363 = vmatpush1.msra.mxu0 %v1368
        %2364 = vmatprep.subr.mxu0 %v1377
        %2365 = vmatpush1.msra.mxu0 %v1376
        %2366 = vmatprep.subr.mxu0 %v1385
        %2367 = vmatpush1.msra.mxu0 %v1384
        %2368 = vmatprep.subr.mxu0 %v1393
        %2369 = vmatpush1.msra.mxu0 %v1392
        %2370 = vmatprep.subr.mxu0 %v1401
        %2371 = vmatpush1.msra.mxu0 %v1400
        %2372 = vmatprep.subr.mxu0 %v1409
        %2373 = vmatpush1.msra.mxu0 %v1408
        %2374 = vmatprep.subr.mxu0 %v1417
        %2375 = vmatpush1.msra.mxu0 %v1416
        %2376 = vmatprep.subr.mxu0 %v1425
        %2377 = vmatpush1.msra.mxu0 %v1424
        %2378 = vmatprep.subr.mxu0 %v1433
        %2379 = vmatpush1.msra.mxu0 %v1432
        %2380 = vmatprep.subr.mxu0 %v1441
        %2381 = vmatpush1.msra.mxu0 %v1440
        %2382 = vmatprep.subr.mxu0 %v1449
        %2383 = vmatpush1.msra.mxu0 %v1448
        %2384 = vmatprep.subr.mxu0 %v1457
        %2385 = vmatpush1.msra.mxu0 %v1456
        %2386 = vmatprep.subr.mxu0 %v1465
        %2387 = vmatpush1.msra.mxu0 %v1464
        %2388 = vmatprep.subr.mxu0 %v1473
        %2389 = vmatpush1.msra.mxu0 %v1472
        %2390 = vmatprep.subr.mxu0 %v1481
        %2391 = vmatpush1.msra.mxu0 %v1480
        %2392 = vmatprep.subr.mxu0 %v1489
        %2393 = vmatpush1.msra.mxu0 %v1488
        %2394 = vmatprep.subr.mxu0 %v1497
        %2395 = vmatpush1.msra.mxu0 %v1496
        %2396 = vmatprep.subr.mxu0 %v1505
        %2397 = vmatpush1.msra.mxu0 %v1504
        %2398 = vmatprep.subr.mxu0 %v1513
        %2399 = vmatpush1.msra.mxu0 %v1512
        %2400 = vmatprep.subr.mxu0 %v1521
        %2401 = vmatpush1.msra.mxu0 %v1520
        %2402 = vmatprep.subr.mxu0 %v1529
        %2403 = vmatpush1.msra.mxu0 %v1528
        %2404 = vmatprep.subr.mxu0 %v1537
        %2405 = vmatpush1.msra.mxu0 %v1536
        %2406 = vmatprep.subr.mxu0 %v1545
        %2407 = vmatpush1.msra.mxu0 %v1544
        %2408 = vmatprep.subr.mxu0 %v1553
        %2409 = vmatpush1.msra.mxu0 %v1552
        %2410 = vmatprep.subr.mxu0 %v1561
        %2411 = vmatpush1.msra.mxu0 %v1560
        %2412 = vmatprep.subr.mxu0 %v1569
        %2413 = vmatpush1.msra.mxu0 %v1568
        %2414 = vmatprep.subr.mxu0 %v1577
        %2415 = vmatpush1.msra.mxu0 %v1576
        %2416 = vmatprep.subr.mxu0 %v1585
        %2417 = vmatpush1.msra.mxu0 %v1584
        %2418 = vmatprep.subr.mxu0 %v1593
        %2419 = vmatpush1.msra.mxu0 %v1592
        %2420 = vmatprep.mubr.f32.mxu0 %v233
        %2421 = vmatmul.mubr.f32.gmra.mrb[0].mxu0 %v232
        %v2422 = vpop.f32.mrb[0].mxu0
        %v2423 = vadd.f32 %v2310, %v2422
        %v2424 = vpop.f32.mrb[0].mxu0
        %v2425 = vadd.f32 %v2312, %v2424
        %2426 = vmatprep.mubr.f32.mxu0 %v245
        %2427 = vmatmul.mubr.f32.gmra.mrb[0].mxu0 %v244
        %v2428 = vpop.f32.mrb[0].mxu0
        %v2429 = vadd.f32 %v2316, %v2428
        %v2430 = vpop.f32.mrb[0].mxu0
        %v2431 = vadd.f32 %v2318, %v2430
        %2432 = vmatprep.mubr.f32.mxu0 %v257
        %2433 = vmatmul.mubr.f32.gmra.mrb[0].mxu0 %v256
        %v2434 = vpop.f32.mrb[0].mxu0
        %v2435 = vadd.f32 %v2322, %v2434
        %v2436 = vpop.f32.mrb[0].mxu0
        %v2437 = vadd.f32 %v2324, %v2436
        %2438 = vmatprep.mubr.f32.mxu0 %v269
        %2439 = vmatmul.mubr.f32.gmra.mrb[0].mxu0 %v268
        %v2440 = vpop.f32.mrb[0].mxu0
        %v2441 = vadd.f32 %v2328, %v2440
        %v2442 = vpop.f32.mrb[0].mxu0
        %v2443 = vadd.f32 %v2330, %v2442
        %2444 = vmatprep.mubr.f32.mxu0 %v281
        %2445 = vmatmul.mubr.f32.gmra.mrb[0].mxu0 %v280
        %v2446 = vpop.f32.mrb[0].mxu0
        %v2447 = vadd.f32 %v2334, %v2446
        %v2448 = vpop.f32.mrb[0].mxu0
        %v2449 = vadd.f32 %v2336, %v2448
        %2450 = vmatprep.mubr.f32.mxu0 %v293
        %2451 = vmatmul.mubr.f32.gmra.mrb[0].mxu0 %v292
        %v2452 = vpop.f32.mrb[0].mxu0
        %v2453 = vadd.f32 %v2340, %v2452
        %v2454 = vpop.f32.mrb[0].mxu0
        %v2455 = vadd.f32 %v2342, %v2454
        %2456 = vmatprep.mubr.f32.mxu0 %v305
        %2457 = vmatmul.mubr.f32.gmra.mrb[0].mxu0 %v304
        %v2458 = vpop.f32.mrb[0].mxu0
        %v2459 = vadd.f32 %v2346, %v2458
        %v2460 = vpop.f32.mrb[0].mxu0
        %v2461 = vadd.f32 %v2348, %v2460
        %2462 = vmatprep.mubr.f32.mxu0 %v317
        %2463 = vmatmul.mubr.f32.gmra.mrb[0].mxu0 %v316
        %v2464 = vpop.f32.mrb[0].mxu0
        %v2465 = vadd.f32 %v2352, %v2464
        %v2466 = vpop.f32.mrb[0].mxu0
        %v2467 = vadd.f32 %v2354, %v2466
        %2468 = vdwg.mxu0
        %2469 = vmatprep.subr.mxu0 %v1601
        %2470 = vmatpush1.msra.mxu0 %v1600
        %2471 = vmatprep.subr.mxu0 %v1609
        %2472 = vmatpush1.msra.mxu0 %v1608
        %2473 = vmatprep.subr.mxu0 %v1617
        %2474 = vmatpush1.msra.mxu0 %v1616
        %2475 = vmatprep.subr.mxu0 %v1625
        %2476 = vmatpush1.msra.mxu0 %v1624
        %2477 = vmatprep.subr.mxu0 %v1633
        %2478 = vmatpush1.msra.mxu0 %v1632
        %2479 = vmatprep.subr.mxu0 %v1641
        %2480 = vmatpush1.msra.mxu0 %v1640
        %2481 = vmatprep.subr.mxu0 %v1649
        %2482 = vmatpush1.msra.mxu0 %v1648
        %2483 = vmatprep.subr.mxu0 %v1657
        %2484 = vmatpush1.msra.mxu0 %v1656
        %2485 = vmatprep.subr.mxu0 %v1665
        %2486 = vmatpush1.msra.mxu0 %v1664
        %2487 = vmatprep.subr.mxu0 %v1673
        %2488 = vmatpush1.msra.mxu0 %v1672
        %2489 = vmatprep.subr.mxu0 %v1681
        %2490 = vmatpush1.msra.mxu0 %v1680
        %2491 = vmatprep.subr.mxu0 %v1689
        %2492 = vmatpush1.msra.mxu0 %v1688
        %2493 = vmatprep.subr.mxu0 %v1697
        %2494 = vmatpush1.msra.mxu0 %v1696
        %2495 = vmatprep.subr.mxu0 %v1705
        %2496 = vmatpush1.msra.mxu0 %v1704
        %2497 = vmatprep.subr.mxu0 %v1713
        %2498 = vmatpush1.msra.mxu0 %v1712
        %2499 = vmatprep.subr.mxu0 %v1721
        %2500 = vmatpush1.msra.mxu0 %v1720
        %2501 = vmatprep.subr.mxu0 %v1729
        %2502 = vmatpush1.msra.mxu0 %v1728
        %2503 = vmatprep.subr.mxu0 %v1737
        %2504 = vmatpush1.msra.mxu0 %v1736
        %2505 = vmatprep.subr.mxu0 %v1745
        %2506 = vmatpush1.msra.mxu0 %v1744
        %2507 = vmatprep.subr.mxu0 %v1753
        %2508 = vmatpush1.msra.mxu0 %v1752
        %2509 = vmatprep.subr.mxu0 %v1761
        %2510 = vmatpush1.msra.mxu0 %v1760
        %2511 = vmatprep.subr.mxu0 %v1769
        %2512 = vmatpush1.msra.mxu0 %v1768
        %2513 = vmatprep.subr.mxu0 %v1777
        %2514 = vmatpush1.msra.mxu0 %v1776
        %2515 = vmatprep.subr.mxu0 %v1785
        %2516 = vmatpush1.msra.mxu0 %v1784
        %2517 = vmatprep.subr.mxu0 %v1793
        %2518 = vmatpush1.msra.mxu0 %v1792
        %2519 = vmatprep.subr.mxu0 %v1801
        %2520 = vmatpush1.msra.mxu0 %v1800
        %2521 = vmatprep.subr.mxu0 %v1809
        %2522 = vmatpush1.msra.mxu0 %v1808
        %2523 = vmatprep.subr.mxu0 %v1817
        %2524 = vmatpush1.msra.mxu0 %v1816
        %2525 = vmatprep.subr.mxu0 %v1825
        %2526 = vmatpush1.msra.mxu0 %v1824
        %2527 = vmatprep.subr.mxu0 %v1833
        %2528 = vmatpush1.msra.mxu0 %v1832
        %2529 = vmatprep.subr.mxu0 %v1841
        %2530 = vmatpush1.msra.mxu0 %v1840
        %2531 = vmatprep.subr.mxu0 %v1849
        %2532 = vmatpush1.msra.mxu0 %v1848
        %2533 = vmatprep.mubr.f32.mxu0 %v235
        %2534 = vmatmul.mubr.f32.gmra.mrb[0].mxu0 %v234
        %v2535 = vpop.f32.mrb[0].mxu0
        %v2536 = vadd.f32 %v2423, %v2535
        %v2537 = vpop.f32.mrb[0].mxu0
        %v2538 = vadd.f32 %v2425, %v2537
        %2539 = vmatprep.mubr.f32.mxu0 %v247
        %2540 = vmatmul.mubr.f32.gmra.mrb[0].mxu0 %v246
        %v2541 = vpop.f32.mrb[0].mxu0
        %v2542 = vadd.f32 %v2429, %v2541
        %v2543 = vpop.f32.mrb[0].mxu0
        %v2544 = vadd.f32 %v2431, %v2543
        %2545 = vmatprep.mubr.f32.mxu0 %v259
        %2546 = vmatmul.mubr.f32.gmra.mrb[0].mxu0 %v258
        %v2547 = vpop.f32.mrb[0].mxu0
        %v2548 = vadd.f32 %v2435, %v2547
        %v2549 = vpop.f32.mrb[0].mxu0
        %v2550 = vadd.f32 %v2437, %v2549
        %2551 = vmatprep.mubr.f32.mxu0 %v271
        %2552 = vmatmul.mubr.f32.gmra.mrb[0].mxu0 %v270
        %v2553 = vpop.f32.mrb[0].mxu0
        %v2554 = vadd.f32 %v2441, %v2553
        %v2555 = vpop.f32.mrb[0].mxu0
        %v2556 = vadd.f32 %v2443, %v2555
        %2557 = vmatprep.mubr.f32.mxu0 %v283
        %2558 = vmatmul.mubr.f32.gmra.mrb[0].mxu0 %v282
        %v2559 = vpop.f32.mrb[0].mxu0
        %v2560 = vadd.f32 %v2447, %v2559
        %v2561 = vpop.f32.mrb[0].mxu0
        %v2562 = vadd.f32 %v2449, %v2561
        %2563 = vmatprep.mubr.f32.mxu0 %v295
        %2564 = vmatmul.mubr.f32.gmra.mrb[0].mxu0 %v294
        %v2565 = vpop.f32.mrb[0].mxu0
        %v2566 = vadd.f32 %v2453, %v2565
        %v2567 = vpop.f32.mrb[0].mxu0
        %v2568 = vadd.f32 %v2455, %v2567
        %2569 = vmatprep.mubr.f32.mxu0 %v307
        %2570 = vmatmul.mubr.f32.gmra.mrb[0].mxu0 %v306
        %v2571 = vpop.f32.mrb[0].mxu0
        %v2572 = vadd.f32 %v2459, %v2571
        %v2573 = vpop.f32.mrb[0].mxu0
        %v2574 = vadd.f32 %v2461, %v2573
        %2575 = vmatprep.mubr.f32.mxu0 %v319
        %2576 = vmatmul.mubr.f32.gmra.mrb[0].mxu0 %v318
        %v2577 = vpop.f32.mrb[0].mxu0
        %v2578 = vadd.f32 %v2465, %v2577
        %v2579 = vpop.f32.mrb[0].mxu0
        %v2580 = vadd.f32 %v2467, %v2579
        %2581 = vdwg.mxu0
        %2582 = vmatprep.subr.mxu0 %v323
        %2583 = vmatpush1.msra.mxu0 %v322
        %2584 = vmatprep.subr.mxu0 %v331
        %2585 = vmatpush1.msra.mxu0 %v330
        %2586 = vmatprep.subr.mxu0 %v339
        %2587 = vmatpush1.msra.mxu0 %v338
        %2588 = vmatprep.subr.mxu0 %v347
        %2589 = vmatpush1.msra.mxu0 %v346
        %2590 = vmatprep.subr.mxu0 %v355
        %2591 = vmatpush1.msra.mxu0 %v354
        %2592 = vmatprep.subr.mxu0 %v363
        %2593 = vmatpush1.msra.mxu0 %v362
        %2594 = vmatprep.subr.mxu0 %v371
        %2595 = vmatpush1.msra.mxu0 %v370
        %2596 = vmatprep.subr.mxu0 %v379
        %2597 = vmatpush1.msra.mxu0 %v378
        %2598 = vmatprep.subr.mxu0 %v387
        %2599 = vmatpush1.msra.mxu0 %v386
        %2600 = vmatprep.subr.mxu0 %v395
        %2601 = vmatpush1.msra.mxu0 %v394
        %2602 = vmatprep.subr.mxu0 %v403
        %2603 = vmatpush1.msra.mxu0 %v402
        %2604 = vmatprep.subr.mxu0 %v411
        %2605 = vmatpush1.msra.mxu0 %v410
        %2606 = vmatprep.subr.mxu0 %v419
        %2607 = vmatpush1.msra.mxu0 %v418
        %2608 = vmatprep.subr.mxu0 %v427
        %2609 = vmatpush1.msra.mxu0 %v426
        %2610 = vmatprep.subr.mxu0 %v435
        %2611 = vmatpush1.msra.mxu0 %v434
        %2612 = vmatprep.subr.mxu0 %v443
        %2613 = vmatpush1.msra.mxu0 %v442
        %2614 = vmatprep.subr.mxu0 %v451
        %2615 = vmatpush1.msra.mxu0 %v450
        %2616 = vmatprep.subr.mxu0 %v459
        %2617 = vmatpush1.msra.mxu0 %v458
        %2618 = vmatprep.subr.mxu0 %v467
        %2619 = vmatpush1.msra.mxu0 %v466
        %2620 = vmatprep.subr.mxu0 %v475
        %2621 = vmatpush1.msra.mxu0 %v474
        %2622 = vmatprep.subr.mxu0 %v483
        %2623 = vmatpush1.msra.mxu0 %v482
        %2624 = vmatprep.subr.mxu0 %v491
        %2625 = vmatpush1.msra.mxu0 %v490
        %2626 = vmatprep.subr.mxu0 %v499
        %2627 = vmatpush1.msra.mxu0 %v498
        %2628 = vmatprep.subr.mxu0 %v507
        %2629 = vmatpush1.msra.mxu0 %v506
        %2630 = vmatprep.subr.mxu0 %v515
        %2631 = vmatpush1.msra.mxu0 %v514
        %2632 = vmatprep.subr.mxu0 %v523
        %2633 = vmatpush1.msra.mxu0 %v522
        %2634 = vmatprep.subr.mxu0 %v531
        %2635 = vmatpush1.msra.mxu0 %v530
        %2636 = vmatprep.subr.mxu0 %v539
        %2637 = vmatpush1.msra.mxu0 %v538
        %2638 = vmatprep.subr.mxu0 %v547
        %2639 = vmatpush1.msra.mxu0 %v546
        %2640 = vmatprep.subr.mxu0 %v555
        %2641 = vmatpush1.msra.mxu0 %v554
        %2642 = vmatprep.subr.mxu0 %v563
        %2643 = vmatpush1.msra.mxu0 %v562
        %2644 = vmatprep.subr.mxu0 %v571
        %2645 = vmatpush1.msra.mxu0 %v570
        %2646 = vmatprep.mubr.f32.mxu0 %v225
        %2647 = vmatmul.mubr.f32.gmra.mrb[0].mxu0 %v224
        %v2648 = vpop.f32.mrb[0].mxu0
        %v2649 = vadd.f32 %v1867, %v2648
        %v2650 = vpop.f32.mrb[0].mxu0
        %v2651 = vadd.f32 %v1867, %v2650
        %2652 = vmatprep.mubr.f32.mxu0 %v237
        %2653 = vmatmul.mubr.f32.gmra.mrb[0].mxu0 %v236
        %v2654 = vpop.f32.mrb[0].mxu0
        %v2655 = vadd.f32 %v1872, %v2654
        %v2656 = vpop.f32.mrb[0].mxu0
        %v2657 = vadd.f32 %v1872, %v2656
        %2658 = vmatprep.mubr.f32.mxu0 %v249
        %2659 = vmatmul.mubr.f32.gmra.mrb[0].mxu0 %v248
        %v2660 = vpop.f32.mrb[0].mxu0
        %v2661 = vadd.f32 %v1877, %v2660
        %v2662 = vpop.f32.mrb[0].mxu0
        %v2663 = vadd.f32 %v1877, %v2662
        %2664 = vmatprep.mubr.f32.mxu0 %v261
        %2665 = vmatmul.mubr.f32.gmra.mrb[0].mxu0 %v260
        %v2666 = vpop.f32.mrb[0].mxu0
        %v2667 = vadd.f32 %v1882, %v2666
        %v2668 = vpop.f32.mrb[0].mxu0
        %v2669 = vadd.f32 %v1882, %v2668
        %2670 = vmatprep.mubr.f32.mxu0 %v273
        %2671 = vmatmul.mubr.f32.gmra.mrb[0].mxu0 %v272
        %v2672 = vpop.f32.mrb[0].mxu0
        %v2673 = vadd.f32 %v1887, %v2672
        %v2674 = vpop.f32.mrb[0].mxu0
        %v2675 = vadd.f32 %v1887, %v2674
        %2676 = vmatprep.mubr.f32.mxu0 %v285
        %2677 = vmatmul.mubr.f32.gmra.mrb[0].mxu0 %v284
        %v2678 = vpop.f32.mrb[0].mxu0
        %v2679 = vadd.f32 %v1892, %v2678
        %v2680 = vpop.f32.mrb[0].mxu0
        %v2681 = vadd.f32 %v1892, %v2680
        %2682 = vmatprep.mubr.f32.mxu0 %v297
        %2683 = vmatmul.mubr.f32.gmra.mrb[0].mxu0 %v296
        %v2684 = vpop.f32.mrb[0].mxu0
        %v2685 = vadd.f32 %v1897, %v2684
        %v2686 = vpop.f32.mrb[0].mxu0
        %v2687 = vadd.f32 %v1897, %v2686
        %2688 = vmatprep.mubr.f32.mxu0 %v309
        %2689 = vmatmul.mubr.f32.gmra.mrb[0].mxu0 %v308
        %v2690 = vpop.f32.mrb[0].mxu0
        %v2691 = vadd.f32 %v1902, %v2690
        %v2692 = vpop.f32.mrb[0].mxu0
        %v2693 = vadd.f32 %v1902, %v2692
        %2694 = vdwg.mxu0
        %2695 = vmatprep.subr.mxu0 %v579
        %2696 = vmatpush1.msra.mxu0 %v578
        %2697 = vmatprep.subr.mxu0 %v587
        %2698 = vmatpush1.msra.mxu0 %v586
        %2699 = vmatprep.subr.mxu0 %v595
        %2700 = vmatpush1.msra.mxu0 %v594
        %2701 = vmatprep.subr.mxu0 %v603
        %2702 = vmatpush1.msra.mxu0 %v602
        %2703 = vmatprep.subr.mxu0 %v611
        %2704 = vmatpush1.msra.mxu0 %v610
        %2705 = vmatprep.subr.mxu0 %v619
        %2706 = vmatpush1.msra.mxu0 %v618
        %2707 = vmatprep.subr.mxu0 %v627
        %2708 = vmatpush1.msra.mxu0 %v626
        %2709 = vmatprep.subr.mxu0 %v635
        %2710 = vmatpush1.msra.mxu0 %v634
        %2711 = vmatprep.subr.mxu0 %v643
        %2712 = vmatpush1.msra.mxu0 %v642
        %2713 = vmatprep.subr.mxu0 %v651
        %2714 = vmatpush1.msra.mxu0 %v650
        %2715 = vmatprep.subr.mxu0 %v659
        %2716 = vmatpush1.msra.mxu0 %v658
        %2717 = vmatprep.subr.mxu0 %v667
        %2718 = vmatpush1.msra.mxu0 %v666
        %2719 = vmatprep.subr.mxu0 %v675
        %2720 = vmatpush1.msra.mxu0 %v674
        %2721 = vmatprep.subr.mxu0 %v683
        %2722 = vmatpush1.msra.mxu0 %v682
        %2723 = vmatprep.subr.mxu0 %v691
        %2724 = vmatpush1.msra.mxu0 %v690
        %2725 = vmatprep.subr.mxu0 %v699
        %2726 = vmatpush1.msra.mxu0 %v698
        %2727 = vmatprep.subr.mxu0 %v707
        %2728 = vmatpush1.msra.mxu0 %v706
        %2729 = vmatprep.subr.mxu0 %v715
        %2730 = vmatpush1.msra.mxu0 %v714
        %2731 = vmatprep.subr.mxu0 %v723
        %2732 = vmatpush1.msra.mxu0 %v722
        %2733 = vmatprep.subr.mxu0 %v731
        %2734 = vmatpush1.msra.mxu0 %v730
        %2735 = vmatprep.subr.mxu0 %v739
        %2736 = vmatpush1.msra.mxu0 %v738
        %2737 = vmatprep.subr.mxu0 %v747
        %2738 = vmatpush1.msra.mxu0 %v746
        %2739 = vmatprep.subr.mxu0 %v755
        %2740 = vmatpush1.msra.mxu0 %v754
        %2741 = vmatprep.subr.mxu0 %v763
        %2742 = vmatpush1.msra.mxu0 %v762
        %2743 = vmatprep.subr.mxu0 %v771
        %2744 = vmatpush1.msra.mxu0 %v770
        %2745 = vmatprep.subr.mxu0 %v779
        %2746 = vmatpush1.msra.mxu0 %v778
        %2747 = vmatprep.subr.mxu0 %v787
        %2748 = vmatpush1.msra.mxu0 %v786
        %2749 = vmatprep.subr.mxu0 %v795
        %2750 = vmatpush1.msra.mxu0 %v794
        %2751 = vmatprep.subr.mxu0 %v803
        %2752 = vmatpush1.msra.mxu0 %v802
        %2753 = vmatprep.subr.mxu0 %v811
        %2754 = vmatpush1.msra.mxu0 %v810
        %2755 = vmatprep.subr.mxu0 %v819
        %2756 = vmatpush1.msra.mxu0 %v818
        %2757 = vmatprep.subr.mxu0 %v827
        %2758 = vmatpush1.msra.mxu0 %v826
        %2759 = vmatprep.mubr.f32.mxu0 %v227
        %2760 = vmatmul.mubr.f32.gmra.mrb[0].mxu0 %v226
        %v2761 = vpop.f32.mrb[0].mxu0
        %v2762 = vadd.f32 %v2649, %v2761
        %v2763 = vpop.f32.mrb[0].mxu0
        %v2764 = vadd.f32 %v2651, %v2763
        %2765 = vmatprep.mubr.f32.mxu0 %v239
        %2766 = vmatmul.mubr.f32.gmra.mrb[0].mxu0 %v238
        %v2767 = vpop.f32.mrb[0].mxu0
        %v2768 = vadd.f32 %v2655, %v2767
        %v2769 = vpop.f32.mrb[0].mxu0
        %v2770 = vadd.f32 %v2657, %v2769
        %2771 = vmatprep.mubr.f32.mxu0 %v251
        %2772 = vmatmul.mubr.f32.gmra.mrb[0].mxu0 %v250
        %v2773 = vpop.f32.mrb[0].mxu0
        %v2774 = vadd.f32 %v2661, %v2773
        %v2775 = vpop.f32.mrb[0].mxu0
        %v2776 = vadd.f32 %v2663, %v2775
        %2777 = vmatprep.mubr.f32.mxu0 %v263
        %2778 = vmatmul.mubr.f32.gmra.mrb[0].mxu0 %v262
        %v2779 = vpop.f32.mrb[0].mxu0
        %v2780 = vadd.f32 %v2667, %v2779
        %v2781 = vpop.f32.mrb[0].mxu0
        %v2782 = vadd.f32 %v2669, %v2781
        %2783 = vmatprep.mubr.f32.mxu0 %v275
        %2784 = vmatmul.mubr.f32.gmra.mrb[0].mxu0 %v274
        %v2785 = vpop.f32.mrb[0].mxu0
        %v2786 = vadd.f32 %v2673, %v2785
        %v2787 = vpop.f32.mrb[0].mxu0
        %v2788 = vadd.f32 %v2675, %v2787
        %2789 = vmatprep.mubr.f32.mxu0 %v287
        %2790 = vmatmul.mubr.f32.gmra.mrb[0].mxu0 %v286
        %v2791 = vpop.f32.mrb[0].mxu0
        %v2792 = vadd.f32 %v2679, %v2791
        %v2793 = vpop.f32.mrb[0].mxu0
        %v2794 = vadd.f32 %v2681, %v2793
        %2795 = vmatprep.mubr.f32.mxu0 %v299
        %2796 = vmatmul.mubr.f32.gmra.mrb[0].mxu0 %v298
        %v2797 = vpop.f32.mrb[0].mxu0
        %v2798 = vadd.f32 %v2685, %v2797
        %v2799 = vpop.f32.mrb[0].mxu0
        %v2800 = vadd.f32 %v2687, %v2799
        %2801 = vmatprep.mubr.f32.mxu0 %v311
        %2802 = vmatmul.mubr.f32.gmra.mrb[0].mxu0 %v310
        %v2803 = vpop.f32.mrb[0].mxu0
        %v2804 = vadd.f32 %v2691, %v2803
        %v2805 = vpop.f32.mrb[0].mxu0
        %v2806 = vadd.f32 %v2693, %v2805
        %2807 = vdwg.mxu0
        %2808 = vmatprep.subr.mxu0 %v835
        %2809 = vmatpush1.msra.mxu0 %v834
        %2810 = vmatprep.subr.mxu0 %v843
        %2811 = vmatpush1.msra.mxu0 %v842
        %2812 = vmatprep.subr.mxu0 %v851
        %2813 = vmatpush1.msra.mxu0 %v850
        %2814 = vmatprep.subr.mxu0 %v859
        %2815 = vmatpush1.msra.mxu0 %v858
        %2816 = vmatprep.subr.mxu0 %v867
        %2817 = vmatpush1.msra.mxu0 %v866
        %2818 = vmatprep.subr.mxu0 %v875
        %2819 = vmatpush1.msra.mxu0 %v874
        %2820 = vmatprep.subr.mxu0 %v883
        %2821 = vmatpush1.msra.mxu0 %v882
        %2822 = vmatprep.subr.mxu0 %v891
        %2823 = vmatpush1.msra.mxu0 %v890
        %2824 = vmatprep.subr.mxu0 %v899
        %2825 = vmatpush1.msra.mxu0 %v898
        %2826 = vmatprep.subr.mxu0 %v907
        %2827 = vmatpush1.msra.mxu0 %v906
        %2828 = vmatprep.subr.mxu0 %v915
        %2829 = vmatpush1.msra.mxu0 %v914
        %2830 = vmatprep.subr.mxu0 %v923
        %2831 = vmatpush1.msra.mxu0 %v922
        %2832 = vmatprep.subr.mxu0 %v931
        %2833 = vmatpush1.msra.mxu0 %v930
        %2834 = vmatprep.subr.mxu0 %v939
        %2835 = vmatpush1.msra.mxu0 %v938
        %2836 = vmatprep.subr.mxu0 %v947
        %2837 = vmatpush1.msra.mxu0 %v946
        %2838 = vmatprep.subr.mxu0 %v955
        %2839 = vmatpush1.msra.mxu0 %v954
        %2840 = vmatprep.subr.mxu0 %v963
        %2841 = vmatpush1.msra.mxu0 %v962
        %2842 = vmatprep.subr.mxu0 %v971
        %2843 = vmatpush1.msra.mxu0 %v970
        %2844 = vmatprep.subr.mxu0 %v979
        %2845 = vmatpush1.msra.mxu0 %v978
        %2846 = vmatprep.subr.mxu0 %v987
        %2847 = vmatpush1.msra.mxu0 %v986
        %2848 = vmatprep.subr.mxu0 %v995
        %2849 = vmatpush1.msra.mxu0 %v994
        %2850 = vmatprep.subr.mxu0 %v1003
        %2851 = vmatpush1.msra.mxu0 %v1002
        %2852 = vmatprep.subr.mxu0 %v1011
        %2853 = vmatpush1.msra.mxu0 %v1010
        %2854 = vmatprep.subr.mxu0 %v1019
        %2855 = vmatpush1.msra.mxu0 %v1018
        %2856 = vmatprep.subr.mxu0 %v1027
        %2857 = vmatpush1.msra.mxu0 %v1026
        %2858 = vmatprep.subr.mxu0 %v1035
        %2859 = vmatpush1.msra.mxu0 %v1034
        %2860 = vmatprep.subr.mxu0 %v1043
        %2861 = vmatpush1.msra.mxu0 %v1042
        %2862 = vmatprep.subr.mxu0 %v1051
        %2863 = vmatpush1.msra.mxu0 %v1050
        %2864 = vmatprep.subr.mxu0 %v1059
        %2865 = vmatpush1.msra.mxu0 %v1058
        %2866 = vmatprep.subr.mxu0 %v1067
        %2867 = vmatpush1.msra.mxu0 %v1066
        %2868 = vmatprep.subr.mxu0 %v1075
        %2869 = vmatpush1.msra.mxu0 %v1074
        %2870 = vmatprep.subr.mxu0 %v1083
        %2871 = vmatpush1.msra.mxu0 %v1082
        %2872 = vmatprep.mubr.f32.mxu0 %v229
        %2873 = vmatmul.mubr.f32.gmra.mrb[0].mxu0 %v228
        %v2874 = vpop.f32.mrb[0].mxu0
        %v2875 = vadd.f32 %v2762, %v2874
        %v2876 = vpop.f32.mrb[0].mxu0
        %v2877 = vadd.f32 %v2764, %v2876
        %2878 = vmatprep.mubr.f32.mxu0 %v241
        %2879 = vmatmul.mubr.f32.gmra.mrb[0].mxu0 %v240
        %v2880 = vpop.f32.mrb[0].mxu0
        %v2881 = vadd.f32 %v2768, %v2880
        %v2882 = vpop.f32.mrb[0].mxu0
        %v2883 = vadd.f32 %v2770, %v2882
        %2884 = vmatprep.mubr.f32.mxu0 %v253
        %2885 = vmatmul.mubr.f32.gmra.mrb[0].mxu0 %v252
        %v2886 = vpop.f32.mrb[0].mxu0
        %v2887 = vadd.f32 %v2774, %v2886
        %v2888 = vpop.f32.mrb[0].mxu0
        %v2889 = vadd.f32 %v2776, %v2888
        %2890 = vmatprep.mubr.f32.mxu0 %v265
        %2891 = vmatmul.mubr.f32.gmra.mrb[0].mxu0 %v264
        %v2892 = vpop.f32.mrb[0].mxu0
        %v2893 = vadd.f32 %v2780, %v2892
        %v2894 = vpop.f32.mrb[0].mxu0
        %v2895 = vadd.f32 %v2782, %v2894
        %2896 = vmatprep.mubr.f32.mxu0 %v277
        %2897 = vmatmul.mubr.f32.gmra.mrb[0].mxu0 %v276
        %v2898 = vpop.f32.mrb[0].mxu0
        %v2899 = vadd.f32 %v2786, %v2898
        %v2900 = vpop.f32.mrb[0].mxu0
        %v2901 = vadd.f32 %v2788, %v2900
        %2902 = vmatprep.mubr.f32.mxu0 %v289
        %2903 = vmatmul.mubr.f32.gmra.mrb[0].mxu0 %v288
        %v2904 = vpop.f32.mrb[0].mxu0
        %v2905 = vadd.f32 %v2792, %v2904
        %v2906 = vpop.f32.mrb[0].mxu0
        %v2907 = vadd.f32 %v2794, %v2906
        %2908 = vmatprep.mubr.f32.mxu0 %v301
        %2909 = vmatmul.mubr.f32.gmra.mrb[0].mxu0 %v300
        %v2910 = vpop.f32.mrb[0].mxu0
        %v2911 = vadd.f32 %v2798, %v2910
        %v2912 = vpop.f32.mrb[0].mxu0
        %v2913 = vadd.f32 %v2800, %v2912
        %2914 = vmatprep.mubr.f32.mxu0 %v313
        %2915 = vmatmul.mubr.f32.gmra.mrb[0].mxu0 %v312
        %v2916 = vpop.f32.mrb[0].mxu0
        %v2917 = vadd.f32 %v2804, %v2916
        %v2918 = vpop.f32.mrb[0].mxu0
        %v2919 = vadd.f32 %v2806, %v2918
        %2920 = vdwg.mxu0
        %2921 = vmatprep.subr.mxu0 %v1091
        %2922 = vmatpush1.msra.mxu0 %v1090
        %2923 = vmatprep.subr.mxu0 %v1099
        %2924 = vmatpush1.msra.mxu0 %v1098
        %2925 = vmatprep.subr.mxu0 %v1107
        %2926 = vmatpush1.msra.mxu0 %v1106
        %2927 = vmatprep.subr.mxu0 %v1115
        %2928 = vmatpush1.msra.mxu0 %v1114
        %2929 = vmatprep.subr.mxu0 %v1123
        %2930 = vmatpush1.msra.mxu0 %v1122
        %2931 = vmatprep.subr.mxu0 %v1131
        %2932 = vmatpush1.msra.mxu0 %v1130
        %2933 = vmatprep.subr.mxu0 %v1139
        %2934 = vmatpush1.msra.mxu0 %v1138
        %2935 = vmatprep.subr.mxu0 %v1147
        %2936 = vmatpush1.msra.mxu0 %v1146
        %2937 = vmatprep.subr.mxu0 %v1155
        %2938 = vmatpush1.msra.mxu0 %v1154
        %2939 = vmatprep.subr.mxu0 %v1163
        %2940 = vmatpush1.msra.mxu0 %v1162
        %2941 = vmatprep.subr.mxu0 %v1171
        %2942 = vmatpush1.msra.mxu0 %v1170
        %2943 = vmatprep.subr.mxu0 %v1179
        %2944 = vmatpush1.msra.mxu0 %v1178
        %2945 = vmatprep.subr.mxu0 %v1187
        %2946 = vmatpush1.msra.mxu0 %v1186
        %2947 = vmatprep.subr.mxu0 %v1195
        %2948 = vmatpush1.msra.mxu0 %v1194
        %2949 = vmatprep.subr.mxu0 %v1203
        %2950 = vmatpush1.msra.mxu0 %v1202
        %2951 = vmatprep.subr.mxu0 %v1211
        %2952 = vmatpush1.msra.mxu0 %v1210
        %2953 = vmatprep.subr.mxu0 %v1219
        %2954 = vmatpush1.msra.mxu0 %v1218
        %2955 = vmatprep.subr.mxu0 %v1227
        %2956 = vmatpush1.msra.mxu0 %v1226
        %2957 = vmatprep.subr.mxu0 %v1235
        %2958 = vmatpush1.msra.mxu0 %v1234
        %2959 = vmatprep.subr.mxu0 %v1243
        %2960 = vmatpush1.msra.mxu0 %v1242
        %2961 = vmatprep.subr.mxu0 %v1251
        %2962 = vmatpush1.msra.mxu0 %v1250
        %2963 = vmatprep.subr.mxu0 %v1259
        %2964 = vmatpush1.msra.mxu0 %v1258
        %2965 = vmatprep.subr.mxu0 %v1267
        %2966 = vmatpush1.msra.mxu0 %v1266
        %2967 = vmatprep.subr.mxu0 %v1275
        %2968 = vmatpush1.msra.mxu0 %v1274
        %2969 = vmatprep.subr.mxu0 %v1283
        %2970 = vmatpush1.msra.mxu0 %v1282
        %2971 = vmatprep.subr.mxu0 %v1291
        %2972 = vmatpush1.msra.mxu0 %v1290
        %2973 = vmatprep.subr.mxu0 %v1299
        %2974 = vmatpush1.msra.mxu0 %v1298
        %2975 = vmatprep.subr.mxu0 %v1307
        %2976 = vmatpush1.msra.mxu0 %v1306
        %2977 = vmatprep.subr.mxu0 %v1315
        %2978 = vmatpush1.msra.mxu0 %v1314
        %2979 = vmatprep.subr.mxu0 %v1323
        %2980 = vmatpush1.msra.mxu0 %v1322
        %2981 = vmatprep.subr.mxu0 %v1331
        %2982 = vmatpush1.msra.mxu0 %v1330
        %2983 = vmatprep.subr.mxu0 %v1339
        %2984 = vmatpush1.msra.mxu0 %v1338
        %2985 = vmatprep.mubr.f32.mxu0 %v231
        %2986 = vmatmul.mubr.f32.gmra.mrb[0].mxu0 %v230
        %v2987 = vpop.f32.mrb[0].mxu0
        %v2988 = vadd.f32 %v2875, %v2987
        %v2989 = vpop.f32.mrb[0].mxu0
        %v2990 = vadd.f32 %v2877, %v2989
        %2991 = vmatprep.mubr.f32.mxu0 %v243
        %2992 = vmatmul.mubr.f32.gmra.mrb[0].mxu0 %v242
        %v2993 = vpop.f32.mrb[0].mxu0
        %v2994 = vadd.f32 %v2881, %v2993
        %v2995 = vpop.f32.mrb[0].mxu0
        %v2996 = vadd.f32 %v2883, %v2995
        %2997 = vmatprep.mubr.f32.mxu0 %v255
        %2998 = vmatmul.mubr.f32.gmra.mrb[0].mxu0 %v254
        %v2999 = vpop.f32.mrb[0].mxu0
        %v3000 = vadd.f32 %v2887, %v2999
        %v3001 = vpop.f32.mrb[0].mxu0
        %v3002 = vadd.f32 %v2889, %v3001
        %3003 = vmatprep.mubr.f32.mxu0 %v267
        %3004 = vmatmul.mubr.f32.gmra.mrb[0].mxu0 %v266
        %v3005 = vpop.f32.mrb[0].mxu0
        %v3006 = vadd.f32 %v2893, %v3005
        %v3007 = vpop.f32.mrb[0].mxu0
        %v3008 = vadd.f32 %v2895, %v3007
        %3009 = vmatprep.mubr.f32.mxu0 %v279
        %3010 = vmatmul.mubr.f32.gmra.mrb[0].mxu0 %v278
        %v3011 = vpop.f32.mrb[0].mxu0
        %v3012 = vadd.f32 %v2899, %v3011
        %v3013 = vpop.f32.mrb[0].mxu0
        %v3014 = vadd.f32 %v2901, %v3013
        %3015 = vmatprep.mubr.f32.mxu0 %v291
        %3016 = vmatmul.mubr.f32.gmra.mrb[0].mxu0 %v290
        %v3017 = vpop.f32.mrb[0].mxu0
        %v3018 = vadd.f32 %v2905, %v3017
        %v3019 = vpop.f32.mrb[0].mxu0
        %v3020 = vadd.f32 %v2907, %v3019
        %3021 = vmatprep.mubr.f32.mxu0 %v303
        %3022 = vmatmul.mubr.f32.gmra.mrb[0].mxu0 %v302
        %v3023 = vpop.f32.mrb[0].mxu0
        %v3024 = vadd.f32 %v2911, %v3023
        %v3025 = vpop.f32.mrb[0].mxu0
        %v3026 = vadd.f32 %v2913, %v3025
        %3027 = vmatprep.mubr.f32.mxu0 %v315
        %3028 = vmatmul.mubr.f32.gmra.mrb[0].mxu0 %v314
        %v3029 = vpop.f32.mrb[0].mxu0
        %v3030 = vadd.f32 %v2917, %v3029
        %v3031 = vpop.f32.mrb[0].mxu0
        %v3032 = vadd.f32 %v2919, %v3031
        %3033 = vdwg.mxu0
        %3034 = vmatprep.subr.mxu0 %v1347
        %3035 = vmatpush1.msra.mxu0 %v1346
        %3036 = vmatprep.subr.mxu0 %v1355
        %3037 = vmatpush1.msra.mxu0 %v1354
        %3038 = vmatprep.subr.mxu0 %v1363
        %3039 = vmatpush1.msra.mxu0 %v1362
        %3040 = vmatprep.subr.mxu0 %v1371
        %3041 = vmatpush1.msra.mxu0 %v1370
        %3042 = vmatprep.subr.mxu0 %v1379
        %3043 = vmatpush1.msra.mxu0 %v1378
        %3044 = vmatprep.subr.mxu0 %v1387
        %3045 = vmatpush1.msra.mxu0 %v1386
        %3046 = vmatprep.subr.mxu0 %v1395
        %3047 = vmatpush1.msra.mxu0 %v1394
        %3048 = vmatprep.subr.mxu0 %v1403
        %3049 = vmatpush1.msra.mxu0 %v1402
        %3050 = vmatprep.subr.mxu0 %v1411
        %3051 = vmatpush1.msra.mxu0 %v1410
        %3052 = vmatprep.subr.mxu0 %v1419
        %3053 = vmatpush1.msra.mxu0 %v1418
        %3054 = vmatprep.subr.mxu0 %v1427
        %3055 = vmatpush1.msra.mxu0 %v1426
        %3056 = vmatprep.subr.mxu0 %v1435
        %3057 = vmatpush1.msra.mxu0 %v1434
        %3058 = vmatprep.subr.mxu0 %v1443
        %3059 = vmatpush1.msra.mxu0 %v1442
        %3060 = vmatprep.subr.mxu0 %v1451
        %3061 = vmatpush1.msra.mxu0 %v1450
        %3062 = vmatprep.subr.mxu0 %v1459
        %3063 = vmatpush1.msra.mxu0 %v1458
        %3064 = vmatprep.subr.mxu0 %v1467
        %3065 = vmatpush1.msra.mxu0 %v1466
        %3066 = vmatprep.subr.mxu0 %v1475
        %3067 = vmatpush1.msra.mxu0 %v1474
        %3068 = vmatprep.subr.mxu0 %v1483
        %3069 = vmatpush1.msra.mxu0 %v1482
        %3070 = vmatprep.subr.mxu0 %v1491
        %3071 = vmatpush1.msra.mxu0 %v1490
        %3072 = vmatprep.subr.mxu0 %v1499
        %3073 = vmatpush1.msra.mxu0 %v1498
        %3074 = vmatprep.subr.mxu0 %v1507
        %3075 = vmatpush1.msra.mxu0 %v1506
        %3076 = vmatprep.subr.mxu0 %v1515
        %3077 = vmatpush1.msra.mxu0 %v1514
        %3078 = vmatprep.subr.mxu0 %v1523
        %3079 = vmatpush1.msra.mxu0 %v1522
        %3080 = vmatprep.subr.mxu0 %v1531
        %3081 = vmatpush1.msra.mxu0 %v1530
        %3082 = vmatprep.subr.mxu0 %v1539
        %3083 = vmatpush1.msra.mxu0 %v1538
        %3084 = vmatprep.subr.mxu0 %v1547
        %3085 = vmatpush1.msra.mxu0 %v1546
        %3086 = vmatprep.subr.mxu0 %v1555
        %3087 = vmatpush1.msra.mxu0 %v1554
        %3088 = vmatprep.subr.mxu0 %v1563
        %3089 = vmatpush1.msra.mxu0 %v1562
        %3090 = vmatprep.subr.mxu0 %v1571
        %3091 = vmatpush1.msra.mxu0 %v1570
        %3092 = vmatprep.subr.mxu0 %v1579
        %3093 = vmatpush1.msra.mxu0 %v1578
        %3094 = vmatprep.subr.mxu0 %v1587
        %3095 = vmatpush1.msra.mxu0 %v1586
        %3096 = vmatprep.subr.mxu0 %v1595
        %3097 = vmatpush1.msra.mxu0 %v1594
        %3098 = vmatprep.mubr.f32.mxu0 %v233
        %3099 = vmatmul.mubr.f32.gmra.mrb[0].mxu0 %v232
        %v3100 = vpop.f32.mrb[0].mxu0
        %v3101 = vadd.f32 %v2988, %v3100
        %v3102 = vpop.f32.mrb[0].mxu0
        %v3103 = vadd.f32 %v2990, %v3102
        %3104 = vmatprep.mubr.f32.mxu0 %v245
        %3105 = vmatmul.mubr.f32.gmra.mrb[0].mxu0 %v244
        %v3106 = vpop.f32.mrb[0].mxu0
        %v3107 = vadd.f32 %v2994, %v3106
        %v3108 = vpop.f32.mrb[0].mxu0
        %v3109 = vadd.f32 %v2996, %v3108
        %3110 = vmatprep.mubr.f32.mxu0 %v257
        %3111 = vmatmul.mubr.f32.gmra.mrb[0].mxu0 %v256
        %v3112 = vpop.f32.mrb[0].mxu0
        %v3113 = vadd.f32 %v3000, %v3112
        %v3114 = vpop.f32.mrb[0].mxu0
        %v3115 = vadd.f32 %v3002, %v3114
        %3116 = vmatprep.mubr.f32.mxu0 %v269
        %3117 = vmatmul.mubr.f32.gmra.mrb[0].mxu0 %v268
        %v3118 = vpop.f32.mrb[0].mxu0
        %v3119 = vadd.f32 %v3006, %v3118
        %v3120 = vpop.f32.mrb[0].mxu0
        %v3121 = vadd.f32 %v3008, %v3120
        %3122 = vmatprep.mubr.f32.mxu0 %v281
        %3123 = vmatmul.mubr.f32.gmra.mrb[0].mxu0 %v280
        %v3124 = vpop.f32.mrb[0].mxu0
        %v3125 = vadd.f32 %v3012, %v3124
        %v3126 = vpop.f32.mrb[0].mxu0
        %v3127 = vadd.f32 %v3014, %v3126
        %3128 = vmatprep.mubr.f32.mxu0 %v293
        %3129 = vmatmul.mubr.f32.gmra.mrb[0].mxu0 %v292
        %v3130 = vpop.f32.mrb[0].mxu0
        %v3131 = vadd.f32 %v3018, %v3130
        %v3132 = vpop.f32.mrb[0].mxu0
        %v3133 = vadd.f32 %v3020, %v3132
        %3134 = vmatprep.mubr.f32.mxu0 %v305
        %3135 = vmatmul.mubr.f32.gmra.mrb[0].mxu0 %v304
        %v3136 = vpop.f32.mrb[0].mxu0
        %v3137 = vadd.f32 %v3024, %v3136
        %v3138 = vpop.f32.mrb[0].mxu0
        %v3139 = vadd.f32 %v3026, %v3138
        %3140 = vmatprep.mubr.f32.mxu0 %v317
        %3141 = vmatmul.mubr.f32.gmra.mrb[0].mxu0 %v316
        %v3142 = vpop.f32.mrb[0].mxu0
        %v3143 = vadd.f32 %v3030, %v3142
        %v3144 = vpop.f32.mrb[0].mxu0
        %v3145 = vadd.f32 %v3032, %v3144
        %3146 = vdwg.mxu0
        %3147 = vmatprep.subr.mxu0 %v1603
        %3148 = vmatpush1.msra.mxu0 %v1602
        %3149 = vmatprep.subr.mxu0 %v1611
        %3150 = vmatpush1.msra.mxu0 %v1610
        %3151 = vmatprep.subr.mxu0 %v1619
        %3152 = vmatpush1.msra.mxu0 %v1618
        %3153 = vmatprep.subr.mxu0 %v1627
        %3154 = vmatpush1.msra.mxu0 %v1626
        %3155 = vmatprep.subr.mxu0 %v1635
        %3156 = vmatpush1.msra.mxu0 %v1634
        %3157 = vmatprep.subr.mxu0 %v1643
        %3158 = vmatpush1.msra.mxu0 %v1642
        %3159 = vmatprep.subr.mxu0 %v1651
        %3160 = vmatpush1.msra.mxu0 %v1650
        %3161 = vmatprep.subr.mxu0 %v1659
        %3162 = vmatpush1.msra.mxu0 %v1658
        %3163 = vmatprep.subr.mxu0 %v1667
        %3164 = vmatpush1.msra.mxu0 %v1666
        %3165 = vmatprep.subr.mxu0 %v1675
        %3166 = vmatpush1.msra.mxu0 %v1674
        %3167 = vmatprep.subr.mxu0 %v1683
        %3168 = vmatpush1.msra.mxu0 %v1682
        %3169 = vmatprep.subr.mxu0 %v1691
        %3170 = vmatpush1.msra.mxu0 %v1690
        %3171 = vmatprep.subr.mxu0 %v1699
        %3172 = vmatpush1.msra.mxu0 %v1698
        %3173 = vmatprep.subr.mxu0 %v1707
        %3174 = vmatpush1.msra.mxu0 %v1706
        %3175 = vmatprep.subr.mxu0 %v1715
        %3176 = vmatpush1.msra.mxu0 %v1714
        %3177 = vmatprep.subr.mxu0 %v1723
        %3178 = vmatpush1.msra.mxu0 %v1722
        %3179 = vmatprep.subr.mxu0 %v1731
        %3180 = vmatpush1.msra.mxu0 %v1730
        %3181 = vmatprep.subr.mxu0 %v1739
        %3182 = vmatpush1.msra.mxu0 %v1738
        %3183 = vmatprep.subr.mxu0 %v1747
        %3184 = vmatpush1.msra.mxu0 %v1746
        %3185 = vmatprep.subr.mxu0 %v1755
        %3186 = vmatpush1.msra.mxu0 %v1754
        %3187 = vmatprep.subr.mxu0 %v1763
        %3188 = vmatpush1.msra.mxu0 %v1762
        %3189 = vmatprep.subr.mxu0 %v1771
        %3190 = vmatpush1.msra.mxu0 %v1770
        %3191 = vmatprep.subr.mxu0 %v1779
        %3192 = vmatpush1.msra.mxu0 %v1778
        %3193 = vmatprep.subr.mxu0 %v1787
        %3194 = vmatpush1.msra.mxu0 %v1786
        %3195 = vmatprep.subr.mxu0 %v1795
        %3196 = vmatpush1.msra.mxu0 %v1794
        %3197 = vmatprep.subr.mxu0 %v1803
        %3198 = vmatpush1.msra.mxu0 %v1802
        %3199 = vmatprep.subr.mxu0 %v1811
        %3200 = vmatpush1.msra.mxu0 %v1810
        %3201 = vmatprep.subr.mxu0 %v1819
        %3202 = vmatpush1.msra.mxu0 %v1818
        %3203 = vmatprep.subr.mxu0 %v1827
        %3204 = vmatpush1.msra.mxu0 %v1826
        %3205 = vmatprep.subr.mxu0 %v1835
        %3206 = vmatpush1.msra.mxu0 %v1834
        %3207 = vmatprep.subr.mxu0 %v1843
        %3208 = vmatpush1.msra.mxu0 %v1842
        %3209 = vmatprep.subr.mxu0 %v1851
        %3210 = vmatpush1.msra.mxu0 %v1850
        %3211 = vmatprep.mubr.f32.mxu0 %v235
        %3212 = vmatmul.mubr.f32.gmra.mrb[0].mxu0 %v234
        %v3213 = vpop.f32.mrb[0].mxu0
        %v3214 = vadd.f32 %v3101, %v3213
        %v3215 = vpop.f32.mrb[0].mxu0
        %v3216 = vadd.f32 %v3103, %v3215
        %3217 = vmatprep.mubr.f32.mxu0 %v247
        %3218 = vmatmul.mubr.f32.gmra.mrb[0].mxu0 %v246
        %v3219 = vpop.f32.mrb[0].mxu0
        %v3220 = vadd.f32 %v3107, %v3219
        %v3221 = vpop.f32.mrb[0].mxu0
        %v3222 = vadd.f32 %v3109, %v3221
        %3223 = vmatprep.mubr.f32.mxu0 %v259
        %3224 = vmatmul.mubr.f32.gmra.mrb[0].mxu0 %v258
        %v3225 = vpop.f32.mrb[0].mxu0
        %v3226 = vadd.f32 %v3113, %v3225
        %v3227 = vpop.f32.mrb[0].mxu0
        %v3228 = vadd.f32 %v3115, %v3227
        %3229 = vmatprep.mubr.f32.mxu0 %v271
        %3230 = vmatmul.mubr.f32.gmra.mrb[0].mxu0 %v270
        %v3231 = vpop.f32.mrb[0].mxu0
        %v3232 = vadd.f32 %v3119, %v3231
        %v3233 = vpop.f32.mrb[0].mxu0
        %v3234 = vadd.f32 %v3121, %v3233
        %3235 = vmatprep.mubr.f32.mxu0 %v283
        %3236 = vmatmul.mubr.f32.gmra.mrb[0].mxu0 %v282
        %v3237 = vpop.f32.mrb[0].mxu0
        %v3238 = vadd.f32 %v3125, %v3237
        %v3239 = vpop.f32.mrb[0].mxu0
        %v3240 = vadd.f32 %v3127, %v3239
        %3241 = vmatprep.mubr.f32.mxu0 %v295
        %3242 = vmatmul.mubr.f32.gmra.mrb[0].mxu0 %v294
        %v3243 = vpop.f32.mrb[0].mxu0
        %v3244 = vadd.f32 %v3131, %v3243
        %v3245 = vpop.f32.mrb[0].mxu0
        %v3246 = vadd.f32 %v3133, %v3245
        %3247 = vmatprep.mubr.f32.mxu0 %v307
        %3248 = vmatmul.mubr.f32.gmra.mrb[0].mxu0 %v306
        %v3249 = vpop.f32.mrb[0].mxu0
        %v3250 = vadd.f32 %v3137, %v3249
        %v3251 = vpop.f32.mrb[0].mxu0
        %v3252 = vadd.f32 %v3139, %v3251
        %3253 = vmatprep.mubr.f32.mxu0 %v319
        %3254 = vmatmul.mubr.f32.gmra.mrb[0].mxu0 %v318
        %v3255 = vpop.f32.mrb[0].mxu0
        %v3256 = vadd.f32 %v3143, %v3255
        %v3257 = vpop.f32.mrb[0].mxu0
        %v3258 = vadd.f32 %v3145, %v3257
        %3259 = vdwg.mxu0
        %3260 = vmatprep.subr.mxu0 %v325
        %3261 = vmatpush1.msra.mxu0 %v324
        %3262 = vmatprep.subr.mxu0 %v333
        %3263 = vmatpush1.msra.mxu0 %v332
        %3264 = vmatprep.subr.mxu0 %v341
        %3265 = vmatpush1.msra.mxu0 %v340
        %3266 = vmatprep.subr.mxu0 %v349
        %3267 = vmatpush1.msra.mxu0 %v348
        %3268 = vmatprep.subr.mxu0 %v357
        %3269 = vmatpush1.msra.mxu0 %v356
        %3270 = vmatprep.subr.mxu0 %v365
        %3271 = vmatpush1.msra.mxu0 %v364
        %3272 = vmatprep.subr.mxu0 %v373
        %3273 = vmatpush1.msra.mxu0 %v372
        %3274 = vmatprep.subr.mxu0 %v381
        %3275 = vmatpush1.msra.mxu0 %v380
        %3276 = vmatprep.subr.mxu0 %v389
        %3277 = vmatpush1.msra.mxu0 %v388
        %3278 = vmatprep.subr.mxu0 %v397
        %3279 = vmatpush1.msra.mxu0 %v396
        %3280 = vmatprep.subr.mxu0 %v405
        %3281 = vmatpush1.msra.mxu0 %v404
        %3282 = vmatprep.subr.mxu0 %v413
        %3283 = vmatpush1.msra.mxu0 %v412
        %3284 = vmatprep.subr.mxu0 %v421
        %3285 = vmatpush1.msra.mxu0 %v420
        %3286 = vmatprep.subr.mxu0 %v429
        %3287 = vmatpush1.msra.mxu0 %v428
        %3288 = vmatprep.subr.mxu0 %v437
        %3289 = vmatpush1.msra.mxu0 %v436
        %3290 = vmatprep.subr.mxu0 %v445
        %3291 = vmatpush1.msra.mxu0 %v444
        %3292 = vmatprep.subr.mxu0 %v453
        %3293 = vmatpush1.msra.mxu0 %v452
        %3294 = vmatprep.subr.mxu0 %v461
        %3295 = vmatpush1.msra.mxu0 %v460
        %3296 = vmatprep.subr.mxu0 %v469
        %3297 = vmatpush1.msra.mxu0 %v468
        %3298 = vmatprep.subr.mxu0 %v477
        %3299 = vmatpush1.msra.mxu0 %v476
        %3300 = vmatprep.subr.mxu0 %v485
        %3301 = vmatpush1.msra.mxu0 %v484
        %3302 = vmatprep.subr.mxu0 %v493
        %3303 = vmatpush1.msra.mxu0 %v492
        %3304 = vmatprep.subr.mxu0 %v501
        %3305 = vmatpush1.msra.mxu0 %v500
        %3306 = vmatprep.subr.mxu0 %v509
        %3307 = vmatpush1.msra.mxu0 %v508
        %3308 = vmatprep.subr.mxu0 %v517
        %3309 = vmatpush1.msra.mxu0 %v516
        %3310 = vmatprep.subr.mxu0 %v525
        %3311 = vmatpush1.msra.mxu0 %v524
        %3312 = vmatprep.subr.mxu0 %v533
        %3313 = vmatpush1.msra.mxu0 %v532
        %3314 = vmatprep.subr.mxu0 %v541
        %3315 = vmatpush1.msra.mxu0 %v540
        %3316 = vmatprep.subr.mxu0 %v549
        %3317 = vmatpush1.msra.mxu0 %v548
        %3318 = vmatprep.subr.mxu0 %v557
        %3319 = vmatpush1.msra.mxu0 %v556
        %3320 = vmatprep.subr.mxu0 %v565
        %3321 = vmatpush1.msra.mxu0 %v564
        %3322 = vmatprep.subr.mxu0 %v573
        %3323 = vmatpush1.msra.mxu0 %v572
        %3324 = vmatprep.mubr.f32.mxu0 %v225
        %3325 = vmatmul.mubr.f32.gmra.mrb[0].mxu0 %v224
        %v3326 = vpop.f32.mrb[0].mxu0
        %v3327 = vadd.f32 %v1867, %v3326
        %v3328 = vpop.f32.mrb[0].mxu0
        %v3329 = vadd.f32 %v1867, %v3328
        %3330 = vmatprep.mubr.f32.mxu0 %v237
        %3331 = vmatmul.mubr.f32.gmra.mrb[0].mxu0 %v236
        %v3332 = vpop.f32.mrb[0].mxu0
        %v3333 = vadd.f32 %v1872, %v3332
        %v3334 = vpop.f32.mrb[0].mxu0
        %v3335 = vadd.f32 %v1872, %v3334
        %3336 = vmatprep.mubr.f32.mxu0 %v249
        %3337 = vmatmul.mubr.f32.gmra.mrb[0].mxu0 %v248
        %v3338 = vpop.f32.mrb[0].mxu0
        %v3339 = vadd.f32 %v1877, %v3338
        %v3340 = vpop.f32.mrb[0].mxu0
        %v3341 = vadd.f32 %v1877, %v3340
        %3342 = vmatprep.mubr.f32.mxu0 %v261
        %3343 = vmatmul.mubr.f32.gmra.mrb[0].mxu0 %v260
        %v3344 = vpop.f32.mrb[0].mxu0
        %v3345 = vadd.f32 %v1882, %v3344
        %v3346 = vpop.f32.mrb[0].mxu0
        %v3347 = vadd.f32 %v1882, %v3346
        %3348 = vmatprep.mubr.f32.mxu0 %v273
        %3349 = vmatmul.mubr.f32.gmra.mrb[0].mxu0 %v272
        %v3350 = vpop.f32.mrb[0].mxu0
        %v3351 = vadd.f32 %v1887, %v3350
        %v3352 = vpop.f32.mrb[0].mxu0
        %v3353 = vadd.f32 %v1887, %v3352
        %3354 = vmatprep.mubr.f32.mxu0 %v285
        %3355 = vmatmul.mubr.f32.gmra.mrb[0].mxu0 %v284
        %v3356 = vpop.f32.mrb[0].mxu0
        %v3357 = vadd.f32 %v1892, %v3356
        %v3358 = vpop.f32.mrb[0].mxu0
        %v3359 = vadd.f32 %v1892, %v3358
        %3360 = vmatprep.mubr.f32.mxu0 %v297
        %3361 = vmatmul.mubr.f32.gmra.mrb[0].mxu0 %v296
        %v3362 = vpop.f32.mrb[0].mxu0
        %v3363 = vadd.f32 %v1897, %v3362
        %v3364 = vpop.f32.mrb[0].mxu0
        %v3365 = vadd.f32 %v1897, %v3364
        %3366 = vmatprep.mubr.f32.mxu0 %v309
        %3367 = vmatmul.mubr.f32.gmra.mrb[0].mxu0 %v308
        %v3368 = vpop.f32.mrb[0].mxu0
        %v3369 = vadd.f32 %v1902, %v3368
        %v3370 = vpop.f32.mrb[0].mxu0
        %v3371 = vadd.f32 %v1902, %v3370
        %3372 = vdwg.mxu0
        %3373 = vmatprep.subr.mxu0 %v581
        %3374 = vmatpush1.msra.mxu0 %v580
        %3375 = vmatprep.subr.mxu0 %v589
        %3376 = vmatpush1.msra.mxu0 %v588
        %3377 = vmatprep.subr.mxu0 %v597
        %3378 = vmatpush1.msra.mxu0 %v596
        %3379 = vmatprep.subr.mxu0 %v605
        %3380 = vmatpush1.msra.mxu0 %v604
        %3381 = vmatprep.subr.mxu0 %v613
        %3382 = vmatpush1.msra.mxu0 %v612
        %3383 = vmatprep.subr.mxu0 %v621
        %3384 = vmatpush1.msra.mxu0 %v620
        %3385 = vmatprep.subr.mxu0 %v629
        %3386 = vmatpush1.msra.mxu0 %v628
        %3387 = vmatprep.subr.mxu0 %v637
        %3388 = vmatpush1.msra.mxu0 %v636
        %3389 = vmatprep.subr.mxu0 %v645
        %3390 = vmatpush1.msra.mxu0 %v644
        %3391 = vmatprep.subr.mxu0 %v653
        %3392 = vmatpush1.msra.mxu0 %v652
        %3393 = vmatprep.subr.mxu0 %v661
        %3394 = vmatpush1.msra.mxu0 %v660
        %3395 = vmatprep.subr.mxu0 %v669
        %3396 = vmatpush1.msra.mxu0 %v668
        %3397 = vmatprep.subr.mxu0 %v677
        %3398 = vmatpush1.msra.mxu0 %v676
        %3399 = vmatprep.subr.mxu0 %v685
        %3400 = vmatpush1.msra.mxu0 %v684
        %3401 = vmatprep.subr.mxu0 %v693
        %3402 = vmatpush1.msra.mxu0 %v692
        %3403 = vmatprep.subr.mxu0 %v701
        %3404 = vmatpush1.msra.mxu0 %v700
        %3405 = vmatprep.subr.mxu0 %v709
        %3406 = vmatpush1.msra.mxu0 %v708
        %3407 = vmatprep.subr.mxu0 %v717
        %3408 = vmatpush1.msra.mxu0 %v716
        %3409 = vmatprep.subr.mxu0 %v725
        %3410 = vmatpush1.msra.mxu0 %v724
        %3411 = vmatprep.subr.mxu0 %v733
        %3412 = vmatpush1.msra.mxu0 %v732
        %3413 = vmatprep.subr.mxu0 %v741
        %3414 = vmatpush1.msra.mxu0 %v740
        %3415 = vmatprep.subr.mxu0 %v749
        %3416 = vmatpush1.msra.mxu0 %v748
        %3417 = vmatprep.subr.mxu0 %v757
        %3418 = vmatpush1.msra.mxu0 %v756
        %3419 = vmatprep.subr.mxu0 %v765
        %3420 = vmatpush1.msra.mxu0 %v764
        %3421 = vmatprep.subr.mxu0 %v773
        %3422 = vmatpush1.msra.mxu0 %v772
        %3423 = vmatprep.subr.mxu0 %v781
        %3424 = vmatpush1.msra.mxu0 %v780
        %3425 = vmatprep.subr.mxu0 %v789
        %3426 = vmatpush1.msra.mxu0 %v788
        %3427 = vmatprep.subr.mxu0 %v797
        %3428 = vmatpush1.msra.mxu0 %v796
        %3429 = vmatprep.subr.mxu0 %v805
        %3430 = vmatpush1.msra.mxu0 %v804
        %3431 = vmatprep.subr.mxu0 %v813
        %3432 = vmatpush1.msra.mxu0 %v812
        %3433 = vmatprep.subr.mxu0 %v821
        %3434 = vmatpush1.msra.mxu0 %v820
        %3435 = vmatprep.subr.mxu0 %v829
        %3436 = vmatpush1.msra.mxu0 %v828
        %3437 = vmatprep.mubr.f32.mxu0 %v227
        %3438 = vmatmul.mubr.f32.gmra.mrb[0].mxu0 %v226
        %v3439 = vpop.f32.mrb[0].mxu0
        %v3440 = vadd.f32 %v3327, %v3439
        %v3441 = vpop.f32.mrb[0].mxu0
        %v3442 = vadd.f32 %v3329, %v3441
        %3443 = vmatprep.mubr.f32.mxu0 %v239
        %3444 = vmatmul.mubr.f32.gmra.mrb[0].mxu0 %v238
        %v3445 = vpop.f32.mrb[0].mxu0
        %v3446 = vadd.f32 %v3333, %v3445
        %v3447 = vpop.f32.mrb[0].mxu0
        %v3448 = vadd.f32 %v3335, %v3447
        %3449 = vmatprep.mubr.f32.mxu0 %v251
        %3450 = vmatmul.mubr.f32.gmra.mrb[0].mxu0 %v250
        %v3451 = vpop.f32.mrb[0].mxu0
        %v3452 = vadd.f32 %v3339, %v3451
        %v3453 = vpop.f32.mrb[0].mxu0
        %v3454 = vadd.f32 %v3341, %v3453
        %3455 = vmatprep.mubr.f32.mxu0 %v263
        %3456 = vmatmul.mubr.f32.gmra.mrb[0].mxu0 %v262
        %v3457 = vpop.f32.mrb[0].mxu0
        %v3458 = vadd.f32 %v3345, %v3457
        %v3459 = vpop.f32.mrb[0].mxu0
        %v3460 = vadd.f32 %v3347, %v3459
        %3461 = vmatprep.mubr.f32.mxu0 %v275
        %3462 = vmatmul.mubr.f32.gmra.mrb[0].mxu0 %v274
        %v3463 = vpop.f32.mrb[0].mxu0
        %v3464 = vadd.f32 %v3351, %v3463
        %v3465 = vpop.f32.mrb[0].mxu0
        %v3466 = vadd.f32 %v3353, %v3465
        %3467 = vmatprep.mubr.f32.mxu0 %v287
        %3468 = vmatmul.mubr.f32.gmra.mrb[0].mxu0 %v286
        %v3469 = vpop.f32.mrb[0].mxu0
        %v3470 = vadd.f32 %v3357, %v3469
        %v3471 = vpop.f32.mrb[0].mxu0
        %v3472 = vadd.f32 %v3359, %v3471
        %3473 = vmatprep.mubr.f32.mxu0 %v299
        %3474 = vmatmul.mubr.f32.gmra.mrb[0].mxu0 %v298
        %v3475 = vpop.f32.mrb[0].mxu0
        %v3476 = vadd.f32 %v3363, %v3475
        %v3477 = vpop.f32.mrb[0].mxu0
        %v3478 = vadd.f32 %v3365, %v3477
        %3479 = vmatprep.mubr.f32.mxu0 %v311
        %3480 = vmatmul.mubr.f32.gmra.mrb[0].mxu0 %v310
        %v3481 = vpop.f32.mrb[0].mxu0
        %v3482 = vadd.f32 %v3369, %v3481
        %v3483 = vpop.f32.mrb[0].mxu0
        %v3484 = vadd.f32 %v3371, %v3483
        %3485 = vdwg.mxu0
        %3486 = vmatprep.subr.mxu0 %v837
        %3487 = vmatpush1.msra.mxu0 %v836
        %3488 = vmatprep.subr.mxu0 %v845
        %3489 = vmatpush1.msra.mxu0 %v844
        %3490 = vmatprep.subr.mxu0 %v853
        %3491 = vmatpush1.msra.mxu0 %v852
        %3492 = vmatprep.subr.mxu0 %v861
        %3493 = vmatpush1.msra.mxu0 %v860
        %3494 = vmatprep.subr.mxu0 %v869
        %3495 = vmatpush1.msra.mxu0 %v868
        %3496 = vmatprep.subr.mxu0 %v877
        %3497 = vmatpush1.msra.mxu0 %v876
        %3498 = vmatprep.subr.mxu0 %v885
        %3499 = vmatpush1.msra.mxu0 %v884
        %3500 = vmatprep.subr.mxu0 %v893
        %3501 = vmatpush1.msra.mxu0 %v892
        %3502 = vmatprep.subr.mxu0 %v901
        %3503 = vmatpush1.msra.mxu0 %v900
        %3504 = vmatprep.subr.mxu0 %v909
        %3505 = vmatpush1.msra.mxu0 %v908
        %3506 = vmatprep.subr.mxu0 %v917
        %3507 = vmatpush1.msra.mxu0 %v916
        %3508 = vmatprep.subr.mxu0 %v925
        %3509 = vmatpush1.msra.mxu0 %v924
        %3510 = vmatprep.subr.mxu0 %v933
        %3511 = vmatpush1.msra.mxu0 %v932
        %3512 = vmatprep.subr.mxu0 %v941
        %3513 = vmatpush1.msra.mxu0 %v940
        %3514 = vmatprep.subr.mxu0 %v949
        %3515 = vmatpush1.msra.mxu0 %v948
        %3516 = vmatprep.subr.mxu0 %v957
        %3517 = vmatpush1.msra.mxu0 %v956
        %3518 = vmatprep.subr.mxu0 %v965
        %3519 = vmatpush1.msra.mxu0 %v964
        %3520 = vmatprep.subr.mxu0 %v973
        %3521 = vmatpush1.msra.mxu0 %v972
        %3522 = vmatprep.subr.mxu0 %v981
        %3523 = vmatpush1.msra.mxu0 %v980
        %3524 = vmatprep.subr.mxu0 %v989
        %3525 = vmatpush1.msra.mxu0 %v988
        %3526 = vmatprep.subr.mxu0 %v997
        %3527 = vmatpush1.msra.mxu0 %v996
        %3528 = vmatprep.subr.mxu0 %v1005
        %3529 = vmatpush1.msra.mxu0 %v1004
        %3530 = vmatprep.subr.mxu0 %v1013
        %3531 = vmatpush1.msra.mxu0 %v1012
        %3532 = vmatprep.subr.mxu0 %v1021
        %3533 = vmatpush1.msra.mxu0 %v1020
        %3534 = vmatprep.subr.mxu0 %v1029
        %3535 = vmatpush1.msra.mxu0 %v1028
        %3536 = vmatprep.subr.mxu0 %v1037
        %3537 = vmatpush1.msra.mxu0 %v1036
        %3538 = vmatprep.subr.mxu0 %v1045
        %3539 = vmatpush1.msra.mxu0 %v1044
        %3540 = vmatprep.subr.mxu0 %v1053
        %3541 = vmatpush1.msra.mxu0 %v1052
        %3542 = vmatprep.subr.mxu0 %v1061
        %3543 = vmatpush1.msra.mxu0 %v1060
        %3544 = vmatprep.subr.mxu0 %v1069
        %3545 = vmatpush1.msra.mxu0 %v1068
        %3546 = vmatprep.subr.mxu0 %v1077
        %3547 = vmatpush1.msra.mxu0 %v1076
        %3548 = vmatprep.subr.mxu0 %v1085
        %3549 = vmatpush1.msra.mxu0 %v1084
        %3550 = vmatprep.mubr.f32.mxu0 %v229
        %3551 = vmatmul.mubr.f32.gmra.mrb[0].mxu0 %v228
        %v3552 = vpop.f32.mrb[0].mxu0
        %v3553 = vadd.f32 %v3440, %v3552
        %v3554 = vpop.f32.mrb[0].mxu0
        %v3555 = vadd.f32 %v3442, %v3554
        %3556 = vmatprep.mubr.f32.mxu0 %v241
        %3557 = vmatmul.mubr.f32.gmra.mrb[0].mxu0 %v240
        %v3558 = vpop.f32.mrb[0].mxu0
        %v3559 = vadd.f32 %v3446, %v3558
        %v3560 = vpop.f32.mrb[0].mxu0
        %v3561 = vadd.f32 %v3448, %v3560
        %3562 = vmatprep.mubr.f32.mxu0 %v253
        %3563 = vmatmul.mubr.f32.gmra.mrb[0].mxu0 %v252
        %v3564 = vpop.f32.mrb[0].mxu0
        %v3565 = vadd.f32 %v3452, %v3564
        %v3566 = vpop.f32.mrb[0].mxu0
        %v3567 = vadd.f32 %v3454, %v3566
        %3568 = vmatprep.mubr.f32.mxu0 %v265
        %3569 = vmatmul.mubr.f32.gmra.mrb[0].mxu0 %v264
        %v3570 = vpop.f32.mrb[0].mxu0
        %v3571 = vadd.f32 %v3458, %v3570
        %v3572 = vpop.f32.mrb[0].mxu0
        %v3573 = vadd.f32 %v3460, %v3572
        %3574 = vmatprep.mubr.f32.mxu0 %v277
        %3575 = vmatmul.mubr.f32.gmra.mrb[0].mxu0 %v276
        %v3576 = vpop.f32.mrb[0].mxu0
        %v3577 = vadd.f32 %v3464, %v3576
        %v3578 = vpop.f32.mrb[0].mxu0
        %v3579 = vadd.f32 %v3466, %v3578
        %3580 = vmatprep.mubr.f32.mxu0 %v289
        %3581 = vmatmul.mubr.f32.gmra.mrb[0].mxu0 %v288
        %v3582 = vpop.f32.mrb[0].mxu0
        %v3583 = vadd.f32 %v3470, %v3582
        %v3584 = vpop.f32.mrb[0].mxu0
        %v3585 = vadd.f32 %v3472, %v3584
        %3586 = vmatprep.mubr.f32.mxu0 %v301
        %3587 = vmatmul.mubr.f32.gmra.mrb[0].mxu0 %v300
        %v3588 = vpop.f32.mrb[0].mxu0
        %v3589 = vadd.f32 %v3476, %v3588
        %v3590 = vpop.f32.mrb[0].mxu0
        %v3591 = vadd.f32 %v3478, %v3590
        %3592 = vmatprep.mubr.f32.mxu0 %v313
        %3593 = vmatmul.mubr.f32.gmra.mrb[0].mxu0 %v312
        %v3594 = vpop.f32.mrb[0].mxu0
        %v3595 = vadd.f32 %v3482, %v3594
        %v3596 = vpop.f32.mrb[0].mxu0
        %v3597 = vadd.f32 %v3484, %v3596
        %3598 = vdwg.mxu0
        %3599 = vmatprep.subr.mxu0 %v1093
        %3600 = vmatpush1.msra.mxu0 %v1092
        %3601 = vmatprep.subr.mxu0 %v1101
        %3602 = vmatpush1.msra.mxu0 %v1100
        %3603 = vmatprep.subr.mxu0 %v1109
        %3604 = vmatpush1.msra.mxu0 %v1108
        %3605 = vmatprep.subr.mxu0 %v1117
        %3606 = vmatpush1.msra.mxu0 %v1116
        %3607 = vmatprep.subr.mxu0 %v1125
        %3608 = vmatpush1.msra.mxu0 %v1124
        %3609 = vmatprep.subr.mxu0 %v1133
        %3610 = vmatpush1.msra.mxu0 %v1132
        %3611 = vmatprep.subr.mxu0 %v1141
        %3612 = vmatpush1.msra.mxu0 %v1140
        %3613 = vmatprep.subr.mxu0 %v1149
        %3614 = vmatpush1.msra.mxu0 %v1148
        %3615 = vmatprep.subr.mxu0 %v1157
        %3616 = vmatpush1.msra.mxu0 %v1156
        %3617 = vmatprep.subr.mxu0 %v1165
        %3618 = vmatpush1.msra.mxu0 %v1164
        %3619 = vmatprep.subr.mxu0 %v1173
        %3620 = vmatpush1.msra.mxu0 %v1172
        %3621 = vmatprep.subr.mxu0 %v1181
        %3622 = vmatpush1.msra.mxu0 %v1180
        %3623 = vmatprep.subr.mxu0 %v1189
        %3624 = vmatpush1.msra.mxu0 %v1188
        %3625 = vmatprep.subr.mxu0 %v1197
        %3626 = vmatpush1.msra.mxu0 %v1196
        %3627 = vmatprep.subr.mxu0 %v1205
        %3628 = vmatpush1.msra.mxu0 %v1204
        %3629 = vmatprep.subr.mxu0 %v1213
        %3630 = vmatpush1.msra.mxu0 %v1212
        %3631 = vmatprep.subr.mxu0 %v1221
        %3632 = vmatpush1.msra.mxu0 %v1220
        %3633 = vmatprep.subr.mxu0 %v1229
        %3634 = vmatpush1.msra.mxu0 %v1228
        %3635 = vmatprep.subr.mxu0 %v1237
        %3636 = vmatpush1.msra.mxu0 %v1236
        %3637 = vmatprep.subr.mxu0 %v1245
        %3638 = vmatpush1.msra.mxu0 %v1244
        %3639 = vmatprep.subr.mxu0 %v1253
        %3640 = vmatpush1.msra.mxu0 %v1252
        %3641 = vmatprep.subr.mxu0 %v1261
        %3642 = vmatpush1.msra.mxu0 %v1260
        %3643 = vmatprep.subr.mxu0 %v1269
        %3644 = vmatpush1.msra.mxu0 %v1268
        %3645 = vmatprep.subr.mxu0 %v1277
        %3646 = vmatpush1.msra.mxu0 %v1276
        %3647 = vmatprep.subr.mxu0 %v1285
        %3648 = vmatpush1.msra.mxu0 %v1284
        %3649 = vmatprep.subr.mxu0 %v1293
        %3650 = vmatpush1.msra.mxu0 %v1292
        %3651 = vmatprep.subr.mxu0 %v1301
        %3652 = vmatpush1.msra.mxu0 %v1300
        %3653 = vmatprep.subr.mxu0 %v1309
        %3654 = vmatpush1.msra.mxu0 %v1308
        %3655 = vmatprep.subr.mxu0 %v1317
        %3656 = vmatpush1.msra.mxu0 %v1316
        %3657 = vmatprep.subr.mxu0 %v1325
        %3658 = vmatpush1.msra.mxu0 %v1324
        %3659 = vmatprep.subr.mxu0 %v1333
        %3660 = vmatpush1.msra.mxu0 %v1332
        %3661 = vmatprep.subr.mxu0 %v1341
        %3662 = vmatpush1.msra.mxu0 %v1340
        %3663 = vmatprep.mubr.f32.mxu0 %v231
        %3664 = vmatmul.mubr.f32.gmra.mrb[0].mxu0 %v230
        %v3665 = vpop.f32.mrb[0].mxu0
        %v3666 = vadd.f32 %v3553, %v3665
        %v3667 = vpop.f32.mrb[0].mxu0
        %v3668 = vadd.f32 %v3555, %v3667
        %3669 = vmatprep.mubr.f32.mxu0 %v243
        %3670 = vmatmul.mubr.f32.gmra.mrb[0].mxu0 %v242
        %v3671 = vpop.f32.mrb[0].mxu0
        %v3672 = vadd.f32 %v3559, %v3671
        %v3673 = vpop.f32.mrb[0].mxu0
        %v3674 = vadd.f32 %v3561, %v3673
        %3675 = vmatprep.mubr.f32.mxu0 %v255
        %3676 = vmatmul.mubr.f32.gmra.mrb[0].mxu0 %v254
        %v3677 = vpop.f32.mrb[0].mxu0
        %v3678 = vadd.f32 %v3565, %v3677
        %v3679 = vpop.f32.mrb[0].mxu0
        %v3680 = vadd.f32 %v3567, %v3679
        %3681 = vmatprep.mubr.f32.mxu0 %v267
        %3682 = vmatmul.mubr.f32.gmra.mrb[0].mxu0 %v266
        %v3683 = vpop.f32.mrb[0].mxu0
        %v3684 = vadd.f32 %v3571, %v3683
        %v3685 = vpop.f32.mrb[0].mxu0
        %v3686 = vadd.f32 %v3573, %v3685
        %3687 = vmatprep.mubr.f32.mxu0 %v279
        %3688 = vmatmul.mubr.f32.gmra.mrb[0].mxu0 %v278
        %v3689 = vpop.f32.mrb[0].mxu0
        %v3690 = vadd.f32 %v3577, %v3689
        %v3691 = vpop.f32.mrb[0].mxu0
        %v3692 = vadd.f32 %v3579, %v3691
        %3693 = vmatprep.mubr.f32.mxu0 %v291
        %3694 = vmatmul.mubr.f32.gmra.mrb[0].mxu0 %v290
        %v3695 = vpop.f32.mrb[0].mxu0
        %v3696 = vadd.f32 %v3583, %v3695
        %v3697 = vpop.f32.mrb[0].mxu0
        %v3698 = vadd.f32 %v3585, %v3697
        %3699 = vmatprep.mubr.f32.mxu0 %v303
        %3700 = vmatmul.mubr.f32.gmra.mrb[0].mxu0 %v302
        %v3701 = vpop.f32.mrb[0].mxu0
        %v3702 = vadd.f32 %v3589, %v3701
        %v3703 = vpop.f32.mrb[0].mxu0
        %v3704 = vadd.f32 %v3591, %v3703
        %3705 = vmatprep.mubr.f32.mxu0 %v315
        %3706 = vmatmul.mubr.f32.gmra.mrb[0].mxu0 %v314
        %v3707 = vpop.f32.mrb[0].mxu0
        %v3708 = vadd.f32 %v3595, %v3707
        %v3709 = vpop.f32.mrb[0].mxu0
        %v3710 = vadd.f32 %v3597, %v3709
        %3711 = vdwg.mxu0
        %3712 = vmatprep.subr.mxu0 %v1349
        %3713 = vmatpush1.msra.mxu0 %v1348
        %3714 = vmatprep.subr.mxu0 %v1357
        %3715 = vmatpush1.msra.mxu0 %v1356
        %3716 = vmatprep.subr.mxu0 %v1365
        %3717 = vmatpush1.msra.mxu0 %v1364
        %3718 = vmatprep.subr.mxu0 %v1373
        %3719 = vmatpush1.msra.mxu0 %v1372
        %3720 = vmatprep.subr.mxu0 %v1381
        %3721 = vmatpush1.msra.mxu0 %v1380
        %3722 = vmatprep.subr.mxu0 %v1389
        %3723 = vmatpush1.msra.mxu0 %v1388
        %3724 = vmatprep.subr.mxu0 %v1397
        %3725 = vmatpush1.msra.mxu0 %v1396
        %3726 = vmatprep.subr.mxu0 %v1405
        %3727 = vmatpush1.msra.mxu0 %v1404
        %3728 = vmatprep.subr.mxu0 %v1413
        %3729 = vmatpush1.msra.mxu0 %v1412
        %3730 = vmatprep.subr.mxu0 %v1421
        %3731 = vmatpush1.msra.mxu0 %v1420
        %3732 = vmatprep.subr.mxu0 %v1429
        %3733 = vmatpush1.msra.mxu0 %v1428
        %3734 = vmatprep.subr.mxu0 %v1437
        %3735 = vmatpush1.msra.mxu0 %v1436
        %3736 = vmatprep.subr.mxu0 %v1445
        %3737 = vmatpush1.msra.mxu0 %v1444
        %3738 = vmatprep.subr.mxu0 %v1453
        %3739 = vmatpush1.msra.mxu0 %v1452
        %3740 = vmatprep.subr.mxu0 %v1461
        %3741 = vmatpush1.msra.mxu0 %v1460
        %3742 = vmatprep.subr.mxu0 %v1469
        %3743 = vmatpush1.msra.mxu0 %v1468
        %3744 = vmatprep.subr.mxu0 %v1477
        %3745 = vmatpush1.msra.mxu0 %v1476
        %3746 = vmatprep.subr.mxu0 %v1485
        %3747 = vmatpush1.msra.mxu0 %v1484
        %3748 = vmatprep.subr.mxu0 %v1493
        %3749 = vmatpush1.msra.mxu0 %v1492
        %3750 = vmatprep.subr.mxu0 %v1501
        %3751 = vmatpush1.msra.mxu0 %v1500
        %3752 = vmatprep.subr.mxu0 %v1509
        %3753 = vmatpush1.msra.mxu0 %v1508
        %3754 = vmatprep.subr.mxu0 %v1517
        %3755 = vmatpush1.msra.mxu0 %v1516
        %3756 = vmatprep.subr.mxu0 %v1525
        %3757 = vmatpush1.msra.mxu0 %v1524
        %3758 = vmatprep.subr.mxu0 %v1533
        %3759 = vmatpush1.msra.mxu0 %v1532
        %3760 = vmatprep.subr.mxu0 %v1541
        %3761 = vmatpush1.msra.mxu0 %v1540
        %3762 = vmatprep.subr.mxu0 %v1549
        %3763 = vmatpush1.msra.mxu0 %v1548
        %3764 = vmatprep.subr.mxu0 %v1557
        %3765 = vmatpush1.msra.mxu0 %v1556
        %3766 = vmatprep.subr.mxu0 %v1565
        %3767 = vmatpush1.msra.mxu0 %v1564
        %3768 = vmatprep.subr.mxu0 %v1573
        %3769 = vmatpush1.msra.mxu0 %v1572
        %3770 = vmatprep.subr.mxu0 %v1581
        %3771 = vmatpush1.msra.mxu0 %v1580
        %3772 = vmatprep.subr.mxu0 %v1589
        %3773 = vmatpush1.msra.mxu0 %v1588
        %3774 = vmatprep.subr.mxu0 %v1597
        %3775 = vmatpush1.msra.mxu0 %v1596
        %3776 = vmatprep.mubr.f32.mxu0 %v233
        %3777 = vmatmul.mubr.f32.gmra.mrb[0].mxu0 %v232
        %v3778 = vpop.f32.mrb[0].mxu0
        %v3779 = vadd.f32 %v3666, %v3778
        %v3780 = vpop.f32.mrb[0].mxu0
        %v3781 = vadd.f32 %v3668, %v3780
        %3782 = vmatprep.mubr.f32.mxu0 %v245
        %3783 = vmatmul.mubr.f32.gmra.mrb[0].mxu0 %v244
        %v3784 = vpop.f32.mrb[0].mxu0
        %v3785 = vadd.f32 %v3672, %v3784
        %v3786 = vpop.f32.mrb[0].mxu0
        %v3787 = vadd.f32 %v3674, %v3786
        %3788 = vmatprep.mubr.f32.mxu0 %v257
        %3789 = vmatmul.mubr.f32.gmra.mrb[0].mxu0 %v256
        %v3790 = vpop.f32.mrb[0].mxu0
        %v3791 = vadd.f32 %v3678, %v3790
        %v3792 = vpop.f32.mrb[0].mxu0
        %v3793 = vadd.f32 %v3680, %v3792
        %3794 = vmatprep.mubr.f32.mxu0 %v269
        %3795 = vmatmul.mubr.f32.gmra.mrb[0].mxu0 %v268
        %v3796 = vpop.f32.mrb[0].mxu0
        %v3797 = vadd.f32 %v3684, %v3796
        %v3798 = vpop.f32.mrb[0].mxu0
        %v3799 = vadd.f32 %v3686, %v3798
        %3800 = vmatprep.mubr.f32.mxu0 %v281
        %3801 = vmatmul.mubr.f32.gmra.mrb[0].mxu0 %v280
        %v3802 = vpop.f32.mrb[0].mxu0
        %v3803 = vadd.f32 %v3690, %v3802
        %v3804 = vpop.f32.mrb[0].mxu0
        %v3805 = vadd.f32 %v3692, %v3804
        %3806 = vmatprep.mubr.f32.mxu0 %v293
        %3807 = vmatmul.mubr.f32.gmra.mrb[0].mxu0 %v292
        %v3808 = vpop.f32.mrb[0].mxu0
        %v3809 = vadd.f32 %v3696, %v3808
        %v3810 = vpop.f32.mrb[0].mxu0
        %v3811 = vadd.f32 %v3698, %v3810
        %3812 = vmatprep.mubr.f32.mxu0 %v305
        %3813 = vmatmul.mubr.f32.gmra.mrb[0].mxu0 %v304
        %v3814 = vpop.f32.mrb[0].mxu0
        %v3815 = vadd.f32 %v3702, %v3814
        %v3816 = vpop.f32.mrb[0].mxu0
        %v3817 = vadd.f32 %v3704, %v3816
        %3818 = vmatprep.mubr.f32.mxu0 %v317
        %3819 = vmatmul.mubr.f32.gmra.mrb[0].mxu0 %v316
        %v3820 = vpop.f32.mrb[0].mxu0
        %v3821 = vadd.f32 %v3708, %v3820
        %v3822 = vpop.f32.mrb[0].mxu0
        %v3823 = vadd.f32 %v3710, %v3822
        %3824 = vdwg.mxu0
        %3825 = vmatprep.subr.mxu0 %v1605
        %3826 = vmatpush1.msra.mxu0 %v1604
        %3827 = vmatprep.subr.mxu0 %v1613
        %3828 = vmatpush1.msra.mxu0 %v1612
        %3829 = vmatprep.subr.mxu0 %v1621
        %3830 = vmatpush1.msra.mxu0 %v1620
        %3831 = vmatprep.subr.mxu0 %v1629
        %3832 = vmatpush1.msra.mxu0 %v1628
        %3833 = vmatprep.subr.mxu0 %v1637
        %3834 = vmatpush1.msra.mxu0 %v1636
        %3835 = vmatprep.subr.mxu0 %v1645
        %3836 = vmatpush1.msra.mxu0 %v1644
        %3837 = vmatprep.subr.mxu0 %v1653
        %3838 = vmatpush1.msra.mxu0 %v1652
        %3839 = vmatprep.subr.mxu0 %v1661
        %3840 = vmatpush1.msra.mxu0 %v1660
        %3841 = vmatprep.subr.mxu0 %v1669
        %3842 = vmatpush1.msra.mxu0 %v1668
        %3843 = vmatprep.subr.mxu0 %v1677
        %3844 = vmatpush1.msra.mxu0 %v1676
        %3845 = vmatprep.subr.mxu0 %v1685
        %3846 = vmatpush1.msra.mxu0 %v1684
        %3847 = vmatprep.subr.mxu0 %v1693
        %3848 = vmatpush1.msra.mxu0 %v1692
        %3849 = vmatprep.subr.mxu0 %v1701
        %3850 = vmatpush1.msra.mxu0 %v1700
        %3851 = vmatprep.subr.mxu0 %v1709
        %3852 = vmatpush1.msra.mxu0 %v1708
        %3853 = vmatprep.subr.mxu0 %v1717
        %3854 = vmatpush1.msra.mxu0 %v1716
        %3855 = vmatprep.subr.mxu0 %v1725
        %3856 = vmatpush1.msra.mxu0 %v1724
        %3857 = vmatprep.subr.mxu0 %v1733
        %3858 = vmatpush1.msra.mxu0 %v1732
        %3859 = vmatprep.subr.mxu0 %v1741
        %3860 = vmatpush1.msra.mxu0 %v1740
        %3861 = vmatprep.subr.mxu0 %v1749
        %3862 = vmatpush1.msra.mxu0 %v1748
        %3863 = vmatprep.subr.mxu0 %v1757
        %3864 = vmatpush1.msra.mxu0 %v1756
        %3865 = vmatprep.subr.mxu0 %v1765
        %3866 = vmatpush1.msra.mxu0 %v1764
        %3867 = vmatprep.subr.mxu0 %v1773
        %3868 = vmatpush1.msra.mxu0 %v1772
        %3869 = vmatprep.subr.mxu0 %v1781
        %3870 = vmatpush1.msra.mxu0 %v1780
        %3871 = vmatprep.subr.mxu0 %v1789
        %3872 = vmatpush1.msra.mxu0 %v1788
        %3873 = vmatprep.subr.mxu0 %v1797
        %3874 = vmatpush1.msra.mxu0 %v1796
        %3875 = vmatprep.subr.mxu0 %v1805
        %3876 = vmatpush1.msra.mxu0 %v1804
        %3877 = vmatprep.subr.mxu0 %v1813
        %3878 = vmatpush1.msra.mxu0 %v1812
        %3879 = vmatprep.subr.mxu0 %v1821
        %3880 = vmatpush1.msra.mxu0 %v1820
        %3881 = vmatprep.subr.mxu0 %v1829
        %3882 = vmatpush1.msra.mxu0 %v1828
        %3883 = vmatprep.subr.mxu0 %v1837
        %3884 = vmatpush1.msra.mxu0 %v1836
        %3885 = vmatprep.subr.mxu0 %v1845
        %3886 = vmatpush1.msra.mxu0 %v1844
        %3887 = vmatprep.subr.mxu0 %v1853
        %3888 = vmatpush1.msra.mxu0 %v1852
        %3889 = vmatprep.mubr.f32.mxu0 %v235
        %3890 = vmatmul.mubr.f32.gmra.mrb[0].mxu0 %v234
        %v3891 = vpop.f32.mrb[0].mxu0
        %v3892 = vadd.f32 %v3779, %v3891
        %v3893 = vpop.f32.mrb[0].mxu0
        %v3894 = vadd.f32 %v3781, %v3893
        %3895 = vmatprep.mubr.f32.mxu0 %v247
        %3896 = vmatmul.mubr.f32.gmra.mrb[0].mxu0 %v246
        %v3897 = vpop.f32.mrb[0].mxu0
        %v3898 = vadd.f32 %v3785, %v3897
        %v3899 = vpop.f32.mrb[0].mxu0
        %v3900 = vadd.f32 %v3787, %v3899
        %3901 = vmatprep.mubr.f32.mxu0 %v259
        %3902 = vmatmul.mubr.f32.gmra.mrb[0].mxu0 %v258
        %v3903 = vpop.f32.mrb[0].mxu0
        %v3904 = vadd.f32 %v3791, %v3903
        %v3905 = vpop.f32.mrb[0].mxu0
        %v3906 = vadd.f32 %v3793, %v3905
        %3907 = vmatprep.mubr.f32.mxu0 %v271
        %3908 = vmatmul.mubr.f32.gmra.mrb[0].mxu0 %v270
        %v3909 = vpop.f32.mrb[0].mxu0
        %v3910 = vadd.f32 %v3797, %v3909
        %v3911 = vpop.f32.mrb[0].mxu0
        %v3912 = vadd.f32 %v3799, %v3911
        %3913 = vmatprep.mubr.f32.mxu0 %v283
        %3914 = vmatmul.mubr.f32.gmra.mrb[0].mxu0 %v282
        %v3915 = vpop.f32.mrb[0].mxu0
        %v3916 = vadd.f32 %v3803, %v3915
        %v3917 = vpop.f32.mrb[0].mxu0
        %v3918 = vadd.f32 %v3805, %v3917
        %3919 = vmatprep.mubr.f32.mxu0 %v295
        %3920 = vmatmul.mubr.f32.gmra.mrb[0].mxu0 %v294
        %v3921 = vpop.f32.mrb[0].mxu0
        %v3922 = vadd.f32 %v3809, %v3921
        %v3923 = vpop.f32.mrb[0].mxu0
        %v3924 = vadd.f32 %v3811, %v3923
        %3925 = vmatprep.mubr.f32.mxu0 %v307
        %3926 = vmatmul.mubr.f32.gmra.mrb[0].mxu0 %v306
        %v3927 = vpop.f32.mrb[0].mxu0
        %v3928 = vadd.f32 %v3815, %v3927
        %v3929 = vpop.f32.mrb[0].mxu0
        %v3930 = vadd.f32 %v3817, %v3929
        %3931 = vmatprep.mubr.f32.mxu0 %v319
        %3932 = vmatmul.mubr.f32.gmra.mrb[0].mxu0 %v318
        %v3933 = vpop.f32.mrb[0].mxu0
        %v3934 = vadd.f32 %v3821, %v3933
        %v3935 = vpop.f32.mrb[0].mxu0
        %v3936 = vadd.f32 %v3823, %v3935
        %3937 = vdwg.mxu0
        %3938 = vmatprep.subr.mxu0 %v327
        %3939 = vmatpush1.msra.mxu0 %v326
        %3940 = vmatprep.subr.mxu0 %v335
        %3941 = vmatpush1.msra.mxu0 %v334
        %3942 = vmatprep.subr.mxu0 %v343
        %3943 = vmatpush1.msra.mxu0 %v342
        %3944 = vmatprep.subr.mxu0 %v351
        %3945 = vmatpush1.msra.mxu0 %v350
        %3946 = vmatprep.subr.mxu0 %v359
        %3947 = vmatpush1.msra.mxu0 %v358
        %3948 = vmatprep.subr.mxu0 %v367
        %3949 = vmatpush1.msra.mxu0 %v366
        %3950 = vmatprep.subr.mxu0 %v375
        %3951 = vmatpush1.msra.mxu0 %v374
        %3952 = vmatprep.subr.mxu0 %v383
        %3953 = vmatpush1.msra.mxu0 %v382
        %3954 = vmatprep.subr.mxu0 %v391
        %3955 = vmatpush1.msra.mxu0 %v390
        %3956 = vmatprep.subr.mxu0 %v399
        %3957 = vmatpush1.msra.mxu0 %v398
        %3958 = vmatprep.subr.mxu0 %v407
        %3959 = vmatpush1.msra.mxu0 %v406
        %3960 = vmatprep.subr.mxu0 %v415
        %3961 = vmatpush1.msra.mxu0 %v414
        %3962 = vmatprep.subr.mxu0 %v423
        %3963 = vmatpush1.msra.mxu0 %v422
        %3964 = vmatprep.subr.mxu0 %v431
        %3965 = vmatpush1.msra.mxu0 %v430
        %3966 = vmatprep.subr.mxu0 %v439
        %3967 = vmatpush1.msra.mxu0 %v438
        %3968 = vmatprep.subr.mxu0 %v447
        %3969 = vmatpush1.msra.mxu0 %v446
        %3970 = vmatprep.subr.mxu0 %v455
        %3971 = vmatpush1.msra.mxu0 %v454
        %3972 = vmatprep.subr.mxu0 %v463
        %3973 = vmatpush1.msra.mxu0 %v462
        %3974 = vmatprep.subr.mxu0 %v471
        %3975 = vmatpush1.msra.mxu0 %v470
        %3976 = vmatprep.subr.mxu0 %v479
        %3977 = vmatpush1.msra.mxu0 %v478
        %3978 = vmatprep.subr.mxu0 %v487
        %3979 = vmatpush1.msra.mxu0 %v486
        %3980 = vmatprep.subr.mxu0 %v495
        %3981 = vmatpush1.msra.mxu0 %v494
        %3982 = vmatprep.subr.mxu0 %v503
        %3983 = vmatpush1.msra.mxu0 %v502
        %3984 = vmatprep.subr.mxu0 %v511
        %3985 = vmatpush1.msra.mxu0 %v510
        %3986 = vmatprep.subr.mxu0 %v519
        %3987 = vmatpush1.msra.mxu0 %v518
        %3988 = vmatprep.subr.mxu0 %v527
        %3989 = vmatpush1.msra.mxu0 %v526
        %3990 = vmatprep.subr.mxu0 %v535
        %3991 = vmatpush1.msra.mxu0 %v534
        %3992 = vmatprep.subr.mxu0 %v543
        %3993 = vmatpush1.msra.mxu0 %v542
        %3994 = vmatprep.subr.mxu0 %v551
        %3995 = vmatpush1.msra.mxu0 %v550
        %3996 = vmatprep.subr.mxu0 %v559
        %3997 = vmatpush1.msra.mxu0 %v558
        %3998 = vmatprep.subr.mxu0 %v567
        %3999 = vmatpush1.msra.mxu0 %v566
        %4000 = vmatprep.subr.mxu0 %v575
        %4001 = vmatpush1.msra.mxu0 %v574
        %4002 = vmatprep.mubr.f32.mxu0 %v225
        %4003 = vmatmul.mubr.f32.gmra.mrb[0].mxu0 %v224
        %v4004 = vpop.f32.mrb[0].mxu0
        %v4005 = vadd.f32 %v1867, %v4004
        %v4006 = vpop.f32.mrb[0].mxu0
        %v4007 = vadd.f32 %v1867, %v4006
        %4008 = vmatprep.mubr.f32.mxu0 %v237
        %4009 = vmatmul.mubr.f32.gmra.mrb[0].mxu0 %v236
        %v4010 = vpop.f32.mrb[0].mxu0
        %v4011 = vadd.f32 %v1872, %v4010
        %v4012 = vpop.f32.mrb[0].mxu0
        %v4013 = vadd.f32 %v1872, %v4012
        %4014 = vmatprep.mubr.f32.mxu0 %v249
        %4015 = vmatmul.mubr.f32.gmra.mrb[0].mxu0 %v248
        %v4016 = vpop.f32.mrb[0].mxu0
        %v4017 = vadd.f32 %v1877, %v4016
        %v4018 = vpop.f32.mrb[0].mxu0
        %v4019 = vadd.f32 %v1877, %v4018
        %4020 = vmatprep.mubr.f32.mxu0 %v261
        %4021 = vmatmul.mubr.f32.gmra.mrb[0].mxu0 %v260
        %v4022 = vpop.f32.mrb[0].mxu0
        %v4023 = vadd.f32 %v1882, %v4022
        %v4024 = vpop.f32.mrb[0].mxu0
        %v4025 = vadd.f32 %v1882, %v4024
        %4026 = vmatprep.mubr.f32.mxu0 %v273
        %4027 = vmatmul.mubr.f32.gmra.mrb[0].mxu0 %v272
        %v4028 = vpop.f32.mrb[0].mxu0
        %v4029 = vadd.f32 %v1887, %v4028
        %v4030 = vpop.f32.mrb[0].mxu0
        %v4031 = vadd.f32 %v1887, %v4030
        %4032 = vmatprep.mubr.f32.mxu0 %v285
        %4033 = vmatmul.mubr.f32.gmra.mrb[0].mxu0 %v284
        %v4034 = vpop.f32.mrb[0].mxu0
        %v4035 = vadd.f32 %v1892, %v4034
        %v4036 = vpop.f32.mrb[0].mxu0
        %v4037 = vadd.f32 %v1892, %v4036
        %4038 = vmatprep.mubr.f32.mxu0 %v297
        %4039 = vmatmul.mubr.f32.gmra.mrb[0].mxu0 %v296
        %v4040 = vpop.f32.mrb[0].mxu0
        %v4041 = vadd.f32 %v1897, %v4040
        %v4042 = vpop.f32.mrb[0].mxu0
        %v4043 = vadd.f32 %v1897, %v4042
        %4044 = vmatprep.mubr.f32.mxu0 %v309
        %4045 = vmatmul.mubr.f32.gmra.mrb[0].mxu0 %v308
        %v4046 = vpop.f32.mrb[0].mxu0
        %v4047 = vadd.f32 %v1902, %v4046
        %v4048 = vpop.f32.mrb[0].mxu0
        %v4049 = vadd.f32 %v1902, %v4048
        %4050 = vdwg.mxu0
        %4051 = vmatprep.subr.mxu0 %v583
        %4052 = vmatpush1.msra.mxu0 %v582
        %4053 = vmatprep.subr.mxu0 %v591
        %4054 = vmatpush1.msra.mxu0 %v590
        %4055 = vmatprep.subr.mxu0 %v599
        %4056 = vmatpush1.msra.mxu0 %v598
        %4057 = vmatprep.subr.mxu0 %v607
        %4058 = vmatpush1.msra.mxu0 %v606
        %4059 = vmatprep.subr.mxu0 %v615
        %4060 = vmatpush1.msra.mxu0 %v614
        %4061 = vmatprep.subr.mxu0 %v623
        %4062 = vmatpush1.msra.mxu0 %v622
        %4063 = vmatprep.subr.mxu0 %v631
        %4064 = vmatpush1.msra.mxu0 %v630
        %4065 = vmatprep.subr.mxu0 %v639
        %4066 = vmatpush1.msra.mxu0 %v638
        %4067 = vmatprep.subr.mxu0 %v647
        %4068 = vmatpush1.msra.mxu0 %v646
        %4069 = vmatprep.subr.mxu0 %v655
        %4070 = vmatpush1.msra.mxu0 %v654
        %4071 = vmatprep.subr.mxu0 %v663
        %4072 = vmatpush1.msra.mxu0 %v662
        %4073 = vmatprep.subr.mxu0 %v671
        %4074 = vmatpush1.msra.mxu0 %v670
        %4075 = vmatprep.subr.mxu0 %v679
        %4076 = vmatpush1.msra.mxu0 %v678
        %4077 = vmatprep.subr.mxu0 %v687
        %4078 = vmatpush1.msra.mxu0 %v686
        %4079 = vmatprep.subr.mxu0 %v695
        %4080 = vmatpush1.msra.mxu0 %v694
        %4081 = vmatprep.subr.mxu0 %v703
        %4082 = vmatpush1.msra.mxu0 %v702
        %4083 = vmatprep.subr.mxu0 %v711
        %4084 = vmatpush1.msra.mxu0 %v710
        %4085 = vmatprep.subr.mxu0 %v719
        %4086 = vmatpush1.msra.mxu0 %v718
        %4087 = vmatprep.subr.mxu0 %v727
        %4088 = vmatpush1.msra.mxu0 %v726
        %4089 = vmatprep.subr.mxu0 %v735
        %4090 = vmatpush1.msra.mxu0 %v734
        %4091 = vmatprep.subr.mxu0 %v743
        %4092 = vmatpush1.msra.mxu0 %v742
        %4093 = vmatprep.subr.mxu0 %v751
        %4094 = vmatpush1.msra.mxu0 %v750
        %4095 = vmatprep.subr.mxu0 %v759
        %4096 = vmatpush1.msra.mxu0 %v758
        %4097 = vmatprep.subr.mxu0 %v767
        %4098 = vmatpush1.msra.mxu0 %v766
        %4099 = vmatprep.subr.mxu0 %v775
        %4100 = vmatpush1.msra.mxu0 %v774
        %4101 = vmatprep.subr.mxu0 %v783
        %4102 = vmatpush1.msra.mxu0 %v782
        %4103 = vmatprep.subr.mxu0 %v791
        %4104 = vmatpush1.msra.mxu0 %v790
        %4105 = vmatprep.subr.mxu0 %v799
        %4106 = vmatpush1.msra.mxu0 %v798
        %4107 = vmatprep.subr.mxu0 %v807
        %4108 = vmatpush1.msra.mxu0 %v806
        %4109 = vmatprep.subr.mxu0 %v815
        %4110 = vmatpush1.msra.mxu0 %v814
        %4111 = vmatprep.subr.mxu0 %v823
        %4112 = vmatpush1.msra.mxu0 %v822
        %4113 = vmatprep.subr.mxu0 %v831
        %4114 = vmatpush1.msra.mxu0 %v830
        %4115 = vmatprep.mubr.f32.mxu0 %v227
        %4116 = vmatmul.mubr.f32.gmra.mrb[0].mxu0 %v226
        %v4117 = vpop.f32.mrb[0].mxu0
        %v4118 = vadd.f32 %v4005, %v4117
        %v4119 = vpop.f32.mrb[0].mxu0
        %v4120 = vadd.f32 %v4007, %v4119
        %4121 = vmatprep.mubr.f32.mxu0 %v239
        %4122 = vmatmul.mubr.f32.gmra.mrb[0].mxu0 %v238
        %v4123 = vpop.f32.mrb[0].mxu0
        %v4124 = vadd.f32 %v4011, %v4123
        %v4125 = vpop.f32.mrb[0].mxu0
        %v4126 = vadd.f32 %v4013, %v4125
        %4127 = vmatprep.mubr.f32.mxu0 %v251
        %4128 = vmatmul.mubr.f32.gmra.mrb[0].mxu0 %v250
        %v4129 = vpop.f32.mrb[0].mxu0
        %v4130 = vadd.f32 %v4017, %v4129
        %v4131 = vpop.f32.mrb[0].mxu0
        %v4132 = vadd.f32 %v4019, %v4131
        %4133 = vmatprep.mubr.f32.mxu0 %v263
        %4134 = vmatmul.mubr.f32.gmra.mrb[0].mxu0 %v262
        %v4135 = vpop.f32.mrb[0].mxu0
        %v4136 = vadd.f32 %v4023, %v4135
        %v4137 = vpop.f32.mrb[0].mxu0
        %v4138 = vadd.f32 %v4025, %v4137
        %4139 = vmatprep.mubr.f32.mxu0 %v275
        %4140 = vmatmul.mubr.f32.gmra.mrb[0].mxu0 %v274
        %v4141 = vpop.f32.mrb[0].mxu0
        %v4142 = vadd.f32 %v4029, %v4141
        %v4143 = vpop.f32.mrb[0].mxu0
        %v4144 = vadd.f32 %v4031, %v4143
        %4145 = vmatprep.mubr.f32.mxu0 %v287
        %4146 = vmatmul.mubr.f32.gmra.mrb[0].mxu0 %v286
        %v4147 = vpop.f32.mrb[0].mxu0
        %v4148 = vadd.f32 %v4035, %v4147
        %v4149 = vpop.f32.mrb[0].mxu0
        %v4150 = vadd.f32 %v4037, %v4149
        %4151 = vmatprep.mubr.f32.mxu0 %v299
        %4152 = vmatmul.mubr.f32.gmra.mrb[0].mxu0 %v298
        %v4153 = vpop.f32.mrb[0].mxu0
        %v4154 = vadd.f32 %v4041, %v4153
        %v4155 = vpop.f32.mrb[0].mxu0
        %v4156 = vadd.f32 %v4043, %v4155
        %4157 = vmatprep.mubr.f32.mxu0 %v311
        %4158 = vmatmul.mubr.f32.gmra.mrb[0].mxu0 %v310
        %v4159 = vpop.f32.mrb[0].mxu0
        %v4160 = vadd.f32 %v4047, %v4159
        %v4161 = vpop.f32.mrb[0].mxu0
        %v4162 = vadd.f32 %v4049, %v4161
        %4163 = vdwg.mxu0
        %4164 = vmatprep.subr.mxu0 %v839
        %4165 = vmatpush1.msra.mxu0 %v838
        %4166 = vmatprep.subr.mxu0 %v847
        %4167 = vmatpush1.msra.mxu0 %v846
        %4168 = vmatprep.subr.mxu0 %v855
        %4169 = vmatpush1.msra.mxu0 %v854
        %4170 = vmatprep.subr.mxu0 %v863
        %4171 = vmatpush1.msra.mxu0 %v862
        %4172 = vmatprep.subr.mxu0 %v871
        %4173 = vmatpush1.msra.mxu0 %v870
        %4174 = vmatprep.subr.mxu0 %v879
        %4175 = vmatpush1.msra.mxu0 %v878
        %4176 = vmatprep.subr.mxu0 %v887
        %4177 = vmatpush1.msra.mxu0 %v886
        %4178 = vmatprep.subr.mxu0 %v895
        %4179 = vmatpush1.msra.mxu0 %v894
        %4180 = vmatprep.subr.mxu0 %v903
        %4181 = vmatpush1.msra.mxu0 %v902
        %4182 = vmatprep.subr.mxu0 %v911
        %4183 = vmatpush1.msra.mxu0 %v910
        %4184 = vmatprep.subr.mxu0 %v919
        %4185 = vmatpush1.msra.mxu0 %v918
        %4186 = vmatprep.subr.mxu0 %v927
        %4187 = vmatpush1.msra.mxu0 %v926
        %4188 = vmatprep.subr.mxu0 %v935
        %4189 = vmatpush1.msra.mxu0 %v934
        %4190 = vmatprep.subr.mxu0 %v943
        %4191 = vmatpush1.msra.mxu0 %v942
        %4192 = vmatprep.subr.mxu0 %v951
        %4193 = vmatpush1.msra.mxu0 %v950
        %4194 = vmatprep.subr.mxu0 %v959
        %4195 = vmatpush1.msra.mxu0 %v958
        %4196 = vmatprep.subr.mxu0 %v967
        %4197 = vmatpush1.msra.mxu0 %v966
        %4198 = vmatprep.subr.mxu0 %v975
        %4199 = vmatpush1.msra.mxu0 %v974
        %4200 = vmatprep.subr.mxu0 %v983
        %4201 = vmatpush1.msra.mxu0 %v982
        %4202 = vmatprep.subr.mxu0 %v991
        %4203 = vmatpush1.msra.mxu0 %v990
        %4204 = vmatprep.subr.mxu0 %v999
        %4205 = vmatpush1.msra.mxu0 %v998
        %4206 = vmatprep.subr.mxu0 %v1007
        %4207 = vmatpush1.msra.mxu0 %v1006
        %4208 = vmatprep.subr.mxu0 %v1015
        %4209 = vmatpush1.msra.mxu0 %v1014
        %4210 = vmatprep.subr.mxu0 %v1023
        %4211 = vmatpush1.msra.mxu0 %v1022
        %4212 = vmatprep.subr.mxu0 %v1031
        %4213 = vmatpush1.msra.mxu0 %v1030
        %4214 = vmatprep.subr.mxu0 %v1039
        %4215 = vmatpush1.msra.mxu0 %v1038
        %4216 = vmatprep.subr.mxu0 %v1047
        %4217 = vmatpush1.msra.mxu0 %v1046
        %4218 = vmatprep.subr.mxu0 %v1055
        %4219 = vmatpush1.msra.mxu0 %v1054
        %4220 = vmatprep.subr.mxu0 %v1063
        %4221 = vmatpush1.msra.mxu0 %v1062
        %4222 = vmatprep.subr.mxu0 %v1071
        %4223 = vmatpush1.msra.mxu0 %v1070
        %4224 = vmatprep.subr.mxu0 %v1079
        %4225 = vmatpush1.msra.mxu0 %v1078
        %4226 = vmatprep.subr.mxu0 %v1087
        %4227 = vmatpush1.msra.mxu0 %v1086
        %4228 = vmatprep.mubr.f32.mxu0 %v229
        %4229 = vmatmul.mubr.f32.gmra.mrb[0].mxu0 %v228
        %v4230 = vpop.f32.mrb[0].mxu0
        %v4231 = vadd.f32 %v4118, %v4230
        %v4232 = vpop.f32.mrb[0].mxu0
        %v4233 = vadd.f32 %v4120, %v4232
        %4234 = vmatprep.mubr.f32.mxu0 %v241
        %4235 = vmatmul.mubr.f32.gmra.mrb[0].mxu0 %v240
        %v4236 = vpop.f32.mrb[0].mxu0
        %v4237 = vadd.f32 %v4124, %v4236
        %v4238 = vpop.f32.mrb[0].mxu0
        %v4239 = vadd.f32 %v4126, %v4238
        %4240 = vmatprep.mubr.f32.mxu0 %v253
        %4241 = vmatmul.mubr.f32.gmra.mrb[0].mxu0 %v252
        %v4242 = vpop.f32.mrb[0].mxu0
        %v4243 = vadd.f32 %v4130, %v4242
        %v4244 = vpop.f32.mrb[0].mxu0
        %v4245 = vadd.f32 %v4132, %v4244
        %4246 = vmatprep.mubr.f32.mxu0 %v265
        %4247 = vmatmul.mubr.f32.gmra.mrb[0].mxu0 %v264
        %v4248 = vpop.f32.mrb[0].mxu0
        %v4249 = vadd.f32 %v4136, %v4248
        %v4250 = vpop.f32.mrb[0].mxu0
        %v4251 = vadd.f32 %v4138, %v4250
        %4252 = vmatprep.mubr.f32.mxu0 %v277
        %4253 = vmatmul.mubr.f32.gmra.mrb[0].mxu0 %v276
        %v4254 = vpop.f32.mrb[0].mxu0
        %v4255 = vadd.f32 %v4142, %v4254
        %v4256 = vpop.f32.mrb[0].mxu0
        %v4257 = vadd.f32 %v4144, %v4256
        %4258 = vmatprep.mubr.f32.mxu0 %v289
        %4259 = vmatmul.mubr.f32.gmra.mrb[0].mxu0 %v288
        %v4260 = vpop.f32.mrb[0].mxu0
        %v4261 = vadd.f32 %v4148, %v4260
        %v4262 = vpop.f32.mrb[0].mxu0
        %v4263 = vadd.f32 %v4150, %v4262
        %4264 = vmatprep.mubr.f32.mxu0 %v301
        %4265 = vmatmul.mubr.f32.gmra.mrb[0].mxu0 %v300
        %v4266 = vpop.f32.mrb[0].mxu0
        %v4267 = vadd.f32 %v4154, %v4266
        %v4268 = vpop.f32.mrb[0].mxu0
        %v4269 = vadd.f32 %v4156, %v4268
        %4270 = vmatprep.mubr.f32.mxu0 %v313
        %4271 = vmatmul.mubr.f32.gmra.mrb[0].mxu0 %v312
        %v4272 = vpop.f32.mrb[0].mxu0
        %v4273 = vadd.f32 %v4160, %v4272
        %v4274 = vpop.f32.mrb[0].mxu0
        %v4275 = vadd.f32 %v4162, %v4274
        %4276 = vdwg.mxu0
        %4277 = vmatprep.subr.mxu0 %v1095
        %4278 = vmatpush1.msra.mxu0 %v1094
        %4279 = vmatprep.subr.mxu0 %v1103
        %4280 = vmatpush1.msra.mxu0 %v1102
        %4281 = vmatprep.subr.mxu0 %v1111
        %4282 = vmatpush1.msra.mxu0 %v1110
        %4283 = vmatprep.subr.mxu0 %v1119
        %4284 = vmatpush1.msra.mxu0 %v1118
        %4285 = vmatprep.subr.mxu0 %v1127
        %4286 = vmatpush1.msra.mxu0 %v1126
        %4287 = vmatprep.subr.mxu0 %v1135
        %4288 = vmatpush1.msra.mxu0 %v1134
        %4289 = vmatprep.subr.mxu0 %v1143
        %4290 = vmatpush1.msra.mxu0 %v1142
        %4291 = vmatprep.subr.mxu0 %v1151
        %4292 = vmatpush1.msra.mxu0 %v1150
        %4293 = vmatprep.subr.mxu0 %v1159
        %4294 = vmatpush1.msra.mxu0 %v1158
        %4295 = vmatprep.subr.mxu0 %v1167
        %4296 = vmatpush1.msra.mxu0 %v1166
        %4297 = vmatprep.subr.mxu0 %v1175
        %4298 = vmatpush1.msra.mxu0 %v1174
        %4299 = vmatprep.subr.mxu0 %v1183
        %4300 = vmatpush1.msra.mxu0 %v1182
        %4301 = vmatprep.subr.mxu0 %v1191
        %4302 = vmatpush1.msra.mxu0 %v1190
        %4303 = vmatprep.subr.mxu0 %v1199
        %4304 = vmatpush1.msra.mxu0 %v1198
        %4305 = vmatprep.subr.mxu0 %v1207
        %4306 = vmatpush1.msra.mxu0 %v1206
        %4307 = vmatprep.subr.mxu0 %v1215
        %4308 = vmatpush1.msra.mxu0 %v1214
        %4309 = vmatprep.subr.mxu0 %v1223
        %4310 = vmatpush1.msra.mxu0 %v1222
        %4311 = vmatprep.subr.mxu0 %v1231
        %4312 = vmatpush1.msra.mxu0 %v1230
        %4313 = vmatprep.subr.mxu0 %v1239
        %4314 = vmatpush1.msra.mxu0 %v1238
        %4315 = vmatprep.subr.mxu0 %v1247
        %4316 = vmatpush1.msra.mxu0 %v1246
        %4317 = vmatprep.subr.mxu0 %v1255
        %4318 = vmatpush1.msra.mxu0 %v1254
        %4319 = vmatprep.subr.mxu0 %v1263
        %4320 = vmatpush1.msra.mxu0 %v1262
        %4321 = vmatprep.subr.mxu0 %v1271
        %4322 = vmatpush1.msra.mxu0 %v1270
        %4323 = vmatprep.subr.mxu0 %v1279
        %4324 = vmatpush1.msra.mxu0 %v1278
        %4325 = vmatprep.subr.mxu0 %v1287
        %4326 = vmatpush1.msra.mxu0 %v1286
        %4327 = vmatprep.subr.mxu0 %v1295
        %4328 = vmatpush1.msra.mxu0 %v1294
        %4329 = vmatprep.subr.mxu0 %v1303
        %4330 = vmatpush1.msra.mxu0 %v1302
        %4331 = vmatprep.subr.mxu0 %v1311
        %4332 = vmatpush1.msra.mxu0 %v1310
        %4333 = vmatprep.subr.mxu0 %v1319
        %4334 = vmatpush1.msra.mxu0 %v1318
        %4335 = vmatprep.subr.mxu0 %v1327
        %4336 = vmatpush1.msra.mxu0 %v1326
        %4337 = vmatprep.subr.mxu0 %v1335
        %4338 = vmatpush1.msra.mxu0 %v1334
        %4339 = vmatprep.subr.mxu0 %v1343
        %4340 = vmatpush1.msra.mxu0 %v1342
        %4341 = vmatprep.mubr.f32.mxu0 %v231
        %4342 = vmatmul.mubr.f32.gmra.mrb[0].mxu0 %v230
        %v4343 = vpop.f32.mrb[0].mxu0
        %v4344 = vadd.f32 %v4231, %v4343
        %v4345 = vpop.f32.mrb[0].mxu0
        %v4346 = vadd.f32 %v4233, %v4345
        %4347 = vmatprep.mubr.f32.mxu0 %v243
        %4348 = vmatmul.mubr.f32.gmra.mrb[0].mxu0 %v242
        %v4349 = vpop.f32.mrb[0].mxu0
        %v4350 = vadd.f32 %v4237, %v4349
        %v4351 = vpop.f32.mrb[0].mxu0
        %v4352 = vadd.f32 %v4239, %v4351
        %4353 = vmatprep.mubr.f32.mxu0 %v255
        %4354 = vmatmul.mubr.f32.gmra.mrb[0].mxu0 %v254
        %v4355 = vpop.f32.mrb[0].mxu0
        %v4356 = vadd.f32 %v4243, %v4355
        %v4357 = vpop.f32.mrb[0].mxu0
        %v4358 = vadd.f32 %v4245, %v4357
        %4359 = vmatprep.mubr.f32.mxu0 %v267
        %4360 = vmatmul.mubr.f32.gmra.mrb[0].mxu0 %v266
        %v4361 = vpop.f32.mrb[0].mxu0
        %v4362 = vadd.f32 %v4249, %v4361
        %v4363 = vpop.f32.mrb[0].mxu0
        %v4364 = vadd.f32 %v4251, %v4363
        %4365 = vmatprep.mubr.f32.mxu0 %v279
        %4366 = vmatmul.mubr.f32.gmra.mrb[0].mxu0 %v278
        %v4367 = vpop.f32.mrb[0].mxu0
        %v4368 = vadd.f32 %v4255, %v4367
        %v4369 = vpop.f32.mrb[0].mxu0
        %v4370 = vadd.f32 %v4257, %v4369
        %4371 = vmatprep.mubr.f32.mxu0 %v291
        %4372 = vmatmul.mubr.f32.gmra.mrb[0].mxu0 %v290
        %v4373 = vpop.f32.mrb[0].mxu0
        %v4374 = vadd.f32 %v4261, %v4373
        %v4375 = vpop.f32.mrb[0].mxu0
        %v4376 = vadd.f32 %v4263, %v4375
        %4377 = vmatprep.mubr.f32.mxu0 %v303
        %4378 = vmatmul.mubr.f32.gmra.mrb[0].mxu0 %v302
        %v4379 = vpop.f32.mrb[0].mxu0
        %v4380 = vadd.f32 %v4267, %v4379
        %v4381 = vpop.f32.mrb[0].mxu0
        %v4382 = vadd.f32 %v4269, %v4381
        %4383 = vmatprep.mubr.f32.mxu0 %v315
        %4384 = vmatmul.mubr.f32.gmra.mrb[0].mxu0 %v314
        %v4385 = vpop.f32.mrb[0].mxu0
        %v4386 = vadd.f32 %v4273, %v4385
        %v4387 = vpop.f32.mrb[0].mxu0
        %v4388 = vadd.f32 %v4275, %v4387
        %4389 = vdwg.mxu0
        %4390 = vmatprep.subr.mxu0 %v1351
        %4391 = vmatpush1.msra.mxu0 %v1350
        %4392 = vmatprep.subr.mxu0 %v1359
        %4393 = vmatpush1.msra.mxu0 %v1358
        %4394 = vmatprep.subr.mxu0 %v1367
        %4395 = vmatpush1.msra.mxu0 %v1366
        %4396 = vmatprep.subr.mxu0 %v1375
        %4397 = vmatpush1.msra.mxu0 %v1374
        %4398 = vmatprep.subr.mxu0 %v1383
        %4399 = vmatpush1.msra.mxu0 %v1382
        %4400 = vmatprep.subr.mxu0 %v1391
        %4401 = vmatpush1.msra.mxu0 %v1390
        %4402 = vmatprep.subr.mxu0 %v1399
        %4403 = vmatpush1.msra.mxu0 %v1398
        %4404 = vmatprep.subr.mxu0 %v1407
        %4405 = vmatpush1.msra.mxu0 %v1406
        %4406 = vmatprep.subr.mxu0 %v1415
        %4407 = vmatpush1.msra.mxu0 %v1414
        %4408 = vmatprep.subr.mxu0 %v1423
        %4409 = vmatpush1.msra.mxu0 %v1422
        %4410 = vmatprep.subr.mxu0 %v1431
        %4411 = vmatpush1.msra.mxu0 %v1430
        %4412 = vmatprep.subr.mxu0 %v1439
        %4413 = vmatpush1.msra.mxu0 %v1438
        %4414 = vmatprep.subr.mxu0 %v1447
        %4415 = vmatpush1.msra.mxu0 %v1446
        %4416 = vmatprep.subr.mxu0 %v1455
        %4417 = vmatpush1.msra.mxu0 %v1454
        %4418 = vmatprep.subr.mxu0 %v1463
        %4419 = vmatpush1.msra.mxu0 %v1462
        %4420 = vmatprep.subr.mxu0 %v1471
        %4421 = vmatpush1.msra.mxu0 %v1470
        %4422 = vmatprep.subr.mxu0 %v1479
        %4423 = vmatpush1.msra.mxu0 %v1478
        %4424 = vmatprep.subr.mxu0 %v1487
        %4425 = vmatpush1.msra.mxu0 %v1486
        %4426 = vmatprep.subr.mxu0 %v1495
        %4427 = vmatpush1.msra.mxu0 %v1494
        %4428 = vmatprep.subr.mxu0 %v1503
        %4429 = vmatpush1.msra.mxu0 %v1502
        %4430 = vmatprep.subr.mxu0 %v1511
        %4431 = vmatpush1.msra.mxu0 %v1510
        %4432 = vmatprep.subr.mxu0 %v1519
        %4433 = vmatpush1.msra.mxu0 %v1518
        %4434 = vmatprep.subr.mxu0 %v1527
        %4435 = vmatpush1.msra.mxu0 %v1526
        %4436 = vmatprep.subr.mxu0 %v1535
        %4437 = vmatpush1.msra.mxu0 %v1534
        %4438 = vmatprep.subr.mxu0 %v1543
        %4439 = vmatpush1.msra.mxu0 %v1542
        %4440 = vmatprep.subr.mxu0 %v1551
        %4441 = vmatpush1.msra.mxu0 %v1550
        %4442 = vmatprep.subr.mxu0 %v1559
        %4443 = vmatpush1.msra.mxu0 %v1558
        %4444 = vmatprep.subr.mxu0 %v1567
        %4445 = vmatpush1.msra.mxu0 %v1566
        %4446 = vmatprep.subr.mxu0 %v1575
        %4447 = vmatpush1.msra.mxu0 %v1574
        %4448 = vmatprep.subr.mxu0 %v1583
        %4449 = vmatpush1.msra.mxu0 %v1582
        %4450 = vmatprep.subr.mxu0 %v1591
        %4451 = vmatpush1.msra.mxu0 %v1590
        %4452 = vmatprep.subr.mxu0 %v1599
        %4453 = vmatpush1.msra.mxu0 %v1598
        %4454 = vmatprep.mubr.f32.mxu0 %v233
        %4455 = vmatmul.mubr.f32.gmra.mrb[0].mxu0 %v232
        %v4456 = vpop.f32.mrb[0].mxu0
        %v4457 = vadd.f32 %v4344, %v4456
        %v4458 = vpop.f32.mrb[0].mxu0
        %v4459 = vadd.f32 %v4346, %v4458
        %4460 = vmatprep.mubr.f32.mxu0 %v245
        %4461 = vmatmul.mubr.f32.gmra.mrb[0].mxu0 %v244
        %v4462 = vpop.f32.mrb[0].mxu0
        %v4463 = vadd.f32 %v4350, %v4462
        %v4464 = vpop.f32.mrb[0].mxu0
        %v4465 = vadd.f32 %v4352, %v4464
        %4466 = vmatprep.mubr.f32.mxu0 %v257
        %4467 = vmatmul.mubr.f32.gmra.mrb[0].mxu0 %v256
        %v4468 = vpop.f32.mrb[0].mxu0
        %v4469 = vadd.f32 %v4356, %v4468
        %v4470 = vpop.f32.mrb[0].mxu0
        %v4471 = vadd.f32 %v4358, %v4470
        %4472 = vmatprep.mubr.f32.mxu0 %v269
        %4473 = vmatmul.mubr.f32.gmra.mrb[0].mxu0 %v268
        %v4474 = vpop.f32.mrb[0].mxu0
        %v4475 = vadd.f32 %v4362, %v4474
        %v4476 = vpop.f32.mrb[0].mxu0
        %v4477 = vadd.f32 %v4364, %v4476
        %4478 = vmatprep.mubr.f32.mxu0 %v281
        %4479 = vmatmul.mubr.f32.gmra.mrb[0].mxu0 %v280
        %v4480 = vpop.f32.mrb[0].mxu0
        %v4481 = vadd.f32 %v4368, %v4480
        %v4482 = vpop.f32.mrb[0].mxu0
        %v4483 = vadd.f32 %v4370, %v4482
        %4484 = vmatprep.mubr.f32.mxu0 %v293
        %4485 = vmatmul.mubr.f32.gmra.mrb[0].mxu0 %v292
        %v4486 = vpop.f32.mrb[0].mxu0
        %v4487 = vadd.f32 %v4374, %v4486
        %v4488 = vpop.f32.mrb[0].mxu0
        %v4489 = vadd.f32 %v4376, %v4488
        %4490 = vmatprep.mubr.f32.mxu0 %v305
        %4491 = vmatmul.mubr.f32.gmra.mrb[0].mxu0 %v304
        %v4492 = vpop.f32.mrb[0].mxu0
        %v4493 = vadd.f32 %v4380, %v4492
        %v4494 = vpop.f32.mrb[0].mxu0
        %v4495 = vadd.f32 %v4382, %v4494
        %4496 = vmatprep.mubr.f32.mxu0 %v317
        %4497 = vmatmul.mubr.f32.gmra.mrb[0].mxu0 %v316
        %v4498 = vpop.f32.mrb[0].mxu0
        %v4499 = vadd.f32 %v4386, %v4498
        %v4500 = vpop.f32.mrb[0].mxu0
        %v4501 = vadd.f32 %v4388, %v4500
        %4502 = vdwg.mxu0
        %4503 = vmatprep.subr.mxu0 %v1607
        %4504 = vmatpush1.msra.mxu0 %v1606
        %4505 = vmatprep.subr.mxu0 %v1615
        %4506 = vmatpush1.msra.mxu0 %v1614
        %4507 = vmatprep.subr.mxu0 %v1623
        %4508 = vmatpush1.msra.mxu0 %v1622
        %4509 = vmatprep.subr.mxu0 %v1631
        %4510 = vmatpush1.msra.mxu0 %v1630
        %4511 = vmatprep.subr.mxu0 %v1639
        %4512 = vmatpush1.msra.mxu0 %v1638
        %4513 = vmatprep.subr.mxu0 %v1647
        %4514 = vmatpush1.msra.mxu0 %v1646
        %4515 = vmatprep.subr.mxu0 %v1655
        %4516 = vmatpush1.msra.mxu0 %v1654
        %4517 = vmatprep.subr.mxu0 %v1663
        %4518 = vmatpush1.msra.mxu0 %v1662
        %4519 = vmatprep.subr.mxu0 %v1671
        %4520 = vmatpush1.msra.mxu0 %v1670
        %4521 = vmatprep.subr.mxu0 %v1679
        %4522 = vmatpush1.msra.mxu0 %v1678
        %4523 = vmatprep.subr.mxu0 %v1687
        %4524 = vmatpush1.msra.mxu0 %v1686
        %4525 = vmatprep.subr.mxu0 %v1695
        %4526 = vmatpush1.msra.mxu0 %v1694
        %4527 = vmatprep.subr.mxu0 %v1703
        %4528 = vmatpush1.msra.mxu0 %v1702
        %4529 = vmatprep.subr.mxu0 %v1711
        %4530 = vmatpush1.msra.mxu0 %v1710
        %4531 = vmatprep.subr.mxu0 %v1719
        %4532 = vmatpush1.msra.mxu0 %v1718
        %4533 = vmatprep.subr.mxu0 %v1727
        %4534 = vmatpush1.msra.mxu0 %v1726
        %4535 = vmatprep.subr.mxu0 %v1735
        %4536 = vmatpush1.msra.mxu0 %v1734
        %4537 = vmatprep.subr.mxu0 %v1743
        %4538 = vmatpush1.msra.mxu0 %v1742
        %4539 = vmatprep.subr.mxu0 %v1751
        %4540 = vmatpush1.msra.mxu0 %v1750
        %4541 = vmatprep.subr.mxu0 %v1759
        %4542 = vmatpush1.msra.mxu0 %v1758
        %4543 = vmatprep.subr.mxu0 %v1767
        %4544 = vmatpush1.msra.mxu0 %v1766
        %4545 = vmatprep.subr.mxu0 %v1775
        %4546 = vmatpush1.msra.mxu0 %v1774
        %4547 = vmatprep.subr.mxu0 %v1783
        %4548 = vmatpush1.msra.mxu0 %v1782
        %4549 = vmatprep.subr.mxu0 %v1791
        %4550 = vmatpush1.msra.mxu0 %v1790
        %4551 = vmatprep.subr.mxu0 %v1799
        %4552 = vmatpush1.msra.mxu0 %v1798
        %4553 = vmatprep.subr.mxu0 %v1807
        %4554 = vmatpush1.msra.mxu0 %v1806
        %4555 = vmatprep.subr.mxu0 %v1815
        %4556 = vmatpush1.msra.mxu0 %v1814
        %4557 = vmatprep.subr.mxu0 %v1823
        %4558 = vmatpush1.msra.mxu0 %v1822
        %4559 = vmatprep.subr.mxu0 %v1831
        %4560 = vmatpush1.msra.mxu0 %v1830
        %4561 = vmatprep.subr.mxu0 %v1839
        %4562 = vmatpush1.msra.mxu0 %v1838
        %4563 = vmatprep.subr.mxu0 %v1847
        %4564 = vmatpush1.msra.mxu0 %v1846
        %4565 = vmatprep.subr.mxu0 %v1855
        %4566 = vmatpush1.msra.mxu0 %v1854
        %4567 = vmatprep.mubr.f32.mxu0 %v235
        %4568 = vmatmul.mubr.f32.gmra.mrb[0].mxu0 %v234
        %v4569 = vpop.f32.mrb[0].mxu0
        %v4570 = vadd.f32 %v4457, %v4569
        %v4571 = vpop.f32.mrb[0].mxu0
        %v4572 = vadd.f32 %v4459, %v4571
        %4573 = vmatprep.mubr.f32.mxu0 %v247
        %4574 = vmatmul.mubr.f32.gmra.mrb[0].mxu0 %v246
        %v4575 = vpop.f32.mrb[0].mxu0
        %v4576 = vadd.f32 %v4463, %v4575
        %v4577 = vpop.f32.mrb[0].mxu0
        %v4578 = vadd.f32 %v4465, %v4577
        %4579 = vmatprep.mubr.f32.mxu0 %v259
        %4580 = vmatmul.mubr.f32.gmra.mrb[0].mxu0 %v258
        %v4581 = vpop.f32.mrb[0].mxu0
        %v4582 = vadd.f32 %v4469, %v4581
        %v4583 = vpop.f32.mrb[0].mxu0
        %v4584 = vadd.f32 %v4471, %v4583
        %4585 = vmatprep.mubr.f32.mxu0 %v271
        %4586 = vmatmul.mubr.f32.gmra.mrb[0].mxu0 %v270
        %v4587 = vpop.f32.mrb[0].mxu0
        %v4588 = vadd.f32 %v4475, %v4587
        %v4589 = vpop.f32.mrb[0].mxu0
        %v4590 = vadd.f32 %v4477, %v4589
        %4591 = vmatprep.mubr.f32.mxu0 %v283
        %4592 = vmatmul.mubr.f32.gmra.mrb[0].mxu0 %v282
        %v4593 = vpop.f32.mrb[0].mxu0
        %v4594 = vadd.f32 %v4481, %v4593
        %v4595 = vpop.f32.mrb[0].mxu0
        %v4596 = vadd.f32 %v4483, %v4595
        %4597 = vmatprep.mubr.f32.mxu0 %v295
        %4598 = vmatmul.mubr.f32.gmra.mrb[0].mxu0 %v294
        %v4599 = vpop.f32.mrb[0].mxu0
        %v4600 = vadd.f32 %v4487, %v4599
        %v4601 = vpop.f32.mrb[0].mxu0
        %v4602 = vadd.f32 %v4489, %v4601
        %4603 = vmatprep.mubr.f32.mxu0 %v307
        %4604 = vmatmul.mubr.f32.gmra.mrb[0].mxu0 %v306
        %v4605 = vpop.f32.mrb[0].mxu0
        %v4606 = vadd.f32 %v4493, %v4605
        %v4607 = vpop.f32.mrb[0].mxu0
        %v4608 = vadd.f32 %v4495, %v4607
        %4609 = vmatprep.mubr.f32.mxu0 %v319
        %4610 = vmatmul.mubr.f32.gmra.mrb[0].mxu0 %v318
        %v4611 = vpop.f32.mrb[0].mxu0
        %v4612 = vadd.f32 %v4499, %v4611
        %v4613 = vpop.f32.mrb[0].mxu0
        %v4614 = vadd.f32 %v4501, %v4613
        %4615 = vdwg.mxu0
        %4616 = vst [vmem:[%s221] sm:$0xff] %v2536
        %4617 = vst [vmem:[%s221 + $0x8] sm:$0xff] %v2538
        %4618 = vst [vmem:[%s221 + $0x10] sm:$0xff] %v3214
        %4619 = vst [vmem:[%s221 + $0x18] sm:$0xff] %v3216
        %4620 = vst [vmem:[%s221 + $0x20] sm:$0xff] %v3892
        %4621 = vst [vmem:[%s221 + $0x28] sm:$0xff] %v3894
        %4622 = vst [vmem:[%s221 + $0x30] sm:$0xff] %v4570
        %4623 = vst [vmem:[%s221 + $0x38] sm:$0xff] %v4572
        %4624 = vst [vmem:[%s221 + $0x40] sm:$0xff] %v2542
        %4625 = vst [vmem:[%s221 + $0x48] sm:$0xff] %v2544
        %4626 = vst [vmem:[%s221 + $0x50] sm:$0xff] %v3220
        %4627 = vst [vmem:[%s221 + $0x58] sm:$0xff] %v3222
        %4628 = vst [vmem:[%s221 + $0x60] sm:$0xff] %v3898
        %4629 = vst [vmem:[%s221 + $0x68] sm:$0xff] %v3900
        %4630 = vst [vmem:[%s221 + $0x70] sm:$0xff] %v4576
        %4631 = vst [vmem:[%s221 + $0x78] sm:$0xff] %v4578
        %4632 = vst [vmem:[%s221 + $0x80] sm:$0xff] %v2548
        %4633 = vst [vmem:[%s221 + $0x88] sm:$0xff] %v2550
        %4634 = vst [vmem:[%s221 + $0x90] sm:$0xff] %v3226
        %4635 = vst [vmem:[%s221 + $0x98] sm:$0xff] %v3228
        %4636 = vst [vmem:[%s221 + $0xa0] sm:$0xff] %v3904
        %4637 = vst [vmem:[%s221 + $0xa8] sm:$0xff] %v3906
        %4638 = vst [vmem:[%s221 + $0xb0] sm:$0xff] %v4582
        %4639 = vst [vmem:[%s221 + $0xb8] sm:$0xff] %v4584
        %4640 = vst [vmem:[%s221 + $0xc0] sm:$0xff] %v2554
        %4641 = vst [vmem:[%s221 + $0xc8] sm:$0xff] %v2556
        %4642 = vst [vmem:[%s221 + $0xd0] sm:$0xff] %v3232
        %4643 = vst [vmem:[%s221 + $0xd8] sm:$0xff] %v3234
        %4644 = vst [vmem:[%s221 + $0xe0] sm:$0xff] %v3910
        %4645 = vst [vmem:[%s221 + $0xe8] sm:$0xff] %v3912
        %4646 = vst [vmem:[%s221 + $0xf0] sm:$0xff] %v4588
        %4647 = vst [vmem:[%s221 + $0xf8] sm:$0xff] %v4590
        %4648 = vst [vmem:[%s221 + $0x100] sm:$0xff] %v2560
        %4649 = vst [vmem:[%s221 + $0x108] sm:$0xff] %v2562
        %4650 = vst [vmem:[%s221 + $0x110] sm:$0xff] %v3238
        %4651 = vst [vmem:[%s221 + $0x118] sm:$0xff] %v3240
        %4652 = vst [vmem:[%s221 + $0x120] sm:$0xff] %v3916
        %4653 = vst [vmem:[%s221 + $0x128] sm:$0xff] %v3918
        %4654 = vst [vmem:[%s221 + $0x130] sm:$0xff] %v4594
        %4655 = vst [vmem:[%s221 + $0x138] sm:$0xff] %v4596
        %4656 = vst [vmem:[%s221 + $0x140] sm:$0xff] %v2566
        %4657 = vst [vmem:[%s221 + $0x148] sm:$0xff] %v2568
        %4658 = vst [vmem:[%s221 + $0x150] sm:$0xff] %v3244
        %4659 = vst [vmem:[%s221 + $0x158] sm:$0xff] %v3246
        %4660 = vst [vmem:[%s221 + $0x160] sm:$0xff] %v3922
        %4661 = vst [vmem:[%s221 + $0x168] sm:$0xff] %v3924
        %4662 = vst [vmem:[%s221 + $0x170] sm:$0xff] %v4600
        %4663 = vst [vmem:[%s221 + $0x178] sm:$0xff] %v4602
        %4664 = vst [vmem:[%s221 + $0x180] sm:$0xff] %v2572
        %4665 = vst [vmem:[%s221 + $0x188] sm:$0xff] %v2574
        %4666 = vst [vmem:[%s221 + $0x190] sm:$0xff] %v3250
        %4667 = vst [vmem:[%s221 + $0x198] sm:$0xff] %v3252
        %4668 = vst [vmem:[%s221 + $0x1a0] sm:$0xff] %v3928
        %4669 = vst [vmem:[%s221 + $0x1a8] sm:$0xff] %v3930
        %4670 = vst [vmem:[%s221 + $0x1b0] sm:$0xff] %v4606
        %4671 = vst [vmem:[%s221 + $0x1b8] sm:$0xff] %v4608
        %4672 = vst [vmem:[%s221 + $0x1c0] sm:$0xff] %v2578
        %4673 = vst [vmem:[%s221 + $0x1c8] sm:$0xff] %v2580
        %4674 = vst [vmem:[%s221 + $0x1d0] sm:$0xff] %v3256
        %4675 = vst [vmem:[%s221 + $0x1d8] sm:$0xff] %v3258
        %4676 = vst [vmem:[%s221 + $0x1e0] sm:$0xff] %v3934
        %4677 = vst [vmem:[%s221 + $0x1e8] sm:$0xff] %v3936
        %4678 = vst [vmem:[%s221 + $0x1f0] sm:$0xff] %v4612
        %4679 = vst [vmem:[%s221 + $0x1f8] sm:$0xff] %v4614
        %s4680 = sand.u32 %s113, 1
        %s4681 = scalar_lea.sflag [#allocation4], %s4680
        %s4682 = sand.u32 %s113, 1
        %s4683 = smul.addr %s4682, 512
        %s4684 = scalar_lea.vmem [#allocation7], %s4683
        // Predicated region
        $region41: #{tpu_custom_call.1} parent=31 // pred_check
          %p4685 = pneg %p123
        $region42: #{tpu_custom_call.1} parent=31 // pred_check_branch
          %4687 = sbr.rel (%p4685) target = $region44
        $region43: #{tpu_custom_call.1} parent=31 // pred_region
          %s4688 = smul.u32 8, %s26
          %s4690 = ssub.s32 8192, 8192
          %4691 = vsyncadd %s4681, %s4690
          %s4692 = smul.addr %s25, 64
          %s4693 = sadd.s32 %s4688, %s4692
          %s4694 = smul.addr %s4693, 128
          %s4695 = scalar_lea.hbm %s3, %s4694
          %s4696 = sshll.u32 %s4684, 4
          %s4697 = int_to_ptr.vmem [resolvable:$true] %s4696
          %4702 = dma.vmem_to_hbm [thread:$0]  %s4697, 8192, %s4695, %s4681, 1024, 1024, 64
        $region44: #{tpu_custom_call.1} parent=31 // pred_fallthru
          _
      $region32: #{tpu_custom_call.1} parent=5 // pred_fallthru
        _
      %p4703 = scmp.le.s32.totalorder 2, %s16
      // Predicated region
      $region45: #{tpu_custom_call.1} parent=5 // pred_check
        %p4704 = pneg %p4703
      $region46: #{tpu_custom_call.1} parent=5 // pred_check_branch
        %4706 = sbr.rel (%p4704) target = $region48
      $region47: #{tpu_custom_call.1} parent=5 // pred_region
        %s4707 = ssub.s32 %s16, 2
        // Predicated region
        $region49: #{tpu_custom_call.1} parent=47 // pred_check
          %p4708 = pneg %p129
        $region50: #{tpu_custom_call.1} parent=47 // pred_check_branch
          %4710 = sbr.rel (%p4708) target = $region52
        $region51: #{tpu_custom_call.1} parent=47 // pred_region
          %s4711 = sand.u32 %s114, 1
          %s4712 = scalar_lea.sflag [#allocation4], %s4711
          %s4713 = sand.u32 %s114, 1
          %s4714 = smul.addr %s4713, 512
          %s4715 = scalar_lea.vmem [#allocation7], %s4714
          %4716 = dma.done %s4712, 8192
        $region52: #{tpu_custom_call.1} parent=47 // pred_fallthru
          _
      $region48: #{tpu_custom_call.1} parent=5 // pred_fallthru
        _
    $region6: #{tpu_custom_call.1} parent=1 // loop_footer
      %s20 = sadd.s32 1, %s16
    $region7: #{tpu_custom_call.1} parent=1 // loop_footer_branch
      %15 = sbr.rel target = $region3
    $region8: #{tpu_custom_call.1} parent=1 // loop_exit
      _
    %4717 = vsyncpa [#allocation3], 1
    %s4718 = scalar_lea.sflag [#allocation3], 1
    %4719 = vsyncpa %s4718, 1
    %4720 = vsyncpa [#allocation6], 1
    %s4721 = scalar_lea.sflag [#allocation6], 1
    %4722 = vsyncpa %s4721, 1
    %4723 = vsyncpa [#allocation4], 1
    %s4724 = scalar_lea.sflag [#allocation4], 1
    %4725 = vsyncpa %s4724, 1

</llo_original>
